<compile_context>
chip_gen: v7x
topology: tpu7x:2x2x1
jax: 0.10.0
libtpu: 0.0.40
codegen_flags: <defaults>
</compile_context>

<pallas_src>
import functools

import jax
import jax.numpy as jnp
from jax import lax
from jax.experimental import pallas as pl
from jax.experimental.pallas import tpu as pltpu


# Fixed LeNet geometry (set by the PyTorch module).
_H = 32                               # input spatial size
_K = 5                                # conv kernel size
_C1_IN, _C1_OUT = 3, 6
_C2_IN, _C2_OUT = 6, 16
_OH1 = _H - _K + 1                    # 28  conv1 output h/w
_PH1 = _OH1 // 2                      # 14  pool1 output h/w
_OH2 = _PH1 - _K + 1                  # 10  conv2 output h/w
_PH2 = _OH2 // 2                      # 5   pool2 output h/w
_R1 = _H                              # 32  rows per image in the conv1 input block
_R2 = 16                              # 16  rows per image in the pool1 block (14 valid)
_R3 = 8                               # 8   rows per image in the pool2 block (5 valid)
_FC1_IN = _C2_OUT * _PH2 * _PH2       # 400
_FC1_OUT, _FC2_OUT = 256, 128
_LANES_IN = _H * _C1_IN               # 96 lanes: index = w*3 + c


# ----------------------------------------------------------------------------
# Fused LeNet kernel: Nb images per grid step, everything VMEM-resident
# ----------------------------------------------------------------------------
def _lenet_kernel(x_ref, t1_ref, b1_ref, t2_ref, b2_ref,
                  pl1_ref, pr1_ref, pl2_ref, pr2_ref, fsel_ref,
                  wf1_ref, bf1_ref, wf2_ref, bf2_ref, wf3_ref, bf3_ref,
                  out_ref, p1_s):
    f32 = jnp.float32
    nb = out_ref.shape[0]             # images in this block (static)
    m1 = nb * _R1 - (_K - 1)          # conv1 stacked-row count
    m2 = nb * _R2 - (_K - 1)          # conv2 stacked-row count

    # ---- conv1 + bias + ReLU: accumulated per-kh banded-weight matmuls -----
    # x_ref row n*32 + h, lane w*3 + c  ==  image n, channel c, pixel (h, w).
    # Rows i in [28,32) of each image block become garbage but are never
    # selected by the pooling matrices.
    h1 = jnp.dot(x_ref[0:m1, :], t1_ref[0], preferred_element_type=f32)
    for kh in range(1, _K):
        h1 += jnp.dot(x_ref[kh:kh + m1, :], t1_ref[kh],
                      preferred_element_type=f32)
    h1 = jnp.maximum(h1 + b1_ref[...], 0.0)                     # [m1, 6*28]

    # ---- maxpool1: precomputed 0/1 selection matmuls + elementwise max -----
    hr = jnp.maximum(jnp.dot(pl1_ref[0], h1, preferred_element_type=f32),
                     jnp.dot(pl1_ref[1], h1, preferred_element_type=f32))
    p1_s[...] = jnp.maximum(
        jnp.dot(hr, pr1_ref[0], preferred_element_type=f32),
        jnp.dot(hr, pr1_ref[1], preferred_element_type=f32))    # [nb*16, 6*14]

    # ---- conv2 + bias + ReLU ------------------------------------------------
    h2 = jnp.dot(p1_s[0:m2, :], t2_ref[0], preferred_element_type=f32)
    for kh in range(1, _K):
        h2 += jnp.dot(p1_s[kh:kh + m2, :], t2_ref[kh],
                      preferred_element_type=f32)
    h2 = jnp.maximum(h2 + b2_ref[...], 0.0)                     # [m2, 16*10]

    # ---- maxpool2 ------------------------------------------------------------
    hr2 = jnp.maximum(jnp.dot(pl2_ref[0], h2, preferred_element_type=f32),
                      jnp.dot(pl2_ref[1], h2, preferred_element_type=f32))
    p2 = jnp.maximum(jnp.dot(hr2, pr2_ref[0], preferred_element_type=f32),
                     jnp.dot(hr2, pr2_ref[1], preferred_element_type=f32))
    # p2: [nb*8, 16*5], row n*8 + h (h in [0,5) valid), lane c*5 + w

    # ---- flatten (folded into per-h fc1 weight blocks) + fc1/fc2/fc3 --------
    y = jnp.dot(jnp.dot(fsel_ref[0], p2, preferred_element_type=f32),
                wf1_ref[0], preferred_element_type=f32)
    for h in range(1, _PH2):
        y += jnp.dot(jnp.dot(fsel_ref[h], p2, preferred_element_type=f32),
                     wf1_ref[h], preferred_element_type=f32)
    y = jnp.maximum(y + bf1_ref[...], 0.0)                      # [nb, 256]
    y = jnp.maximum(jnp.dot(y, wf2_ref[...], preferred_element_type=f32)
                    + bf2_ref[...], 0.0)                        # [nb, 128]
    y = jnp.dot(y, wf3_ref[...], preferred_element_type=f32) + bf3_ref[...]
    out_ref[...] = y                                            # [nb, n_pad]


# ----------------------------------------------------------------------------
# Wrapper: one pallas_call for the whole forward, batch-tiled grid
# ----------------------------------------------------------------------------
def _full_spec(a):
    nd = a.ndim
    return pl.BlockSpec(a.shape, lambda b, nd=nd: (0,) * nd)


@functools.partial(jax.jit, static_argnames=("num_classes",))
def _fused_logits(x, prep, num_classes):
    B = x.shape[0]
    nb = prep["fsel"].shape[1]                     # images per grid step (static)
    n_blocks = pl.cdiv(B, nb)
    bp = n_blocks * nb
    n_pad = prep["wf3"].shape[1]

    # Lane-dense conv1 input: rows = image*height, lanes = (w, c) -> w*3 + c.
    x2d = jnp.transpose(x, (0, 2, 3, 1)).reshape(B, _H, _LANES_IN)
    if bp != B:
        x2d = jnp.pad(x2d, ((0, bp - B), (0, 0), (0, 0)))
    x2d = x2d.reshape(bp * _R1, _LANES_IN)

    operands = (x2d, prep["t1"], prep["b1"], prep["t2"], prep["b2"],
                prep["pl1"], prep["pr1"], prep["pl2"], prep["pr2"],
                prep["fsel"], prep["wf1"], prep["bf1"], prep["wf2"],
                prep["bf2"], prep["wf3"], prep["bf3"])
    in_specs = [pl.BlockSpec((nb * _R1, _LANES_IN), lambda b: (b, 0))]
    in_specs += [_full_spec(a) for a in operands[1:]]

    out = pl.pallas_call(
        _lenet_kernel,
        out_shape=jax.ShapeDtypeStruct((bp, n_pad), jnp.float32),
        grid=(n_blocks,),
        in_specs=in_specs,
        out_specs=pl.BlockSpec((nb, n_pad), lambda b: (b, 0)),
        scratch_shapes=[
            pltpu.VMEM((nb * _R2, _C2_IN * _PH1), jnp.float32),   # pool1 output
        ],
        compiler_params=pltpu.CompilerParams(
            dimension_semantics=("parallel",)),
    )(*operands)
    return out[:B, :num_classes]


def lenet_forward(x, prep, num_classes=100):
    """Mirrors LeNet.forward: returns (logits, shape_dict)."""
    logits = _fused_logits(x, prep, num_classes)
    B = x.shape[0]
    shape_dict = {
        1: [B, _C1_OUT, _PH1, _PH1],
        2: [B, _C2_OUT, _PH2, _PH2],
        3: [B, _FC1_IN],
        4: [B, _FC1_OUT],
        5: [B, _FC2_OUT],
        6: [B, num_classes],
    }
    return logits, shape_dict


# ----------------------------------------------------------------------------
# One-time parameter preparation (banded conv weights, pooling/flatten
# selection matrices, pre-transposed / padded fc weights)
# ----------------------------------------------------------------------------
def prepare_params(params, num_classes=100, block_b=8):
    f32 = jnp.float32
    nb = block_b
    m1 = nb * _R1 - (_K - 1)
    m2 = nb * _R2 - (_K - 1)

    def banded_conv_weight(w, w_in, chan_minor):
        # w: [OC, C, K, K] (PyTorch) -> [K, rows, OC*w_out] per-kh banded slices:
        #   chan_minor=True : rows = w*C + c    (conv1: input lanes are (w, c))
        #   chan_minor=False: rows = c*w_in + j (conv2: pooled lanes are (c, j))
        oc, c, k, _ = w.shape
        w_out = w_in - k + 1
        bands = jnp.stack(
            [jnp.eye(w_in, w_out, k=-kw, dtype=f32) for kw in range(k)])  # [K,w_in,w_out]
        if chan_minor:
            t = jnp.einsum("kwv,ochk->hwcov", bands, w.astype(f32))
            return t.reshape(k, w_in * c, oc * w_out)
        t = jnp.einsum("kwv,ochk->hcwov", bands, w.astype(f32))
        return t.reshape(k, c * w_in, oc * w_out)

    def row_pool_mats(rop, rip, valid, cols):
        # [2, nb*rop, cols]: mat[r, n*rop + i, n*rip + 2i + r] = 1 for i < valid.
        n = jnp.arange(nb * rop) // rop
        i = jnp.arange(nb * rop) % rop
        col_ids = jnp.arange(cols)[None, :]
        mats = []
        for r in (0, 1):
            tgt = (n * rip + 2 * i + r)[:, None]
            mats.append(((col_ids == tgt) & (i[:, None] < valid)).astype(f32))
        return jnp.stack(mats)

    def col_pool_mats(n_ch, w_in, w_out):
        # [2, n_ch*w_in, n_ch*w_out]: mat[s, c*w_in + 2j + s, c*w_out + j] = 1.
        co = jnp.arange(n_ch * w_out) // w_out
        j = jnp.arange(n_ch * w_out) % w_out
        row_ids = jnp.arange(n_ch * w_in)[:, None]
        mats = []
        for s in (0, 1):
            tgt = (co * w_in + 2 * j + s)[None, :]
            mats.append((row_ids == tgt).astype(f32))
        return jnp.stack(mats)

    # flatten row-selectors: fsel[h, n, n*8 + h] = 1
    fsel = jnp.stack(
        [(jnp.arange(nb * _R3)[None, :]
          == (jnp.arange(nb) * _R3 + h)[:, None]).astype(f32)
         for h in range(_PH2)])

    n_pad = ((num_classes + 127) // 128) * 128
    wf3 = jnp.zeros((_FC2_OUT, n_pad), f32).at[:, :num_classes].set(
        params["fc3w"].T.astype(f32))
    bf3 = jnp.zeros((1, n_pad), f32).at[0, :num_classes].set(
        params["fc3b"].astype(f32))

    # fc1 weight with PyTorch's (c, h, w) flatten folded into per-h row blocks
    # matching the pool2 layout (row h, lane c*5 + w).
    wf1 = (params["fc1w"].astype(f32)
           .reshape(_FC1_OUT, _C2_OUT, _PH2, _PH2)
           .transpose(2, 1, 3, 0)                               # [h, c, w, out]
           .reshape(_PH2, _C2_OUT * _PH2, _FC1_OUT))

    return {
        "t1": banded_conv_weight(params["c1w"], _H, chan_minor=True),     # [5, 96, 168]
        "b1": jnp.repeat(params["c1b"].astype(f32), _OH1)[None, :],       # [1, 168]
        "t2": banded_conv_weight(params["c2w"], _PH1, chan_minor=False),  # [5, 84, 160]
        "b2": jnp.repeat(params["c2b"].astype(f32), _OH2)[None, :],       # [1, 160]
        "pl1": row_pool_mats(_R2, _R1, _PH1, m1),           # [2, nb*16, nb*32-4]
        "pr1": col_pool_mats(_C1_OUT, _OH1, _PH1),          # [2, 168, 84]
        "pl2": row_pool_mats(_R3, _R2, _PH2, m2),           # [2, nb*8, nb*16-4]
        "pr2": col_pool_mats(_C2_OUT, _OH2, _PH2),          # [2, 160, 80]
        "fsel": fsel,                                       # [5, nb, nb*8]
        "wf1": wf1,                                         # [5, 80, 256]
        "bf1": params["fc1b"].astype(f32)[None, :],         # [1, 256]
        "wf2": params["fc2w"].T.astype(f32),                # [256, 128]
        "bf2": params["fc2b"].astype(f32)[None, :],         # [1, 128]
        "wf3": wf3,                                         # [128, n_pad]
        "bf3": bf3,                                         # [1, n_pad]
    }


# ----------------------------------------------------------------------------
# Deterministic parameter init (PyTorch-style uniform(-1/sqrt(fan_in), ...))
# ----------------------------------------------------------------------------
def init_params(key, num_classes=100):
    def uinit(k, shape, fan_in):
        bound = 1.0 / jnp.sqrt(jnp.float32(fan_in))
        return jax.random.uniform(k, shape, jnp.float32, -bound, bound)

    ks = jax.random.split(key, 10)
    return {
        "c1w": uinit(ks[0], (6, 3, 5, 5), 3 * 5 * 5),
        "c1b": uinit(ks[1], (6,), 3 * 5 * 5),
        "c2w": uinit(ks[2], (16, 6, 5, 5), 6 * 5 * 5),
        "c2b": uinit(ks[3], (16,), 6 * 5 * 5),
        "fc1w": uinit(ks[4], (256, 16 * 5 * 5), 16 * 5 * 5),
        "fc1b": uinit(ks[5], (256,), 16 * 5 * 5),
        "fc2w": uinit(ks[6], (128, 256), 256),
        "fc2b": uinit(ks[7], (128,), 256),
        "fc3w": uinit(ks[8], (num_classes, 128), 128),
        "fc3b": uinit(ks[9], (num_classes,), 128),
    }


# ----------------------------------------------------------------------------
# Plain-JAX reference (HIGHEST precision, for validating the fused kernel)
# ----------------------------------------------------------------------------
def _reference_forward(x, params):
    dn = ("NCHW", "OIHW", "NCHW")
    hp = lax.Precision.HIGHEST
    h = lax.conv_general_dilated(x, params["c1w"], (1, 1), "VALID",
                                 dimension_numbers=dn, precision=hp)
    h = jnp.maximum(h + params["c1b"][None, :, None, None], 0.0)
    h = lax.reduce_window(h, -jnp.inf, lax.max, (1, 1, 2, 2), (1, 1, 2, 2), "VALID")
    h = lax.conv_general_dilated(h, params["c2w"], (1, 1), "VALID",
                                 dimension_numbers=dn, precision=hp)
    h = jnp.maximum(h + params["c2b"][None, :, None, None], 0.0)
    h = lax.reduce_window(h, -jnp.inf, lax.max, (1, 1, 2, 2), (1, 1, 2, 2), "VALID")
    h = h.reshape(h.shape[0], -1)
    h = jnp.maximum(jnp.dot(h, params["fc1w"].T, precision=hp) + params["fc1b"], 0.0)
    h = jnp.maximum(jnp.dot(h, params["fc2w"].T, precision=hp) + params["fc2b"], 0.0)
    return jnp.dot(h, params["fc3w"].T, precision=hp) + params["fc3b"]


if __name__ == "__main__":
    key = jax.random.PRNGKey(0)
    k_x, k_p = jax.random.split(key)
    # LeNet fixes channels=3 and spatial=32x32; batch 16, 8 images per grid
    # step -> grid=(2,) so both v7x TensorCores get a step.
    B = 16
    x = jax.random.normal(k_x, (B, 3, 32, 32), dtype=jnp.float32)
    params = init_params(k_p, num_classes=100)
    prep = prepare_params(params, num_classes=100, block_b=8)

    logits, shape_dict = lenet_forward(x, prep, num_classes=100)
    logits = jax.block_until_ready(logits)

    assert logits.shape == (B, 100)
    assert shape_dict == {
        1: [B, 6, 14, 14],
        2: [B, 16, 5, 5],
        3: [B, 400],
        4: [B, 256],
        5: [B, 128],
        6: [B, 100],
    }

    ref = _reference_forward(x, params)
    err = float(jnp.max(jnp.abs(logits - ref)))
    # 50x tighter than before; leaves headroom for MXU f32-pass differences.
    assert err < 1e-3, f"fused Pallas LeNet mismatch: max abs err {err}"

    print("KERNEL_OK")
</pallas_src>

<mosaic_0001>
module attributes {stable_mosaic.version = 11 : i64} {
  func.func @_lenet_kernel(%arg0: i32, %arg1: memref<256x96xf32, #tpu.memory_space<vmem>>, %arg2: memref<5x96x168xf32, #tpu.memory_space<vmem>>, %arg3: memref<1x168xf32, #tpu.memory_space<vmem>>, %arg4: memref<5x84x160xf32, #tpu.memory_space<vmem>>, %arg5: memref<1x160xf32, #tpu.memory_space<vmem>>, %arg6: memref<2x128x252xf32, #tpu.memory_space<vmem>>, %arg7: memref<2x168x84xf32, #tpu.memory_space<vmem>>, %arg8: memref<2x64x124xf32, #tpu.memory_space<vmem>>, %arg9: memref<2x160x80xf32, #tpu.memory_space<vmem>>, %arg10: memref<5x8x64xf32, #tpu.memory_space<vmem>>, %arg11: memref<5x80x256xf32, #tpu.memory_space<vmem>>, %arg12: memref<1x256xf32, #tpu.memory_space<vmem>>, %arg13: memref<256x128xf32, #tpu.memory_space<vmem>>, %arg14: memref<1x128xf32, #tpu.memory_space<vmem>>, %arg15: memref<128x128xf32, #tpu.memory_space<vmem>>, %arg16: memref<1x128xf32, #tpu.memory_space<vmem>>, %arg17: memref<8x128xf32, #tpu.memory_space<vmem>>, %arg18: memref<128x84xf32, #tpu.memory_space<vmem>>) attributes {dimension_semantics = [#tpu.dimension_semantics<parallel>], iteration_bounds = array<i64: 2>, scalar_prefetch = 0 : i64, scratch_operands = 1 : i64, tpu.core_type = #tpu.core_type<tc>, window_params = [{transform_indices = @transform_0, window_bounds = array<i64: 256, 96>}, {pipeline_mode = #tpu.pipeline_mode<synchronous>, transform_indices = @transform_1, window_bounds = array<i64: 5, 96, 168>}, {pipeline_mode = #tpu.pipeline_mode<synchronous>, transform_indices = @transform_2, window_bounds = array<i64: 1, 168>}, {pipeline_mode = #tpu.pipeline_mode<synchronous>, transform_indices = @transform_3, window_bounds = array<i64: 5, 84, 160>}, {pipeline_mode = #tpu.pipeline_mode<synchronous>, transform_indices = @transform_4, window_bounds = array<i64: 1, 160>}, {pipeline_mode = #tpu.pipeline_mode<synchronous>, transform_indices = @transform_5, window_bounds = array<i64: 2, 128, 252>}, {pipeline_mode = #tpu.pipeline_mode<synchronous>, transform_indices = @transform_6, window_bounds = array<i64: 2, 168, 84>}, {pipeline_mode = #tpu.pipeline_mode<synchronous>, transform_indices = @transform_7, window_bounds = array<i64: 2, 64, 124>}, {pipeline_mode = #tpu.pipeline_mode<synchronous>, transform_indices = @transform_8, window_bounds = array<i64: 2, 160, 80>}, {pipeline_mode = #tpu.pipeline_mode<synchronous>, transform_indices = @transform_9, window_bounds = array<i64: 5, 8, 64>}, {pipeline_mode = #tpu.pipeline_mode<synchronous>, transform_indices = @transform_10, window_bounds = array<i64: 5, 80, 256>}, {pipeline_mode = #tpu.pipeline_mode<synchronous>, transform_indices = @transform_11, window_bounds = array<i64: 1, 256>}, {pipeline_mode = #tpu.pipeline_mode<synchronous>, transform_indices = @transform_12, window_bounds = array<i64: 256, 128>}, {pipeline_mode = #tpu.pipeline_mode<synchronous>, transform_indices = @transform_13, window_bounds = array<i64: 1, 128>}, {pipeline_mode = #tpu.pipeline_mode<synchronous>, transform_indices = @transform_14, window_bounds = array<i64: 128, 128>}, {pipeline_mode = #tpu.pipeline_mode<synchronous>, transform_indices = @transform_15, window_bounds = array<i64: 1, 128>}, {transform_indices = @transform_16, window_bounds = array<i64: 8, 128>}]} {
    %c0 = arith.constant 0 : index
    %c0_0 = arith.constant 0 : index
    %0 = vector.load %arg1[%c0, %c0_0] : memref<256x96xf32, #tpu.memory_space<vmem>>, vector<252x96xf32>
    %c0_1 = arith.constant 0 : index
    %c0_2 = arith.constant 0 : index
    %c0_3 = arith.constant 0 : index
    %1 = vector.load %arg2[%c0_1, %c0_2, %c0_3] : memref<5x96x168xf32, #tpu.memory_space<vmem>>, vector<1x96x168xf32>
    %2 = vector.shape_cast %1 : vector<1x96x168xf32> to vector<96x168xf32>
    %cst = arith.constant dense<0.000000e+00> : vector<252x168xf32>
    %3 = tpu.matmul %0, %2, %cst {dimension_numbers = #tpu.dot_dimension_numbers<[1], [0], [0], [1], [0, 0, 1, 1], [], []>} : vector<252x96xf32>, vector<96x168xf32>, vector<252x168xf32> -> vector<252x168xf32>
    %c1 = arith.constant 1 : index
    %c0_4 = arith.constant 0 : index
    %4 = vector.load %arg1[%c1, %c0_4] : memref<256x96xf32, #tpu.memory_space<vmem>>, vector<252x96xf32>
    %c1_5 = arith.constant 1 : index
    %c0_6 = arith.constant 0 : index
    %c0_7 = arith.constant 0 : index
    %5 = vector.load %arg2[%c1_5, %c0_6, %c0_7] : memref<5x96x168xf32, #tpu.memory_space<vmem>>, vector<1x96x168xf32>
    %6 = vector.shape_cast %5 : vector<1x96x168xf32> to vector<96x168xf32>
    %cst_8 = arith.constant dense<0.000000e+00> : vector<252x168xf32>
    %7 = tpu.matmul %4, %6, %cst_8 {dimension_numbers = #tpu.dot_dimension_numbers<[1], [0], [0], [1], [0, 0, 1, 1], [], []>} : vector<252x96xf32>, vector<96x168xf32>, vector<252x168xf32> -> vector<252x168xf32>
    %8 = arith.addf %3, %7 : vector<252x168xf32>
    %c2 = arith.constant 2 : index
    %c0_9 = arith.constant 0 : index
    %9 = vector.load %arg1[%c2, %c0_9] : memref<256x96xf32, #tpu.memory_space<vmem>>, vector<252x96xf32>
    %c2_10 = arith.constant 2 : index
    %c0_11 = arith.constant 0 : index
    %c0_12 = arith.constant 0 : index
    %10 = vector.load %arg2[%c2_10, %c0_11, %c0_12] : memref<5x96x168xf32, #tpu.memory_space<vmem>>, vector<1x96x168xf32>
    %11 = vector.shape_cast %10 : vector<1x96x168xf32> to vector<96x168xf32>
    %cst_13 = arith.constant dense<0.000000e+00> : vector<252x168xf32>
    %12 = tpu.matmul %9, %11, %cst_13 {dimension_numbers = #tpu.dot_dimension_numbers<[1], [0], [0], [1], [0, 0, 1, 1], [], []>} : vector<252x96xf32>, vector<96x168xf32>, vector<252x168xf32> -> vector<252x168xf32>
    %13 = arith.addf %8, %12 : vector<252x168xf32>
    %c3 = arith.constant 3 : index
    %c0_14 = arith.constant 0 : index
    %14 = vector.load %arg1[%c3, %c0_14] : memref<256x96xf32, #tpu.memory_space<vmem>>, vector<252x96xf32>
    %c3_15 = arith.constant 3 : index
    %c0_16 = arith.constant 0 : index
    %c0_17 = arith.constant 0 : index
    %15 = vector.load %arg2[%c3_15, %c0_16, %c0_17] : memref<5x96x168xf32, #tpu.memory_space<vmem>>, vector<1x96x168xf32>
    %16 = vector.shape_cast %15 : vector<1x96x168xf32> to vector<96x168xf32>
    %cst_18 = arith.constant dense<0.000000e+00> : vector<252x168xf32>
    %17 = tpu.matmul %14, %16, %cst_18 {dimension_numbers = #tpu.dot_dimension_numbers<[1], [0], [0], [1], [0, 0, 1, 1], [], []>} : vector<252x96xf32>, vector<96x168xf32>, vector<252x168xf32> -> vector<252x168xf32>
    %18 = arith.addf %13, %17 : vector<252x168xf32>
    %c4 = arith.constant 4 : index
    %c0_19 = arith.constant 0 : index
    %19 = vector.load %arg1[%c4, %c0_19] : memref<256x96xf32, #tpu.memory_space<vmem>>, vector<252x96xf32>
    %c4_20 = arith.constant 4 : index
    %c0_21 = arith.constant 0 : index
    %c0_22 = arith.constant 0 : index
    %20 = vector.load %arg2[%c4_20, %c0_21, %c0_22] : memref<5x96x168xf32, #tpu.memory_space<vmem>>, vector<1x96x168xf32>
    %21 = vector.shape_cast %20 : vector<1x96x168xf32> to vector<96x168xf32>
    %cst_23 = arith.constant dense<0.000000e+00> : vector<252x168xf32>
    %22 = tpu.matmul %19, %21, %cst_23 {dimension_numbers = #tpu.dot_dimension_numbers<[1], [0], [0], [1], [0, 0, 1, 1], [], []>} : vector<252x96xf32>, vector<96x168xf32>, vector<252x168xf32> -> vector<252x168xf32>
    %23 = arith.addf %18, %22 : vector<252x168xf32>
    %c0_24 = arith.constant 0 : index
    %c0_25 = arith.constant 0 : index
    %24 = vector.load %arg3[%c0_24, %c0_25] : memref<1x168xf32, #tpu.memory_space<vmem>>, vector<1x168xf32>
    %25 = vector.broadcast %24 : vector<1x168xf32> to vector<252x168xf32>
    %26 = arith.addf %23, %25 : vector<252x168xf32>
    %cst_26 = arith.constant 0.000000e+00 : f32
    %27 = vector.broadcast %cst_26 : f32 to vector<252x168xf32>
    %28 = arith.maximumf %26, %27 : vector<252x168xf32>
    %c0_27 = arith.constant 0 : index
    %c0_28 = arith.constant 0 : index
    %c0_29 = arith.constant 0 : index
    %29 = vector.load %arg6[%c0_27, %c0_28, %c0_29] : memref<2x128x252xf32, #tpu.memory_space<vmem>>, vector<1x128x252xf32>
    %30 = vector.shape_cast %29 : vector<1x128x252xf32> to vector<128x252xf32>
    %cst_30 = arith.constant dense<0.000000e+00> : vector<128x168xf32>
    %31 = tpu.matmul %30, %28, %cst_30 {dimension_numbers = #tpu.dot_dimension_numbers<[1], [0], [0], [1], [0, 0, 1, 1], [], []>} : vector<128x252xf32>, vector<252x168xf32>, vector<128x168xf32> -> vector<128x168xf32>
    %c1_31 = arith.constant 1 : index
    %c0_32 = arith.constant 0 : index
    %c0_33 = arith.constant 0 : index
    %32 = vector.load %arg6[%c1_31, %c0_32, %c0_33] : memref<2x128x252xf32, #tpu.memory_space<vmem>>, vector<1x128x252xf32>
    %33 = vector.shape_cast %32 : vector<1x128x252xf32> to vector<128x252xf32>
    %cst_34 = arith.constant dense<0.000000e+00> : vector<128x168xf32>
    %34 = tpu.matmul %33, %28, %cst_34 {dimension_numbers = #tpu.dot_dimension_numbers<[1], [0], [0], [1], [0, 0, 1, 1], [], []>} : vector<128x252xf32>, vector<252x168xf32>, vector<128x168xf32> -> vector<128x168xf32>
    %35 = arith.maximumf %31, %34 : vector<128x168xf32>
    %c0_35 = arith.constant 0 : index
    %c0_36 = arith.constant 0 : index
    %c0_37 = arith.constant 0 : index
    %36 = vector.load %arg7[%c0_35, %c0_36, %c0_37] : memref<2x168x84xf32, #tpu.memory_space<vmem>>, vector<1x168x84xf32>
    %37 = vector.shape_cast %36 : vector<1x168x84xf32> to vector<168x84xf32>
    %cst_38 = arith.constant dense<0.000000e+00> : vector<128x84xf32>
    %38 = tpu.matmul %35, %37, %cst_38 {dimension_numbers = #tpu.dot_dimension_numbers<[1], [0], [0], [1], [0, 0, 1, 1], [], []>} : vector<128x168xf32>, vector<168x84xf32>, vector<128x84xf32> -> vector<128x84xf32>
    %c1_39 = arith.constant 1 : index
    %c0_40 = arith.constant 0 : index
    %c0_41 = arith.constant 0 : index
    %39 = vector.load %arg7[%c1_39, %c0_40, %c0_41] : memref<2x168x84xf32, #tpu.memory_space<vmem>>, vector<1x168x84xf32>
    %40 = vector.shape_cast %39 : vector<1x168x84xf32> to vector<168x84xf32>
    %cst_42 = arith.constant dense<0.000000e+00> : vector<128x84xf32>
    %41 = tpu.matmul %35, %40, %cst_42 {dimension_numbers = #tpu.dot_dimension_numbers<[1], [0], [0], [1], [0, 0, 1, 1], [], []>} : vector<128x168xf32>, vector<168x84xf32>, vector<128x84xf32> -> vector<128x84xf32>
    %42 = arith.maximumf %38, %41 : vector<128x84xf32>
    %c0_43 = arith.constant 0 : index
    %c0_44 = arith.constant 0 : index
    %43 = vector.load %arg18[%c0_43, %c0_44] : memref<128x84xf32, #tpu.memory_space<vmem>>, vector<128x84xf32>
    tpu.vector_store %arg18[%c0_43, %c0_44], %42 {strides = array<i32>} : memref<128x84xf32, #tpu.memory_space<vmem>>, vector<128x84xf32>,
    %c0_45 = arith.constant 0 : index
    %c0_46 = arith.constant 0 : index
    %44 = vector.load %arg18[%c0_45, %c0_46] : memref<128x84xf32, #tpu.memory_space<vmem>>, vector<124x84xf32>
    %c0_47 = arith.constant 0 : index
    %c0_48 = arith.constant 0 : index
    %c0_49 = arith.constant 0 : index
    %45 = vector.load %arg4[%c0_47, %c0_48, %c0_49] : memref<5x84x160xf32, #tpu.memory_space<vmem>>, vector<1x84x160xf32>
    %46 = vector.shape_cast %45 : vector<1x84x160xf32> to vector<84x160xf32>
    %cst_50 = arith.constant dense<0.000000e+00> : vector<124x160xf32>
    %47 = tpu.matmul %44, %46, %cst_50 {dimension_numbers = #tpu.dot_dimension_numbers<[1], [0], [0], [1], [0, 0, 1, 1], [], []>} : vector<124x84xf32>, vector<84x160xf32>, vector<124x160xf32> -> vector<124x160xf32>
    %c1_51 = arith.constant 1 : index
    %c0_52 = arith.constant 0 : index
    %48 = vector.load %arg18[%c1_51, %c0_52] : memref<128x84xf32, #tpu.memory_space<vmem>>, vector<124x84xf32>
    %c1_53 = arith.constant 1 : index
    %c0_54 = arith.constant 0 : index
    %c0_55 = arith.constant 0 : index
    %49 = vector.load %arg4[%c1_53, %c0_54, %c0_55] : memref<5x84x160xf32, #tpu.memory_space<vmem>>, vector<1x84x160xf32>
    %50 = vector.shape_cast %49 : vector<1x84x160xf32> to vector<84x160xf32>
    %cst_56 = arith.constant dense<0.000000e+00> : vector<124x160xf32>
    %51 = tpu.matmul %48, %50, %cst_56 {dimension_numbers = #tpu.dot_dimension_numbers<[1], [0], [0], [1], [0, 0, 1, 1], [], []>} : vector<124x84xf32>, vector<84x160xf32>, vector<124x160xf32> -> vector<124x160xf32>
    %52 = arith.addf %47, %51 : vector<124x160xf32>
    %c2_57 = arith.constant 2 : index
    %c0_58 = arith.constant 0 : index
    %53 = vector.load %arg18[%c2_57, %c0_58] : memref<128x84xf32, #tpu.memory_space<vmem>>, vector<124x84xf32>
    %c2_59 = arith.constant 2 : index
    %c0_60 = arith.constant 0 : index
    %c0_61 = arith.constant 0 : index
    %54 = vector.load %arg4[%c2_59, %c0_60, %c0_61] : memref<5x84x160xf32, #tpu.memory_space<vmem>>, vector<1x84x160xf32>
    %55 = vector.shape_cast %54 : vector<1x84x160xf32> to vector<84x160xf32>
    %cst_62 = arith.constant dense<0.000000e+00> : vector<124x160xf32>
    %56 = tpu.matmul %53, %55, %cst_62 {dimension_numbers = #tpu.dot_dimension_numbers<[1], [0], [0], [1], [0, 0, 1, 1], [], []>} : vector<124x84xf32>, vector<84x160xf32>, vector<124x160xf32> -> vector<124x160xf32>
    %57 = arith.addf %52, %56 : vector<124x160xf32>
    %c3_63 = arith.constant 3 : index
    %c0_64 = arith.constant 0 : index
    %58 = vector.load %arg18[%c3_63, %c0_64] : memref<128x84xf32, #tpu.memory_space<vmem>>, vector<124x84xf32>
    %c3_65 = arith.constant 3 : index
    %c0_66 = arith.constant 0 : index
    %c0_67 = arith.constant 0 : index
    %59 = vector.load %arg4[%c3_65, %c0_66, %c0_67] : memref<5x84x160xf32, #tpu.memory_space<vmem>>, vector<1x84x160xf32>
    %60 = vector.shape_cast %59 : vector<1x84x160xf32> to vector<84x160xf32>
    %cst_68 = arith.constant dense<0.000000e+00> : vector<124x160xf32>
    %61 = tpu.matmul %58, %60, %cst_68 {dimension_numbers = #tpu.dot_dimension_numbers<[1], [0], [0], [1], [0, 0, 1, 1], [], []>} : vector<124x84xf32>, vector<84x160xf32>, vector<124x160xf32> -> vector<124x160xf32>
    %62 = arith.addf %57, %61 : vector<124x160xf32>
    %c4_69 = arith.constant 4 : index
    %c0_70 = arith.constant 0 : index
    %63 = vector.load %arg18[%c4_69, %c0_70] : memref<128x84xf32, #tpu.memory_space<vmem>>, vector<124x84xf32>
    %c4_71 = arith.constant 4 : index
    %c0_72 = arith.constant 0 : index
    %c0_73 = arith.constant 0 : index
    %64 = vector.load %arg4[%c4_71, %c0_72, %c0_73] : memref<5x84x160xf32, #tpu.memory_space<vmem>>, vector<1x84x160xf32>
    %65 = vector.shape_cast %64 : vector<1x84x160xf32> to vector<84x160xf32>
    %cst_74 = arith.constant dense<0.000000e+00> : vector<124x160xf32>
    %66 = tpu.matmul %63, %65, %cst_74 {dimension_numbers = #tpu.dot_dimension_numbers<[1], [0], [0], [1], [0, 0, 1, 1], [], []>} : vector<124x84xf32>, vector<84x160xf32>, vector<124x160xf32> -> vector<124x160xf32>
    %67 = arith.addf %62, %66 : vector<124x160xf32>
    %c0_75 = arith.constant 0 : index
    %c0_76 = arith.constant 0 : index
    %68 = vector.load %arg5[%c0_75, %c0_76] : memref<1x160xf32, #tpu.memory_space<vmem>>, vector<1x160xf32>
    %69 = vector.broadcast %68 : vector<1x160xf32> to vector<124x160xf32>
    %70 = arith.addf %67, %69 : vector<124x160xf32>
    %cst_77 = arith.constant 0.000000e+00 : f32
    %71 = vector.broadcast %cst_77 : f32 to vector<124x160xf32>
    %72 = arith.maximumf %70, %71 : vector<124x160xf32>
    %c0_78 = arith.constant 0 : index
    %c0_79 = arith.constant 0 : index
    %c0_80 = arith.constant 0 : index
    %73 = vector.load %arg8[%c0_78, %c0_79, %c0_80] : memref<2x64x124xf32, #tpu.memory_space<vmem>>, vector<1x64x124xf32>
    %74 = vector.shape_cast %73 : vector<1x64x124xf32> to vector<64x124xf32>
    %cst_81 = arith.constant dense<0.000000e+00> : vector<64x160xf32>
    %75 = tpu.matmul %74, %72, %cst_81 {dimension_numbers = #tpu.dot_dimension_numbers<[1], [0], [0], [1], [0, 0, 1, 1], [], []>} : vector<64x124xf32>, vector<124x160xf32>, vector<64x160xf32> -> vector<64x160xf32>
    %c1_82 = arith.constant 1 : index
    %c0_83 = arith.constant 0 : index
    %c0_84 = arith.constant 0 : index
    %76 = vector.load %arg8[%c1_82, %c0_83, %c0_84] : memref<2x64x124xf32, #tpu.memory_space<vmem>>, vector<1x64x124xf32>
    %77 = vector.shape_cast %76 : vector<1x64x124xf32> to vector<64x124xf32>
    %cst_85 = arith.constant dense<0.000000e+00> : vector<64x160xf32>
    %78 = tpu.matmul %77, %72, %cst_85 {dimension_numbers = #tpu.dot_dimension_numbers<[1], [0], [0], [1], [0, 0, 1, 1], [], []>} : vector<64x124xf32>, vector<124x160xf32>, vector<64x160xf32> -> vector<64x160xf32>
    %79 = arith.maximumf %75, %78 : vector<64x160xf32>
    %c0_86 = arith.constant 0 : index
    %c0_87 = arith.constant 0 : index
    %c0_88 = arith.constant 0 : index
    %80 = vector.load %arg9[%c0_86, %c0_87, %c0_88] : memref<2x160x80xf32, #tpu.memory_space<vmem>>, vector<1x160x80xf32>
    %81 = vector.shape_cast %80 : vector<1x160x80xf32> to vector<160x80xf32>
    %cst_89 = arith.constant dense<0.000000e+00> : vector<64x80xf32>
    %82 = tpu.matmul %79, %81, %cst_89 {dimension_numbers = #tpu.dot_dimension_numbers<[1], [0], [0], [1], [0, 0, 1, 1], [], []>} : vector<64x160xf32>, vector<160x80xf32>, vector<64x80xf32> -> vector<64x80xf32>
    %c1_90 = arith.constant 1 : index
    %c0_91 = arith.constant 0 : index
    %c0_92 = arith.constant 0 : index
    %83 = vector.load %arg9[%c1_90, %c0_91, %c0_92] : memref<2x160x80xf32, #tpu.memory_space<vmem>>, vector<1x160x80xf32>
    %84 = vector.shape_cast %83 : vector<1x160x80xf32> to vector<160x80xf32>
    %cst_93 = arith.constant dense<0.000000e+00> : vector<64x80xf32>
    %85 = tpu.matmul %79, %84, %cst_93 {dimension_numbers = #tpu.dot_dimension_numbers<[1], [0], [0], [1], [0, 0, 1, 1], [], []>} : vector<64x160xf32>, vector<160x80xf32>, vector<64x80xf32> -> vector<64x80xf32>
    %86 = arith.maximumf %82, %85 : vector<64x80xf32>
    %c0_94 = arith.constant 0 : index
    %c0_95 = arith.constant 0 : index
    %c0_96 = arith.constant 0 : index
    %87 = vector.load %arg10[%c0_94, %c0_95, %c0_96] : memref<5x8x64xf32, #tpu.memory_space<vmem>>, vector<1x8x64xf32>
    %88 = vector.shape_cast %87 : vector<1x8x64xf32> to vector<8x64xf32>
    %cst_97 = arith.constant dense<0.000000e+00> : vector<8x80xf32>
    %89 = tpu.matmul %88, %86, %cst_97 {dimension_numbers = #tpu.dot_dimension_numbers<[1], [0], [0], [1], [0, 0, 1, 1], [], []>} : vector<8x64xf32>, vector<64x80xf32>, vector<8x80xf32> -> vector<8x80xf32>
    %c0_98 = arith.constant 0 : index
    %c0_99 = arith.constant 0 : index
    %c0_100 = arith.constant 0 : index
    %90 = vector.load %arg11[%c0_98, %c0_99, %c0_100] : memref<5x80x256xf32, #tpu.memory_space<vmem>>, vector<1x80x256xf32>
    %91 = vector.shape_cast %90 : vector<1x80x256xf32> to vector<80x256xf32>
    %cst_101 = arith.constant dense<0.000000e+00> : vector<8x256xf32>
    %92 = tpu.matmul %89, %91, %cst_101 {dimension_numbers = #tpu.dot_dimension_numbers<[1], [0], [0], [1], [0, 0, 1, 1], [], []>} : vector<8x80xf32>, vector<80x256xf32>, vector<8x256xf32> -> vector<8x256xf32>
    %c1_102 = arith.constant 1 : index
    %c0_103 = arith.constant 0 : index
    %c0_104 = arith.constant 0 : index
    %93 = vector.load %arg10[%c1_102, %c0_103, %c0_104] : memref<5x8x64xf32, #tpu.memory_space<vmem>>, vector<1x8x64xf32>
    %94 = vector.shape_cast %93 : vector<1x8x64xf32> to vector<8x64xf32>
    %cst_105 = arith.constant dense<0.000000e+00> : vector<8x80xf32>
    %95 = tpu.matmul %94, %86, %cst_105 {dimension_numbers = #tpu.dot_dimension_numbers<[1], [0], [0], [1], [0, 0, 1, 1], [], []>} : vector<8x64xf32>, vector<64x80xf32>, vector<8x80xf32> -> vector<8x80xf32>
    %c1_106 = arith.constant 1 : index
    %c0_107 = arith.constant 0 : index
    %c0_108 = arith.constant 0 : index
    %96 = vector.load %arg11[%c1_106, %c0_107, %c0_108] : memref<5x80x256xf32, #tpu.memory_space<vmem>>, vector<1x80x256xf32>
    %97 = vector.shape_cast %96 : vector<1x80x256xf32> to vector<80x256xf32>
    %cst_109 = arith.constant dense<0.000000e+00> : vector<8x256xf32>
    %98 = tpu.matmul %95, %97, %cst_109 {dimension_numbers = #tpu.dot_dimension_numbers<[1], [0], [0], [1], [0, 0, 1, 1], [], []>} : vector<8x80xf32>, vector<80x256xf32>, vector<8x256xf32> -> vector<8x256xf32>
    %99 = arith.addf %92, %98 : vector<8x256xf32>
    %c2_110 = arith.constant 2 : index
    %c0_111 = arith.constant 0 : index
    %c0_112 = arith.constant 0 : index
    %100 = vector.load %arg10[%c2_110, %c0_111, %c0_112] : memref<5x8x64xf32, #tpu.memory_space<vmem>>, vector<1x8x64xf32>
    %101 = vector.shape_cast %100 : vector<1x8x64xf32> to vector<8x64xf32>
    %cst_113 = arith.constant dense<0.000000e+00> : vector<8x80xf32>
    %102 = tpu.matmul %101, %86, %cst_113 {dimension_numbers = #tpu.dot_dimension_numbers<[1], [0], [0], [1], [0, 0, 1, 1], [], []>} : vector<8x64xf32>, vector<64x80xf32>, vector<8x80xf32> -> vector<8x80xf32>
    %c2_114 = arith.constant 2 : index
    %c0_115 = arith.constant 0 : index
    %c0_116 = arith.constant 0 : index
    %103 = vector.load %arg11[%c2_114, %c0_115, %c0_116] : memref<5x80x256xf32, #tpu.memory_space<vmem>>, vector<1x80x256xf32>
    %104 = vector.shape_cast %103 : vector<1x80x256xf32> to vector<80x256xf32>
    %cst_117 = arith.constant dense<0.000000e+00> : vector<8x256xf32>
    %105 = tpu.matmul %102, %104, %cst_117 {dimension_numbers = #tpu.dot_dimension_numbers<[1], [0], [0], [1], [0, 0, 1, 1], [], []>} : vector<8x80xf32>, vector<80x256xf32>, vector<8x256xf32> -> vector<8x256xf32>
    %106 = arith.addf %99, %105 : vector<8x256xf32>
    %c3_118 = arith.constant 3 : index
    %c0_119 = arith.constant 0 : index
    %c0_120 = arith.constant 0 : index
    %107 = vector.load %arg10[%c3_118, %c0_119, %c0_120] : memref<5x8x64xf32, #tpu.memory_space<vmem>>, vector<1x8x64xf32>
    %108 = vector.shape_cast %107 : vector<1x8x64xf32> to vector<8x64xf32>
    %cst_121 = arith.constant dense<0.000000e+00> : vector<8x80xf32>
    %109 = tpu.matmul %108, %86, %cst_121 {dimension_numbers = #tpu.dot_dimension_numbers<[1], [0], [0], [1], [0, 0, 1, 1], [], []>} : vector<8x64xf32>, vector<64x80xf32>, vector<8x80xf32> -> vector<8x80xf32>
    %c3_122 = arith.constant 3 : index
    %c0_123 = arith.constant 0 : index
    %c0_124 = arith.constant 0 : index
    %110 = vector.load %arg11[%c3_122, %c0_123, %c0_124] : memref<5x80x256xf32, #tpu.memory_space<vmem>>, vector<1x80x256xf32>
    %111 = vector.shape_cast %110 : vector<1x80x256xf32> to vector<80x256xf32>
    %cst_125 = arith.constant dense<0.000000e+00> : vector<8x256xf32>
    %112 = tpu.matmul %109, %111, %cst_125 {dimension_numbers = #tpu.dot_dimension_numbers<[1], [0], [0], [1], [0, 0, 1, 1], [], []>} : vector<8x80xf32>, vector<80x256xf32>, vector<8x256xf32> -> vector<8x256xf32>
    %113 = arith.addf %106, %112 : vector<8x256xf32>
    %c4_126 = arith.constant 4 : index
    %c0_127 = arith.constant 0 : index
    %c0_128 = arith.constant 0 : index
    %114 = vector.load %arg10[%c4_126, %c0_127, %c0_128] : memref<5x8x64xf32, #tpu.memory_space<vmem>>, vector<1x8x64xf32>
    %115 = vector.shape_cast %114 : vector<1x8x64xf32> to vector<8x64xf32>
    %cst_129 = arith.constant dense<0.000000e+00> : vector<8x80xf32>
    %116 = tpu.matmul %115, %86, %cst_129 {dimension_numbers = #tpu.dot_dimension_numbers<[1], [0], [0], [1], [0, 0, 1, 1], [], []>} : vector<8x64xf32>, vector<64x80xf32>, vector<8x80xf32> -> vector<8x80xf32>
    %c4_130 = arith.constant 4 : index
    %c0_131 = arith.constant 0 : index
    %c0_132 = arith.constant 0 : index
    %117 = vector.load %arg11[%c4_130, %c0_131, %c0_132] : memref<5x80x256xf32, #tpu.memory_space<vmem>>, vector<1x80x256xf32>
    %118 = vector.shape_cast %117 : vector<1x80x256xf32> to vector<80x256xf32>
    %cst_133 = arith.constant dense<0.000000e+00> : vector<8x256xf32>
    %119 = tpu.matmul %116, %118, %cst_133 {dimension_numbers = #tpu.dot_dimension_numbers<[1], [0], [0], [1], [0, 0, 1, 1], [], []>} : vector<8x80xf32>, vector<80x256xf32>, vector<8x256xf32> -> vector<8x256xf32>
    %120 = arith.addf %113, %119 : vector<8x256xf32>
    %c0_134 = arith.constant 0 : index
    %c0_135 = arith.constant 0 : index
    %121 = vector.load %arg12[%c0_134, %c0_135] : memref<1x256xf32, #tpu.memory_space<vmem>>, vector<1x256xf32>
    %122 = vector.broadcast %121 : vector<1x256xf32> to vector<8x256xf32>
    %123 = arith.addf %120, %122 : vector<8x256xf32>
    %cst_136 = arith.constant 0.000000e+00 : f32
    %124 = vector.broadcast %cst_136 : f32 to vector<8x256xf32>
    %125 = arith.maximumf %123, %124 : vector<8x256xf32>
    %c0_137 = arith.constant 0 : index
    %c0_138 = arith.constant 0 : index
    %126 = vector.load %arg13[%c0_137, %c0_138] : memref<256x128xf32, #tpu.memory_space<vmem>>, vector<256x128xf32>
    %cst_139 = arith.constant dense<0.000000e+00> : vector<8x128xf32>
    %127 = tpu.matmul %125, %126, %cst_139 {dimension_numbers = #tpu.dot_dimension_numbers<[1], [0], [0], [1], [0, 0, 1, 1], [], []>} : vector<8x256xf32>, vector<256x128xf32>, vector<8x128xf32> -> vector<8x128xf32>
    %c0_140 = arith.constant 0 : index
    %c0_141 = arith.constant 0 : index
    %128 = vector.load %arg14[%c0_140, %c0_141] : memref<1x128xf32, #tpu.memory_space<vmem>>, vector<1x128xf32>
    %129 = vector.broadcast %128 : vector<1x128xf32> to vector<8x128xf32>
    %130 = arith.addf %127, %129 : vector<8x128xf32>
    %cst_142 = arith.constant 0.000000e+00 : f32
    %131 = vector.broadcast %cst_142 : f32 to vector<8x128xf32>
    %132 = arith.maximumf %130, %131 : vector<8x128xf32>
    %c0_143 = arith.constant 0 : index
    %c0_144 = arith.constant 0 : index
    %133 = vector.load %arg15[%c0_143, %c0_144] : memref<128x128xf32, #tpu.memory_space<vmem>>, vector<128x128xf32>
    %cst_145 = arith.constant dense<0.000000e+00> : vector<8x128xf32>
    %134 = tpu.matmul %132, %133, %cst_145 {dimension_numbers = #tpu.dot_dimension_numbers<[1], [0], [0], [1], [0, 0, 1, 1], [], []>} : vector<8x128xf32>, vector<128x128xf32>, vector<8x128xf32> -> vector<8x128xf32>
    %c0_146 = arith.constant 0 : index
    %c0_147 = arith.constant 0 : index
    %135 = vector.load %arg16[%c0_146, %c0_147] : memref<1x128xf32, #tpu.memory_space<vmem>>, vector<1x128xf32>
    %136 = vector.broadcast %135 : vector<1x128xf32> to vector<8x128xf32>
    %137 = arith.addf %134, %136 : vector<8x128xf32>
    %c0_148 = arith.constant 0 : index
    %c0_149 = arith.constant 0 : index
    %138 = vector.load %arg17[%c0_148, %c0_149] : memref<8x128xf32, #tpu.memory_space<vmem>>, vector<8x128xf32>
    tpu.vector_store %arg17[%c0_148, %c0_149], %137 {strides = array<i32>} : memref<8x128xf32, #tpu.memory_space<vmem>>, vector<8x128xf32>,
    return
  }
  func.func @transform_0(%arg0: i32) -> (i32, i32) {
    %c0_i32 = arith.constant 0 : i32
    %c0_i32_0 = arith.constant 0 : i32
    return %arg0, %c0_i32 : i32, i32
  }
  func.func @transform_1(%arg0: i32) -> (i32, i32, i32) {
    %c0_i32 = arith.constant 0 : i32
    %c0_i32_0 = arith.constant 0 : i32
    %c0_i32_1 = arith.constant 0 : i32
    %c0_i32_2 = arith.constant 0 : i32
    return %c0_i32, %c0_i32_0, %c0_i32_1 : i32, i32, i32
  }
  func.func @transform_2(%arg0: i32) -> (i32, i32) {
    %c0_i32 = arith.constant 0 : i32
    %c0_i32_0 = arith.constant 0 : i32
    %c0_i32_1 = arith.constant 0 : i32
    return %c0_i32, %c0_i32_0 : i32, i32
  }
  func.func @transform_3(%arg0: i32) -> (i32, i32, i32) {
    %c0_i32 = arith.constant 0 : i32
    %c0_i32_0 = arith.constant 0 : i32
    %c0_i32_1 = arith.constant 0 : i32
    %c0_i32_2 = arith.constant 0 : i32
    return %c0_i32, %c0_i32_0, %c0_i32_1 : i32, i32, i32
  }
  func.func @transform_4(%arg0: i32) -> (i32, i32) {
    %c0_i32 = arith.constant 0 : i32
    %c0_i32_0 = arith.constant 0 : i32
    %c0_i32_1 = arith.constant 0 : i32
    return %c0_i32, %c0_i32_0 : i32, i32
  }
  func.func @transform_5(%arg0: i32) -> (i32, i32, i32) {
    %c0_i32 = arith.constant 0 : i32
    %c0_i32_0 = arith.constant 0 : i32
    %c0_i32_1 = arith.constant 0 : i32
    %c0_i32_2 = arith.constant 0 : i32
    return %c0_i32, %c0_i32_0, %c0_i32_1 : i32, i32, i32
  }
  func.func @transform_6(%arg0: i32) -> (i32, i32, i32) {
    %c0_i32 = arith.constant 0 : i32
    %c0_i32_0 = arith.constant 0 : i32
    %c0_i32_1 = arith.constant 0 : i32
    %c0_i32_2 = arith.constant 0 : i32
    return %c0_i32, %c0_i32_0, %c0_i32_1 : i32, i32, i32
  }
  func.func @transform_7(%arg0: i32) -> (i32, i32, i32) {
    %c0_i32 = arith.constant 0 : i32
    %c0_i32_0 = arith.constant 0 : i32
    %c0_i32_1 = arith.constant 0 : i32
    %c0_i32_2 = arith.constant 0 : i32
    return %c0_i32, %c0_i32_0, %c0_i32_1 : i32, i32, i32
  }
  func.func @transform_8(%arg0: i32) -> (i32, i32, i32) {
    %c0_i32 = arith.constant 0 : i32
    %c0_i32_0 = arith.constant 0 : i32
    %c0_i32_1 = arith.constant 0 : i32
    %c0_i32_2 = arith.constant 0 : i32
    return %c0_i32, %c0_i32_0, %c0_i32_1 : i32, i32, i32
  }
  func.func @transform_9(%arg0: i32) -> (i32, i32, i32) {
    %c0_i32 = arith.constant 0 : i32
    %c0_i32_0 = arith.constant 0 : i32
    %c0_i32_1 = arith.constant 0 : i32
    %c0_i32_2 = arith.constant 0 : i32
    return %c0_i32, %c0_i32_0, %c0_i32_1 : i32, i32, i32
  }
  func.func @transform_10(%arg0: i32) -> (i32, i32, i32) {
    %c0_i32 = arith.constant 0 : i32
    %c0_i32_0 = arith.constant 0 : i32
    %c0_i32_1 = arith.constant 0 : i32
    %c0_i32_2 = arith.constant 0 : i32
    return %c0_i32, %c0_i32_0, %c0_i32_1 : i32, i32, i32
  }
  func.func @transform_11(%arg0: i32) -> (i32, i32) {
    %c0_i32 = arith.constant 0 : i32
    %c0_i32_0 = arith.constant 0 : i32
    %c0_i32_1 = arith.constant 0 : i32
    return %c0_i32, %c0_i32_0 : i32, i32
  }
  func.func @transform_12(%arg0: i32) -> (i32, i32) {
    %c0_i32 = arith.constant 0 : i32
    %c0_i32_0 = arith.constant 0 : i32
    %c0_i32_1 = arith.constant 0 : i32
    return %c0_i32, %c0_i32_0 : i32, i32
  }
  func.func @transform_13(%arg0: i32) -> (i32, i32) {
    %c0_i32 = arith.constant 0 : i32
    %c0_i32_0 = arith.constant 0 : i32
    %c0_i32_1 = arith.constant 0 : i32
    return %c0_i32, %c0_i32_0 : i32, i32
  }
  func.func @transform_14(%arg0: i32) -> (i32, i32) {
    %c0_i32 = arith.constant 0 : i32
    %c0_i32_0 = arith.constant 0 : i32
    %c0_i32_1 = arith.constant 0 : i32
    return %c0_i32, %c0_i32_0 : i32, i32
  }
  func.func @transform_15(%arg0: i32) -> (i32, i32) {
    %c0_i32 = arith.constant 0 : i32
    %c0_i32_0 = arith.constant 0 : i32
    %c0_i32_1 = arith.constant 0 : i32
    return %c0_i32, %c0_i32_0 : i32, i32
  }
  func.func @transform_16(%arg0: i32) -> (i32, i32) {
    %c0_i32 = arith.constant 0 : i32
    %c0_i32_0 = arith.constant 0 : i32
    return %arg0, %c0_i32 : i32, i32
  }
}

</mosaic_0001>

<llo_original>
// kernel: _fused_logits.1
$region0: #{_fused_logits.1}
  #allocation0 [shape = 'u32[]', space=smem, size = 0x4, offset = 0x4, fixed_abs, tag = 'smem constant byte address 0x4 - core index']
  #allocation1 [shape = 'u32[144,128]{1,0:T(1,128)}', space=vmem, size = 0x12000, scoped, tag = 'internal scratch']
  #allocation2 [shape = 'f32[128,84]{1,0:T(8,128)}', space=vmem, size = 0x10000, scoped, tag = 'scratch operand']
  %s0 = inlined_call_operand.vmem [shape: f32[512,96], index: 0, kind: input, shape index: {}]
  %s1 = inlined_call_operand.vmem [shape: f32[5,96,168], index: 1, kind: input, shape index: {}]
  %s2 = inlined_call_operand.vmem [shape: f32[1,168], index: 2, kind: input, shape index: {}]
  %s3 = inlined_call_operand.vmem [shape: f32[5,84,160], index: 3, kind: input, shape index: {}]
  %s4 = inlined_call_operand.vmem [shape: f32[1,160], index: 4, kind: input, shape index: {}]
  %s5 = inlined_call_operand.vmem [shape: f32[2,128,252], index: 5, kind: input, shape index: {}]
  %s6 = inlined_call_operand.vmem [shape: f32[2,168,84], index: 6, kind: input, shape index: {}]
  %s7 = inlined_call_operand.vmem [shape: f32[2,64,124], index: 7, kind: input, shape index: {}]
  %s8 = inlined_call_operand.vmem [shape: f32[2,160,80], index: 8, kind: input, shape index: {}]
  %s9 = inlined_call_operand.vmem [shape: f32[5,8,64], index: 9, kind: input, shape index: {}]
  %s10 = inlined_call_operand.vmem [shape: f32[5,80,256], index: 10, kind: input, shape index: {}]
  %s11 = inlined_call_operand.vmem [shape: f32[1,256], index: 11, kind: input, shape index: {}]
  %s12 = inlined_call_operand.vmem [shape: f32[256,128], index: 12, kind: input, shape index: {}]
  %s13 = inlined_call_operand.vmem [shape: f32[1,128], index: 13, kind: input, shape index: {}]
  %s14 = inlined_call_operand.vmem [shape: f32[128,128], index: 14, kind: input, shape index: {}]
  %s15 = inlined_call_operand.vmem [shape: f32[1,128], index: 15, kind: input, shape index: {}]
  %s16 = inlined_call_operand.hbm [shape: f32[16,128], index: 16, kind: output, shape index: {}]
  %s17 = sld [smem:[#allocation0]]
  $region97: #{_fused_logits.1} parent=0
    _
  %s19 = ssub.s32 1, %s17
  %s20 = scalar_select 0, %s19, %s17
  $region1: #{_fused_logits.1} parent=0
    #allocation3 [shape = 'u8[8192]{0}', space=vmem, size = 0x2000, scoped, tag = 'output window, operand 0']
    #allocation4 [shape = 's32[2]{0}', space=sflag, size = 0x8, scoped, tag = 'scoped memory for _fused_logits.1']
    %21 = vsyncpa [#allocation4], 0
    %s22 = scalar_lea.sflag [#allocation4], 1
    %23 = vsyncpa %s22, 0
    loop: start=0, step=1, limit=4
    $region2: #{_fused_logits.1} parent=1 // loop_pre_header
      _
    $region3: #{_fused_logits.1} parent=1 // loop_header
      %s25 = sphi 0, %s29
      %p26 = scmp.ge.s32.totalorder %s25, 4
      %s35 = sphi 0, %s37
      %s38 = sphi 0, %s35
      %s39 = sphi 0, %s38
      %s55 = sphi 0, %s39
      %s59 = sphi 0, %s59
      %s61 = sphi 0, %s59
      %s62 = sphi 0, %s61
      %s76 = sphi 0, %s62
      %s80 = sphi 0, %s80
      %s82 = sphi 0, %s80
      %s83 = sphi 0, %s82
      %s97 = sphi 0, %s83
      %s101 = sphi 0, %s101
      %s103 = sphi 0, %s101
      %s104 = sphi 0, %s103
      %s118 = sphi 0, %s104
      %s122 = sphi 0, %s122
      %s124 = sphi 0, %s122
      %s125 = sphi 0, %s124
      %s139 = sphi 0, %s125
      %s143 = sphi 0, %s143
      %s145 = sphi 0, %s143
      %s146 = sphi 0, %s145
      %s160 = sphi 0, %s146
      %s164 = sphi 0, %s164
      %s166 = sphi 0, %s164
      %s167 = sphi 0, %s166
      %s181 = sphi 0, %s167
      %s185 = sphi 0, %s185
      %s187 = sphi 0, %s185
      %s188 = sphi 0, %s187
      %s202 = sphi 0, %s188
      %s206 = sphi 0, %s206
      %s208 = sphi 0, %s206
      %s209 = sphi 0, %s208
      %s223 = sphi 0, %s209
      %s227 = sphi 0, %s227
      %s229 = sphi 0, %s227
      %s230 = sphi 0, %s229
      %s244 = sphi 0, %s230
      %s248 = sphi 0, %s248
      %s250 = sphi 0, %s248
      %s251 = sphi 0, %s250
      %s265 = sphi 0, %s251
      %s269 = sphi 0, %s269
      %s271 = sphi 0, %s269
      %s272 = sphi 0, %s271
      %s286 = sphi 0, %s272
      %s290 = sphi 0, %s290
      %s292 = sphi 0, %s290
      %s293 = sphi 0, %s292
      %s307 = sphi 0, %s293
      %s311 = sphi 0, %s311
      %s313 = sphi 0, %s311
      %s314 = sphi 0, %s313
      %s328 = sphi 0, %s314
      %s332 = sphi 0, %s332
      %s334 = sphi 0, %s332
      %s335 = sphi 0, %s334
      %s349 = sphi 0, %s335
      %s353 = sphi 0, %s353
      %s355 = sphi 0, %s353
      %s356 = sphi 0, %s355
      %s370 = sphi 0, %s356
      %s376 = sphi 0, %s378
      %s379 = sphi 0, %s376
      %s380 = sphi 0, %s379
      %s396 = sphi 0, %s380
    $region4: #{_fused_logits.1} parent=1 // loop_header_branch
      %28 = sbr.rel (%p26) target = $region8
    $region5: #{_fused_logits.1} parent=1 // loop_body
      %s30 = ssub.s32 %s25, 1
      %s31 = ssub.s32 %s25, 2
      %s32 = sadd.s32 %s25, 1
      %s33 = ssub.s32 %s25, %s32
      %p34 = scmp.eq.s32.totalorder %s33, 0
      %s36 = sadd.s32 %s35, 1
      %s37 = scalar_select %p34, %s35, %s36
      %p40 = pneg %p34
      %p41 = scmp.eq.s32.totalorder %s25, 1
      %p42 = por %p40, %p41
      %p43 = scmp.ne.s32.totalorder %s35, %s38
      %p44 = scmp.eq.s32.totalorder %s25, 0
      %p45 = por %p43, %p44
      %p46 = scmp.ne.s32.totalorder %s35, %s38
      %p47 = scmp.eq.s32.totalorder %s30, 1
      %p48 = por %p46, %p47
      %p49 = scmp.ne.s32.totalorder %s38, %s39
      %p50 = scmp.eq.s32.totalorder %s30, 0
      %p51 = por %p49, %p50
      %p52 = scmp.ne.s32.totalorder %s38, %s39
      %p53 = scmp.eq.s32.totalorder %s31, 1
      %p54 = por %p52, %p53
      %p56 = scmp.ne.s32.totalorder %s39, %s55
      %p57 = scmp.eq.s32.totalorder %s31, 0
      %p58 = por %p56, %p57
      %s60 = sadd.s32 %s59, 1
      %p63 = scmp.eq.s32.totalorder %s25, 1
      %p64 = scmp.ne.s32.totalorder %s59, %s61
      %p65 = scmp.eq.s32.totalorder %s25, 0
      %p66 = por %p64, %p65
      %p67 = scmp.ne.s32.totalorder %s59, %s61
      %p68 = scmp.eq.s32.totalorder %s30, 1
      %p69 = por %p67, %p68
      %p70 = scmp.ne.s32.totalorder %s61, %s62
      %p71 = scmp.eq.s32.totalorder %s30, 0
      %p72 = por %p70, %p71
      %p73 = scmp.ne.s32.totalorder %s61, %s62
      %p74 = scmp.eq.s32.totalorder %s31, 1
      %p75 = por %p73, %p74
      %p77 = scmp.ne.s32.totalorder %s62, %s76
      %p78 = scmp.eq.s32.totalorder %s31, 0
      %p79 = por %p77, %p78
      %s81 = sadd.s32 %s80, 1
      %p84 = scmp.eq.s32.totalorder %s25, 1
      %p85 = scmp.ne.s32.totalorder %s80, %s82
      %p86 = scmp.eq.s32.totalorder %s25, 0
      %p87 = por %p85, %p86
      %p88 = scmp.ne.s32.totalorder %s80, %s82
      %p89 = scmp.eq.s32.totalorder %s30, 1
      %p90 = por %p88, %p89
      %p91 = scmp.ne.s32.totalorder %s82, %s83
      %p92 = scmp.eq.s32.totalorder %s30, 0
      %p93 = por %p91, %p92
      %p94 = scmp.ne.s32.totalorder %s82, %s83
      %p95 = scmp.eq.s32.totalorder %s31, 1
      %p96 = por %p94, %p95
      %p98 = scmp.ne.s32.totalorder %s83, %s97
      %p99 = scmp.eq.s32.totalorder %s31, 0
      %p100 = por %p98, %p99
      %s102 = sadd.s32 %s101, 1
      %p105 = scmp.eq.s32.totalorder %s25, 1
      %p106 = scmp.ne.s32.totalorder %s101, %s103
      %p107 = scmp.eq.s32.totalorder %s25, 0
      %p108 = por %p106, %p107
      %p109 = scmp.ne.s32.totalorder %s101, %s103
      %p110 = scmp.eq.s32.totalorder %s30, 1
      %p111 = por %p109, %p110
      %p112 = scmp.ne.s32.totalorder %s103, %s104
      %p113 = scmp.eq.s32.totalorder %s30, 0
      %p114 = por %p112, %p113
      %p115 = scmp.ne.s32.totalorder %s103, %s104
      %p116 = scmp.eq.s32.totalorder %s31, 1
      %p117 = por %p115, %p116
      %p119 = scmp.ne.s32.totalorder %s104, %s118
      %p120 = scmp.eq.s32.totalorder %s31, 0
      %p121 = por %p119, %p120
      %s123 = sadd.s32 %s122, 1
      %p126 = scmp.eq.s32.totalorder %s25, 1
      %p127 = scmp.ne.s32.totalorder %s122, %s124
      %p128 = scmp.eq.s32.totalorder %s25, 0
      %p129 = por %p127, %p128
      %p130 = scmp.ne.s32.totalorder %s122, %s124
      %p131 = scmp.eq.s32.totalorder %s30, 1
      %p132 = por %p130, %p131
      %p133 = scmp.ne.s32.totalorder %s124, %s125
      %p134 = scmp.eq.s32.totalorder %s30, 0
      %p135 = por %p133, %p134
      %p136 = scmp.ne.s32.totalorder %s124, %s125
      %p137 = scmp.eq.s32.totalorder %s31, 1
      %p138 = por %p136, %p137
      %p140 = scmp.ne.s32.totalorder %s125, %s139
      %p141 = scmp.eq.s32.totalorder %s31, 0
      %p142 = por %p140, %p141
      %s144 = sadd.s32 %s143, 1
      %p147 = scmp.eq.s32.totalorder %s25, 1
      %p148 = scmp.ne.s32.totalorder %s143, %s145
      %p149 = scmp.eq.s32.totalorder %s25, 0
      %p150 = por %p148, %p149
      %p151 = scmp.ne.s32.totalorder %s143, %s145
      %p152 = scmp.eq.s32.totalorder %s30, 1
      %p153 = por %p151, %p152
      %p154 = scmp.ne.s32.totalorder %s145, %s146
      %p155 = scmp.eq.s32.totalorder %s30, 0
      %p156 = por %p154, %p155
      %p157 = scmp.ne.s32.totalorder %s145, %s146
      %p158 = scmp.eq.s32.totalorder %s31, 1
      %p159 = por %p157, %p158
      %p161 = scmp.ne.s32.totalorder %s146, %s160
      %p162 = scmp.eq.s32.totalorder %s31, 0
      %p163 = por %p161, %p162
      %s165 = sadd.s32 %s164, 1
      %p168 = scmp.eq.s32.totalorder %s25, 1
      %p169 = scmp.ne.s32.totalorder %s164, %s166
      %p170 = scmp.eq.s32.totalorder %s25, 0
      %p171 = por %p169, %p170
      %p172 = scmp.ne.s32.totalorder %s164, %s166
      %p173 = scmp.eq.s32.totalorder %s30, 1
      %p174 = por %p172, %p173
      %p175 = scmp.ne.s32.totalorder %s166, %s167
      %p176 = scmp.eq.s32.totalorder %s30, 0
      %p177 = por %p175, %p176
      %p178 = scmp.ne.s32.totalorder %s166, %s167
      %p179 = scmp.eq.s32.totalorder %s31, 1
      %p180 = por %p178, %p179
      %p182 = scmp.ne.s32.totalorder %s167, %s181
      %p183 = scmp.eq.s32.totalorder %s31, 0
      %p184 = por %p182, %p183
      %s186 = sadd.s32 %s185, 1
      %p189 = scmp.eq.s32.totalorder %s25, 1
      %p190 = scmp.ne.s32.totalorder %s185, %s187
      %p191 = scmp.eq.s32.totalorder %s25, 0
      %p192 = por %p190, %p191
      %p193 = scmp.ne.s32.totalorder %s185, %s187
      %p194 = scmp.eq.s32.totalorder %s30, 1
      %p195 = por %p193, %p194
      %p196 = scmp.ne.s32.totalorder %s187, %s188
      %p197 = scmp.eq.s32.totalorder %s30, 0
      %p198 = por %p196, %p197
      %p199 = scmp.ne.s32.totalorder %s187, %s188
      %p200 = scmp.eq.s32.totalorder %s31, 1
      %p201 = por %p199, %p200
      %p203 = scmp.ne.s32.totalorder %s188, %s202
      %p204 = scmp.eq.s32.totalorder %s31, 0
      %p205 = por %p203, %p204
      %s207 = sadd.s32 %s206, 1
      %p210 = scmp.eq.s32.totalorder %s25, 1
      %p211 = scmp.ne.s32.totalorder %s206, %s208
      %p212 = scmp.eq.s32.totalorder %s25, 0
      %p213 = por %p211, %p212
      %p214 = scmp.ne.s32.totalorder %s206, %s208
      %p215 = scmp.eq.s32.totalorder %s30, 1
      %p216 = por %p214, %p215
      %p217 = scmp.ne.s32.totalorder %s208, %s209
      %p218 = scmp.eq.s32.totalorder %s30, 0
      %p219 = por %p217, %p218
      %p220 = scmp.ne.s32.totalorder %s208, %s209
      %p221 = scmp.eq.s32.totalorder %s31, 1
      %p222 = por %p220, %p221
      %p224 = scmp.ne.s32.totalorder %s209, %s223
      %p225 = scmp.eq.s32.totalorder %s31, 0
      %p226 = por %p224, %p225
      %s228 = sadd.s32 %s227, 1
      %p231 = scmp.eq.s32.totalorder %s25, 1
      %p232 = scmp.ne.s32.totalorder %s227, %s229
      %p233 = scmp.eq.s32.totalorder %s25, 0
      %p234 = por %p232, %p233
      %p235 = scmp.ne.s32.totalorder %s227, %s229
      %p236 = scmp.eq.s32.totalorder %s30, 1
      %p237 = por %p235, %p236
      %p238 = scmp.ne.s32.totalorder %s229, %s230
      %p239 = scmp.eq.s32.totalorder %s30, 0
      %p240 = por %p238, %p239
      %p241 = scmp.ne.s32.totalorder %s229, %s230
      %p242 = scmp.eq.s32.totalorder %s31, 1
      %p243 = por %p241, %p242
      %p245 = scmp.ne.s32.totalorder %s230, %s244
      %p246 = scmp.eq.s32.totalorder %s31, 0
      %p247 = por %p245, %p246
      %s249 = sadd.s32 %s248, 1
      %p252 = scmp.eq.s32.totalorder %s25, 1
      %p253 = scmp.ne.s32.totalorder %s248, %s250
      %p254 = scmp.eq.s32.totalorder %s25, 0
      %p255 = por %p253, %p254
      %p256 = scmp.ne.s32.totalorder %s248, %s250
      %p257 = scmp.eq.s32.totalorder %s30, 1
      %p258 = por %p256, %p257
      %p259 = scmp.ne.s32.totalorder %s250, %s251
      %p260 = scmp.eq.s32.totalorder %s30, 0
      %p261 = por %p259, %p260
      %p262 = scmp.ne.s32.totalorder %s250, %s251
      %p263 = scmp.eq.s32.totalorder %s31, 1
      %p264 = por %p262, %p263
      %p266 = scmp.ne.s32.totalorder %s251, %s265
      %p267 = scmp.eq.s32.totalorder %s31, 0
      %p268 = por %p266, %p267
      %s270 = sadd.s32 %s269, 1
      %p273 = scmp.eq.s32.totalorder %s25, 1
      %p274 = scmp.ne.s32.totalorder %s269, %s271
      %p275 = scmp.eq.s32.totalorder %s25, 0
      %p276 = por %p274, %p275
      %p277 = scmp.ne.s32.totalorder %s269, %s271
      %p278 = scmp.eq.s32.totalorder %s30, 1
      %p279 = por %p277, %p278
      %p280 = scmp.ne.s32.totalorder %s271, %s272
      %p281 = scmp.eq.s32.totalorder %s30, 0
      %p282 = por %p280, %p281
      %p283 = scmp.ne.s32.totalorder %s271, %s272
      %p284 = scmp.eq.s32.totalorder %s31, 1
      %p285 = por %p283, %p284
      %p287 = scmp.ne.s32.totalorder %s272, %s286
      %p288 = scmp.eq.s32.totalorder %s31, 0
      %p289 = por %p287, %p288
      %s291 = sadd.s32 %s290, 1
      %p294 = scmp.eq.s32.totalorder %s25, 1
      %p295 = scmp.ne.s32.totalorder %s290, %s292
      %p296 = scmp.eq.s32.totalorder %s25, 0
      %p297 = por %p295, %p296
      %p298 = scmp.ne.s32.totalorder %s290, %s292
      %p299 = scmp.eq.s32.totalorder %s30, 1
      %p300 = por %p298, %p299
      %p301 = scmp.ne.s32.totalorder %s292, %s293
      %p302 = scmp.eq.s32.totalorder %s30, 0
      %p303 = por %p301, %p302
      %p304 = scmp.ne.s32.totalorder %s292, %s293
      %p305 = scmp.eq.s32.totalorder %s31, 1
      %p306 = por %p304, %p305
      %p308 = scmp.ne.s32.totalorder %s293, %s307
      %p309 = scmp.eq.s32.totalorder %s31, 0
      %p310 = por %p308, %p309
      %s312 = sadd.s32 %s311, 1
      %p315 = scmp.eq.s32.totalorder %s25, 1
      %p316 = scmp.ne.s32.totalorder %s311, %s313
      %p317 = scmp.eq.s32.totalorder %s25, 0
      %p318 = por %p316, %p317
      %p319 = scmp.ne.s32.totalorder %s311, %s313
      %p320 = scmp.eq.s32.totalorder %s30, 1
      %p321 = por %p319, %p320
      %p322 = scmp.ne.s32.totalorder %s313, %s314
      %p323 = scmp.eq.s32.totalorder %s30, 0
      %p324 = por %p322, %p323
      %p325 = scmp.ne.s32.totalorder %s313, %s314
      %p326 = scmp.eq.s32.totalorder %s31, 1
      %p327 = por %p325, %p326
      %p329 = scmp.ne.s32.totalorder %s314, %s328
      %p330 = scmp.eq.s32.totalorder %s31, 0
      %p331 = por %p329, %p330
      %s333 = sadd.s32 %s332, 1
      %p336 = scmp.eq.s32.totalorder %s25, 1
      %p337 = scmp.ne.s32.totalorder %s332, %s334
      %p338 = scmp.eq.s32.totalorder %s25, 0
      %p339 = por %p337, %p338
      %p340 = scmp.ne.s32.totalorder %s332, %s334
      %p341 = scmp.eq.s32.totalorder %s30, 1
      %p342 = por %p340, %p341
      %p343 = scmp.ne.s32.totalorder %s334, %s335
      %p344 = scmp.eq.s32.totalorder %s30, 0
      %p345 = por %p343, %p344
      %p346 = scmp.ne.s32.totalorder %s334, %s335
      %p347 = scmp.eq.s32.totalorder %s31, 1
      %p348 = por %p346, %p347
      %p350 = scmp.ne.s32.totalorder %s335, %s349
      %p351 = scmp.eq.s32.totalorder %s31, 0
      %p352 = por %p350, %p351
      %s354 = sadd.s32 %s353, 1
      %p357 = scmp.eq.s32.totalorder %s25, 1
      %p358 = scmp.ne.s32.totalorder %s353, %s355
      %p359 = scmp.eq.s32.totalorder %s25, 0
      %p360 = por %p358, %p359
      %p361 = scmp.ne.s32.totalorder %s353, %s355
      %p362 = scmp.eq.s32.totalorder %s30, 1
      %p363 = por %p361, %p362
      %p364 = scmp.ne.s32.totalorder %s355, %s356
      %p365 = scmp.eq.s32.totalorder %s30, 0
      %p366 = por %p364, %p365
      %p367 = scmp.ne.s32.totalorder %s355, %s356
      %p368 = scmp.eq.s32.totalorder %s31, 1
      %p369 = por %p367, %p368
      %p371 = scmp.ne.s32.totalorder %s356, %s370
      %p372 = scmp.eq.s32.totalorder %s31, 0
      %p373 = por %p371, %p372
      %s374 = ssub.s32 %s25, %s32
      %p375 = scmp.eq.s32.totalorder %s374, 0
      %s377 = sadd.s32 %s376, 1
      %s378 = scalar_select %p375, %s376, %s377
      %p381 = pneg %p375
      %p382 = scmp.eq.s32.totalorder %s25, 1
      %p383 = por %p381, %p382
      %p384 = scmp.ne.s32.totalorder %s376, %s379
      %p385 = scmp.eq.s32.totalorder %s25, 0
      %p386 = por %p384, %p385
      %p387 = scmp.ne.s32.totalorder %s376, %s379
      %p388 = scmp.eq.s32.totalorder %s30, 1
      %p389 = por %p387, %p388
      %p390 = scmp.ne.s32.totalorder %s379, %s380
      %p391 = scmp.eq.s32.totalorder %s30, 0
      %p392 = por %p390, %p391
      %p393 = scmp.ne.s32.totalorder %s379, %s380
      %p394 = scmp.eq.s32.totalorder %s31, 1
      %p395 = por %p393, %p394
      %p397 = scmp.ne.s32.totalorder %s380, %s396
      %p398 = scmp.eq.s32.totalorder %s31, 0
      %p399 = por %p397, %p398
      %p400 = scmp.le.s32.totalorder 1, %s25
      %p401 = scmp.lt.s32.totalorder %s25, 3
      %p402 = pnand %p400, %p401
      %p403 = pneg %p402
      // Predicated region
      $region9: #{_fused_logits.1} parent=5 // pred_check
        _
      $region10: #{_fused_logits.1} parent=5 // pred_check_branch
        %405 = sbr.rel (%p402) target = $region12
      $region11: #{_fused_logits.1} parent=5 // pred_region
        %s406 = ssub.s32 %s25, 1
        // Predicated region
        $region13: #{_fused_logits.1} parent=11 // pred_check
          %p407 = pneg %p72
        $region14: #{_fused_logits.1} parent=11 // pred_check_branch
          %409 = sbr.rel (%p407) target = $region16
        $region15: #{_fused_logits.1} parent=11 // pred_region
          _
        $region16: #{_fused_logits.1} parent=11 // pred_fallthru
          _
        // Predicated region
        $region17: #{_fused_logits.1} parent=11 // pred_check
          %p410 = pneg %p93
        $region18: #{_fused_logits.1} parent=11 // pred_check_branch
          %412 = sbr.rel (%p410) target = $region20
        $region19: #{_fused_logits.1} parent=11 // pred_region
          _
        $region20: #{_fused_logits.1} parent=11 // pred_fallthru
          _
        // Predicated region
        $region21: #{_fused_logits.1} parent=11 // pred_check
          %p413 = pneg %p114
        $region22: #{_fused_logits.1} parent=11 // pred_check_branch
          %415 = sbr.rel (%p413) target = $region24
        $region23: #{_fused_logits.1} parent=11 // pred_region
          _
        $region24: #{_fused_logits.1} parent=11 // pred_fallthru
          _
        // Predicated region
        $region25: #{_fused_logits.1} parent=11 // pred_check
          %p416 = pneg %p135
        $region26: #{_fused_logits.1} parent=11 // pred_check_branch
          %418 = sbr.rel (%p416) target = $region28
        $region27: #{_fused_logits.1} parent=11 // pred_region
          _
        $region28: #{_fused_logits.1} parent=11 // pred_fallthru
          _
        // Predicated region
        $region29: #{_fused_logits.1} parent=11 // pred_check
          %p419 = pneg %p156
        $region30: #{_fused_logits.1} parent=11 // pred_check_branch
          %421 = sbr.rel (%p419) target = $region32
        $region31: #{_fused_logits.1} parent=11 // pred_region
          _
        $region32: #{_fused_logits.1} parent=11 // pred_fallthru
          _
        // Predicated region
        $region33: #{_fused_logits.1} parent=11 // pred_check
          %p422 = pneg %p177
        $region34: #{_fused_logits.1} parent=11 // pred_check_branch
          %424 = sbr.rel (%p422) target = $region36
        $region35: #{_fused_logits.1} parent=11 // pred_region
          _
        $region36: #{_fused_logits.1} parent=11 // pred_fallthru
          _
        // Predicated region
        $region37: #{_fused_logits.1} parent=11 // pred_check
          %p425 = pneg %p198
        $region38: #{_fused_logits.1} parent=11 // pred_check_branch
          %427 = sbr.rel (%p425) target = $region40
        $region39: #{_fused_logits.1} parent=11 // pred_region
          _
        $region40: #{_fused_logits.1} parent=11 // pred_fallthru
          _
        // Predicated region
        $region41: #{_fused_logits.1} parent=11 // pred_check
          %p428 = pneg %p219
        $region42: #{_fused_logits.1} parent=11 // pred_check_branch
          %430 = sbr.rel (%p428) target = $region44
        $region43: #{_fused_logits.1} parent=11 // pred_region
          _
        $region44: #{_fused_logits.1} parent=11 // pred_fallthru
          _
        // Predicated region
        $region45: #{_fused_logits.1} parent=11 // pred_check
          %p431 = pneg %p240
        $region46: #{_fused_logits.1} parent=11 // pred_check_branch
          %433 = sbr.rel (%p431) target = $region48
        $region47: #{_fused_logits.1} parent=11 // pred_region
          _
        $region48: #{_fused_logits.1} parent=11 // pred_fallthru
          _
        // Predicated region
        $region49: #{_fused_logits.1} parent=11 // pred_check
          %p434 = pneg %p261
        $region50: #{_fused_logits.1} parent=11 // pred_check_branch
          %436 = sbr.rel (%p434) target = $region52
        $region51: #{_fused_logits.1} parent=11 // pred_region
          _
        $region52: #{_fused_logits.1} parent=11 // pred_fallthru
          _
        // Predicated region
        $region53: #{_fused_logits.1} parent=11 // pred_check
          %p437 = pneg %p282
        $region54: #{_fused_logits.1} parent=11 // pred_check_branch
          %439 = sbr.rel (%p437) target = $region56
        $region55: #{_fused_logits.1} parent=11 // pred_region
          _
        $region56: #{_fused_logits.1} parent=11 // pred_fallthru
          _
        // Predicated region
        $region57: #{_fused_logits.1} parent=11 // pred_check
          %p440 = pneg %p303
        $region58: #{_fused_logits.1} parent=11 // pred_check_branch
          %442 = sbr.rel (%p440) target = $region60
        $region59: #{_fused_logits.1} parent=11 // pred_region
          _
        $region60: #{_fused_logits.1} parent=11 // pred_fallthru
          _
        // Predicated region
        $region61: #{_fused_logits.1} parent=11 // pred_check
          %p443 = pneg %p324
        $region62: #{_fused_logits.1} parent=11 // pred_check_branch
          %445 = sbr.rel (%p443) target = $region64
        $region63: #{_fused_logits.1} parent=11 // pred_region
          _
        $region64: #{_fused_logits.1} parent=11 // pred_fallthru
          _
        // Predicated region
        $region65: #{_fused_logits.1} parent=11 // pred_check
          %p446 = pneg %p345
        $region66: #{_fused_logits.1} parent=11 // pred_check_branch
          %448 = sbr.rel (%p446) target = $region68
        $region67: #{_fused_logits.1} parent=11 // pred_region
          _
        $region68: #{_fused_logits.1} parent=11 // pred_fallthru
          _
        // Predicated region
        $region69: #{_fused_logits.1} parent=11 // pred_check
          %p449 = pneg %p366
        $region70: #{_fused_logits.1} parent=11 // pred_check_branch
          %451 = sbr.rel (%p449) target = $region72
        $region71: #{_fused_logits.1} parent=11 // pred_region
          _
        $region72: #{_fused_logits.1} parent=11 // pred_fallthru
          _
      $region12: #{_fused_logits.1} parent=5 // pred_fallthru
        _
      %p452 = scmp.lt.s32.totalorder %s25, 2
      // Predicated region
      $region73: #{_fused_logits.1} parent=5 // pred_check
        %p453 = pneg %p452
      $region74: #{_fused_logits.1} parent=5 // pred_check_branch
        %455 = sbr.rel (%p453) target = $region76
      $region75: #{_fused_logits.1} parent=5 // pred_region
        // Predicated region
        $region77: #{_fused_logits.1} parent=75 // pred_check
          %p456 = pneg %p45
        $region78: #{_fused_logits.1} parent=75 // pred_check_branch
          %458 = sbr.rel (%p456) target = $region80
        $region79: #{_fused_logits.1} parent=75 // pred_region
          %s459 = smul.u32 32, %s25
          %p460 = scmp.lt.s32.totalorder %s459, 63
          %s461 = scalar_select %p460, %s459, 63
          %s462 = smul.addr %s461, 8
          %s463 = scalar_lea.vmem %s0, %s462
          %s464 = smul.u32 32, %s25
        $region80: #{_fused_logits.1} parent=75 // pred_fallthru
          _
      $region76: #{_fused_logits.1} parent=5 // pred_fallthru
        _
      %p465 = scmp.le.s32.totalorder 1, %s25
      %p466 = scmp.lt.s32.totalorder %s25, 3
      %p467 = pnand %p465, %p466
      %p468 = pneg %p467
      // Predicated region
      $region81: #{_fused_logits.1} parent=5 // pred_check
        _
      $region82: #{_fused_logits.1} parent=5 // pred_check_branch
        %470 = sbr.rel (%p467) target = $region84
      $region83: #{_fused_logits.1} parent=5 // pred_region
        %s471 = ssub.s32 %s25, 1
        %s472 = smul.u32 32, %s30
        %p473 = scmp.lt.s32.totalorder %s472, 63
        %s474 = scalar_select %p473, %s472, 63
        %s475 = smul.addr %s474, 8
        %s476 = scalar_lea.vmem %s0, %s475
        %p477 = pneg %p51
        %p478 = pneg %p48
        %p479 = pneg %p72
        %p480 = pneg %p69
        %p481 = pneg %p93
        %p482 = pneg %p90
        %p483 = pneg %p114
        %p484 = pneg %p111
        %p485 = pneg %p135
        %p486 = pneg %p132
        %p487 = pneg %p156
        %p488 = pneg %p153
        %p489 = pneg %p177
        %p490 = pneg %p174
        %p491 = pneg %p198
        %p492 = pneg %p195
        %p493 = pneg %p219
        %p494 = pneg %p216
        %p495 = pneg %p240
        %p496 = pneg %p237
        %p497 = pneg %p261
        %p498 = pneg %p258
        %p499 = pneg %p282
        %p500 = pneg %p279
        %p501 = pneg %p303
        %p502 = pneg %p300
        %p503 = pneg %p324
        %p504 = pneg %p321
        %p505 = pneg %p345
        %p506 = pneg %p342
        %p507 = pneg %p366
        %p508 = pneg %p363
        %p509 = pneg %p392
        %p510 = pneg %p389
        %s511 = sand.u32 %s379, 1
        %s512 = scalar_lea.sflag [#allocation4], %s511
        %s513 = sand.u32 %s379, 1
        %s514 = smul.addr %s513, 8
        %s515 = scalar_lea.vmem [#allocation3], %s514
        %s516 = smul.u32 32, %s30
        %p517 = scmp.lt.s32.totalorder %s516, 63
        %s518 = scalar_select %p517, %s516, 63
        %s519 = smul.addr %s518, 8
        %s520 = scalar_lea.vmem %s0, %s519
        %s521 = smul.u32 32, %s30
        %v522 = vld [vmem:[%s520] sm:$0xff]
        %v523 = vld [vmem:[%s520 + $0x8] sm:$0xff]
        %v524 = vld [vmem:[%s520 + $0x10] sm:$0xff]
        %v525 = vld [vmem:[%s520 + $0x18] sm:$0xff]
        %v526 = vld [vmem:[%s520 + $0x20] sm:$0xff]
        %v527 = vld [vmem:[%s520 + $0x28] sm:$0xff]
        %v528 = vld [vmem:[%s520 + $0x30] sm:$0xff]
        %v529 = vld [vmem:[%s520 + $0x38] sm:$0xff]
        %v530 = vld [vmem:[%s520 + $0x40] sm:$0xff]
        %v531 = vld [vmem:[%s520 + $0x48] sm:$0xff]
        %v532 = vld [vmem:[%s520 + $0x50] sm:$0xff]
        %v533 = vld [vmem:[%s520 + $0x58] sm:$0xff]
        %v534 = vld [vmem:[%s520 + $0x60] sm:$0xff]
        %v535 = vld [vmem:[%s520 + $0x68] sm:$0xff]
        %v536 = vld [vmem:[%s520 + $0x70] sm:$0xff]
        %v537 = vld [vmem:[%s520 + $0x78] sm:$0xff]
        %v538 = vld [vmem:[%s520 + $0x80] sm:$0xff]
        %v539 = vld [vmem:[%s520 + $0x88] sm:$0xff]
        %v540 = vld [vmem:[%s520 + $0x90] sm:$0xff]
        %v541 = vld [vmem:[%s520 + $0x98] sm:$0xff]
        %v542 = vld [vmem:[%s520 + $0xa0] sm:$0xff]
        %v543 = vld [vmem:[%s520 + $0xa8] sm:$0xff]
        %v544 = vld [vmem:[%s520 + $0xb0] sm:$0xff]
        %v545 = vld [vmem:[%s520 + $0xb8] sm:$0xff]
        %v546 = vld [vmem:[%s520 + $0xc0] sm:$0xff]
        %v547 = vld [vmem:[%s520 + $0xc8] sm:$0xff]
        %v548 = vld [vmem:[%s520 + $0xd0] sm:$0xff]
        %v549 = vld [vmem:[%s520 + $0xd8] sm:$0xff]
        %v550 = vld [vmem:[%s520 + $0xe0] sm:$0xff]
        %v551 = vld [vmem:[%s520 + $0xe8] sm:$0xff]
        %v552 = vld [vmem:[%s520 + $0xf0] sm:$0xff]
        %v553 = vld [vmem:[%s520 + $0xf8] sm:$0xf]
        %v554 = vld [vmem:[%s1] sm:$0xff]
        %v555 = vld [vmem:[%s1 + $0x8] sm:$0xff]
        %v556 = vld [vmem:[%s1 + $0x10] sm:$0xff]
        %v557 = vld [vmem:[%s1 + $0x18] sm:$0xff]
        %v558 = vld [vmem:[%s1 + $0x20] sm:$0xff]
        %v559 = vld [vmem:[%s1 + $0x28] sm:$0xff]
        %v560 = vld [vmem:[%s1 + $0x30] sm:$0xff]
        %v561 = vld [vmem:[%s1 + $0x38] sm:$0xff]
        %v562 = vld [vmem:[%s1 + $0x40] sm:$0xff]
        %v563 = vld [vmem:[%s1 + $0x48] sm:$0xff]
        %v564 = vld [vmem:[%s1 + $0x50] sm:$0xff]
        %v565 = vld [vmem:[%s1 + $0x58] sm:$0xff]
        %v566 = vld [vmem:[%s1 + $0x60] sm:$0xff]
        %v567 = vld [vmem:[%s1 + $0x68] sm:$0xff]
        %v568 = vld [vmem:[%s1 + $0x70] sm:$0xff]
        %v569 = vld [vmem:[%s1 + $0x78] sm:$0xff]
        %v570 = vld [vmem:[%s1 + $0x80] sm:$0xff]
        %v571 = vld [vmem:[%s1 + $0x88] sm:$0xff]
        %v572 = vld [vmem:[%s1 + $0x90] sm:$0xff]
        %v573 = vld [vmem:[%s1 + $0x98] sm:$0xff]
        %v574 = vld [vmem:[%s1 + $0xa0] sm:$0xff]
        %v575 = vld [vmem:[%s1 + $0xa8] sm:$0xff]
        %v576 = vld [vmem:[%s1 + $0xb0] sm:$0xff]
        %v577 = vld [vmem:[%s1 + $0xb8] sm:$0xff]
        %v578 = vld [vmem:[%s520 + $0x1] sm:$0xff]
        %v579 = vld [vmem:[%s520 + $0x9] sm:$0xff]
        %v580 = vld [vmem:[%s520 + $0x11] sm:$0xff]
        %v581 = vld [vmem:[%s520 + $0x19] sm:$0xff]
        %v582 = vld [vmem:[%s520 + $0x21] sm:$0xff]
        %v583 = vld [vmem:[%s520 + $0x29] sm:$0xff]
        %v584 = vld [vmem:[%s520 + $0x31] sm:$0xff]
        %v585 = vld [vmem:[%s520 + $0x39] sm:$0xff]
        %v586 = vld [vmem:[%s520 + $0x41] sm:$0xff]
        %v587 = vld [vmem:[%s520 + $0x49] sm:$0xff]
        %v588 = vld [vmem:[%s520 + $0x51] sm:$0xff]
        %v589 = vld [vmem:[%s520 + $0x59] sm:$0xff]
        %v590 = vld [vmem:[%s520 + $0x61] sm:$0xff]
        %v591 = vld [vmem:[%s520 + $0x69] sm:$0xff]
        %v592 = vld [vmem:[%s520 + $0x71] sm:$0xff]
        %v593 = vld [vmem:[%s520 + $0x79] sm:$0xff]
        %v594 = vld [vmem:[%s520 + $0x81] sm:$0xff]
        %v595 = vld [vmem:[%s520 + $0x89] sm:$0xff]
        %v596 = vld [vmem:[%s520 + $0x91] sm:$0xff]
        %v597 = vld [vmem:[%s520 + $0x99] sm:$0xff]
        %v598 = vld [vmem:[%s520 + $0xa1] sm:$0xff]
        %v599 = vld [vmem:[%s520 + $0xa9] sm:$0xff]
        %v600 = vld [vmem:[%s520 + $0xb1] sm:$0xff]
        %v601 = vld [vmem:[%s520 + $0xb9] sm:$0xff]
        %v602 = vld [vmem:[%s520 + $0xc1] sm:$0xff]
        %v603 = vld [vmem:[%s520 + $0xc9] sm:$0xff]
        %v604 = vld [vmem:[%s520 + $0xd1] sm:$0xff]
        %v605 = vld [vmem:[%s520 + $0xd9] sm:$0xff]
        %v606 = vld [vmem:[%s520 + $0xe1] sm:$0xff]
        %v607 = vld [vmem:[%s520 + $0xe9] sm:$0xff]
        %v608 = vld [vmem:[%s520 + $0xf1] sm:$0xff]
        %v609 = vld [vmem:[%s520 + $0xf9] sm:$0xf]
        %s610 = scalar_lea.vmem %s1, 192
        %v611 = vld [vmem:[%s610] sm:$0xff]
        %v612 = vld [vmem:[%s610 + $0x8] sm:$0xff]
        %v613 = vld [vmem:[%s610 + $0x10] sm:$0xff]
        %v614 = vld [vmem:[%s610 + $0x18] sm:$0xff]
        %v615 = vld [vmem:[%s610 + $0x20] sm:$0xff]
        %v616 = vld [vmem:[%s610 + $0x28] sm:$0xff]
        %v617 = vld [vmem:[%s610 + $0x30] sm:$0xff]
        %v618 = vld [vmem:[%s610 + $0x38] sm:$0xff]
        %v619 = vld [vmem:[%s610 + $0x40] sm:$0xff]
        %v620 = vld [vmem:[%s610 + $0x48] sm:$0xff]
        %v621 = vld [vmem:[%s610 + $0x50] sm:$0xff]
        %v622 = vld [vmem:[%s610 + $0x58] sm:$0xff]
        %v623 = vld [vmem:[%s610 + $0x60] sm:$0xff]
        %v624 = vld [vmem:[%s610 + $0x68] sm:$0xff]
        %v625 = vld [vmem:[%s610 + $0x70] sm:$0xff]
        %v626 = vld [vmem:[%s610 + $0x78] sm:$0xff]
        %v627 = vld [vmem:[%s610 + $0x80] sm:$0xff]
        %v628 = vld [vmem:[%s610 + $0x88] sm:$0xff]
        %v629 = vld [vmem:[%s610 + $0x90] sm:$0xff]
        %v630 = vld [vmem:[%s610 + $0x98] sm:$0xff]
        %v631 = vld [vmem:[%s610 + $0xa0] sm:$0xff]
        %v632 = vld [vmem:[%s610 + $0xa8] sm:$0xff]
        %v633 = vld [vmem:[%s610 + $0xb0] sm:$0xff]
        %v634 = vld [vmem:[%s610 + $0xb8] sm:$0xff]
        %vm635 = vcmask 785408
        %v637 = vsel %vm635, %v578, 0
        %v640 = vsel %vm635, %v579, 0
        %v643 = vsel %vm635, %v580, 0
        %v646 = vsel %vm635, %v581, 0
        %v649 = vsel %vm635, %v582, 0
        %v652 = vsel %vm635, %v583, 0
        %v655 = vsel %vm635, %v584, 0
        %v658 = vsel %vm635, %v585, 0
        %v661 = vsel %vm635, %v586, 0
        %v664 = vsel %vm635, %v587, 0
        %v667 = vsel %vm635, %v588, 0
        %v670 = vsel %vm635, %v589, 0
        %v673 = vsel %vm635, %v590, 0
        %v676 = vsel %vm635, %v591, 0
        %v679 = vsel %vm635, %v592, 0
        %v682 = vsel %vm635, %v593, 0
        %v685 = vsel %vm635, %v594, 0
        %v688 = vsel %vm635, %v595, 0
        %v691 = vsel %vm635, %v596, 0
        %v694 = vsel %vm635, %v597, 0
        %v697 = vsel %vm635, %v598, 0
        %v700 = vsel %vm635, %v599, 0
        %v703 = vsel %vm635, %v600, 0
        %v706 = vsel %vm635, %v601, 0
        %v709 = vsel %vm635, %v602, 0
        %v712 = vsel %vm635, %v603, 0
        %v715 = vsel %vm635, %v604, 0
        %v718 = vsel %vm635, %v605, 0
        %v721 = vsel %vm635, %v606, 0
        %v724 = vsel %vm635, %v607, 0
        %v727 = vsel %vm635, %v608, 0
        %v730 = vsel %vm635, %v609, 0
        %732 = vmatprep.subr.mxu0 %v612
        %733 = vmatpush1.msra.mxu0 %v611
        %734 = vmatprep.subr.mxu0 %v614
        %735 = vmatpush1.msra.mxu0 %v613
        %736 = vmatprep.subr.mxu0 %v616
        %737 = vmatpush1.msra.mxu0 %v615
        %738 = vmatprep.subr.mxu0 %v618
        %739 = vmatpush1.msra.mxu0 %v617
        %740 = vmatprep.subr.mxu0 %v620
        %741 = vmatpush1.msra.mxu0 %v619
        %742 = vmatprep.subr.mxu0 %v622
        %743 = vmatpush1.msra.mxu0 %v621
        %744 = vmatprep.subr.mxu0 %v624
        %745 = vmatpush1.msra.mxu0 %v623
        %746 = vmatprep.subr.mxu0 %v626
        %747 = vmatpush1.msra.mxu0 %v625
        %748 = vmatprep.subr.mxu0 %v628
        %749 = vmatpush1.msra.mxu0 %v627
        %750 = vmatprep.subr.mxu0 %v630
        %751 = vmatpush1.msra.mxu0 %v629
        %752 = vmatprep.subr.mxu0 %v632
        %753 = vmatpush1.msra.mxu0 %v631
        %754 = vmatprep.subr.mxu0 %v634
        %755 = vmatpush1.msra.mxu0 %v633
        %756 = vmatprep.subr.mxu0 0.0
        %757 = vmatpush1.msra.mxu0 0.0
        %758 = vmatprep.subr.mxu0 0.0
        %759 = vmatpush1.msra.mxu0 0.0
        %760 = vmatprep.subr.mxu0 0.0
        %761 = vmatpush1.msra.mxu0 0.0
        %762 = vmatprep.subr.mxu0 0.0
        %763 = vmatpush1.msra.mxu0 0.0
        %764 = vmatprep.subr.mxu0 0.0
        %765 = vmatpush1.msra.mxu0 0.0
        %766 = vmatprep.subr.mxu0 0.0
        %767 = vmatpush1.msra.mxu0 0.0
        %768 = vmatprep.subr.mxu0 0.0
        %769 = vmatpush1.msra.mxu0 0.0
        %770 = vmatprep.subr.mxu0 0.0
        %771 = vmatpush1.msra.mxu0 0.0
        %772 = vmatprep.subr.mxu0 0.0
        %773 = vmatpush1.msra.mxu0 0.0
        %774 = vmatprep.subr.mxu0 0.0
        %775 = vmatpush1.msra.mxu0 0.0
        %776 = vmatprep.subr.mxu0 0.0
        %777 = vmatpush1.msra.mxu0 0.0
        %778 = vmatprep.subr.mxu0 0.0
        %779 = vmatpush1.msra.mxu0 0.0
        %780 = vmatprep.subr.mxu0 0.0
        %781 = vmatpush1.msra.mxu0 0.0
        %782 = vmatprep.subr.mxu0 0.0
        %783 = vmatpush1.msra.mxu0 0.0
        %784 = vmatprep.subr.mxu0 0.0
        %785 = vmatpush1.msra.mxu0 0.0
        %786 = vmatprep.subr.mxu0 0.0
        %787 = vmatpush1.msra.mxu0 0.0
        %788 = vmatprep.subr.mxu0 0.0
        %789 = vmatpush1.msra.mxu0 0.0
        %790 = vmatprep.subr.mxu0 0.0
        %791 = vmatpush1.msra.mxu0 0.0
        %792 = vmatprep.subr.mxu0 0.0
        %793 = vmatpush1.msra.mxu0 0.0
        %794 = vmatprep.subr.mxu0 0.0
        %795 = vmatpush1.msra.mxu0 0.0
        %796 = vmatprep.mubr.f32.mxu0 0.0
        %797 = vmatmul.mubr.f32.gmra.mrb[0].mxu0 %v637
        %v798 = vpop.f32.mrb[0].mxu0
        %v799 = vadd.f32 0.0, %v798
        %v800 = vpop.f32.mrb[0].mxu0
        %v801 = vadd.f32 0.0, %v800
        %802 = vmatprep.mubr.f32.mxu0 0.0
        %803 = vmatmul.mubr.f32.gmra.mrb[0].mxu0 %v640
        %v804 = vpop.f32.mrb[0].mxu0
        %v805 = vadd.f32 0.0, %v804
        %v806 = vpop.f32.mrb[0].mxu0
        %v807 = vadd.f32 0.0, %v806
        %808 = vmatprep.mubr.f32.mxu0 0.0
        %809 = vmatmul.mubr.f32.gmra.mrb[0].mxu0 %v643
        %v810 = vpop.f32.mrb[0].mxu0
        %v811 = vadd.f32 0.0, %v810
        %v812 = vpop.f32.mrb[0].mxu0
        %v813 = vadd.f32 0.0, %v812
        %814 = vmatprep.mubr.f32.mxu0 0.0
        %815 = vmatmul.mubr.f32.gmra.mrb[0].mxu0 %v646
        %v816 = vpop.f32.mrb[0].mxu0
        %v817 = vadd.f32 0.0, %v816
        %v818 = vpop.f32.mrb[0].mxu0
        %v819 = vadd.f32 0.0, %v818
        %820 = vmatprep.mubr.f32.mxu0 0.0
        %821 = vmatmul.mubr.f32.gmra.mrb[0].mxu0 %v649
        %v822 = vpop.f32.mrb[0].mxu0
        %v823 = vadd.f32 0.0, %v822
        %v824 = vpop.f32.mrb[0].mxu0
        %v825 = vadd.f32 0.0, %v824
        %826 = vmatprep.mubr.f32.mxu0 0.0
        %827 = vmatmul.mubr.f32.gmra.mrb[0].mxu0 %v652
        %v828 = vpop.f32.mrb[0].mxu0
        %v829 = vadd.f32 0.0, %v828
        %v830 = vpop.f32.mrb[0].mxu0
        %v831 = vadd.f32 0.0, %v830
        %832 = vmatprep.mubr.f32.mxu0 0.0
        %833 = vmatmul.mubr.f32.gmra.mrb[0].mxu0 %v655
        %v834 = vpop.f32.mrb[0].mxu0
        %v835 = vadd.f32 0.0, %v834
        %v836 = vpop.f32.mrb[0].mxu0
        %v837 = vadd.f32 0.0, %v836
        %838 = vmatprep.mubr.f32.mxu0 0.0
        %839 = vmatmul.mubr.f32.gmra.mrb[0].mxu0 %v658
        %v840 = vpop.f32.mrb[0].mxu0
        %v841 = vadd.f32 0.0, %v840
        %v842 = vpop.f32.mrb[0].mxu0
        %v843 = vadd.f32 0.0, %v842
        %844 = vmatprep.mubr.f32.mxu0 0.0
        %845 = vmatmul.mubr.f32.gmra.mrb[0].mxu0 %v661
        %v846 = vpop.f32.mrb[0].mxu0
        %v847 = vadd.f32 0.0, %v846
        %v848 = vpop.f32.mrb[0].mxu0
        %v849 = vadd.f32 0.0, %v848
        %850 = vmatprep.mubr.f32.mxu0 0.0
        %851 = vmatmul.mubr.f32.gmra.mrb[0].mxu0 %v664
        %v852 = vpop.f32.mrb[0].mxu0
        %v853 = vadd.f32 0.0, %v852
        %v854 = vpop.f32.mrb[0].mxu0
        %v855 = vadd.f32 0.0, %v854
        %856 = vmatprep.mubr.f32.mxu0 0.0
        %857 = vmatmul.mubr.f32.gmra.mrb[0].mxu0 %v667
        %v858 = vpop.f32.mrb[0].mxu0
        %v859 = vadd.f32 0.0, %v858
        %v860 = vpop.f32.mrb[0].mxu0
        %v861 = vadd.f32 0.0, %v860
        %862 = vmatprep.mubr.f32.mxu0 0.0
        %863 = vmatmul.mubr.f32.gmra.mrb[0].mxu0 %v670
        %v864 = vpop.f32.mrb[0].mxu0
        %v865 = vadd.f32 0.0, %v864
        %v866 = vpop.f32.mrb[0].mxu0
        %v867 = vadd.f32 0.0, %v866
        %868 = vmatprep.mubr.f32.mxu0 0.0
        %869 = vmatmul.mubr.f32.gmra.mrb[0].mxu0 %v673
        %v870 = vpop.f32.mrb[0].mxu0
        %v871 = vadd.f32 0.0, %v870
        %v872 = vpop.f32.mrb[0].mxu0
        %v873 = vadd.f32 0.0, %v872
        %874 = vmatprep.mubr.f32.mxu0 0.0
        %875 = vmatmul.mubr.f32.gmra.mrb[0].mxu0 %v676
        %v876 = vpop.f32.mrb[0].mxu0
        %v877 = vadd.f32 0.0, %v876
        %v878 = vpop.f32.mrb[0].mxu0
        %v879 = vadd.f32 0.0, %v878
        %880 = vmatprep.mubr.f32.mxu0 0.0
        %881 = vmatmul.mubr.f32.gmra.mrb[0].mxu0 %v679
        %v882 = vpop.f32.mrb[0].mxu0
        %v883 = vadd.f32 0.0, %v882
        %v884 = vpop.f32.mrb[0].mxu0
        %v885 = vadd.f32 0.0, %v884
        %886 = vmatprep.mubr.f32.mxu0 0.0
        %887 = vmatmul.mubr.f32.gmra.mrb[0].mxu0 %v682
        %v888 = vpop.f32.mrb[0].mxu0
        %v889 = vadd.f32 0.0, %v888
        %v890 = vpop.f32.mrb[0].mxu0
        %v891 = vadd.f32 0.0, %v890
        %892 = vmatprep.mubr.f32.mxu0 0.0
        %893 = vmatmul.mubr.f32.gmra.mrb[0].mxu0 %v685
        %v894 = vpop.f32.mrb[0].mxu0
        %v895 = vadd.f32 0.0, %v894
        %v896 = vpop.f32.mrb[0].mxu0
        %v897 = vadd.f32 0.0, %v896
        %898 = vmatprep.mubr.f32.mxu0 0.0
        %899 = vmatmul.mubr.f32.gmra.mrb[0].mxu0 %v688
        %v900 = vpop.f32.mrb[0].mxu0
        %v901 = vadd.f32 0.0, %v900
        %v902 = vpop.f32.mrb[0].mxu0
        %v903 = vadd.f32 0.0, %v902
        %904 = vmatprep.mubr.f32.mxu0 0.0
        %905 = vmatmul.mubr.f32.gmra.mrb[0].mxu0 %v691
        %v906 = vpop.f32.mrb[0].mxu0
        %v907 = vadd.f32 0.0, %v906
        %v908 = vpop.f32.mrb[0].mxu0
        %v909 = vadd.f32 0.0, %v908
        %910 = vmatprep.mubr.f32.mxu0 0.0
        %911 = vmatmul.mubr.f32.gmra.mrb[0].mxu0 %v694
        %v912 = vpop.f32.mrb[0].mxu0
        %v913 = vadd.f32 0.0, %v912
        %v914 = vpop.f32.mrb[0].mxu0
        %v915 = vadd.f32 0.0, %v914
        %916 = vmatprep.mubr.f32.mxu0 0.0
        %917 = vmatmul.mubr.f32.gmra.mrb[0].mxu0 %v697
        %v918 = vpop.f32.mrb[0].mxu0
        %v919 = vadd.f32 0.0, %v918
        %v920 = vpop.f32.mrb[0].mxu0
        %v921 = vadd.f32 0.0, %v920
        %922 = vmatprep.mubr.f32.mxu0 0.0
        %923 = vmatmul.mubr.f32.gmra.mrb[0].mxu0 %v700
        %v924 = vpop.f32.mrb[0].mxu0
        %v925 = vadd.f32 0.0, %v924
        %v926 = vpop.f32.mrb[0].mxu0
        %v927 = vadd.f32 0.0, %v926
        %928 = vmatprep.mubr.f32.mxu0 0.0
        %929 = vmatmul.mubr.f32.gmra.mrb[0].mxu0 %v703
        %v930 = vpop.f32.mrb[0].mxu0
        %v931 = vadd.f32 0.0, %v930
        %v932 = vpop.f32.mrb[0].mxu0
        %v933 = vadd.f32 0.0, %v932
        %934 = vmatprep.mubr.f32.mxu0 0.0
        %935 = vmatmul.mubr.f32.gmra.mrb[0].mxu0 %v706
        %v936 = vpop.f32.mrb[0].mxu0
        %v937 = vadd.f32 0.0, %v936
        %v938 = vpop.f32.mrb[0].mxu0
        %v939 = vadd.f32 0.0, %v938
        %940 = vmatprep.mubr.f32.mxu0 0.0
        %941 = vmatmul.mubr.f32.gmra.mrb[0].mxu0 %v709
        %v942 = vpop.f32.mrb[0].mxu0
        %v943 = vadd.f32 0.0, %v942
        %v944 = vpop.f32.mrb[0].mxu0
        %v945 = vadd.f32 0.0, %v944
        %946 = vmatprep.mubr.f32.mxu0 0.0
        %947 = vmatmul.mubr.f32.gmra.mrb[0].mxu0 %v712
        %v948 = vpop.f32.mrb[0].mxu0
        %v949 = vadd.f32 0.0, %v948
        %v950 = vpop.f32.mrb[0].mxu0
        %v951 = vadd.f32 0.0, %v950
        %952 = vmatprep.mubr.f32.mxu0 0.0
        %953 = vmatmul.mubr.f32.gmra.mrb[0].mxu0 %v715
        %v954 = vpop.f32.mrb[0].mxu0
        %v955 = vadd.f32 0.0, %v954
        %v956 = vpop.f32.mrb[0].mxu0
        %v957 = vadd.f32 0.0, %v956
        %958 = vmatprep.mubr.f32.mxu0 0.0
        %959 = vmatmul.mubr.f32.gmra.mrb[0].mxu0 %v718
        %v960 = vpop.f32.mrb[0].mxu0
        %v961 = vadd.f32 0.0, %v960
        %v962 = vpop.f32.mrb[0].mxu0
        %v963 = vadd.f32 0.0, %v962
        %964 = vmatprep.mubr.f32.mxu0 0.0
        %965 = vmatmul.mubr.f32.gmra.mrb[0].mxu0 %v721
        %v966 = vpop.f32.mrb[0].mxu0
        %v967 = vadd.f32 0.0, %v966
        %v968 = vpop.f32.mrb[0].mxu0
        %v969 = vadd.f32 0.0, %v968
        %970 = vmatprep.mubr.f32.mxu0 0.0
        %971 = vmatmul.mubr.f32.gmra.mrb[0].mxu0 %v724
        %v972 = vpop.f32.mrb[0].mxu0
        %v973 = vadd.f32 0.0, %v972
        %v974 = vpop.f32.mrb[0].mxu0
        %v975 = vadd.f32 0.0, %v974
        %976 = vmatprep.mubr.f32.mxu0 0.0
        %977 = vmatmul.mubr.f32.gmra.mrb[0].mxu0 %v727
        %v978 = vpop.f32.mrb[0].mxu0
        %v979 = vadd.f32 0.0, %v978
        %v980 = vpop.f32.mrb[0].mxu0
        %v981 = vadd.f32 0.0, %v980
        %982 = vmatprep.mubr.f32.mxu0 0.0
        %983 = vmatmul.mubr.f32.gmra.mrb[0].mxu0 %v730
        %v984 = vpop.f32.mrb[0].mxu0
        %v985 = vadd.f32 0.0, %v984
        %v986 = vpop.f32.mrb[0].mxu0
        %v987 = vadd.f32 0.0, %v986
        %988 = vdwg.mxu0
        %v990 = vsel %vm635, %v522, 0
        %v993 = vsel %vm635, %v523, 0
        %v996 = vsel %vm635, %v524, 0
        %v999 = vsel %vm635, %v525, 0
        %v1002 = vsel %vm635, %v526, 0
        %v1005 = vsel %vm635, %v527, 0
        %v1008 = vsel %vm635, %v528, 0
        %v1011 = vsel %vm635, %v529, 0
        %v1014 = vsel %vm635, %v530, 0
        %v1017 = vsel %vm635, %v531, 0
        %v1020 = vsel %vm635, %v532, 0
        %v1023 = vsel %vm635, %v533, 0
        %v1026 = vsel %vm635, %v534, 0
        %v1029 = vsel %vm635, %v535, 0
        %v1032 = vsel %vm635, %v536, 0
        %v1035 = vsel %vm635, %v537, 0
        %v1038 = vsel %vm635, %v538, 0
        %v1041 = vsel %vm635, %v539, 0
        %v1044 = vsel %vm635, %v540, 0
        %v1047 = vsel %vm635, %v541, 0
        %v1050 = vsel %vm635, %v542, 0
        %v1053 = vsel %vm635, %v543, 0
        %v1056 = vsel %vm635, %v544, 0
        %v1059 = vsel %vm635, %v545, 0
        %v1062 = vsel %vm635, %v546, 0
        %v1065 = vsel %vm635, %v547, 0
        %v1068 = vsel %vm635, %v548, 0
        %v1071 = vsel %vm635, %v549, 0
        %v1074 = vsel %vm635, %v550, 0
        %v1077 = vsel %vm635, %v551, 0
        %v1080 = vsel %vm635, %v552, 0
        %v1083 = vsel %vm635, %v553, 0
        %1085 = vmatprep.subr.mxu0 %v555
        %1086 = vmatpush1.msra.mxu0 %v554
        %1087 = vmatprep.subr.mxu0 %v557
        %1088 = vmatpush1.msra.mxu0 %v556
        %1089 = vmatprep.subr.mxu0 %v559
        %1090 = vmatpush1.msra.mxu0 %v558
        %1091 = vmatprep.subr.mxu0 %v561
        %1092 = vmatpush1.msra.mxu0 %v560
        %1093 = vmatprep.subr.mxu0 %v563
        %1094 = vmatpush1.msra.mxu0 %v562
        %1095 = vmatprep.subr.mxu0 %v565
        %1096 = vmatpush1.msra.mxu0 %v564
        %1097 = vmatprep.subr.mxu0 %v567
        %1098 = vmatpush1.msra.mxu0 %v566
        %1099 = vmatprep.subr.mxu0 %v569
        %1100 = vmatpush1.msra.mxu0 %v568
        %1101 = vmatprep.subr.mxu0 %v571
        %1102 = vmatpush1.msra.mxu0 %v570
        %1103 = vmatprep.subr.mxu0 %v573
        %1104 = vmatpush1.msra.mxu0 %v572
        %1105 = vmatprep.subr.mxu0 %v575
        %1106 = vmatpush1.msra.mxu0 %v574
        %1107 = vmatprep.subr.mxu0 %v577
        %1108 = vmatpush1.msra.mxu0 %v576
        %1109 = vmatprep.subr.mxu0 0.0
        %1110 = vmatpush1.msra.mxu0 0.0
        %1111 = vmatprep.subr.mxu0 0.0
        %1112 = vmatpush1.msra.mxu0 0.0
        %1113 = vmatprep.subr.mxu0 0.0
        %1114 = vmatpush1.msra.mxu0 0.0
        %1115 = vmatprep.subr.mxu0 0.0
        %1116 = vmatpush1.msra.mxu0 0.0
        %1117 = vmatprep.subr.mxu0 0.0
        %1118 = vmatpush1.msra.mxu0 0.0
        %1119 = vmatprep.subr.mxu0 0.0
        %1120 = vmatpush1.msra.mxu0 0.0
        %1121 = vmatprep.subr.mxu0 0.0
        %1122 = vmatpush1.msra.mxu0 0.0
        %1123 = vmatprep.subr.mxu0 0.0
        %1124 = vmatpush1.msra.mxu0 0.0
        %1125 = vmatprep.subr.mxu0 0.0
        %1126 = vmatpush1.msra.mxu0 0.0
        %1127 = vmatprep.subr.mxu0 0.0
        %1128 = vmatpush1.msra.mxu0 0.0
        %1129 = vmatprep.subr.mxu0 0.0
        %1130 = vmatpush1.msra.mxu0 0.0
        %1131 = vmatprep.subr.mxu0 0.0
        %1132 = vmatpush1.msra.mxu0 0.0
        %1133 = vmatprep.subr.mxu0 0.0
        %1134 = vmatpush1.msra.mxu0 0.0
        %1135 = vmatprep.subr.mxu0 0.0
        %1136 = vmatpush1.msra.mxu0 0.0
        %1137 = vmatprep.subr.mxu0 0.0
        %1138 = vmatpush1.msra.mxu0 0.0
        %1139 = vmatprep.subr.mxu0 0.0
        %1140 = vmatpush1.msra.mxu0 0.0
        %1141 = vmatprep.subr.mxu0 0.0
        %1142 = vmatpush1.msra.mxu0 0.0
        %1143 = vmatprep.subr.mxu0 0.0
        %1144 = vmatpush1.msra.mxu0 0.0
        %1145 = vmatprep.subr.mxu0 0.0
        %1146 = vmatpush1.msra.mxu0 0.0
        %1147 = vmatprep.subr.mxu0 0.0
        %1148 = vmatpush1.msra.mxu0 0.0
        %1149 = vmatprep.mubr.f32.mxu0 0.0
        %1150 = vmatmul.mubr.f32.gmra.mrb[0].mxu0 %v990
        %v1151 = vpop.f32.mrb[0].mxu0
        %v1152 = vadd.f32 %v799, %v1151
        %v1153 = vpop.f32.mrb[0].mxu0
        %v1154 = vadd.f32 %v801, %v1153
        %1155 = vmatprep.mubr.f32.mxu0 0.0
        %1156 = vmatmul.mubr.f32.gmra.mrb[0].mxu0 %v993
        %v1157 = vpop.f32.mrb[0].mxu0
        %v1158 = vadd.f32 %v805, %v1157
        %v1159 = vpop.f32.mrb[0].mxu0
        %v1160 = vadd.f32 %v807, %v1159
        %1161 = vmatprep.mubr.f32.mxu0 0.0
        %1162 = vmatmul.mubr.f32.gmra.mrb[0].mxu0 %v996
        %v1163 = vpop.f32.mrb[0].mxu0
        %v1164 = vadd.f32 %v811, %v1163
        %v1165 = vpop.f32.mrb[0].mxu0
        %v1166 = vadd.f32 %v813, %v1165
        %1167 = vmatprep.mubr.f32.mxu0 0.0
        %1168 = vmatmul.mubr.f32.gmra.mrb[0].mxu0 %v999
        %v1169 = vpop.f32.mrb[0].mxu0
        %v1170 = vadd.f32 %v817, %v1169
        %v1171 = vpop.f32.mrb[0].mxu0
        %v1172 = vadd.f32 %v819, %v1171
        %1173 = vmatprep.mubr.f32.mxu0 0.0
        %1174 = vmatmul.mubr.f32.gmra.mrb[0].mxu0 %v1002
        %v1175 = vpop.f32.mrb[0].mxu0
        %v1176 = vadd.f32 %v823, %v1175
        %v1177 = vpop.f32.mrb[0].mxu0
        %v1178 = vadd.f32 %v825, %v1177
        %1179 = vmatprep.mubr.f32.mxu0 0.0
        %1180 = vmatmul.mubr.f32.gmra.mrb[0].mxu0 %v1005
        %v1181 = vpop.f32.mrb[0].mxu0
        %v1182 = vadd.f32 %v829, %v1181
        %v1183 = vpop.f32.mrb[0].mxu0
        %v1184 = vadd.f32 %v831, %v1183
        %1185 = vmatprep.mubr.f32.mxu0 0.0
        %1186 = vmatmul.mubr.f32.gmra.mrb[0].mxu0 %v1008
        %v1187 = vpop.f32.mrb[0].mxu0
        %v1188 = vadd.f32 %v835, %v1187
        %v1189 = vpop.f32.mrb[0].mxu0
        %v1190 = vadd.f32 %v837, %v1189
        %1191 = vmatprep.mubr.f32.mxu0 0.0
        %1192 = vmatmul.mubr.f32.gmra.mrb[0].mxu0 %v1011
        %v1193 = vpop.f32.mrb[0].mxu0
        %v1194 = vadd.f32 %v841, %v1193
        %v1195 = vpop.f32.mrb[0].mxu0
        %v1196 = vadd.f32 %v843, %v1195
        %1197 = vmatprep.mubr.f32.mxu0 0.0
        %1198 = vmatmul.mubr.f32.gmra.mrb[0].mxu0 %v1014
        %v1199 = vpop.f32.mrb[0].mxu0
        %v1200 = vadd.f32 %v847, %v1199
        %v1201 = vpop.f32.mrb[0].mxu0
        %v1202 = vadd.f32 %v849, %v1201
        %1203 = vmatprep.mubr.f32.mxu0 0.0
        %1204 = vmatmul.mubr.f32.gmra.mrb[0].mxu0 %v1017
        %v1205 = vpop.f32.mrb[0].mxu0
        %v1206 = vadd.f32 %v853, %v1205
        %v1207 = vpop.f32.mrb[0].mxu0
        %v1208 = vadd.f32 %v855, %v1207
        %1209 = vmatprep.mubr.f32.mxu0 0.0
        %1210 = vmatmul.mubr.f32.gmra.mrb[0].mxu0 %v1020
        %v1211 = vpop.f32.mrb[0].mxu0
        %v1212 = vadd.f32 %v859, %v1211
        %v1213 = vpop.f32.mrb[0].mxu0
        %v1214 = vadd.f32 %v861, %v1213
        %1215 = vmatprep.mubr.f32.mxu0 0.0
        %1216 = vmatmul.mubr.f32.gmra.mrb[0].mxu0 %v1023
        %v1217 = vpop.f32.mrb[0].mxu0
        %v1218 = vadd.f32 %v865, %v1217
        %v1219 = vpop.f32.mrb[0].mxu0
        %v1220 = vadd.f32 %v867, %v1219
        %1221 = vmatprep.mubr.f32.mxu0 0.0
        %1222 = vmatmul.mubr.f32.gmra.mrb[0].mxu0 %v1026
        %v1223 = vpop.f32.mrb[0].mxu0
        %v1224 = vadd.f32 %v871, %v1223
        %v1225 = vpop.f32.mrb[0].mxu0
        %v1226 = vadd.f32 %v873, %v1225
        %1227 = vmatprep.mubr.f32.mxu0 0.0
        %1228 = vmatmul.mubr.f32.gmra.mrb[0].mxu0 %v1029
        %v1229 = vpop.f32.mrb[0].mxu0
        %v1230 = vadd.f32 %v877, %v1229
        %v1231 = vpop.f32.mrb[0].mxu0
        %v1232 = vadd.f32 %v879, %v1231
        %1233 = vmatprep.mubr.f32.mxu0 0.0
        %1234 = vmatmul.mubr.f32.gmra.mrb[0].mxu0 %v1032
        %v1235 = vpop.f32.mrb[0].mxu0
        %v1236 = vadd.f32 %v883, %v1235
        %v1237 = vpop.f32.mrb[0].mxu0
        %v1238 = vadd.f32 %v885, %v1237
        %1239 = vmatprep.mubr.f32.mxu0 0.0
        %1240 = vmatmul.mubr.f32.gmra.mrb[0].mxu0 %v1035
        %v1241 = vpop.f32.mrb[0].mxu0
        %v1242 = vadd.f32 %v889, %v1241
        %v1243 = vpop.f32.mrb[0].mxu0
        %v1244 = vadd.f32 %v891, %v1243
        %1245 = vmatprep.mubr.f32.mxu0 0.0
        %1246 = vmatmul.mubr.f32.gmra.mrb[0].mxu0 %v1038
        %v1247 = vpop.f32.mrb[0].mxu0
        %v1248 = vadd.f32 %v895, %v1247
        %v1249 = vpop.f32.mrb[0].mxu0
        %v1250 = vadd.f32 %v897, %v1249
        %1251 = vmatprep.mubr.f32.mxu0 0.0
        %1252 = vmatmul.mubr.f32.gmra.mrb[0].mxu0 %v1041
        %v1253 = vpop.f32.mrb[0].mxu0
        %v1254 = vadd.f32 %v901, %v1253
        %v1255 = vpop.f32.mrb[0].mxu0
        %v1256 = vadd.f32 %v903, %v1255
        %1257 = vmatprep.mubr.f32.mxu0 0.0
        %1258 = vmatmul.mubr.f32.gmra.mrb[0].mxu0 %v1044
        %v1259 = vpop.f32.mrb[0].mxu0
        %v1260 = vadd.f32 %v907, %v1259
        %v1261 = vpop.f32.mrb[0].mxu0
        %v1262 = vadd.f32 %v909, %v1261
        %1263 = vmatprep.mubr.f32.mxu0 0.0
        %1264 = vmatmul.mubr.f32.gmra.mrb[0].mxu0 %v1047
        %v1265 = vpop.f32.mrb[0].mxu0
        %v1266 = vadd.f32 %v913, %v1265
        %v1267 = vpop.f32.mrb[0].mxu0
        %v1268 = vadd.f32 %v915, %v1267
        %1269 = vmatprep.mubr.f32.mxu0 0.0
        %1270 = vmatmul.mubr.f32.gmra.mrb[0].mxu0 %v1050
        %v1271 = vpop.f32.mrb[0].mxu0
        %v1272 = vadd.f32 %v919, %v1271
        %v1273 = vpop.f32.mrb[0].mxu0
        %v1274 = vadd.f32 %v921, %v1273
        %1275 = vmatprep.mubr.f32.mxu0 0.0
        %1276 = vmatmul.mubr.f32.gmra.mrb[0].mxu0 %v1053
        %v1277 = vpop.f32.mrb[0].mxu0
        %v1278 = vadd.f32 %v925, %v1277
        %v1279 = vpop.f32.mrb[0].mxu0
        %v1280 = vadd.f32 %v927, %v1279
        %1281 = vmatprep.mubr.f32.mxu0 0.0
        %1282 = vmatmul.mubr.f32.gmra.mrb[0].mxu0 %v1056
        %v1283 = vpop.f32.mrb[0].mxu0
        %v1284 = vadd.f32 %v931, %v1283
        %v1285 = vpop.f32.mrb[0].mxu0
        %v1286 = vadd.f32 %v933, %v1285
        %1287 = vmatprep.mubr.f32.mxu0 0.0
        %1288 = vmatmul.mubr.f32.gmra.mrb[0].mxu0 %v1059
        %v1289 = vpop.f32.mrb[0].mxu0
        %v1290 = vadd.f32 %v937, %v1289
        %v1291 = vpop.f32.mrb[0].mxu0
        %v1292 = vadd.f32 %v939, %v1291
        %1293 = vmatprep.mubr.f32.mxu0 0.0
        %1294 = vmatmul.mubr.f32.gmra.mrb[0].mxu0 %v1062
        %v1295 = vpop.f32.mrb[0].mxu0
        %v1296 = vadd.f32 %v943, %v1295
        %v1297 = vpop.f32.mrb[0].mxu0
        %v1298 = vadd.f32 %v945, %v1297
        %1299 = vmatprep.mubr.f32.mxu0 0.0
        %1300 = vmatmul.mubr.f32.gmra.mrb[0].mxu0 %v1065
        %v1301 = vpop.f32.mrb[0].mxu0
        %v1302 = vadd.f32 %v949, %v1301
        %v1303 = vpop.f32.mrb[0].mxu0
        %v1304 = vadd.f32 %v951, %v1303
        %1305 = vmatprep.mubr.f32.mxu0 0.0
        %1306 = vmatmul.mubr.f32.gmra.mrb[0].mxu0 %v1068
        %v1307 = vpop.f32.mrb[0].mxu0
        %v1308 = vadd.f32 %v955, %v1307
        %v1309 = vpop.f32.mrb[0].mxu0
        %v1310 = vadd.f32 %v957, %v1309
        %1311 = vmatprep.mubr.f32.mxu0 0.0
        %1312 = vmatmul.mubr.f32.gmra.mrb[0].mxu0 %v1071
        %v1313 = vpop.f32.mrb[0].mxu0
        %v1314 = vadd.f32 %v961, %v1313
        %v1315 = vpop.f32.mrb[0].mxu0
        %v1316 = vadd.f32 %v963, %v1315
        %1317 = vmatprep.mubr.f32.mxu0 0.0
        %1318 = vmatmul.mubr.f32.gmra.mrb[0].mxu0 %v1074
        %v1319 = vpop.f32.mrb[0].mxu0
        %v1320 = vadd.f32 %v967, %v1319
        %v1321 = vpop.f32.mrb[0].mxu0
        %v1322 = vadd.f32 %v969, %v1321
        %1323 = vmatprep.mubr.f32.mxu0 0.0
        %1324 = vmatmul.mubr.f32.gmra.mrb[0].mxu0 %v1077
        %v1325 = vpop.f32.mrb[0].mxu0
        %v1326 = vadd.f32 %v973, %v1325
        %v1327 = vpop.f32.mrb[0].mxu0
        %v1328 = vadd.f32 %v975, %v1327
        %1329 = vmatprep.mubr.f32.mxu0 0.0
        %1330 = vmatmul.mubr.f32.gmra.mrb[0].mxu0 %v1080
        %v1331 = vpop.f32.mrb[0].mxu0
        %v1332 = vadd.f32 %v979, %v1331
        %v1333 = vpop.f32.mrb[0].mxu0
        %v1334 = vadd.f32 %v981, %v1333
        %1335 = vmatprep.mubr.f32.mxu0 0.0
        %1336 = vmatmul.mubr.f32.gmra.mrb[0].mxu0 %v1083
        %v1337 = vpop.f32.mrb[0].mxu0
        %v1338 = vadd.f32 %v985, %v1337
        %v1339 = vpop.f32.mrb[0].mxu0
        %v1340 = vadd.f32 %v987, %v1339
        %1341 = vdwg.mxu0
        %v1342 = vld [vmem:[%s520 + $0x2] sm:$0xff]
        %v1343 = vld [vmem:[%s520 + $0xa] sm:$0xff]
        %v1344 = vld [vmem:[%s520 + $0x12] sm:$0xff]
        %v1345 = vld [vmem:[%s520 + $0x1a] sm:$0xff]
        %v1346 = vld [vmem:[%s520 + $0x22] sm:$0xff]
        %v1347 = vld [vmem:[%s520 + $0x2a] sm:$0xff]
        %v1348 = vld [vmem:[%s520 + $0x32] sm:$0xff]
        %v1349 = vld [vmem:[%s520 + $0x3a] sm:$0xff]
        %v1350 = vld [vmem:[%s520 + $0x42] sm:$0xff]
        %v1351 = vld [vmem:[%s520 + $0x4a] sm:$0xff]
        %v1352 = vld [vmem:[%s520 + $0x52] sm:$0xff]
        %v1353 = vld [vmem:[%s520 + $0x5a] sm:$0xff]
        %v1354 = vld [vmem:[%s520 + $0x62] sm:$0xff]
        %v1355 = vld [vmem:[%s520 + $0x6a] sm:$0xff]
        %v1356 = vld [vmem:[%s520 + $0x72] sm:$0xff]
        %v1357 = vld [vmem:[%s520 + $0x7a] sm:$0xff]
        %v1358 = vld [vmem:[%s520 + $0x82] sm:$0xff]
        %v1359 = vld [vmem:[%s520 + $0x8a] sm:$0xff]
        %v1360 = vld [vmem:[%s520 + $0x92] sm:$0xff]
        %v1361 = vld [vmem:[%s520 + $0x9a] sm:$0xff]
        %v1362 = vld [vmem:[%s520 + $0xa2] sm:$0xff]
        %v1363 = vld [vmem:[%s520 + $0xaa] sm:$0xff]
        %v1364 = vld [vmem:[%s520 + $0xb2] sm:$0xff]
        %v1365 = vld [vmem:[%s520 + $0xba] sm:$0xff]
        %v1366 = vld [vmem:[%s520 + $0xc2] sm:$0xff]
        %v1367 = vld [vmem:[%s520 + $0xca] sm:$0xff]
        %v1368 = vld [vmem:[%s520 + $0xd2] sm:$0xff]
        %v1369 = vld [vmem:[%s520 + $0xda] sm:$0xff]
        %v1370 = vld [vmem:[%s520 + $0xe2] sm:$0xff]
        %v1371 = vld [vmem:[%s520 + $0xea] sm:$0xff]
        %v1372 = vld [vmem:[%s520 + $0xf2] sm:$0xff]
        %v1373 = vld [vmem:[%s520 + $0xfa] sm:$0xf]
        %s1374 = scalar_lea.vmem %s1, 384
        %v1375 = vld [vmem:[%s1374] sm:$0xff]
        %v1376 = vld [vmem:[%s1374 + $0x8] sm:$0xff]
        %v1377 = vld [vmem:[%s1374 + $0x10] sm:$0xff]
        %v1378 = vld [vmem:[%s1374 + $0x18] sm:$0xff]
        %v1379 = vld [vmem:[%s1374 + $0x20] sm:$0xff]
        %v1380 = vld [vmem:[%s1374 + $0x28] sm:$0xff]
        %v1381 = vld [vmem:[%s1374 + $0x30] sm:$0xff]
        %v1382 = vld [vmem:[%s1374 + $0x38] sm:$0xff]
        %v1383 = vld [vmem:[%s1374 + $0x40] sm:$0xff]
        %v1384 = vld [vmem:[%s1374 + $0x48] sm:$0xff]
        %v1385 = vld [vmem:[%s1374 + $0x50] sm:$0xff]
        %v1386 = vld [vmem:[%s1374 + $0x58] sm:$0xff]
        %v1387 = vld [vmem:[%s1374 + $0x60] sm:$0xff]
        %v1388 = vld [vmem:[%s1374 + $0x68] sm:$0xff]
        %v1389 = vld [vmem:[%s1374 + $0x70] sm:$0xff]
        %v1390 = vld [vmem:[%s1374 + $0x78] sm:$0xff]
        %v1391 = vld [vmem:[%s1374 + $0x80] sm:$0xff]
        %v1392 = vld [vmem:[%s1374 + $0x88] sm:$0xff]
        %v1393 = vld [vmem:[%s1374 + $0x90] sm:$0xff]
        %v1394 = vld [vmem:[%s1374 + $0x98] sm:$0xff]
        %v1395 = vld [vmem:[%s1374 + $0xa0] sm:$0xff]
        %v1396 = vld [vmem:[%s1374 + $0xa8] sm:$0xff]
        %v1397 = vld [vmem:[%s1374 + $0xb0] sm:$0xff]
        %v1398 = vld [vmem:[%s1374 + $0xb8] sm:$0xff]
        %v1400 = vsel %vm635, %v1342, 0
        %v1403 = vsel %vm635, %v1343, 0
        %v1406 = vsel %vm635, %v1344, 0
        %v1409 = vsel %vm635, %v1345, 0
        %v1412 = vsel %vm635, %v1346, 0
        %v1415 = vsel %vm635, %v1347, 0
        %v1418 = vsel %vm635, %v1348, 0
        %v1421 = vsel %vm635, %v1349, 0
        %v1424 = vsel %vm635, %v1350, 0
        %v1427 = vsel %vm635, %v1351, 0
        %v1430 = vsel %vm635, %v1352, 0
        %v1433 = vsel %vm635, %v1353, 0
        %v1436 = vsel %vm635, %v1354, 0
        %v1439 = vsel %vm635, %v1355, 0
        %v1442 = vsel %vm635, %v1356, 0
        %v1445 = vsel %vm635, %v1357, 0
        %v1448 = vsel %vm635, %v1358, 0
        %v1451 = vsel %vm635, %v1359, 0
        %v1454 = vsel %vm635, %v1360, 0
        %v1457 = vsel %vm635, %v1361, 0
        %v1460 = vsel %vm635, %v1362, 0
        %v1463 = vsel %vm635, %v1363, 0
        %v1466 = vsel %vm635, %v1364, 0
        %v1469 = vsel %vm635, %v1365, 0
        %v1472 = vsel %vm635, %v1366, 0
        %v1475 = vsel %vm635, %v1367, 0
        %v1478 = vsel %vm635, %v1368, 0
        %v1481 = vsel %vm635, %v1369, 0
        %v1484 = vsel %vm635, %v1370, 0
        %v1487 = vsel %vm635, %v1371, 0
        %v1490 = vsel %vm635, %v1372, 0
        %v1493 = vsel %vm635, %v1373, 0
        %1495 = vmatprep.subr.mxu0 %v1376
        %1496 = vmatpush1.msra.mxu0 %v1375
        %1497 = vmatprep.subr.mxu0 %v1378
        %1498 = vmatpush1.msra.mxu0 %v1377
        %1499 = vmatprep.subr.mxu0 %v1380
        %1500 = vmatpush1.msra.mxu0 %v1379
        %1501 = vmatprep.subr.mxu0 %v1382
        %1502 = vmatpush1.msra.mxu0 %v1381
        %1503 = vmatprep.subr.mxu0 %v1384
        %1504 = vmatpush1.msra.mxu0 %v1383
        %1505 = vmatprep.subr.mxu0 %v1386
        %1506 = vmatpush1.msra.mxu0 %v1385
        %1507 = vmatprep.subr.mxu0 %v1388
        %1508 = vmatpush1.msra.mxu0 %v1387
        %1509 = vmatprep.subr.mxu0 %v1390
        %1510 = vmatpush1.msra.mxu0 %v1389
        %1511 = vmatprep.subr.mxu0 %v1392
        %1512 = vmatpush1.msra.mxu0 %v1391
        %1513 = vmatprep.subr.mxu0 %v1394
        %1514 = vmatpush1.msra.mxu0 %v1393
        %1515 = vmatprep.subr.mxu0 %v1396
        %1516 = vmatpush1.msra.mxu0 %v1395
        %1517 = vmatprep.subr.mxu0 %v1398
        %1518 = vmatpush1.msra.mxu0 %v1397
        %1519 = vmatprep.subr.mxu0 0.0
        %1520 = vmatpush1.msra.mxu0 0.0
        %1521 = vmatprep.subr.mxu0 0.0
        %1522 = vmatpush1.msra.mxu0 0.0
        %1523 = vmatprep.subr.mxu0 0.0
        %1524 = vmatpush1.msra.mxu0 0.0
        %1525 = vmatprep.subr.mxu0 0.0
        %1526 = vmatpush1.msra.mxu0 0.0
        %1527 = vmatprep.subr.mxu0 0.0
        %1528 = vmatpush1.msra.mxu0 0.0
        %1529 = vmatprep.subr.mxu0 0.0
        %1530 = vmatpush1.msra.mxu0 0.0
        %1531 = vmatprep.subr.mxu0 0.0
        %1532 = vmatpush1.msra.mxu0 0.0
        %1533 = vmatprep.subr.mxu0 0.0
        %1534 = vmatpush1.msra.mxu0 0.0
        %1535 = vmatprep.subr.mxu0 0.0
        %1536 = vmatpush1.msra.mxu0 0.0
        %1537 = vmatprep.subr.mxu0 0.0
        %1538 = vmatpush1.msra.mxu0 0.0
        %1539 = vmatprep.subr.mxu0 0.0
        %1540 = vmatpush1.msra.mxu0 0.0
        %1541 = vmatprep.subr.mxu0 0.0
        %1542 = vmatpush1.msra.mxu0 0.0
        %1543 = vmatprep.subr.mxu0 0.0
        %1544 = vmatpush1.msra.mxu0 0.0
        %1545 = vmatprep.subr.mxu0 0.0
        %1546 = vmatpush1.msra.mxu0 0.0
        %1547 = vmatprep.subr.mxu0 0.0
        %1548 = vmatpush1.msra.mxu0 0.0
        %1549 = vmatprep.subr.mxu0 0.0
        %1550 = vmatpush1.msra.mxu0 0.0
        %1551 = vmatprep.subr.mxu0 0.0
        %1552 = vmatpush1.msra.mxu0 0.0
        %1553 = vmatprep.subr.mxu0 0.0
        %1554 = vmatpush1.msra.mxu0 0.0
        %1555 = vmatprep.subr.mxu0 0.0
        %1556 = vmatpush1.msra.mxu0 0.0
        %1557 = vmatprep.subr.mxu0 0.0
        %1558 = vmatpush1.msra.mxu0 0.0
        %1559 = vmatprep.mubr.f32.mxu0 0.0
        %1560 = vmatmul.mubr.f32.gmra.mrb[0].mxu0 %v1400
        %v1561 = vpop.f32.mrb[0].mxu0
        %v1562 = vadd.f32 0.0, %v1561
        %v1563 = vpop.f32.mrb[0].mxu0
        %v1564 = vadd.f32 0.0, %v1563
        %1565 = vmatprep.mubr.f32.mxu0 0.0
        %1566 = vmatmul.mubr.f32.gmra.mrb[0].mxu0 %v1403
        %v1567 = vpop.f32.mrb[0].mxu0
        %v1568 = vadd.f32 0.0, %v1567
        %v1569 = vpop.f32.mrb[0].mxu0
        %v1570 = vadd.f32 0.0, %v1569
        %1571 = vmatprep.mubr.f32.mxu0 0.0
        %1572 = vmatmul.mubr.f32.gmra.mrb[0].mxu0 %v1406
        %v1573 = vpop.f32.mrb[0].mxu0
        %v1574 = vadd.f32 0.0, %v1573
        %v1575 = vpop.f32.mrb[0].mxu0
        %v1576 = vadd.f32 0.0, %v1575
        %1577 = vmatprep.mubr.f32.mxu0 0.0
        %1578 = vmatmul.mubr.f32.gmra.mrb[0].mxu0 %v1409
        %v1579 = vpop.f32.mrb[0].mxu0
        %v1580 = vadd.f32 0.0, %v1579
        %v1581 = vpop.f32.mrb[0].mxu0
        %v1582 = vadd.f32 0.0, %v1581
        %1583 = vmatprep.mubr.f32.mxu0 0.0
        %1584 = vmatmul.mubr.f32.gmra.mrb[0].mxu0 %v1412
        %v1585 = vpop.f32.mrb[0].mxu0
        %v1586 = vadd.f32 0.0, %v1585
        %v1587 = vpop.f32.mrb[0].mxu0
        %v1588 = vadd.f32 0.0, %v1587
        %1589 = vmatprep.mubr.f32.mxu0 0.0
        %1590 = vmatmul.mubr.f32.gmra.mrb[0].mxu0 %v1415
        %v1591 = vpop.f32.mrb[0].mxu0
        %v1592 = vadd.f32 0.0, %v1591
        %v1593 = vpop.f32.mrb[0].mxu0
        %v1594 = vadd.f32 0.0, %v1593
        %1595 = vmatprep.mubr.f32.mxu0 0.0
        %1596 = vmatmul.mubr.f32.gmra.mrb[0].mxu0 %v1418
        %v1597 = vpop.f32.mrb[0].mxu0
        %v1598 = vadd.f32 0.0, %v1597
        %v1599 = vpop.f32.mrb[0].mxu0
        %v1600 = vadd.f32 0.0, %v1599
        %1601 = vmatprep.mubr.f32.mxu0 0.0
        %1602 = vmatmul.mubr.f32.gmra.mrb[0].mxu0 %v1421
        %v1603 = vpop.f32.mrb[0].mxu0
        %v1604 = vadd.f32 0.0, %v1603
        %v1605 = vpop.f32.mrb[0].mxu0
        %v1606 = vadd.f32 0.0, %v1605
        %1607 = vmatprep.mubr.f32.mxu0 0.0
        %1608 = vmatmul.mubr.f32.gmra.mrb[0].mxu0 %v1424
        %v1609 = vpop.f32.mrb[0].mxu0
        %v1610 = vadd.f32 0.0, %v1609
        %v1611 = vpop.f32.mrb[0].mxu0
        %v1612 = vadd.f32 0.0, %v1611
        %1613 = vmatprep.mubr.f32.mxu0 0.0
        %1614 = vmatmul.mubr.f32.gmra.mrb[0].mxu0 %v1427
        %v1615 = vpop.f32.mrb[0].mxu0
        %v1616 = vadd.f32 0.0, %v1615
        %v1617 = vpop.f32.mrb[0].mxu0
        %v1618 = vadd.f32 0.0, %v1617
        %1619 = vmatprep.mubr.f32.mxu0 0.0
        %1620 = vmatmul.mubr.f32.gmra.mrb[0].mxu0 %v1430
        %v1621 = vpop.f32.mrb[0].mxu0
        %v1622 = vadd.f32 0.0, %v1621
        %v1623 = vpop.f32.mrb[0].mxu0
        %v1624 = vadd.f32 0.0, %v1623
        %1625 = vmatprep.mubr.f32.mxu0 0.0
        %1626 = vmatmul.mubr.f32.gmra.mrb[0].mxu0 %v1433
        %v1627 = vpop.f32.mrb[0].mxu0
        %v1628 = vadd.f32 0.0, %v1627
        %v1629 = vpop.f32.mrb[0].mxu0
        %v1630 = vadd.f32 0.0, %v1629
        %1631 = vmatprep.mubr.f32.mxu0 0.0
        %1632 = vmatmul.mubr.f32.gmra.mrb[0].mxu0 %v1436
        %v1633 = vpop.f32.mrb[0].mxu0
        %v1634 = vadd.f32 0.0, %v1633
        %v1635 = vpop.f32.mrb[0].mxu0
        %v1636 = vadd.f32 0.0, %v1635
        %1637 = vmatprep.mubr.f32.mxu0 0.0
        %1638 = vmatmul.mubr.f32.gmra.mrb[0].mxu0 %v1439
        %v1639 = vpop.f32.mrb[0].mxu0
        %v1640 = vadd.f32 0.0, %v1639
        %v1641 = vpop.f32.mrb[0].mxu0
        %v1642 = vadd.f32 0.0, %v1641
        %1643 = vmatprep.mubr.f32.mxu0 0.0
        %1644 = vmatmul.mubr.f32.gmra.mrb[0].mxu0 %v1442
        %v1645 = vpop.f32.mrb[0].mxu0
        %v1646 = vadd.f32 0.0, %v1645
        %v1647 = vpop.f32.mrb[0].mxu0
        %v1648 = vadd.f32 0.0, %v1647
        %1649 = vmatprep.mubr.f32.mxu0 0.0
        %1650 = vmatmul.mubr.f32.gmra.mrb[0].mxu0 %v1445
        %v1651 = vpop.f32.mrb[0].mxu0
        %v1652 = vadd.f32 0.0, %v1651
        %v1653 = vpop.f32.mrb[0].mxu0
        %v1654 = vadd.f32 0.0, %v1653
        %1655 = vmatprep.mubr.f32.mxu0 0.0
        %1656 = vmatmul.mubr.f32.gmra.mrb[0].mxu0 %v1448
        %v1657 = vpop.f32.mrb[0].mxu0
        %v1658 = vadd.f32 0.0, %v1657
        %v1659 = vpop.f32.mrb[0].mxu0
        %v1660 = vadd.f32 0.0, %v1659
        %1661 = vmatprep.mubr.f32.mxu0 0.0
        %1662 = vmatmul.mubr.f32.gmra.mrb[0].mxu0 %v1451
        %v1663 = vpop.f32.mrb[0].mxu0
        %v1664 = vadd.f32 0.0, %v1663
        %v1665 = vpop.f32.mrb[0].mxu0
        %v1666 = vadd.f32 0.0, %v1665
        %1667 = vmatprep.mubr.f32.mxu0 0.0
        %1668 = vmatmul.mubr.f32.gmra.mrb[0].mxu0 %v1454
        %v1669 = vpop.f32.mrb[0].mxu0
        %v1670 = vadd.f32 0.0, %v1669
        %v1671 = vpop.f32.mrb[0].mxu0
        %v1672 = vadd.f32 0.0, %v1671
        %1673 = vmatprep.mubr.f32.mxu0 0.0
        %1674 = vmatmul.mubr.f32.gmra.mrb[0].mxu0 %v1457
        %v1675 = vpop.f32.mrb[0].mxu0
        %v1676 = vadd.f32 0.0, %v1675
        %v1677 = vpop.f32.mrb[0].mxu0
        %v1678 = vadd.f32 0.0, %v1677
        %1679 = vmatprep.mubr.f32.mxu0 0.0
        %1680 = vmatmul.mubr.f32.gmra.mrb[0].mxu0 %v1460
        %v1681 = vpop.f32.mrb[0].mxu0
        %v1682 = vadd.f32 0.0, %v1681
        %v1683 = vpop.f32.mrb[0].mxu0
        %v1684 = vadd.f32 0.0, %v1683
        %1685 = vmatprep.mubr.f32.mxu0 0.0
        %1686 = vmatmul.mubr.f32.gmra.mrb[0].mxu0 %v1463
        %v1687 = vpop.f32.mrb[0].mxu0
        %v1688 = vadd.f32 0.0, %v1687
        %v1689 = vpop.f32.mrb[0].mxu0
        %v1690 = vadd.f32 0.0, %v1689
        %1691 = vmatprep.mubr.f32.mxu0 0.0
        %1692 = vmatmul.mubr.f32.gmra.mrb[0].mxu0 %v1466
        %v1693 = vpop.f32.mrb[0].mxu0
        %v1694 = vadd.f32 0.0, %v1693
        %v1695 = vpop.f32.mrb[0].mxu0
        %v1696 = vadd.f32 0.0, %v1695
        %1697 = vmatprep.mubr.f32.mxu0 0.0
        %1698 = vmatmul.mubr.f32.gmra.mrb[0].mxu0 %v1469
        %v1699 = vpop.f32.mrb[0].mxu0
        %v1700 = vadd.f32 0.0, %v1699
        %v1701 = vpop.f32.mrb[0].mxu0
        %v1702 = vadd.f32 0.0, %v1701
        %1703 = vmatprep.mubr.f32.mxu0 0.0
        %1704 = vmatmul.mubr.f32.gmra.mrb[0].mxu0 %v1472
        %v1705 = vpop.f32.mrb[0].mxu0
        %v1706 = vadd.f32 0.0, %v1705
        %v1707 = vpop.f32.mrb[0].mxu0
        %v1708 = vadd.f32 0.0, %v1707
        %1709 = vmatprep.mubr.f32.mxu0 0.0
        %1710 = vmatmul.mubr.f32.gmra.mrb[0].mxu0 %v1475
        %v1711 = vpop.f32.mrb[0].mxu0
        %v1712 = vadd.f32 0.0, %v1711
        %v1713 = vpop.f32.mrb[0].mxu0
        %v1714 = vadd.f32 0.0, %v1713
        %1715 = vmatprep.mubr.f32.mxu0 0.0
        %1716 = vmatmul.mubr.f32.gmra.mrb[0].mxu0 %v1478
        %v1717 = vpop.f32.mrb[0].mxu0
        %v1718 = vadd.f32 0.0, %v1717
        %v1719 = vpop.f32.mrb[0].mxu0
        %v1720 = vadd.f32 0.0, %v1719
        %1721 = vmatprep.mubr.f32.mxu0 0.0
        %1722 = vmatmul.mubr.f32.gmra.mrb[0].mxu0 %v1481
        %v1723 = vpop.f32.mrb[0].mxu0
        %v1724 = vadd.f32 0.0, %v1723
        %v1725 = vpop.f32.mrb[0].mxu0
        %v1726 = vadd.f32 0.0, %v1725
        %1727 = vmatprep.mubr.f32.mxu0 0.0
        %1728 = vmatmul.mubr.f32.gmra.mrb[0].mxu0 %v1484
        %v1729 = vpop.f32.mrb[0].mxu0
        %v1730 = vadd.f32 0.0, %v1729
        %v1731 = vpop.f32.mrb[0].mxu0
        %v1732 = vadd.f32 0.0, %v1731
        %1733 = vmatprep.mubr.f32.mxu0 0.0
        %1734 = vmatmul.mubr.f32.gmra.mrb[0].mxu0 %v1487
        %v1735 = vpop.f32.mrb[0].mxu0
        %v1736 = vadd.f32 0.0, %v1735
        %v1737 = vpop.f32.mrb[0].mxu0
        %v1738 = vadd.f32 0.0, %v1737
        %1739 = vmatprep.mubr.f32.mxu0 0.0
        %1740 = vmatmul.mubr.f32.gmra.mrb[0].mxu0 %v1490
        %v1741 = vpop.f32.mrb[0].mxu0
        %v1742 = vadd.f32 0.0, %v1741
        %v1743 = vpop.f32.mrb[0].mxu0
        %v1744 = vadd.f32 0.0, %v1743
        %1745 = vmatprep.mubr.f32.mxu0 0.0
        %1746 = vmatmul.mubr.f32.gmra.mrb[0].mxu0 %v1493
        %v1747 = vpop.f32.mrb[0].mxu0
        %v1748 = vadd.f32 0.0, %v1747
        %v1749 = vpop.f32.mrb[0].mxu0
        %v1750 = vadd.f32 0.0, %v1749
        %1751 = vdwg.mxu0
        %v1752 = vadd.f32 %v1152, %v1562
        %v1753 = vadd.f32 %v1154, %v1564
        %v1754 = vadd.f32 %v1158, %v1568
        %v1755 = vadd.f32 %v1160, %v1570
        %v1756 = vadd.f32 %v1164, %v1574
        %v1757 = vadd.f32 %v1166, %v1576
        %v1758 = vadd.f32 %v1170, %v1580
        %v1759 = vadd.f32 %v1172, %v1582
        %v1760 = vadd.f32 %v1176, %v1586
        %v1761 = vadd.f32 %v1178, %v1588
        %v1762 = vadd.f32 %v1182, %v1592
        %v1763 = vadd.f32 %v1184, %v1594
        %v1764 = vadd.f32 %v1188, %v1598
        %v1765 = vadd.f32 %v1190, %v1600
        %v1766 = vadd.f32 %v1194, %v1604
        %v1767 = vadd.f32 %v1196, %v1606
        %v1768 = vadd.f32 %v1200, %v1610
        %v1769 = vadd.f32 %v1202, %v1612
        %v1770 = vadd.f32 %v1206, %v1616
        %v1771 = vadd.f32 %v1208, %v1618
        %v1772 = vadd.f32 %v1212, %v1622
        %v1773 = vadd.f32 %v1214, %v1624
        %v1774 = vadd.f32 %v1218, %v1628
        %v1775 = vadd.f32 %v1220, %v1630
        %v1776 = vadd.f32 %v1224, %v1634
        %v1777 = vadd.f32 %v1226, %v1636
        %v1778 = vadd.f32 %v1230, %v1640
        %v1779 = vadd.f32 %v1232, %v1642
        %v1780 = vadd.f32 %v1236, %v1646
        %v1781 = vadd.f32 %v1238, %v1648
        %v1782 = vadd.f32 %v1242, %v1652
        %v1783 = vadd.f32 %v1244, %v1654
        %v1784 = vadd.f32 %v1248, %v1658
        %v1785 = vadd.f32 %v1250, %v1660
        %v1786 = vadd.f32 %v1254, %v1664
        %v1787 = vadd.f32 %v1256, %v1666
        %v1788 = vadd.f32 %v1260, %v1670
        %v1789 = vadd.f32 %v1262, %v1672
        %v1790 = vadd.f32 %v1266, %v1676
        %v1791 = vadd.f32 %v1268, %v1678
        %v1792 = vadd.f32 %v1272, %v1682
        %v1793 = vadd.f32 %v1274, %v1684
        %v1794 = vadd.f32 %v1278, %v1688
        %v1795 = vadd.f32 %v1280, %v1690
        %v1796 = vadd.f32 %v1284, %v1694
        %v1797 = vadd.f32 %v1286, %v1696
        %v1798 = vadd.f32 %v1290, %v1700
        %v1799 = vadd.f32 %v1292, %v1702
        %v1800 = vadd.f32 %v1296, %v1706
        %v1801 = vadd.f32 %v1298, %v1708
        %v1802 = vadd.f32 %v1302, %v1712
        %v1803 = vadd.f32 %v1304, %v1714
        %v1804 = vadd.f32 %v1308, %v1718
        %v1805 = vadd.f32 %v1310, %v1720
        %v1806 = vadd.f32 %v1314, %v1724
        %v1807 = vadd.f32 %v1316, %v1726
        %v1808 = vadd.f32 %v1320, %v1730
        %v1809 = vadd.f32 %v1322, %v1732
        %v1810 = vadd.f32 %v1326, %v1736
        %v1811 = vadd.f32 %v1328, %v1738
        %v1812 = vadd.f32 %v1332, %v1742
        %v1813 = vadd.f32 %v1334, %v1744
        %v1814 = vadd.f32 %v1338, %v1748
        %v1815 = vadd.f32 %v1340, %v1750
        %v1816 = vld [vmem:[%s520 + $0x3] sm:$0xff]
        %v1817 = vld [vmem:[%s520 + $0xb] sm:$0xff]
        %v1818 = vld [vmem:[%s520 + $0x13] sm:$0xff]
        %v1819 = vld [vmem:[%s520 + $0x1b] sm:$0xff]
        %v1820 = vld [vmem:[%s520 + $0x23] sm:$0xff]
        %v1821 = vld [vmem:[%s520 + $0x2b] sm:$0xff]
        %v1822 = vld [vmem:[%s520 + $0x33] sm:$0xff]
        %v1823 = vld [vmem:[%s520 + $0x3b] sm:$0xff]
        %v1824 = vld [vmem:[%s520 + $0x43] sm:$0xff]
        %v1825 = vld [vmem:[%s520 + $0x4b] sm:$0xff]
        %v1826 = vld [vmem:[%s520 + $0x53] sm:$0xff]
        %v1827 = vld [vmem:[%s520 + $0x5b] sm:$0xff]
        %v1828 = vld [vmem:[%s520 + $0x63] sm:$0xff]
        %v1829 = vld [vmem:[%s520 + $0x6b] sm:$0xff]
        %v1830 = vld [vmem:[%s520 + $0x73] sm:$0xff]
        %v1831 = vld [vmem:[%s520 + $0x7b] sm:$0xff]
        %v1832 = vld [vmem:[%s520 + $0x83] sm:$0xff]
        %v1833 = vld [vmem:[%s520 + $0x8b] sm:$0xff]
        %v1834 = vld [vmem:[%s520 + $0x93] sm:$0xff]
        %v1835 = vld [vmem:[%s520 + $0x9b] sm:$0xff]
        %v1836 = vld [vmem:[%s520 + $0xa3] sm:$0xff]
        %v1837 = vld [vmem:[%s520 + $0xab] sm:$0xff]
        %v1838 = vld [vmem:[%s520 + $0xb3] sm:$0xff]
        %v1839 = vld [vmem:[%s520 + $0xbb] sm:$0xff]
        %v1840 = vld [vmem:[%s520 + $0xc3] sm:$0xff]
        %v1841 = vld [vmem:[%s520 + $0xcb] sm:$0xff]
        %v1842 = vld [vmem:[%s520 + $0xd3] sm:$0xff]
        %v1843 = vld [vmem:[%s520 + $0xdb] sm:$0xff]
        %v1844 = vld [vmem:[%s520 + $0xe3] sm:$0xff]
        %v1845 = vld [vmem:[%s520 + $0xeb] sm:$0xff]
        %v1846 = vld [vmem:[%s520 + $0xf3] sm:$0xff]
        %v1847 = vld [vmem:[%s520 + $0xfb] sm:$0xf]
        %s1848 = scalar_lea.vmem %s1, 576
        %v1849 = vld [vmem:[%s1848] sm:$0xff]
        %v1850 = vld [vmem:[%s1848 + $0x8] sm:$0xff]
        %v1851 = vld [vmem:[%s1848 + $0x10] sm:$0xff]
        %v1852 = vld [vmem:[%s1848 + $0x18] sm:$0xff]
        %v1853 = vld [vmem:[%s1848 + $0x20] sm:$0xff]
        %v1854 = vld [vmem:[%s1848 + $0x28] sm:$0xff]
        %v1855 = vld [vmem:[%s1848 + $0x30] sm:$0xff]
        %v1856 = vld [vmem:[%s1848 + $0x38] sm:$0xff]
        %v1857 = vld [vmem:[%s1848 + $0x40] sm:$0xff]
        %v1858 = vld [vmem:[%s1848 + $0x48] sm:$0xff]
        %v1859 = vld [vmem:[%s1848 + $0x50] sm:$0xff]
        %v1860 = vld [vmem:[%s1848 + $0x58] sm:$0xff]
        %v1861 = vld [vmem:[%s1848 + $0x60] sm:$0xff]
        %v1862 = vld [vmem:[%s1848 + $0x68] sm:$0xff]
        %v1863 = vld [vmem:[%s1848 + $0x70] sm:$0xff]
        %v1864 = vld [vmem:[%s1848 + $0x78] sm:$0xff]
        %v1865 = vld [vmem:[%s1848 + $0x80] sm:$0xff]
        %v1866 = vld [vmem:[%s1848 + $0x88] sm:$0xff]
        %v1867 = vld [vmem:[%s1848 + $0x90] sm:$0xff]
        %v1868 = vld [vmem:[%s1848 + $0x98] sm:$0xff]
        %v1869 = vld [vmem:[%s1848 + $0xa0] sm:$0xff]
        %v1870 = vld [vmem:[%s1848 + $0xa8] sm:$0xff]
        %v1871 = vld [vmem:[%s1848 + $0xb0] sm:$0xff]
        %v1872 = vld [vmem:[%s1848 + $0xb8] sm:$0xff]
        %v1874 = vsel %vm635, %v1816, 0
        %v1877 = vsel %vm635, %v1817, 0
        %v1880 = vsel %vm635, %v1818, 0
        %v1883 = vsel %vm635, %v1819, 0
        %v1886 = vsel %vm635, %v1820, 0
        %v1889 = vsel %vm635, %v1821, 0
        %v1892 = vsel %vm635, %v1822, 0
        %v1895 = vsel %vm635, %v1823, 0
        %v1898 = vsel %vm635, %v1824, 0
        %v1901 = vsel %vm635, %v1825, 0
        %v1904 = vsel %vm635, %v1826, 0
        %v1907 = vsel %vm635, %v1827, 0
        %v1910 = vsel %vm635, %v1828, 0
        %v1913 = vsel %vm635, %v1829, 0
        %v1916 = vsel %vm635, %v1830, 0
        %v1919 = vsel %vm635, %v1831, 0
        %v1922 = vsel %vm635, %v1832, 0
        %v1925 = vsel %vm635, %v1833, 0
        %v1928 = vsel %vm635, %v1834, 0
        %v1931 = vsel %vm635, %v1835, 0
        %v1934 = vsel %vm635, %v1836, 0
        %v1937 = vsel %vm635, %v1837, 0
        %v1940 = vsel %vm635, %v1838, 0
        %v1943 = vsel %vm635, %v1839, 0
        %v1946 = vsel %vm635, %v1840, 0
        %v1949 = vsel %vm635, %v1841, 0
        %v1952 = vsel %vm635, %v1842, 0
        %v1955 = vsel %vm635, %v1843, 0
        %v1958 = vsel %vm635, %v1844, 0
        %v1961 = vsel %vm635, %v1845, 0
        %v1964 = vsel %vm635, %v1846, 0
        %v1967 = vsel %vm635, %v1847, 0
        %1969 = vmatprep.subr.mxu0 %v1850
        %1970 = vmatpush1.msra.mxu0 %v1849
        %1971 = vmatprep.subr.mxu0 %v1852
        %1972 = vmatpush1.msra.mxu0 %v1851
        %1973 = vmatprep.subr.mxu0 %v1854
        %1974 = vmatpush1.msra.mxu0 %v1853
        %1975 = vmatprep.subr.mxu0 %v1856
        %1976 = vmatpush1.msra.mxu0 %v1855
        %1977 = vmatprep.subr.mxu0 %v1858
        %1978 = vmatpush1.msra.mxu0 %v1857
        %1979 = vmatprep.subr.mxu0 %v1860
        %1980 = vmatpush1.msra.mxu0 %v1859
        %1981 = vmatprep.subr.mxu0 %v1862
        %1982 = vmatpush1.msra.mxu0 %v1861
        %1983 = vmatprep.subr.mxu0 %v1864
        %1984 = vmatpush1.msra.mxu0 %v1863
        %1985 = vmatprep.subr.mxu0 %v1866
        %1986 = vmatpush1.msra.mxu0 %v1865
        %1987 = vmatprep.subr.mxu0 %v1868
        %1988 = vmatpush1.msra.mxu0 %v1867
        %1989 = vmatprep.subr.mxu0 %v1870
        %1990 = vmatpush1.msra.mxu0 %v1869
        %1991 = vmatprep.subr.mxu0 %v1872
        %1992 = vmatpush1.msra.mxu0 %v1871
        %1993 = vmatprep.subr.mxu0 0.0
        %1994 = vmatpush1.msra.mxu0 0.0
        %1995 = vmatprep.subr.mxu0 0.0
        %1996 = vmatpush1.msra.mxu0 0.0
        %1997 = vmatprep.subr.mxu0 0.0
        %1998 = vmatpush1.msra.mxu0 0.0
        %1999 = vmatprep.subr.mxu0 0.0
        %2000 = vmatpush1.msra.mxu0 0.0
        %2001 = vmatprep.subr.mxu0 0.0
        %2002 = vmatpush1.msra.mxu0 0.0
        %2003 = vmatprep.subr.mxu0 0.0
        %2004 = vmatpush1.msra.mxu0 0.0
        %2005 = vmatprep.subr.mxu0 0.0
        %2006 = vmatpush1.msra.mxu0 0.0
        %2007 = vmatprep.subr.mxu0 0.0
        %2008 = vmatpush1.msra.mxu0 0.0
        %2009 = vmatprep.subr.mxu0 0.0
        %2010 = vmatpush1.msra.mxu0 0.0
        %2011 = vmatprep.subr.mxu0 0.0
        %2012 = vmatpush1.msra.mxu0 0.0
        %2013 = vmatprep.subr.mxu0 0.0
        %2014 = vmatpush1.msra.mxu0 0.0
        %2015 = vmatprep.subr.mxu0 0.0
        %2016 = vmatpush1.msra.mxu0 0.0
        %2017 = vmatprep.subr.mxu0 0.0
        %2018 = vmatpush1.msra.mxu0 0.0
        %2019 = vmatprep.subr.mxu0 0.0
        %2020 = vmatpush1.msra.mxu0 0.0
        %2021 = vmatprep.subr.mxu0 0.0
        %2022 = vmatpush1.msra.mxu0 0.0
        %2023 = vmatprep.subr.mxu0 0.0
        %2024 = vmatpush1.msra.mxu0 0.0
        %2025 = vmatprep.subr.mxu0 0.0
        %2026 = vmatpush1.msra.mxu0 0.0
        %2027 = vmatprep.subr.mxu0 0.0
        %2028 = vmatpush1.msra.mxu0 0.0
        %2029 = vmatprep.subr.mxu0 0.0
        %2030 = vmatpush1.msra.mxu0 0.0
        %2031 = vmatprep.subr.mxu0 0.0
        %2032 = vmatpush1.msra.mxu0 0.0
        %2033 = vmatprep.mubr.f32.mxu0 0.0
        %2034 = vmatmul.mubr.f32.gmra.mrb[0].mxu0 %v1874
        %v2035 = vpop.f32.mrb[0].mxu0
        %v2036 = vadd.f32 0.0, %v2035
        %v2037 = vpop.f32.mrb[0].mxu0
        %v2038 = vadd.f32 0.0, %v2037
        %2039 = vmatprep.mubr.f32.mxu0 0.0
        %2040 = vmatmul.mubr.f32.gmra.mrb[0].mxu0 %v1877
        %v2041 = vpop.f32.mrb[0].mxu0
        %v2042 = vadd.f32 0.0, %v2041
        %v2043 = vpop.f32.mrb[0].mxu0
        %v2044 = vadd.f32 0.0, %v2043
        %2045 = vmatprep.mubr.f32.mxu0 0.0
        %2046 = vmatmul.mubr.f32.gmra.mrb[0].mxu0 %v1880
        %v2047 = vpop.f32.mrb[0].mxu0
        %v2048 = vadd.f32 0.0, %v2047
        %v2049 = vpop.f32.mrb[0].mxu0
        %v2050 = vadd.f32 0.0, %v2049
        %2051 = vmatprep.mubr.f32.mxu0 0.0
        %2052 = vmatmul.mubr.f32.gmra.mrb[0].mxu0 %v1883
        %v2053 = vpop.f32.mrb[0].mxu0
        %v2054 = vadd.f32 0.0, %v2053
        %v2055 = vpop.f32.mrb[0].mxu0
        %v2056 = vadd.f32 0.0, %v2055
        %2057 = vmatprep.mubr.f32.mxu0 0.0
        %2058 = vmatmul.mubr.f32.gmra.mrb[0].mxu0 %v1886
        %v2059 = vpop.f32.mrb[0].mxu0
        %v2060 = vadd.f32 0.0, %v2059
        %v2061 = vpop.f32.mrb[0].mxu0
        %v2062 = vadd.f32 0.0, %v2061
        %2063 = vmatprep.mubr.f32.mxu0 0.0
        %2064 = vmatmul.mubr.f32.gmra.mrb[0].mxu0 %v1889
        %v2065 = vpop.f32.mrb[0].mxu0
        %v2066 = vadd.f32 0.0, %v2065
        %v2067 = vpop.f32.mrb[0].mxu0
        %v2068 = vadd.f32 0.0, %v2067
        %2069 = vmatprep.mubr.f32.mxu0 0.0
        %2070 = vmatmul.mubr.f32.gmra.mrb[0].mxu0 %v1892
        %v2071 = vpop.f32.mrb[0].mxu0
        %v2072 = vadd.f32 0.0, %v2071
        %v2073 = vpop.f32.mrb[0].mxu0
        %v2074 = vadd.f32 0.0, %v2073
        %2075 = vmatprep.mubr.f32.mxu0 0.0
        %2076 = vmatmul.mubr.f32.gmra.mrb[0].mxu0 %v1895
        %v2077 = vpop.f32.mrb[0].mxu0
        %v2078 = vadd.f32 0.0, %v2077
        %v2079 = vpop.f32.mrb[0].mxu0
        %v2080 = vadd.f32 0.0, %v2079
        %2081 = vmatprep.mubr.f32.mxu0 0.0
        %2082 = vmatmul.mubr.f32.gmra.mrb[0].mxu0 %v1898
        %v2083 = vpop.f32.mrb[0].mxu0
        %v2084 = vadd.f32 0.0, %v2083
        %v2085 = vpop.f32.mrb[0].mxu0
        %v2086 = vadd.f32 0.0, %v2085
        %2087 = vmatprep.mubr.f32.mxu0 0.0
        %2088 = vmatmul.mubr.f32.gmra.mrb[0].mxu0 %v1901
        %v2089 = vpop.f32.mrb[0].mxu0
        %v2090 = vadd.f32 0.0, %v2089
        %v2091 = vpop.f32.mrb[0].mxu0
        %v2092 = vadd.f32 0.0, %v2091
        %2093 = vmatprep.mubr.f32.mxu0 0.0
        %2094 = vmatmul.mubr.f32.gmra.mrb[0].mxu0 %v1904
        %v2095 = vpop.f32.mrb[0].mxu0
        %v2096 = vadd.f32 0.0, %v2095
        %v2097 = vpop.f32.mrb[0].mxu0
        %v2098 = vadd.f32 0.0, %v2097
        %2099 = vmatprep.mubr.f32.mxu0 0.0
        %2100 = vmatmul.mubr.f32.gmra.mrb[0].mxu0 %v1907
        %v2101 = vpop.f32.mrb[0].mxu0
        %v2102 = vadd.f32 0.0, %v2101
        %v2103 = vpop.f32.mrb[0].mxu0
        %v2104 = vadd.f32 0.0, %v2103
        %2105 = vmatprep.mubr.f32.mxu0 0.0
        %2106 = vmatmul.mubr.f32.gmra.mrb[0].mxu0 %v1910
        %v2107 = vpop.f32.mrb[0].mxu0
        %v2108 = vadd.f32 0.0, %v2107
        %v2109 = vpop.f32.mrb[0].mxu0
        %v2110 = vadd.f32 0.0, %v2109
        %2111 = vmatprep.mubr.f32.mxu0 0.0
        %2112 = vmatmul.mubr.f32.gmra.mrb[0].mxu0 %v1913
        %v2113 = vpop.f32.mrb[0].mxu0
        %v2114 = vadd.f32 0.0, %v2113
        %v2115 = vpop.f32.mrb[0].mxu0
        %v2116 = vadd.f32 0.0, %v2115
        %2117 = vmatprep.mubr.f32.mxu0 0.0
        %2118 = vmatmul.mubr.f32.gmra.mrb[0].mxu0 %v1916
        %v2119 = vpop.f32.mrb[0].mxu0
        %v2120 = vadd.f32 0.0, %v2119
        %v2121 = vpop.f32.mrb[0].mxu0
        %v2122 = vadd.f32 0.0, %v2121
        %2123 = vmatprep.mubr.f32.mxu0 0.0
        %2124 = vmatmul.mubr.f32.gmra.mrb[0].mxu0 %v1919
        %v2125 = vpop.f32.mrb[0].mxu0
        %v2126 = vadd.f32 0.0, %v2125
        %v2127 = vpop.f32.mrb[0].mxu0
        %v2128 = vadd.f32 0.0, %v2127
        %2129 = vmatprep.mubr.f32.mxu0 0.0
        %2130 = vmatmul.mubr.f32.gmra.mrb[0].mxu0 %v1922
        %v2131 = vpop.f32.mrb[0].mxu0
        %v2132 = vadd.f32 0.0, %v2131
        %v2133 = vpop.f32.mrb[0].mxu0
        %v2134 = vadd.f32 0.0, %v2133
        %2135 = vmatprep.mubr.f32.mxu0 0.0
        %2136 = vmatmul.mubr.f32.gmra.mrb[0].mxu0 %v1925
        %v2137 = vpop.f32.mrb[0].mxu0
        %v2138 = vadd.f32 0.0, %v2137
        %v2139 = vpop.f32.mrb[0].mxu0
        %v2140 = vadd.f32 0.0, %v2139
        %2141 = vmatprep.mubr.f32.mxu0 0.0
        %2142 = vmatmul.mubr.f32.gmra.mrb[0].mxu0 %v1928
        %v2143 = vpop.f32.mrb[0].mxu0
        %v2144 = vadd.f32 0.0, %v2143
        %v2145 = vpop.f32.mrb[0].mxu0
        %v2146 = vadd.f32 0.0, %v2145
        %2147 = vmatprep.mubr.f32.mxu0 0.0
        %2148 = vmatmul.mubr.f32.gmra.mrb[0].mxu0 %v1931
        %v2149 = vpop.f32.mrb[0].mxu0
        %v2150 = vadd.f32 0.0, %v2149
        %v2151 = vpop.f32.mrb[0].mxu0
        %v2152 = vadd.f32 0.0, %v2151
        %2153 = vmatprep.mubr.f32.mxu0 0.0
        %2154 = vmatmul.mubr.f32.gmra.mrb[0].mxu0 %v1934
        %v2155 = vpop.f32.mrb[0].mxu0
        %v2156 = vadd.f32 0.0, %v2155
        %v2157 = vpop.f32.mrb[0].mxu0
        %v2158 = vadd.f32 0.0, %v2157
        %2159 = vmatprep.mubr.f32.mxu0 0.0
        %2160 = vmatmul.mubr.f32.gmra.mrb[0].mxu0 %v1937
        %v2161 = vpop.f32.mrb[0].mxu0
        %v2162 = vadd.f32 0.0, %v2161
        %v2163 = vpop.f32.mrb[0].mxu0
        %v2164 = vadd.f32 0.0, %v2163
        %2165 = vmatprep.mubr.f32.mxu0 0.0
        %2166 = vmatmul.mubr.f32.gmra.mrb[0].mxu0 %v1940
        %v2167 = vpop.f32.mrb[0].mxu0
        %v2168 = vadd.f32 0.0, %v2167
        %v2169 = vpop.f32.mrb[0].mxu0
        %v2170 = vadd.f32 0.0, %v2169
        %2171 = vmatprep.mubr.f32.mxu0 0.0
        %2172 = vmatmul.mubr.f32.gmra.mrb[0].mxu0 %v1943
        %v2173 = vpop.f32.mrb[0].mxu0
        %v2174 = vadd.f32 0.0, %v2173
        %v2175 = vpop.f32.mrb[0].mxu0
        %v2176 = vadd.f32 0.0, %v2175
        %2177 = vmatprep.mubr.f32.mxu0 0.0
        %2178 = vmatmul.mubr.f32.gmra.mrb[0].mxu0 %v1946
        %v2179 = vpop.f32.mrb[0].mxu0
        %v2180 = vadd.f32 0.0, %v2179
        %v2181 = vpop.f32.mrb[0].mxu0
        %v2182 = vadd.f32 0.0, %v2181
        %2183 = vmatprep.mubr.f32.mxu0 0.0
        %2184 = vmatmul.mubr.f32.gmra.mrb[0].mxu0 %v1949
        %v2185 = vpop.f32.mrb[0].mxu0
        %v2186 = vadd.f32 0.0, %v2185
        %v2187 = vpop.f32.mrb[0].mxu0
        %v2188 = vadd.f32 0.0, %v2187
        %2189 = vmatprep.mubr.f32.mxu0 0.0
        %2190 = vmatmul.mubr.f32.gmra.mrb[0].mxu0 %v1952
        %v2191 = vpop.f32.mrb[0].mxu0
        %v2192 = vadd.f32 0.0, %v2191
        %v2193 = vpop.f32.mrb[0].mxu0
        %v2194 = vadd.f32 0.0, %v2193
        %2195 = vmatprep.mubr.f32.mxu0 0.0
        %2196 = vmatmul.mubr.f32.gmra.mrb[0].mxu0 %v1955
        %v2197 = vpop.f32.mrb[0].mxu0
        %v2198 = vadd.f32 0.0, %v2197
        %v2199 = vpop.f32.mrb[0].mxu0
        %v2200 = vadd.f32 0.0, %v2199
        %2201 = vmatprep.mubr.f32.mxu0 0.0
        %2202 = vmatmul.mubr.f32.gmra.mrb[0].mxu0 %v1958
        %v2203 = vpop.f32.mrb[0].mxu0
        %v2204 = vadd.f32 0.0, %v2203
        %v2205 = vpop.f32.mrb[0].mxu0
        %v2206 = vadd.f32 0.0, %v2205
        %2207 = vmatprep.mubr.f32.mxu0 0.0
        %2208 = vmatmul.mubr.f32.gmra.mrb[0].mxu0 %v1961
        %v2209 = vpop.f32.mrb[0].mxu0
        %v2210 = vadd.f32 0.0, %v2209
        %v2211 = vpop.f32.mrb[0].mxu0
        %v2212 = vadd.f32 0.0, %v2211
        %2213 = vmatprep.mubr.f32.mxu0 0.0
        %2214 = vmatmul.mubr.f32.gmra.mrb[0].mxu0 %v1964
        %v2215 = vpop.f32.mrb[0].mxu0
        %v2216 = vadd.f32 0.0, %v2215
        %v2217 = vpop.f32.mrb[0].mxu0
        %v2218 = vadd.f32 0.0, %v2217
        %2219 = vmatprep.mubr.f32.mxu0 0.0
        %2220 = vmatmul.mubr.f32.gmra.mrb[0].mxu0 %v1967
        %v2221 = vpop.f32.mrb[0].mxu0
        %v2222 = vadd.f32 0.0, %v2221
        %v2223 = vpop.f32.mrb[0].mxu0
        %v2224 = vadd.f32 0.0, %v2223
        %2225 = vdwg.mxu0
        %v2226 = vadd.f32 %v1752, %v2036
        %v2227 = vadd.f32 %v1753, %v2038
        %v2228 = vadd.f32 %v1754, %v2042
        %v2229 = vadd.f32 %v1755, %v2044
        %v2230 = vadd.f32 %v1756, %v2048
        %v2231 = vadd.f32 %v1757, %v2050
        %v2232 = vadd.f32 %v1758, %v2054
        %v2233 = vadd.f32 %v1759, %v2056
        %v2234 = vadd.f32 %v1760, %v2060
        %v2235 = vadd.f32 %v1761, %v2062
        %v2236 = vadd.f32 %v1762, %v2066
        %v2237 = vadd.f32 %v1763, %v2068
        %v2238 = vadd.f32 %v1764, %v2072
        %v2239 = vadd.f32 %v1765, %v2074
        %v2240 = vadd.f32 %v1766, %v2078
        %v2241 = vadd.f32 %v1767, %v2080
        %v2242 = vadd.f32 %v1768, %v2084
        %v2243 = vadd.f32 %v1769, %v2086
        %v2244 = vadd.f32 %v1770, %v2090
        %v2245 = vadd.f32 %v1771, %v2092
        %v2246 = vadd.f32 %v1772, %v2096
        %v2247 = vadd.f32 %v1773, %v2098
        %v2248 = vadd.f32 %v1774, %v2102
        %v2249 = vadd.f32 %v1775, %v2104
        %v2250 = vadd.f32 %v1776, %v2108
        %v2251 = vadd.f32 %v1777, %v2110
        %v2252 = vadd.f32 %v1778, %v2114
        %v2253 = vadd.f32 %v1779, %v2116
        %v2254 = vadd.f32 %v1780, %v2120
        %v2255 = vadd.f32 %v1781, %v2122
        %v2256 = vadd.f32 %v1782, %v2126
        %v2257 = vadd.f32 %v1783, %v2128
        %v2258 = vadd.f32 %v1784, %v2132
        %v2259 = vadd.f32 %v1785, %v2134
        %v2260 = vadd.f32 %v1786, %v2138
        %v2261 = vadd.f32 %v1787, %v2140
        %v2262 = vadd.f32 %v1788, %v2144
        %v2263 = vadd.f32 %v1789, %v2146
        %v2264 = vadd.f32 %v1790, %v2150
        %v2265 = vadd.f32 %v1791, %v2152
        %v2266 = vadd.f32 %v1792, %v2156
        %v2267 = vadd.f32 %v1793, %v2158
        %v2268 = vadd.f32 %v1794, %v2162
        %v2269 = vadd.f32 %v1795, %v2164
        %v2270 = vadd.f32 %v1796, %v2168
        %v2271 = vadd.f32 %v1797, %v2170
        %v2272 = vadd.f32 %v1798, %v2174
        %v2273 = vadd.f32 %v1799, %v2176
        %v2274 = vadd.f32 %v1800, %v2180
        %v2275 = vadd.f32 %v1801, %v2182
        %v2276 = vadd.f32 %v1802, %v2186
        %v2277 = vadd.f32 %v1803, %v2188
        %v2278 = vadd.f32 %v1804, %v2192
        %v2279 = vadd.f32 %v1805, %v2194
        %v2280 = vadd.f32 %v1806, %v2198
        %v2281 = vadd.f32 %v1807, %v2200
        %v2282 = vadd.f32 %v1808, %v2204
        %v2283 = vadd.f32 %v1809, %v2206
        %v2284 = vadd.f32 %v1810, %v2210
        %v2285 = vadd.f32 %v1811, %v2212
        %v2286 = vadd.f32 %v1812, %v2216
        %v2287 = vadd.f32 %v1813, %v2218
        %v2288 = vadd.f32 %v1814, %v2222
        %v2289 = vadd.f32 %v1815, %v2224
        %v2290 = vld [vmem:[%s520 + $0x4] sm:$0xff]
        %v2291 = vld [vmem:[%s520 + $0xc] sm:$0xff]
        %v2292 = vld [vmem:[%s520 + $0x14] sm:$0xff]
        %v2293 = vld [vmem:[%s520 + $0x1c] sm:$0xff]
        %v2294 = vld [vmem:[%s520 + $0x24] sm:$0xff]
        %v2295 = vld [vmem:[%s520 + $0x2c] sm:$0xff]
        %v2296 = vld [vmem:[%s520 + $0x34] sm:$0xff]
        %v2297 = vld [vmem:[%s520 + $0x3c] sm:$0xff]
        %v2298 = vld [vmem:[%s520 + $0x44] sm:$0xff]
        %v2299 = vld [vmem:[%s520 + $0x4c] sm:$0xff]
        %v2300 = vld [vmem:[%s520 + $0x54] sm:$0xff]
        %v2301 = vld [vmem:[%s520 + $0x5c] sm:$0xff]
        %v2302 = vld [vmem:[%s520 + $0x64] sm:$0xff]
        %v2303 = vld [vmem:[%s520 + $0x6c] sm:$0xff]
        %v2304 = vld [vmem:[%s520 + $0x74] sm:$0xff]
        %v2305 = vld [vmem:[%s520 + $0x7c] sm:$0xff]
        %v2306 = vld [vmem:[%s520 + $0x84] sm:$0xff]
        %v2307 = vld [vmem:[%s520 + $0x8c] sm:$0xff]
        %v2308 = vld [vmem:[%s520 + $0x94] sm:$0xff]
        %v2309 = vld [vmem:[%s520 + $0x9c] sm:$0xff]
        %v2310 = vld [vmem:[%s520 + $0xa4] sm:$0xff]
        %v2311 = vld [vmem:[%s520 + $0xac] sm:$0xff]
        %v2312 = vld [vmem:[%s520 + $0xb4] sm:$0xff]
        %v2313 = vld [vmem:[%s520 + $0xbc] sm:$0xff]
        %v2314 = vld [vmem:[%s520 + $0xc4] sm:$0xff]
        %v2315 = vld [vmem:[%s520 + $0xcc] sm:$0xff]
        %v2316 = vld [vmem:[%s520 + $0xd4] sm:$0xff]
        %v2317 = vld [vmem:[%s520 + $0xdc] sm:$0xff]
        %v2318 = vld [vmem:[%s520 + $0xe4] sm:$0xff]
        %v2319 = vld [vmem:[%s520 + $0xec] sm:$0xff]
        %v2320 = vld [vmem:[%s520 + $0xf4] sm:$0xff]
        %v2321 = vld [vmem:[%s520 + $0xfc] sm:$0xf]
        %s2322 = scalar_lea.vmem %s1, 768
        %v2323 = vld [vmem:[%s2322] sm:$0xff]
        %v2324 = vld [vmem:[%s2322 + $0x8] sm:$0xff]
        %v2325 = vld [vmem:[%s2322 + $0x10] sm:$0xff]
        %v2326 = vld [vmem:[%s2322 + $0x18] sm:$0xff]
        %v2327 = vld [vmem:[%s2322 + $0x20] sm:$0xff]
        %v2328 = vld [vmem:[%s2322 + $0x28] sm:$0xff]
        %v2329 = vld [vmem:[%s2322 + $0x30] sm:$0xff]
        %v2330 = vld [vmem:[%s2322 + $0x38] sm:$0xff]
        %v2331 = vld [vmem:[%s2322 + $0x40] sm:$0xff]
        %v2332 = vld [vmem:[%s2322 + $0x48] sm:$0xff]
        %v2333 = vld [vmem:[%s2322 + $0x50] sm:$0xff]
        %v2334 = vld [vmem:[%s2322 + $0x58] sm:$0xff]
        %v2335 = vld [vmem:[%s2322 + $0x60] sm:$0xff]
        %v2336 = vld [vmem:[%s2322 + $0x68] sm:$0xff]
        %v2337 = vld [vmem:[%s2322 + $0x70] sm:$0xff]
        %v2338 = vld [vmem:[%s2322 + $0x78] sm:$0xff]
        %v2339 = vld [vmem:[%s2322 + $0x80] sm:$0xff]
        %v2340 = vld [vmem:[%s2322 + $0x88] sm:$0xff]
        %v2341 = vld [vmem:[%s2322 + $0x90] sm:$0xff]
        %v2342 = vld [vmem:[%s2322 + $0x98] sm:$0xff]
        %v2343 = vld [vmem:[%s2322 + $0xa0] sm:$0xff]
        %v2344 = vld [vmem:[%s2322 + $0xa8] sm:$0xff]
        %v2345 = vld [vmem:[%s2322 + $0xb0] sm:$0xff]
        %v2346 = vld [vmem:[%s2322 + $0xb8] sm:$0xff]
        %v2348 = vsel %vm635, %v2290, 0
        %v2351 = vsel %vm635, %v2291, 0
        %v2354 = vsel %vm635, %v2292, 0
        %v2357 = vsel %vm635, %v2293, 0
        %v2360 = vsel %vm635, %v2294, 0
        %v2363 = vsel %vm635, %v2295, 0
        %v2366 = vsel %vm635, %v2296, 0
        %v2369 = vsel %vm635, %v2297, 0
        %v2372 = vsel %vm635, %v2298, 0
        %v2375 = vsel %vm635, %v2299, 0
        %v2378 = vsel %vm635, %v2300, 0
        %v2381 = vsel %vm635, %v2301, 0
        %v2384 = vsel %vm635, %v2302, 0
        %v2387 = vsel %vm635, %v2303, 0
        %v2390 = vsel %vm635, %v2304, 0
        %v2393 = vsel %vm635, %v2305, 0
        %v2396 = vsel %vm635, %v2306, 0
        %v2399 = vsel %vm635, %v2307, 0
        %v2402 = vsel %vm635, %v2308, 0
        %v2405 = vsel %vm635, %v2309, 0
        %v2408 = vsel %vm635, %v2310, 0
        %v2411 = vsel %vm635, %v2311, 0
        %v2414 = vsel %vm635, %v2312, 0
        %v2417 = vsel %vm635, %v2313, 0
        %v2420 = vsel %vm635, %v2314, 0
        %v2423 = vsel %vm635, %v2315, 0
        %v2426 = vsel %vm635, %v2316, 0
        %v2429 = vsel %vm635, %v2317, 0
        %v2432 = vsel %vm635, %v2318, 0
        %v2435 = vsel %vm635, %v2319, 0
        %v2438 = vsel %vm635, %v2320, 0
        %v2441 = vsel %vm635, %v2321, 0
        %2443 = vmatprep.subr.mxu0 %v2324
        %2444 = vmatpush1.msra.mxu0 %v2323
        %2445 = vmatprep.subr.mxu0 %v2326
        %2446 = vmatpush1.msra.mxu0 %v2325
        %2447 = vmatprep.subr.mxu0 %v2328
        %2448 = vmatpush1.msra.mxu0 %v2327
        %2449 = vmatprep.subr.mxu0 %v2330
        %2450 = vmatpush1.msra.mxu0 %v2329
        %2451 = vmatprep.subr.mxu0 %v2332
        %2452 = vmatpush1.msra.mxu0 %v2331
        %2453 = vmatprep.subr.mxu0 %v2334
        %2454 = vmatpush1.msra.mxu0 %v2333
        %2455 = vmatprep.subr.mxu0 %v2336
        %2456 = vmatpush1.msra.mxu0 %v2335
        %2457 = vmatprep.subr.mxu0 %v2338
        %2458 = vmatpush1.msra.mxu0 %v2337
        %2459 = vmatprep.subr.mxu0 %v2340
        %2460 = vmatpush1.msra.mxu0 %v2339
        %2461 = vmatprep.subr.mxu0 %v2342
        %2462 = vmatpush1.msra.mxu0 %v2341
        %2463 = vmatprep.subr.mxu0 %v2344
        %2464 = vmatpush1.msra.mxu0 %v2343
        %2465 = vmatprep.subr.mxu0 %v2346
        %2466 = vmatpush1.msra.mxu0 %v2345
        %2467 = vmatprep.subr.mxu0 0.0
        %2468 = vmatpush1.msra.mxu0 0.0
        %2469 = vmatprep.subr.mxu0 0.0
        %2470 = vmatpush1.msra.mxu0 0.0
        %2471 = vmatprep.subr.mxu0 0.0
        %2472 = vmatpush1.msra.mxu0 0.0
        %2473 = vmatprep.subr.mxu0 0.0
        %2474 = vmatpush1.msra.mxu0 0.0
        %2475 = vmatprep.subr.mxu0 0.0
        %2476 = vmatpush1.msra.mxu0 0.0
        %2477 = vmatprep.subr.mxu0 0.0
        %2478 = vmatpush1.msra.mxu0 0.0
        %2479 = vmatprep.subr.mxu0 0.0
        %2480 = vmatpush1.msra.mxu0 0.0
        %2481 = vmatprep.subr.mxu0 0.0
        %2482 = vmatpush1.msra.mxu0 0.0
        %2483 = vmatprep.subr.mxu0 0.0
        %2484 = vmatpush1.msra.mxu0 0.0
        %2485 = vmatprep.subr.mxu0 0.0
        %2486 = vmatpush1.msra.mxu0 0.0
        %2487 = vmatprep.subr.mxu0 0.0
        %2488 = vmatpush1.msra.mxu0 0.0
        %2489 = vmatprep.subr.mxu0 0.0
        %2490 = vmatpush1.msra.mxu0 0.0
        %2491 = vmatprep.subr.mxu0 0.0
        %2492 = vmatpush1.msra.mxu0 0.0
        %2493 = vmatprep.subr.mxu0 0.0
        %2494 = vmatpush1.msra.mxu0 0.0
        %2495 = vmatprep.subr.mxu0 0.0
        %2496 = vmatpush1.msra.mxu0 0.0
        %2497 = vmatprep.subr.mxu0 0.0
        %2498 = vmatpush1.msra.mxu0 0.0
        %2499 = vmatprep.subr.mxu0 0.0
        %2500 = vmatpush1.msra.mxu0 0.0
        %2501 = vmatprep.subr.mxu0 0.0
        %2502 = vmatpush1.msra.mxu0 0.0
        %2503 = vmatprep.subr.mxu0 0.0
        %2504 = vmatpush1.msra.mxu0 0.0
        %2505 = vmatprep.subr.mxu0 0.0
        %2506 = vmatpush1.msra.mxu0 0.0
        %2507 = vmatprep.mubr.f32.mxu0 0.0
        %2508 = vmatmul.mubr.f32.gmra.mrb[0].mxu0 %v2348
        %v2509 = vpop.f32.mrb[0].mxu0
        %v2510 = vadd.f32 0.0, %v2509
        %v2511 = vpop.f32.mrb[0].mxu0
        %v2512 = vadd.f32 0.0, %v2511
        %2513 = vmatprep.mubr.f32.mxu0 0.0
        %2514 = vmatmul.mubr.f32.gmra.mrb[0].mxu0 %v2351
        %v2515 = vpop.f32.mrb[0].mxu0
        %v2516 = vadd.f32 0.0, %v2515
        %v2517 = vpop.f32.mrb[0].mxu0
        %v2518 = vadd.f32 0.0, %v2517
        %2519 = vmatprep.mubr.f32.mxu0 0.0
        %2520 = vmatmul.mubr.f32.gmra.mrb[0].mxu0 %v2354
        %v2521 = vpop.f32.mrb[0].mxu0
        %v2522 = vadd.f32 0.0, %v2521
        %v2523 = vpop.f32.mrb[0].mxu0
        %v2524 = vadd.f32 0.0, %v2523
        %2525 = vmatprep.mubr.f32.mxu0 0.0
        %2526 = vmatmul.mubr.f32.gmra.mrb[0].mxu0 %v2357
        %v2527 = vpop.f32.mrb[0].mxu0
        %v2528 = vadd.f32 0.0, %v2527
        %v2529 = vpop.f32.mrb[0].mxu0
        %v2530 = vadd.f32 0.0, %v2529
        %2531 = vmatprep.mubr.f32.mxu0 0.0
        %2532 = vmatmul.mubr.f32.gmra.mrb[0].mxu0 %v2360
        %v2533 = vpop.f32.mrb[0].mxu0
        %v2534 = vadd.f32 0.0, %v2533
        %v2535 = vpop.f32.mrb[0].mxu0
        %v2536 = vadd.f32 0.0, %v2535
        %2537 = vmatprep.mubr.f32.mxu0 0.0
        %2538 = vmatmul.mubr.f32.gmra.mrb[0].mxu0 %v2363
        %v2539 = vpop.f32.mrb[0].mxu0
        %v2540 = vadd.f32 0.0, %v2539
        %v2541 = vpop.f32.mrb[0].mxu0
        %v2542 = vadd.f32 0.0, %v2541
        %2543 = vmatprep.mubr.f32.mxu0 0.0
        %2544 = vmatmul.mubr.f32.gmra.mrb[0].mxu0 %v2366
        %v2545 = vpop.f32.mrb[0].mxu0
        %v2546 = vadd.f32 0.0, %v2545
        %v2547 = vpop.f32.mrb[0].mxu0
        %v2548 = vadd.f32 0.0, %v2547
        %2549 = vmatprep.mubr.f32.mxu0 0.0
        %2550 = vmatmul.mubr.f32.gmra.mrb[0].mxu0 %v2369
        %v2551 = vpop.f32.mrb[0].mxu0
        %v2552 = vadd.f32 0.0, %v2551
        %v2553 = vpop.f32.mrb[0].mxu0
        %v2554 = vadd.f32 0.0, %v2553
        %2555 = vmatprep.mubr.f32.mxu0 0.0
        %2556 = vmatmul.mubr.f32.gmra.mrb[0].mxu0 %v2372
        %v2557 = vpop.f32.mrb[0].mxu0
        %v2558 = vadd.f32 0.0, %v2557
        %v2559 = vpop.f32.mrb[0].mxu0
        %v2560 = vadd.f32 0.0, %v2559
        %2561 = vmatprep.mubr.f32.mxu0 0.0
        %2562 = vmatmul.mubr.f32.gmra.mrb[0].mxu0 %v2375
        %v2563 = vpop.f32.mrb[0].mxu0
        %v2564 = vadd.f32 0.0, %v2563
        %v2565 = vpop.f32.mrb[0].mxu0
        %v2566 = vadd.f32 0.0, %v2565
        %2567 = vmatprep.mubr.f32.mxu0 0.0
        %2568 = vmatmul.mubr.f32.gmra.mrb[0].mxu0 %v2378
        %v2569 = vpop.f32.mrb[0].mxu0
        %v2570 = vadd.f32 0.0, %v2569
        %v2571 = vpop.f32.mrb[0].mxu0
        %v2572 = vadd.f32 0.0, %v2571
        %2573 = vmatprep.mubr.f32.mxu0 0.0
        %2574 = vmatmul.mubr.f32.gmra.mrb[0].mxu0 %v2381
        %v2575 = vpop.f32.mrb[0].mxu0
        %v2576 = vadd.f32 0.0, %v2575
        %v2577 = vpop.f32.mrb[0].mxu0
        %v2578 = vadd.f32 0.0, %v2577
        %2579 = vmatprep.mubr.f32.mxu0 0.0
        %2580 = vmatmul.mubr.f32.gmra.mrb[0].mxu0 %v2384
        %v2581 = vpop.f32.mrb[0].mxu0
        %v2582 = vadd.f32 0.0, %v2581
        %v2583 = vpop.f32.mrb[0].mxu0
        %v2584 = vadd.f32 0.0, %v2583
        %2585 = vmatprep.mubr.f32.mxu0 0.0
        %2586 = vmatmul.mubr.f32.gmra.mrb[0].mxu0 %v2387
        %v2587 = vpop.f32.mrb[0].mxu0
        %v2588 = vadd.f32 0.0, %v2587
        %v2589 = vpop.f32.mrb[0].mxu0
        %v2590 = vadd.f32 0.0, %v2589
        %2591 = vmatprep.mubr.f32.mxu0 0.0
        %2592 = vmatmul.mubr.f32.gmra.mrb[0].mxu0 %v2390
        %v2593 = vpop.f32.mrb[0].mxu0
        %v2594 = vadd.f32 0.0, %v2593
        %v2595 = vpop.f32.mrb[0].mxu0
        %v2596 = vadd.f32 0.0, %v2595
        %2597 = vmatprep.mubr.f32.mxu0 0.0
        %2598 = vmatmul.mubr.f32.gmra.mrb[0].mxu0 %v2393
        %v2599 = vpop.f32.mrb[0].mxu0
        %v2600 = vadd.f32 0.0, %v2599
        %v2601 = vpop.f32.mrb[0].mxu0
        %v2602 = vadd.f32 0.0, %v2601
        %2603 = vmatprep.mubr.f32.mxu0 0.0
        %2604 = vmatmul.mubr.f32.gmra.mrb[0].mxu0 %v2396
        %v2605 = vpop.f32.mrb[0].mxu0
        %v2606 = vadd.f32 0.0, %v2605
        %v2607 = vpop.f32.mrb[0].mxu0
        %v2608 = vadd.f32 0.0, %v2607
        %2609 = vmatprep.mubr.f32.mxu0 0.0
        %2610 = vmatmul.mubr.f32.gmra.mrb[0].mxu0 %v2399
        %v2611 = vpop.f32.mrb[0].mxu0
        %v2612 = vadd.f32 0.0, %v2611
        %v2613 = vpop.f32.mrb[0].mxu0
        %v2614 = vadd.f32 0.0, %v2613
        %2615 = vmatprep.mubr.f32.mxu0 0.0
        %2616 = vmatmul.mubr.f32.gmra.mrb[0].mxu0 %v2402
        %v2617 = vpop.f32.mrb[0].mxu0
        %v2618 = vadd.f32 0.0, %v2617
        %v2619 = vpop.f32.mrb[0].mxu0
        %v2620 = vadd.f32 0.0, %v2619
        %2621 = vmatprep.mubr.f32.mxu0 0.0
        %2622 = vmatmul.mubr.f32.gmra.mrb[0].mxu0 %v2405
        %v2623 = vpop.f32.mrb[0].mxu0
        %v2624 = vadd.f32 0.0, %v2623
        %v2625 = vpop.f32.mrb[0].mxu0
        %v2626 = vadd.f32 0.0, %v2625
        %2627 = vmatprep.mubr.f32.mxu0 0.0
        %2628 = vmatmul.mubr.f32.gmra.mrb[0].mxu0 %v2408
        %v2629 = vpop.f32.mrb[0].mxu0
        %v2630 = vadd.f32 0.0, %v2629
        %v2631 = vpop.f32.mrb[0].mxu0
        %v2632 = vadd.f32 0.0, %v2631
        %2633 = vmatprep.mubr.f32.mxu0 0.0
        %2634 = vmatmul.mubr.f32.gmra.mrb[0].mxu0 %v2411
        %v2635 = vpop.f32.mrb[0].mxu0
        %v2636 = vadd.f32 0.0, %v2635
        %v2637 = vpop.f32.mrb[0].mxu0
        %v2638 = vadd.f32 0.0, %v2637
        %2639 = vmatprep.mubr.f32.mxu0 0.0
        %2640 = vmatmul.mubr.f32.gmra.mrb[0].mxu0 %v2414
        %v2641 = vpop.f32.mrb[0].mxu0
        %v2642 = vadd.f32 0.0, %v2641
        %v2643 = vpop.f32.mrb[0].mxu0
        %v2644 = vadd.f32 0.0, %v2643
        %2645 = vmatprep.mubr.f32.mxu0 0.0
        %2646 = vmatmul.mubr.f32.gmra.mrb[0].mxu0 %v2417
        %v2647 = vpop.f32.mrb[0].mxu0
        %v2648 = vadd.f32 0.0, %v2647
        %v2649 = vpop.f32.mrb[0].mxu0
        %v2650 = vadd.f32 0.0, %v2649
        %2651 = vmatprep.mubr.f32.mxu0 0.0
        %2652 = vmatmul.mubr.f32.gmra.mrb[0].mxu0 %v2420
        %v2653 = vpop.f32.mrb[0].mxu0
        %v2654 = vadd.f32 0.0, %v2653
        %v2655 = vpop.f32.mrb[0].mxu0
        %v2656 = vadd.f32 0.0, %v2655
        %2657 = vmatprep.mubr.f32.mxu0 0.0
        %2658 = vmatmul.mubr.f32.gmra.mrb[0].mxu0 %v2423
        %v2659 = vpop.f32.mrb[0].mxu0
        %v2660 = vadd.f32 0.0, %v2659
        %v2661 = vpop.f32.mrb[0].mxu0
        %v2662 = vadd.f32 0.0, %v2661
        %2663 = vmatprep.mubr.f32.mxu0 0.0
        %2664 = vmatmul.mubr.f32.gmra.mrb[0].mxu0 %v2426
        %v2665 = vpop.f32.mrb[0].mxu0
        %v2666 = vadd.f32 0.0, %v2665
        %v2667 = vpop.f32.mrb[0].mxu0
        %v2668 = vadd.f32 0.0, %v2667
        %2669 = vmatprep.mubr.f32.mxu0 0.0
        %2670 = vmatmul.mubr.f32.gmra.mrb[0].mxu0 %v2429
        %v2671 = vpop.f32.mrb[0].mxu0
        %v2672 = vadd.f32 0.0, %v2671
        %v2673 = vpop.f32.mrb[0].mxu0
        %v2674 = vadd.f32 0.0, %v2673
        %2675 = vmatprep.mubr.f32.mxu0 0.0
        %2676 = vmatmul.mubr.f32.gmra.mrb[0].mxu0 %v2432
        %v2677 = vpop.f32.mrb[0].mxu0
        %v2678 = vadd.f32 0.0, %v2677
        %v2679 = vpop.f32.mrb[0].mxu0
        %v2680 = vadd.f32 0.0, %v2679
        %2681 = vmatprep.mubr.f32.mxu0 0.0
        %2682 = vmatmul.mubr.f32.gmra.mrb[0].mxu0 %v2435
        %v2683 = vpop.f32.mrb[0].mxu0
        %v2684 = vadd.f32 0.0, %v2683
        %v2685 = vpop.f32.mrb[0].mxu0
        %v2686 = vadd.f32 0.0, %v2685
        %2687 = vmatprep.mubr.f32.mxu0 0.0
        %2688 = vmatmul.mubr.f32.gmra.mrb[0].mxu0 %v2438
        %v2689 = vpop.f32.mrb[0].mxu0
        %v2690 = vadd.f32 0.0, %v2689
        %v2691 = vpop.f32.mrb[0].mxu0
        %v2692 = vadd.f32 0.0, %v2691
        %2693 = vmatprep.mubr.f32.mxu0 0.0
        %2694 = vmatmul.mubr.f32.gmra.mrb[0].mxu0 %v2441
        %v2695 = vpop.f32.mrb[0].mxu0
        %v2696 = vadd.f32 0.0, %v2695
        %v2697 = vpop.f32.mrb[0].mxu0
        %v2698 = vadd.f32 0.0, %v2697
        %2699 = vdwg.mxu0
        %v2700 = vadd.f32 %v2226, %v2510
        %v2701 = vadd.f32 %v2227, %v2512
        %v2702 = vadd.f32 %v2228, %v2516
        %v2703 = vadd.f32 %v2229, %v2518
        %v2704 = vadd.f32 %v2230, %v2522
        %v2705 = vadd.f32 %v2231, %v2524
        %v2706 = vadd.f32 %v2232, %v2528
        %v2707 = vadd.f32 %v2233, %v2530
        %v2708 = vadd.f32 %v2234, %v2534
        %v2709 = vadd.f32 %v2235, %v2536
        %v2710 = vadd.f32 %v2236, %v2540
        %v2711 = vadd.f32 %v2237, %v2542
        %v2712 = vadd.f32 %v2238, %v2546
        %v2713 = vadd.f32 %v2239, %v2548
        %v2714 = vadd.f32 %v2240, %v2552
        %v2715 = vadd.f32 %v2241, %v2554
        %v2716 = vadd.f32 %v2242, %v2558
        %v2717 = vadd.f32 %v2243, %v2560
        %v2718 = vadd.f32 %v2244, %v2564
        %v2719 = vadd.f32 %v2245, %v2566
        %v2720 = vadd.f32 %v2246, %v2570
        %v2721 = vadd.f32 %v2247, %v2572
        %v2722 = vadd.f32 %v2248, %v2576
        %v2723 = vadd.f32 %v2249, %v2578
        %v2724 = vadd.f32 %v2250, %v2582
        %v2725 = vadd.f32 %v2251, %v2584
        %v2726 = vadd.f32 %v2252, %v2588
        %v2727 = vadd.f32 %v2253, %v2590
        %v2728 = vadd.f32 %v2254, %v2594
        %v2729 = vadd.f32 %v2255, %v2596
        %v2730 = vadd.f32 %v2256, %v2600
        %v2731 = vadd.f32 %v2257, %v2602
        %v2732 = vadd.f32 %v2258, %v2606
        %v2733 = vadd.f32 %v2259, %v2608
        %v2734 = vadd.f32 %v2260, %v2612
        %v2735 = vadd.f32 %v2261, %v2614
        %v2736 = vadd.f32 %v2262, %v2618
        %v2737 = vadd.f32 %v2263, %v2620
        %v2738 = vadd.f32 %v2264, %v2624
        %v2739 = vadd.f32 %v2265, %v2626
        %v2740 = vadd.f32 %v2266, %v2630
        %v2741 = vadd.f32 %v2267, %v2632
        %v2742 = vadd.f32 %v2268, %v2636
        %v2743 = vadd.f32 %v2269, %v2638
        %v2744 = vadd.f32 %v2270, %v2642
        %v2745 = vadd.f32 %v2271, %v2644
        %v2746 = vadd.f32 %v2272, %v2648
        %v2747 = vadd.f32 %v2273, %v2650
        %v2748 = vadd.f32 %v2274, %v2654
        %v2749 = vadd.f32 %v2275, %v2656
        %v2750 = vadd.f32 %v2276, %v2660
        %v2751 = vadd.f32 %v2277, %v2662
        %v2752 = vadd.f32 %v2278, %v2666
        %v2753 = vadd.f32 %v2279, %v2668
        %v2754 = vadd.f32 %v2280, %v2672
        %v2755 = vadd.f32 %v2281, %v2674
        %v2756 = vadd.f32 %v2282, %v2678
        %v2757 = vadd.f32 %v2283, %v2680
        %v2758 = vadd.f32 %v2284, %v2684
        %v2759 = vadd.f32 %v2285, %v2686
        %v2760 = vadd.f32 %v2286, %v2690
        %v2761 = vadd.f32 %v2287, %v2692
        %v2762 = vadd.f32 %v2288, %v2696
        %v2763 = vadd.f32 %v2289, %v2698
        %v2764 = vld [vmem:[%s2] sm:$0x3]
        %v2766 = vlaneseq
        %v2767 = vshrl.u32 %v2766, 7
        %v2768 = vsub.s32 0, %v2767
        %v2769 = vrot.slane %v2764, %v2768
        %v2770 = vlaneseq
        %v2771 = vshrl.u32 %v2770, 7
        %v2772 = vsub.s32 1, %v2771
        %v2773 = vrot.slane %v2764, %v2772
        %v2776 = vadd.f32 %v2700, %v2769
        %v2777 = vadd.f32 %v2701, %v2773
        %v2778 = vadd.f32 %v2702, %v2769
        %v2779 = vadd.f32 %v2703, %v2773
        %v2780 = vadd.f32 %v2704, %v2769
        %v2781 = vadd.f32 %v2705, %v2773
        %v2782 = vadd.f32 %v2706, %v2769
        %v2783 = vadd.f32 %v2707, %v2773
        %v2784 = vadd.f32 %v2708, %v2769
        %v2785 = vadd.f32 %v2709, %v2773
        %v2786 = vadd.f32 %v2710, %v2769
        %v2787 = vadd.f32 %v2711, %v2773
        %v2788 = vadd.f32 %v2712, %v2769
        %v2789 = vadd.f32 %v2713, %v2773
        %v2790 = vadd.f32 %v2714, %v2769
        %v2791 = vadd.f32 %v2715, %v2773
        %v2792 = vadd.f32 %v2716, %v2769
        %v2793 = vadd.f32 %v2717, %v2773
        %v2794 = vadd.f32 %v2718, %v2769
        %v2795 = vadd.f32 %v2719, %v2773
        %v2796 = vadd.f32 %v2720, %v2769
        %v2797 = vadd.f32 %v2721, %v2773
        %v2798 = vadd.f32 %v2722, %v2769
        %v2799 = vadd.f32 %v2723, %v2773
        %v2800 = vadd.f32 %v2724, %v2769
        %v2801 = vadd.f32 %v2725, %v2773
        %v2802 = vadd.f32 %v2726, %v2769
        %v2803 = vadd.f32 %v2727, %v2773
        %v2804 = vadd.f32 %v2728, %v2769
        %v2805 = vadd.f32 %v2729, %v2773
        %v2806 = vadd.f32 %v2730, %v2769
        %v2807 = vadd.f32 %v2731, %v2773
        %v2808 = vadd.f32 %v2732, %v2769
        %v2809 = vadd.f32 %v2733, %v2773
        %v2810 = vadd.f32 %v2734, %v2769
        %v2811 = vadd.f32 %v2735, %v2773
        %v2812 = vadd.f32 %v2736, %v2769
        %v2813 = vadd.f32 %v2737, %v2773
        %v2814 = vadd.f32 %v2738, %v2769
        %v2815 = vadd.f32 %v2739, %v2773
        %v2816 = vadd.f32 %v2740, %v2769
        %v2817 = vadd.f32 %v2741, %v2773
        %v2818 = vadd.f32 %v2742, %v2769
        %v2819 = vadd.f32 %v2743, %v2773
        %v2820 = vadd.f32 %v2744, %v2769
        %v2821 = vadd.f32 %v2745, %v2773
        %v2822 = vadd.f32 %v2746, %v2769
        %v2823 = vadd.f32 %v2747, %v2773
        %v2824 = vadd.f32 %v2748, %v2769
        %v2825 = vadd.f32 %v2749, %v2773
        %v2826 = vadd.f32 %v2750, %v2769
        %v2827 = vadd.f32 %v2751, %v2773
        %v2828 = vadd.f32 %v2752, %v2769
        %v2829 = vadd.f32 %v2753, %v2773
        %v2830 = vadd.f32 %v2754, %v2769
        %v2831 = vadd.f32 %v2755, %v2773
        %v2832 = vadd.f32 %v2756, %v2769
        %v2833 = vadd.f32 %v2757, %v2773
        %v2834 = vadd.f32 %v2758, %v2769
        %v2835 = vadd.f32 %v2759, %v2773
        %v2836 = vadd.f32 %v2760, %v2769
        %v2837 = vadd.f32 %v2761, %v2773
        %v2838 = vadd.f32 %v2762, %v2769
        %v2839 = vadd.f32 %v2763, %v2773
        %v2840 = vmax.f32 %v2776, 0.0
        %v2841 = vmax.f32 %v2777, 0.0
        %v2842 = vmax.f32 %v2778, 0.0
        %v2843 = vmax.f32 %v2779, 0.0
        %v2844 = vmax.f32 %v2780, 0.0
        %v2845 = vmax.f32 %v2781, 0.0
        %v2846 = vmax.f32 %v2782, 0.0
        %v2847 = vmax.f32 %v2783, 0.0
        %v2848 = vmax.f32 %v2784, 0.0
        %v2849 = vmax.f32 %v2785, 0.0
        %v2850 = vmax.f32 %v2786, 0.0
        %v2851 = vmax.f32 %v2787, 0.0
        %v2852 = vmax.f32 %v2788, 0.0
        %v2853 = vmax.f32 %v2789, 0.0
        %v2854 = vmax.f32 %v2790, 0.0
        %v2855 = vmax.f32 %v2791, 0.0
        %v2856 = vmax.f32 %v2792, 0.0
        %v2857 = vmax.f32 %v2793, 0.0
        %v2858 = vmax.f32 %v2794, 0.0
        %v2859 = vmax.f32 %v2795, 0.0
        %v2860 = vmax.f32 %v2796, 0.0
        %v2861 = vmax.f32 %v2797, 0.0
        %v2862 = vmax.f32 %v2798, 0.0
        %v2863 = vmax.f32 %v2799, 0.0
        %v2864 = vmax.f32 %v2800, 0.0
        %v2865 = vmax.f32 %v2801, 0.0
        %v2866 = vmax.f32 %v2802, 0.0
        %v2867 = vmax.f32 %v2803, 0.0
        %v2868 = vmax.f32 %v2804, 0.0
        %v2869 = vmax.f32 %v2805, 0.0
        %v2870 = vmax.f32 %v2806, 0.0
        %v2871 = vmax.f32 %v2807, 0.0
        %v2872 = vmax.f32 %v2808, 0.0
        %v2873 = vmax.f32 %v2809, 0.0
        %v2874 = vmax.f32 %v2810, 0.0
        %v2875 = vmax.f32 %v2811, 0.0
        %v2876 = vmax.f32 %v2812, 0.0
        %v2877 = vmax.f32 %v2813, 0.0
        %v2878 = vmax.f32 %v2814, 0.0
        %v2879 = vmax.f32 %v2815, 0.0
        %v2880 = vmax.f32 %v2816, 0.0
        %v2881 = vmax.f32 %v2817, 0.0
        %v2882 = vmax.f32 %v2818, 0.0
        %v2883 = vmax.f32 %v2819, 0.0
        %v2884 = vmax.f32 %v2820, 0.0
        %v2885 = vmax.f32 %v2821, 0.0
        %v2886 = vmax.f32 %v2822, 0.0
        %v2887 = vmax.f32 %v2823, 0.0
        %v2888 = vmax.f32 %v2824, 0.0
        %v2889 = vmax.f32 %v2825, 0.0
        %v2890 = vmax.f32 %v2826, 0.0
        %v2891 = vmax.f32 %v2827, 0.0
        %v2892 = vmax.f32 %v2828, 0.0
        %v2893 = vmax.f32 %v2829, 0.0
        %v2894 = vmax.f32 %v2830, 0.0
        %v2895 = vmax.f32 %v2831, 0.0
        %v2896 = vmax.f32 %v2832, 0.0
        %v2897 = vmax.f32 %v2833, 0.0
        %v2898 = vmax.f32 %v2834, 0.0
        %v2899 = vmax.f32 %v2835, 0.0
        %v2900 = vmax.f32 %v2836, 0.0
        %v2901 = vmax.f32 %v2837, 0.0
        %v2902 = vmax.f32 %v2838, 0.0
        %v2903 = vmax.f32 %v2839, 0.0
        %v2904 = vld [vmem:[%s5] sm:$0xff]
        %v2905 = vld [vmem:[%s5 + $0x8] sm:$0xff]
        %v2906 = vld [vmem:[%s5 + $0x10] sm:$0xff]
        %v2907 = vld [vmem:[%s5 + $0x18] sm:$0xff]
        %v2908 = vld [vmem:[%s5 + $0x20] sm:$0xff]
        %v2909 = vld [vmem:[%s5 + $0x28] sm:$0xff]
        %v2910 = vld [vmem:[%s5 + $0x30] sm:$0xff]
        %v2911 = vld [vmem:[%s5 + $0x38] sm:$0xff]
        %v2912 = vld [vmem:[%s5 + $0x40] sm:$0xff]
        %v2913 = vld [vmem:[%s5 + $0x48] sm:$0xff]
        %v2914 = vld [vmem:[%s5 + $0x50] sm:$0xff]
        %v2915 = vld [vmem:[%s5 + $0x58] sm:$0xff]
        %v2916 = vld [vmem:[%s5 + $0x60] sm:$0xff]
        %v2917 = vld [vmem:[%s5 + $0x68] sm:$0xff]
        %v2918 = vld [vmem:[%s5 + $0x70] sm:$0xff]
        %v2919 = vld [vmem:[%s5 + $0x78] sm:$0xff]
        %v2920 = vld [vmem:[%s5 + $0x80] sm:$0xff]
        %v2921 = vld [vmem:[%s5 + $0x88] sm:$0xff]
        %v2922 = vld [vmem:[%s5 + $0x90] sm:$0xff]
        %v2923 = vld [vmem:[%s5 + $0x98] sm:$0xff]
        %v2924 = vld [vmem:[%s5 + $0xa0] sm:$0xff]
        %v2925 = vld [vmem:[%s5 + $0xa8] sm:$0xff]
        %v2926 = vld [vmem:[%s5 + $0xb0] sm:$0xff]
        %v2927 = vld [vmem:[%s5 + $0xb8] sm:$0xff]
        %v2928 = vld [vmem:[%s5 + $0xc0] sm:$0xff]
        %v2929 = vld [vmem:[%s5 + $0xc8] sm:$0xff]
        %v2930 = vld [vmem:[%s5 + $0xd0] sm:$0xff]
        %v2931 = vld [vmem:[%s5 + $0xd8] sm:$0xff]
        %v2932 = vld [vmem:[%s5 + $0xe0] sm:$0xff]
        %v2933 = vld [vmem:[%s5 + $0xe8] sm:$0xff]
        %v2934 = vld [vmem:[%s5 + $0xf0] sm:$0xff]
        %v2935 = vld [vmem:[%s5 + $0xf8] sm:$0xff]
        %vm2936 = vcmask 1014784
        %v2938 = vsel %vm2936, %v2905, 0
        %v2941 = vsel %vm2936, %v2907, 0
        %v2944 = vsel %vm2936, %v2909, 0
        %v2947 = vsel %vm2936, %v2911, 0
        %v2950 = vsel %vm2936, %v2913, 0
        %v2953 = vsel %vm2936, %v2915, 0
        %v2956 = vsel %vm2936, %v2917, 0
        %v2959 = vsel %vm2936, %v2919, 0
        %v2962 = vsel %vm2936, %v2921, 0
        %v2965 = vsel %vm2936, %v2923, 0
        %v2968 = vsel %vm2936, %v2925, 0
        %v2971 = vsel %vm2936, %v2927, 0
        %v2974 = vsel %vm2936, %v2929, 0
        %v2977 = vsel %vm2936, %v2931, 0
        %v2980 = vsel %vm2936, %v2933, 0
        %v2983 = vsel %vm2936, %v2935, 0
        %vm2985 = vcmask 1043456
        %v2987 = vsel %vm2985, %v2902, 0
        %v2990 = vsel %vm2985, %v2903, 0
        %2992 = vmatprep.subr.mxu0 %v2841
        %2993 = vmatpush1.msra.mxu0 %v2840
        %2994 = vmatprep.subr.mxu0 %v2843
        %2995 = vmatpush1.msra.mxu0 %v2842
        %2996 = vmatprep.subr.mxu0 %v2845
        %2997 = vmatpush1.msra.mxu0 %v2844
        %2998 = vmatprep.subr.mxu0 %v2847
        %2999 = vmatpush1.msra.mxu0 %v2846
        %3000 = vmatprep.subr.mxu0 %v2849
        %3001 = vmatpush1.msra.mxu0 %v2848
        %3002 = vmatprep.subr.mxu0 %v2851
        %3003 = vmatpush1.msra.mxu0 %v2850
        %3004 = vmatprep.subr.mxu0 %v2853
        %3005 = vmatpush1.msra.mxu0 %v2852
        %3006 = vmatprep.subr.mxu0 %v2855
        %3007 = vmatpush1.msra.mxu0 %v2854
        %3008 = vmatprep.subr.mxu0 %v2857
        %3009 = vmatpush1.msra.mxu0 %v2856
        %3010 = vmatprep.subr.mxu0 %v2859
        %3011 = vmatpush1.msra.mxu0 %v2858
        %3012 = vmatprep.subr.mxu0 %v2861
        %3013 = vmatpush1.msra.mxu0 %v2860
        %3014 = vmatprep.subr.mxu0 %v2863
        %3015 = vmatpush1.msra.mxu0 %v2862
        %3016 = vmatprep.subr.mxu0 %v2865
        %3017 = vmatpush1.msra.mxu0 %v2864
        %3018 = vmatprep.subr.mxu0 %v2867
        %3019 = vmatpush1.msra.mxu0 %v2866
        %3020 = vmatprep.subr.mxu0 %v2869
        %3021 = vmatpush1.msra.mxu0 %v2868
        %3022 = vmatprep.subr.mxu0 %v2871
        %3023 = vmatpush1.msra.mxu0 %v2870
        %3024 = vmatprep.subr.mxu0 %v2873
        %3025 = vmatpush1.msra.mxu0 %v2872
        %3026 = vmatprep.subr.mxu0 %v2875
        %3027 = vmatpush1.msra.mxu0 %v2874
        %3028 = vmatprep.subr.mxu0 %v2877
        %3029 = vmatpush1.msra.mxu0 %v2876
        %3030 = vmatprep.subr.mxu0 %v2879
        %3031 = vmatpush1.msra.mxu0 %v2878
        %3032 = vmatprep.subr.mxu0 %v2881
        %3033 = vmatpush1.msra.mxu0 %v2880
        %3034 = vmatprep.subr.mxu0 %v2883
        %3035 = vmatpush1.msra.mxu0 %v2882
        %3036 = vmatprep.subr.mxu0 %v2885
        %3037 = vmatpush1.msra.mxu0 %v2884
        %3038 = vmatprep.subr.mxu0 %v2887
        %3039 = vmatpush1.msra.mxu0 %v2886
        %3040 = vmatprep.subr.mxu0 %v2889
        %3041 = vmatpush1.msra.mxu0 %v2888
        %3042 = vmatprep.subr.mxu0 %v2891
        %3043 = vmatpush1.msra.mxu0 %v2890
        %3044 = vmatprep.subr.mxu0 %v2893
        %3045 = vmatpush1.msra.mxu0 %v2892
        %3046 = vmatprep.subr.mxu0 %v2895
        %3047 = vmatpush1.msra.mxu0 %v2894
        %3048 = vmatprep.subr.mxu0 %v2897
        %3049 = vmatpush1.msra.mxu0 %v2896
        %3050 = vmatprep.subr.mxu0 %v2899
        %3051 = vmatpush1.msra.mxu0 %v2898
        %3052 = vmatprep.subr.mxu0 %v2901
        %3053 = vmatpush1.msra.mxu0 %v2900
        %3054 = vmatprep.subr.mxu0 %v2990
        %3055 = vmatpush1.msra.mxu0 %v2987
        %3056 = vmatprep.mubr.f32.mxu0 %v2938
        %3057 = vmatmul.mubr.f32.gmra.mrb[0].mxu0 %v2904
        %v3058 = vpop.f32.mrb[0].mxu0
        %v3059 = vadd.f32 0.0, %v3058
        %v3060 = vpop.f32.mrb[0].mxu0
        %v3061 = vadd.f32 0.0, %v3060
        %3062 = vmatprep.mubr.f32.mxu0 %v2941
        %3063 = vmatmul.mubr.f32.gmra.mrb[0].mxu0 %v2906
        %v3064 = vpop.f32.mrb[0].mxu0
        %v3065 = vadd.f32 0.0, %v3064
        %v3066 = vpop.f32.mrb[0].mxu0
        %v3067 = vadd.f32 0.0, %v3066
        %3068 = vmatprep.mubr.f32.mxu0 %v2944
        %3069 = vmatmul.mubr.f32.gmra.mrb[0].mxu0 %v2908
        %v3070 = vpop.f32.mrb[0].mxu0
        %v3071 = vadd.f32 0.0, %v3070
        %v3072 = vpop.f32.mrb[0].mxu0
        %v3073 = vadd.f32 0.0, %v3072
        %3074 = vmatprep.mubr.f32.mxu0 %v2947
        %3075 = vmatmul.mubr.f32.gmra.mrb[0].mxu0 %v2910
        %v3076 = vpop.f32.mrb[0].mxu0
        %v3077 = vadd.f32 0.0, %v3076
        %v3078 = vpop.f32.mrb[0].mxu0
        %v3079 = vadd.f32 0.0, %v3078
        %3080 = vmatprep.mubr.f32.mxu0 %v2950
        %3081 = vmatmul.mubr.f32.gmra.mrb[0].mxu0 %v2912
        %v3082 = vpop.f32.mrb[0].mxu0
        %v3083 = vadd.f32 0.0, %v3082
        %v3084 = vpop.f32.mrb[0].mxu0
        %v3085 = vadd.f32 0.0, %v3084
        %3086 = vmatprep.mubr.f32.mxu0 %v2953
        %3087 = vmatmul.mubr.f32.gmra.mrb[0].mxu0 %v2914
        %v3088 = vpop.f32.mrb[0].mxu0
        %v3089 = vadd.f32 0.0, %v3088
        %v3090 = vpop.f32.mrb[0].mxu0
        %v3091 = vadd.f32 0.0, %v3090
        %3092 = vmatprep.mubr.f32.mxu0 %v2956
        %3093 = vmatmul.mubr.f32.gmra.mrb[0].mxu0 %v2916
        %v3094 = vpop.f32.mrb[0].mxu0
        %v3095 = vadd.f32 0.0, %v3094
        %v3096 = vpop.f32.mrb[0].mxu0
        %v3097 = vadd.f32 0.0, %v3096
        %3098 = vmatprep.mubr.f32.mxu0 %v2959
        %3099 = vmatmul.mubr.f32.gmra.mrb[0].mxu0 %v2918
        %v3100 = vpop.f32.mrb[0].mxu0
        %v3101 = vadd.f32 0.0, %v3100
        %v3102 = vpop.f32.mrb[0].mxu0
        %v3103 = vadd.f32 0.0, %v3102
        %3104 = vmatprep.mubr.f32.mxu0 %v2962
        %3105 = vmatmul.mubr.f32.gmra.mrb[0].mxu0 %v2920
        %v3106 = vpop.f32.mrb[0].mxu0
        %v3107 = vadd.f32 0.0, %v3106
        %v3108 = vpop.f32.mrb[0].mxu0
        %v3109 = vadd.f32 0.0, %v3108
        %3110 = vmatprep.mubr.f32.mxu0 %v2965
        %3111 = vmatmul.mubr.f32.gmra.mrb[0].mxu0 %v2922
        %v3112 = vpop.f32.mrb[0].mxu0
        %v3113 = vadd.f32 0.0, %v3112
        %v3114 = vpop.f32.mrb[0].mxu0
        %v3115 = vadd.f32 0.0, %v3114
        %3116 = vmatprep.mubr.f32.mxu0 %v2968
        %3117 = vmatmul.mubr.f32.gmra.mrb[0].mxu0 %v2924
        %v3118 = vpop.f32.mrb[0].mxu0
        %v3119 = vadd.f32 0.0, %v3118
        %v3120 = vpop.f32.mrb[0].mxu0
        %v3121 = vadd.f32 0.0, %v3120
        %3122 = vmatprep.mubr.f32.mxu0 %v2971
        %3123 = vmatmul.mubr.f32.gmra.mrb[0].mxu0 %v2926
        %v3124 = vpop.f32.mrb[0].mxu0
        %v3125 = vadd.f32 0.0, %v3124
        %v3126 = vpop.f32.mrb[0].mxu0
        %v3127 = vadd.f32 0.0, %v3126
        %3128 = vmatprep.mubr.f32.mxu0 %v2974
        %3129 = vmatmul.mubr.f32.gmra.mrb[0].mxu0 %v2928
        %v3130 = vpop.f32.mrb[0].mxu0
        %v3131 = vadd.f32 0.0, %v3130
        %v3132 = vpop.f32.mrb[0].mxu0
        %v3133 = vadd.f32 0.0, %v3132
        %3134 = vmatprep.mubr.f32.mxu0 %v2977
        %3135 = vmatmul.mubr.f32.gmra.mrb[0].mxu0 %v2930
        %v3136 = vpop.f32.mrb[0].mxu0
        %v3137 = vadd.f32 0.0, %v3136
        %v3138 = vpop.f32.mrb[0].mxu0
        %v3139 = vadd.f32 0.0, %v3138
        %3140 = vmatprep.mubr.f32.mxu0 %v2980
        %3141 = vmatmul.mubr.f32.gmra.mrb[0].mxu0 %v2932
        %v3142 = vpop.f32.mrb[0].mxu0
        %v3143 = vadd.f32 0.0, %v3142
        %v3144 = vpop.f32.mrb[0].mxu0
        %v3145 = vadd.f32 0.0, %v3144
        %3146 = vmatprep.mubr.f32.mxu0 %v2983
        %3147 = vmatmul.mubr.f32.gmra.mrb[0].mxu0 %v2934
        %v3148 = vpop.f32.mrb[0].mxu0
        %v3149 = vadd.f32 0.0, %v3148
        %v3150 = vpop.f32.mrb[0].mxu0
        %v3151 = vadd.f32 0.0, %v3150
        %3152 = vdwg.mxu0
        %s3153 = scalar_lea.vmem %s5, 256
        %v3154 = vld [vmem:[%s3153] sm:$0xff]
        %v3155 = vld [vmem:[%s3153 + $0x8] sm:$0xff]
        %v3156 = vld [vmem:[%s3153 + $0x10] sm:$0xff]
        %v3157 = vld [vmem:[%s3153 + $0x18] sm:$0xff]
        %v3158 = vld [vmem:[%s3153 + $0x20] sm:$0xff]
        %v3159 = vld [vmem:[%s3153 + $0x28] sm:$0xff]
        %v3160 = vld [vmem:[%s3153 + $0x30] sm:$0xff]
        %v3161 = vld [vmem:[%s3153 + $0x38] sm:$0xff]
        %v3162 = vld [vmem:[%s3153 + $0x40] sm:$0xff]
        %v3163 = vld [vmem:[%s3153 + $0x48] sm:$0xff]
        %v3164 = vld [vmem:[%s3153 + $0x50] sm:$0xff]
        %v3165 = vld [vmem:[%s3153 + $0x58] sm:$0xff]
        %v3166 = vld [vmem:[%s3153 + $0x60] sm:$0xff]
        %v3167 = vld [vmem:[%s3153 + $0x68] sm:$0xff]
        %v3168 = vld [vmem:[%s3153 + $0x70] sm:$0xff]
        %v3169 = vld [vmem:[%s3153 + $0x78] sm:$0xff]
        %v3170 = vld [vmem:[%s3153 + $0x80] sm:$0xff]
        %v3171 = vld [vmem:[%s3153 + $0x88] sm:$0xff]
        %v3172 = vld [vmem:[%s3153 + $0x90] sm:$0xff]
        %v3173 = vld [vmem:[%s3153 + $0x98] sm:$0xff]
        %v3174 = vld [vmem:[%s3153 + $0xa0] sm:$0xff]
        %v3175 = vld [vmem:[%s3153 + $0xa8] sm:$0xff]
        %v3176 = vld [vmem:[%s3153 + $0xb0] sm:$0xff]
        %v3177 = vld [vmem:[%s3153 + $0xb8] sm:$0xff]
        %v3178 = vld [vmem:[%s3153 + $0xc0] sm:$0xff]
        %v3179 = vld [vmem:[%s3153 + $0xc8] sm:$0xff]
        %v3180 = vld [vmem:[%s3153 + $0xd0] sm:$0xff]
        %v3181 = vld [vmem:[%s3153 + $0xd8] sm:$0xff]
        %v3182 = vld [vmem:[%s3153 + $0xe0] sm:$0xff]
        %v3183 = vld [vmem:[%s3153 + $0xe8] sm:$0xff]
        %v3184 = vld [vmem:[%s3153 + $0xf0] sm:$0xff]
        %v3185 = vld [vmem:[%s3153 + $0xf8] sm:$0xff]
        %v3187 = vsel %vm2936, %v3155, 0
        %v3190 = vsel %vm2936, %v3157, 0
        %v3193 = vsel %vm2936, %v3159, 0
        %v3196 = vsel %vm2936, %v3161, 0
        %v3199 = vsel %vm2936, %v3163, 0
        %v3202 = vsel %vm2936, %v3165, 0
        %v3205 = vsel %vm2936, %v3167, 0
        %v3208 = vsel %vm2936, %v3169, 0
        %v3211 = vsel %vm2936, %v3171, 0
        %v3214 = vsel %vm2936, %v3173, 0
        %v3217 = vsel %vm2936, %v3175, 0
        %v3220 = vsel %vm2936, %v3177, 0
        %v3223 = vsel %vm2936, %v3179, 0
        %v3226 = vsel %vm2936, %v3181, 0
        %v3229 = vsel %vm2936, %v3183, 0
        %v3232 = vsel %vm2936, %v3185, 0
        %3234 = vmatprep.subr.mxu0 %v2841
        %3235 = vmatpush1.msra.mxu0 %v2840
        %3236 = vmatprep.subr.mxu0 %v2843
        %3237 = vmatpush1.msra.mxu0 %v2842
        %3238 = vmatprep.subr.mxu0 %v2845
        %3239 = vmatpush1.msra.mxu0 %v2844
        %3240 = vmatprep.subr.mxu0 %v2847
        %3241 = vmatpush1.msra.mxu0 %v2846
        %3242 = vmatprep.subr.mxu0 %v2849
        %3243 = vmatpush1.msra.mxu0 %v2848
        %3244 = vmatprep.subr.mxu0 %v2851
        %3245 = vmatpush1.msra.mxu0 %v2850
        %3246 = vmatprep.subr.mxu0 %v2853
        %3247 = vmatpush1.msra.mxu0 %v2852
        %3248 = vmatprep.subr.mxu0 %v2855
        %3249 = vmatpush1.msra.mxu0 %v2854
        %3250 = vmatprep.subr.mxu0 %v2857
        %3251 = vmatpush1.msra.mxu0 %v2856
        %3252 = vmatprep.subr.mxu0 %v2859
        %3253 = vmatpush1.msra.mxu0 %v2858
        %3254 = vmatprep.subr.mxu0 %v2861
        %3255 = vmatpush1.msra.mxu0 %v2860
        %3256 = vmatprep.subr.mxu0 %v2863
        %3257 = vmatpush1.msra.mxu0 %v2862
        %3258 = vmatprep.subr.mxu0 %v2865
        %3259 = vmatpush1.msra.mxu0 %v2864
        %3260 = vmatprep.subr.mxu0 %v2867
        %3261 = vmatpush1.msra.mxu0 %v2866
        %3262 = vmatprep.subr.mxu0 %v2869
        %3263 = vmatpush1.msra.mxu0 %v2868
        %3264 = vmatprep.subr.mxu0 %v2871
        %3265 = vmatpush1.msra.mxu0 %v2870
        %3266 = vmatprep.subr.mxu0 %v2873
        %3267 = vmatpush1.msra.mxu0 %v2872
        %3268 = vmatprep.subr.mxu0 %v2875
        %3269 = vmatpush1.msra.mxu0 %v2874
        %3270 = vmatprep.subr.mxu0 %v2877
        %3271 = vmatpush1.msra.mxu0 %v2876
        %3272 = vmatprep.subr.mxu0 %v2879
        %3273 = vmatpush1.msra.mxu0 %v2878
        %3274 = vmatprep.subr.mxu0 %v2881
        %3275 = vmatpush1.msra.mxu0 %v2880
        %3276 = vmatprep.subr.mxu0 %v2883
        %3277 = vmatpush1.msra.mxu0 %v2882
        %3278 = vmatprep.subr.mxu0 %v2885
        %3279 = vmatpush1.msra.mxu0 %v2884
        %3280 = vmatprep.subr.mxu0 %v2887
        %3281 = vmatpush1.msra.mxu0 %v2886
        %3282 = vmatprep.subr.mxu0 %v2889
        %3283 = vmatpush1.msra.mxu0 %v2888
        %3284 = vmatprep.subr.mxu0 %v2891
        %3285 = vmatpush1.msra.mxu0 %v2890
        %3286 = vmatprep.subr.mxu0 %v2893
        %3287 = vmatpush1.msra.mxu0 %v2892
        %3288 = vmatprep.subr.mxu0 %v2895
        %3289 = vmatpush1.msra.mxu0 %v2894
        %3290 = vmatprep.subr.mxu0 %v2897
        %3291 = vmatpush1.msra.mxu0 %v2896
        %3292 = vmatprep.subr.mxu0 %v2899
        %3293 = vmatpush1.msra.mxu0 %v2898
        %3294 = vmatprep.subr.mxu0 %v2901
        %3295 = vmatpush1.msra.mxu0 %v2900
        %3296 = vmatprep.subr.mxu0 %v2990
        %3297 = vmatpush1.msra.mxu0 %v2987
        %3298 = vmatprep.mubr.f32.mxu0 %v3187
        %3299 = vmatmul.mubr.f32.gmra.mrb[0].mxu0 %v3154
        %v3300 = vpop.f32.mrb[0].mxu0
        %v3301 = vadd.f32 0.0, %v3300
        %v3302 = vpop.f32.mrb[0].mxu0
        %v3303 = vadd.f32 0.0, %v3302
        %3304 = vmatprep.mubr.f32.mxu0 %v3190
        %3305 = vmatmul.mubr.f32.gmra.mrb[0].mxu0 %v3156
        %v3306 = vpop.f32.mrb[0].mxu0
        %v3307 = vadd.f32 0.0, %v3306
        %v3308 = vpop.f32.mrb[0].mxu0
        %v3309 = vadd.f32 0.0, %v3308
        %3310 = vmatprep.mubr.f32.mxu0 %v3193
        %3311 = vmatmul.mubr.f32.gmra.mrb[0].mxu0 %v3158
        %v3312 = vpop.f32.mrb[0].mxu0
        %v3313 = vadd.f32 0.0, %v3312
        %v3314 = vpop.f32.mrb[0].mxu0
        %v3315 = vadd.f32 0.0, %v3314
        %3316 = vmatprep.mubr.f32.mxu0 %v3196
        %3317 = vmatmul.mubr.f32.gmra.mrb[0].mxu0 %v3160
        %v3318 = vpop.f32.mrb[0].mxu0
        %v3319 = vadd.f32 0.0, %v3318
        %v3320 = vpop.f32.mrb[0].mxu0
        %v3321 = vadd.f32 0.0, %v3320
        %3322 = vmatprep.mubr.f32.mxu0 %v3199
        %3323 = vmatmul.mubr.f32.gmra.mrb[0].mxu0 %v3162
        %v3324 = vpop.f32.mrb[0].mxu0
        %v3325 = vadd.f32 0.0, %v3324
        %v3326 = vpop.f32.mrb[0].mxu0
        %v3327 = vadd.f32 0.0, %v3326
        %3328 = vmatprep.mubr.f32.mxu0 %v3202
        %3329 = vmatmul.mubr.f32.gmra.mrb[0].mxu0 %v3164
        %v3330 = vpop.f32.mrb[0].mxu0
        %v3331 = vadd.f32 0.0, %v3330
        %v3332 = vpop.f32.mrb[0].mxu0
        %v3333 = vadd.f32 0.0, %v3332
        %3334 = vmatprep.mubr.f32.mxu0 %v3205
        %3335 = vmatmul.mubr.f32.gmra.mrb[0].mxu0 %v3166
        %v3336 = vpop.f32.mrb[0].mxu0
        %v3337 = vadd.f32 0.0, %v3336
        %v3338 = vpop.f32.mrb[0].mxu0
        %v3339 = vadd.f32 0.0, %v3338
        %3340 = vmatprep.mubr.f32.mxu0 %v3208
        %3341 = vmatmul.mubr.f32.gmra.mrb[0].mxu0 %v3168
        %v3342 = vpop.f32.mrb[0].mxu0
        %v3343 = vadd.f32 0.0, %v3342
        %v3344 = vpop.f32.mrb[0].mxu0
        %v3345 = vadd.f32 0.0, %v3344
        %3346 = vmatprep.mubr.f32.mxu0 %v3211
        %3347 = vmatmul.mubr.f32.gmra.mrb[0].mxu0 %v3170
        %v3348 = vpop.f32.mrb[0].mxu0
        %v3349 = vadd.f32 0.0, %v3348
        %v3350 = vpop.f32.mrb[0].mxu0
        %v3351 = vadd.f32 0.0, %v3350
        %3352 = vmatprep.mubr.f32.mxu0 %v3214
        %3353 = vmatmul.mubr.f32.gmra.mrb[0].mxu0 %v3172
        %v3354 = vpop.f32.mrb[0].mxu0
        %v3355 = vadd.f32 0.0, %v3354
        %v3356 = vpop.f32.mrb[0].mxu0
        %v3357 = vadd.f32 0.0, %v3356
        %3358 = vmatprep.mubr.f32.mxu0 %v3217
        %3359 = vmatmul.mubr.f32.gmra.mrb[0].mxu0 %v3174
        %v3360 = vpop.f32.mrb[0].mxu0
        %v3361 = vadd.f32 0.0, %v3360
        %v3362 = vpop.f32.mrb[0].mxu0
        %v3363 = vadd.f32 0.0, %v3362
        %3364 = vmatprep.mubr.f32.mxu0 %v3220
        %3365 = vmatmul.mubr.f32.gmra.mrb[0].mxu0 %v3176
        %v3366 = vpop.f32.mrb[0].mxu0
        %v3367 = vadd.f32 0.0, %v3366
        %v3368 = vpop.f32.mrb[0].mxu0
        %v3369 = vadd.f32 0.0, %v3368
        %3370 = vmatprep.mubr.f32.mxu0 %v3223
        %3371 = vmatmul.mubr.f32.gmra.mrb[0].mxu0 %v3178
        %v3372 = vpop.f32.mrb[0].mxu0
        %v3373 = vadd.f32 0.0, %v3372
        %v3374 = vpop.f32.mrb[0].mxu0
        %v3375 = vadd.f32 0.0, %v3374
        %3376 = vmatprep.mubr.f32.mxu0 %v3226
        %3377 = vmatmul.mubr.f32.gmra.mrb[0].mxu0 %v3180
        %v3378 = vpop.f32.mrb[0].mxu0
        %v3379 = vadd.f32 0.0, %v3378
        %v3380 = vpop.f32.mrb[0].mxu0
        %v3381 = vadd.f32 0.0, %v3380
        %3382 = vmatprep.mubr.f32.mxu0 %v3229
        %3383 = vmatmul.mubr.f32.gmra.mrb[0].mxu0 %v3182
        %v3384 = vpop.f32.mrb[0].mxu0
        %v3385 = vadd.f32 0.0, %v3384
        %v3386 = vpop.f32.mrb[0].mxu0
        %v3387 = vadd.f32 0.0, %v3386
        %3388 = vmatprep.mubr.f32.mxu0 %v3232
        %3389 = vmatmul.mubr.f32.gmra.mrb[0].mxu0 %v3184
        %v3390 = vpop.f32.mrb[0].mxu0
        %v3391 = vadd.f32 0.0, %v3390
        %v3392 = vpop.f32.mrb[0].mxu0
        %v3393 = vadd.f32 0.0, %v3392
        %3394 = vdwg.mxu0
        %v3395 = vmax.f32 %v3059, %v3301
        %v3396 = vmax.f32 %v3061, %v3303
        %v3397 = vmax.f32 %v3065, %v3307
        %v3398 = vmax.f32 %v3067, %v3309
        %v3399 = vmax.f32 %v3071, %v3313
        %v3400 = vmax.f32 %v3073, %v3315
        %v3401 = vmax.f32 %v3077, %v3319
        %v3402 = vmax.f32 %v3079, %v3321
        %v3403 = vmax.f32 %v3083, %v3325
        %v3404 = vmax.f32 %v3085, %v3327
        %v3405 = vmax.f32 %v3089, %v3331
        %v3406 = vmax.f32 %v3091, %v3333
        %v3407 = vmax.f32 %v3095, %v3337
        %v3408 = vmax.f32 %v3097, %v3339
        %v3409 = vmax.f32 %v3101, %v3343
        %v3410 = vmax.f32 %v3103, %v3345
        %v3411 = vmax.f32 %v3107, %v3349
        %v3412 = vmax.f32 %v3109, %v3351
        %v3413 = vmax.f32 %v3113, %v3355
        %v3414 = vmax.f32 %v3115, %v3357
        %v3415 = vmax.f32 %v3119, %v3361
        %v3416 = vmax.f32 %v3121, %v3363
        %v3417 = vmax.f32 %v3125, %v3367
        %v3418 = vmax.f32 %v3127, %v3369
        %v3419 = vmax.f32 %v3131, %v3373
        %v3420 = vmax.f32 %v3133, %v3375
        %v3421 = vmax.f32 %v3137, %v3379
        %v3422 = vmax.f32 %v3139, %v3381
        %v3423 = vmax.f32 %v3143, %v3385
        %v3424 = vmax.f32 %v3145, %v3387
        %v3425 = vmax.f32 %v3149, %v3391
        %v3426 = vmax.f32 %v3151, %v3393
        %v3427 = vld [vmem:[%s6] sm:$0xff]
        %v3428 = vld [vmem:[%s6 + $0x8] sm:$0xff]
        %v3429 = vld [vmem:[%s6 + $0x10] sm:$0xff]
        %v3430 = vld [vmem:[%s6 + $0x18] sm:$0xff]
        %v3431 = vld [vmem:[%s6 + $0x20] sm:$0xff]
        %v3432 = vld [vmem:[%s6 + $0x28] sm:$0xff]
        %v3433 = vld [vmem:[%s6 + $0x30] sm:$0xff]
        %v3434 = vld [vmem:[%s6 + $0x38] sm:$0xff]
        %v3435 = vld [vmem:[%s6 + $0x40] sm:$0xff]
        %v3436 = vld [vmem:[%s6 + $0x48] sm:$0xff]
        %v3437 = vld [vmem:[%s6 + $0x50] sm:$0xff]
        %v3438 = vld [vmem:[%s6 + $0x58] sm:$0xff]
        %v3439 = vld [vmem:[%s6 + $0x60] sm:$0xff]
        %v3440 = vld [vmem:[%s6 + $0x68] sm:$0xff]
        %v3441 = vld [vmem:[%s6 + $0x70] sm:$0xff]
        %v3442 = vld [vmem:[%s6 + $0x78] sm:$0xff]
        %v3443 = vld [vmem:[%s6 + $0x80] sm:$0xff]
        %v3444 = vld [vmem:[%s6 + $0x88] sm:$0xff]
        %v3445 = vld [vmem:[%s6 + $0x90] sm:$0xff]
        %v3446 = vld [vmem:[%s6 + $0x98] sm:$0xff]
        %v3447 = vld [vmem:[%s6 + $0xa0] sm:$0xff]
        %vm3448 = vcmask 326656
        %v3450 = vsel %vm3448, %v3396, 0
        %v3453 = vsel %vm3448, %v3398, 0
        %v3456 = vsel %vm3448, %v3400, 0
        %v3459 = vsel %vm3448, %v3402, 0
        %v3462 = vsel %vm3448, %v3404, 0
        %v3465 = vsel %vm3448, %v3406, 0
        %v3468 = vsel %vm3448, %v3408, 0
        %v3471 = vsel %vm3448, %v3410, 0
        %v3474 = vsel %vm3448, %v3412, 0
        %v3477 = vsel %vm3448, %v3414, 0
        %v3480 = vsel %vm3448, %v3416, 0
        %v3483 = vsel %vm3448, %v3418, 0
        %v3486 = vsel %vm3448, %v3420, 0
        %v3489 = vsel %vm3448, %v3422, 0
        %v3492 = vsel %vm3448, %v3424, 0
        %v3495 = vsel %vm3448, %v3426, 0
        %3497 = vmatprep.subr.mxu0 0.0
        %3498 = vmatpush1.msra.mxu0 %v3427
        %3499 = vmatprep.subr.mxu0 0.0
        %3500 = vmatpush1.msra.mxu0 %v3428
        %3501 = vmatprep.subr.mxu0 0.0
        %3502 = vmatpush1.msra.mxu0 %v3429
        %3503 = vmatprep.subr.mxu0 0.0
        %3504 = vmatpush1.msra.mxu0 %v3430
        %3505 = vmatprep.subr.mxu0 0.0
        %3506 = vmatpush1.msra.mxu0 %v3431
        %3507 = vmatprep.subr.mxu0 0.0
        %3508 = vmatpush1.msra.mxu0 %v3432
        %3509 = vmatprep.subr.mxu0 0.0
        %3510 = vmatpush1.msra.mxu0 %v3433
        %3511 = vmatprep.subr.mxu0 0.0
        %3512 = vmatpush1.msra.mxu0 %v3434
        %3513 = vmatprep.subr.mxu0 0.0
        %3514 = vmatpush1.msra.mxu0 %v3435
        %3515 = vmatprep.subr.mxu0 0.0
        %3516 = vmatpush1.msra.mxu0 %v3436
        %3517 = vmatprep.subr.mxu0 0.0
        %3518 = vmatpush1.msra.mxu0 %v3437
        %3519 = vmatprep.subr.mxu0 0.0
        %3520 = vmatpush1.msra.mxu0 %v3438
        %3521 = vmatprep.subr.mxu0 0.0
        %3522 = vmatpush1.msra.mxu0 %v3439
        %3523 = vmatprep.subr.mxu0 0.0
        %3524 = vmatpush1.msra.mxu0 %v3440
        %3525 = vmatprep.subr.mxu0 0.0
        %3526 = vmatpush1.msra.mxu0 %v3441
        %3527 = vmatprep.subr.mxu0 0.0
        %3528 = vmatpush1.msra.mxu0 %v3442
        %3529 = vmatprep.subr.mxu0 0.0
        %3530 = vmatpush1.msra.mxu0 %v3443
        %3531 = vmatprep.subr.mxu0 0.0
        %3532 = vmatpush1.msra.mxu0 %v3444
        %3533 = vmatprep.subr.mxu0 0.0
        %3534 = vmatpush1.msra.mxu0 %v3445
        %3535 = vmatprep.subr.mxu0 0.0
        %3536 = vmatpush1.msra.mxu0 %v3446
        %3537 = vmatprep.subr.mxu0 0.0
        %3538 = vmatpush1.msra.mxu0 %v3447
        %3539 = vmatprep.subr.mxu0 0.0
        %3540 = vmatpush1.msra.mxu0 0.0
        %3541 = vmatprep.subr.mxu0 0.0
        %3542 = vmatpush1.msra.mxu0 0.0
        %3543 = vmatprep.subr.mxu0 0.0
        %3544 = vmatpush1.msra.mxu0 0.0
        %3545 = vmatprep.subr.mxu0 0.0
        %3546 = vmatpush1.msra.mxu0 0.0
        %3547 = vmatprep.subr.mxu0 0.0
        %3548 = vmatpush1.msra.mxu0 0.0
        %3549 = vmatprep.subr.mxu0 0.0
        %3550 = vmatpush1.msra.mxu0 0.0
        %3551 = vmatprep.subr.mxu0 0.0
        %3552 = vmatpush1.msra.mxu0 0.0
        %3553 = vmatprep.subr.mxu0 0.0
        %3554 = vmatpush1.msra.mxu0 0.0
        %3555 = vmatprep.subr.mxu0 0.0
        %3556 = vmatpush1.msra.mxu0 0.0
        %3557 = vmatprep.subr.mxu0 0.0
        %3558 = vmatpush1.msra.mxu0 0.0
        %3559 = vmatprep.subr.mxu0 0.0
        %3560 = vmatpush1.msra.mxu0 0.0
        %3561 = vmatprep.mubr.f32.mxu0 %v3450
        %3562 = vmatmul.mubr.f32.gmra.mrb[0].mxu0 %v3395
        %v3563 = vpop.f32.mrb[0].mxu0
        %v3564 = vadd.f32 0.0, %v3563
        %v3565 = vpop.f32.mrb[0].mxu0
        %3566 = vmatprep.mubr.f32.mxu0 %v3453
        %3567 = vmatmul.mubr.f32.gmra.mrb[0].mxu0 %v3397
        %v3568 = vpop.f32.mrb[0].mxu0
        %v3569 = vadd.f32 0.0, %v3568
        %v3570 = vpop.f32.mrb[0].mxu0
        %3571 = vmatprep.mubr.f32.mxu0 %v3456
        %3572 = vmatmul.mubr.f32.gmra.mrb[0].mxu0 %v3399
        %v3573 = vpop.f32.mrb[0].mxu0
        %v3574 = vadd.f32 0.0, %v3573
        %v3575 = vpop.f32.mrb[0].mxu0
        %3576 = vmatprep.mubr.f32.mxu0 %v3459
        %3577 = vmatmul.mubr.f32.gmra.mrb[0].mxu0 %v3401
        %v3578 = vpop.f32.mrb[0].mxu0
        %v3579 = vadd.f32 0.0, %v3578
        %v3580 = vpop.f32.mrb[0].mxu0
        %3581 = vmatprep.mubr.f32.mxu0 %v3462
        %3582 = vmatmul.mubr.f32.gmra.mrb[0].mxu0 %v3403
        %v3583 = vpop.f32.mrb[0].mxu0
        %v3584 = vadd.f32 0.0, %v3583
        %v3585 = vpop.f32.mrb[0].mxu0
        %3586 = vmatprep.mubr.f32.mxu0 %v3465
        %3587 = vmatmul.mubr.f32.gmra.mrb[0].mxu0 %v3405
        %v3588 = vpop.f32.mrb[0].mxu0
        %v3589 = vadd.f32 0.0, %v3588
        %v3590 = vpop.f32.mrb[0].mxu0
        %3591 = vmatprep.mubr.f32.mxu0 %v3468
        %3592 = vmatmul.mubr.f32.gmra.mrb[0].mxu0 %v3407
        %v3593 = vpop.f32.mrb[0].mxu0
        %v3594 = vadd.f32 0.0, %v3593
        %v3595 = vpop.f32.mrb[0].mxu0
        %3596 = vmatprep.mubr.f32.mxu0 %v3471
        %3597 = vmatmul.mubr.f32.gmra.mrb[0].mxu0 %v3409
        %v3598 = vpop.f32.mrb[0].mxu0
        %v3599 = vadd.f32 0.0, %v3598
        %v3600 = vpop.f32.mrb[0].mxu0
        %3601 = vmatprep.mubr.f32.mxu0 %v3474
        %3602 = vmatmul.mubr.f32.gmra.mrb[0].mxu0 %v3411
        %v3603 = vpop.f32.mrb[0].mxu0
        %v3604 = vadd.f32 0.0, %v3603
        %v3605 = vpop.f32.mrb[0].mxu0
        %3606 = vmatprep.mubr.f32.mxu0 %v3477
        %3607 = vmatmul.mubr.f32.gmra.mrb[0].mxu0 %v3413
        %v3608 = vpop.f32.mrb[0].mxu0
        %v3609 = vadd.f32 0.0, %v3608
        %v3610 = vpop.f32.mrb[0].mxu0
        %3611 = vmatprep.mubr.f32.mxu0 %v3480
        %3612 = vmatmul.mubr.f32.gmra.mrb[0].mxu0 %v3415
        %v3613 = vpop.f32.mrb[0].mxu0
        %v3614 = vadd.f32 0.0, %v3613
        %v3615 = vpop.f32.mrb[0].mxu0
        %3616 = vmatprep.mubr.f32.mxu0 %v3483
        %3617 = vmatmul.mubr.f32.gmra.mrb[0].mxu0 %v3417
        %v3618 = vpop.f32.mrb[0].mxu0
        %v3619 = vadd.f32 0.0, %v3618
        %v3620 = vpop.f32.mrb[0].mxu0
        %3621 = vmatprep.mubr.f32.mxu0 %v3486
        %3622 = vmatmul.mubr.f32.gmra.mrb[0].mxu0 %v3419
        %v3623 = vpop.f32.mrb[0].mxu0
        %v3624 = vadd.f32 0.0, %v3623
        %v3625 = vpop.f32.mrb[0].mxu0
        %3626 = vmatprep.mubr.f32.mxu0 %v3489
        %3627 = vmatmul.mubr.f32.gmra.mrb[0].mxu0 %v3421
        %v3628 = vpop.f32.mrb[0].mxu0
        %v3629 = vadd.f32 0.0, %v3628
        %v3630 = vpop.f32.mrb[0].mxu0
        %3631 = vmatprep.mubr.f32.mxu0 %v3492
        %3632 = vmatmul.mubr.f32.gmra.mrb[0].mxu0 %v3423
        %v3633 = vpop.f32.mrb[0].mxu0
        %v3634 = vadd.f32 0.0, %v3633
        %v3635 = vpop.f32.mrb[0].mxu0
        %3636 = vmatprep.mubr.f32.mxu0 %v3495
        %3637 = vmatmul.mubr.f32.gmra.mrb[0].mxu0 %v3425
        %v3638 = vpop.f32.mrb[0].mxu0
        %v3639 = vadd.f32 0.0, %v3638
        %v3640 = vpop.f32.mrb[0].mxu0
        %3641 = vdwg.mxu0
        %s3642 = scalar_lea.vmem %s6, 168
        %v3643 = vld [vmem:[%s3642] sm:$0xff]
        %v3644 = vld [vmem:[%s3642 + $0x8] sm:$0xff]
        %v3645 = vld [vmem:[%s3642 + $0x10] sm:$0xff]
        %v3646 = vld [vmem:[%s3642 + $0x18] sm:$0xff]
        %v3647 = vld [vmem:[%s3642 + $0x20] sm:$0xff]
        %v3648 = vld [vmem:[%s3642 + $0x28] sm:$0xff]
        %v3649 = vld [vmem:[%s3642 + $0x30] sm:$0xff]
        %v3650 = vld [vmem:[%s3642 + $0x38] sm:$0xff]
        %v3651 = vld [vmem:[%s3642 + $0x40] sm:$0xff]
        %v3652 = vld [vmem:[%s3642 + $0x48] sm:$0xff]
        %v3653 = vld [vmem:[%s3642 + $0x50] sm:$0xff]
        %v3654 = vld [vmem:[%s3642 + $0x58] sm:$0xff]
        %v3655 = vld [vmem:[%s3642 + $0x60] sm:$0xff]
        %v3656 = vld [vmem:[%s3642 + $0x68] sm:$0xff]
        %v3657 = vld [vmem:[%s3642 + $0x70] sm:$0xff]
        %v3658 = vld [vmem:[%s3642 + $0x78] sm:$0xff]
        %v3659 = vld [vmem:[%s3642 + $0x80] sm:$0xff]
        %v3660 = vld [vmem:[%s3642 + $0x88] sm:$0xff]
        %v3661 = vld [vmem:[%s3642 + $0x90] sm:$0xff]
        %v3662 = vld [vmem:[%s3642 + $0x98] sm:$0xff]
        %v3663 = vld [vmem:[%s3642 + $0xa0] sm:$0xff]
        %3664 = vmatprep.subr.mxu0 0.0
        %3665 = vmatpush1.msra.mxu0 %v3643
        %3666 = vmatprep.subr.mxu0 0.0
        %3667 = vmatpush1.msra.mxu0 %v3644
        %3668 = vmatprep.subr.mxu0 0.0
        %3669 = vmatpush1.msra.mxu0 %v3645
        %3670 = vmatprep.subr.mxu0 0.0
        %3671 = vmatpush1.msra.mxu0 %v3646
        %3672 = vmatprep.subr.mxu0 0.0
        %3673 = vmatpush1.msra.mxu0 %v3647
        %3674 = vmatprep.subr.mxu0 0.0
        %3675 = vmatpush1.msra.mxu0 %v3648
        %3676 = vmatprep.subr.mxu0 0.0
        %3677 = vmatpush1.msra.mxu0 %v3649
        %3678 = vmatprep.subr.mxu0 0.0
        %3679 = vmatpush1.msra.mxu0 %v3650
        %3680 = vmatprep.subr.mxu0 0.0
        %3681 = vmatpush1.msra.mxu0 %v3651
        %3682 = vmatprep.subr.mxu0 0.0
        %3683 = vmatpush1.msra.mxu0 %v3652
        %3684 = vmatprep.subr.mxu0 0.0
        %3685 = vmatpush1.msra.mxu0 %v3653
        %3686 = vmatprep.subr.mxu0 0.0
        %3687 = vmatpush1.msra.mxu0 %v3654
        %3688 = vmatprep.subr.mxu0 0.0
        %3689 = vmatpush1.msra.mxu0 %v3655
        %3690 = vmatprep.subr.mxu0 0.0
        %3691 = vmatpush1.msra.mxu0 %v3656
        %3692 = vmatprep.subr.mxu0 0.0
        %3693 = vmatpush1.msra.mxu0 %v3657
        %3694 = vmatprep.subr.mxu0 0.0
        %3695 = vmatpush1.msra.mxu0 %v3658
        %3696 = vmatprep.subr.mxu0 0.0
        %3697 = vmatpush1.msra.mxu0 %v3659
        %3698 = vmatprep.subr.mxu0 0.0
        %3699 = vmatpush1.msra.mxu0 %v3660
        %3700 = vmatprep.subr.mxu0 0.0
        %3701 = vmatpush1.msra.mxu0 %v3661
        %3702 = vmatprep.subr.mxu0 0.0
        %3703 = vmatpush1.msra.mxu0 %v3662
        %3704 = vmatprep.subr.mxu0 0.0
        %3705 = vmatpush1.msra.mxu0 %v3663
        %3706 = vmatprep.subr.mxu0 0.0
        %3707 = vmatpush1.msra.mxu0 0.0
        %3708 = vmatprep.subr.mxu0 0.0
        %3709 = vmatpush1.msra.mxu0 0.0
        %3710 = vmatprep.subr.mxu0 0.0
        %3711 = vmatpush1.msra.mxu0 0.0
        %3712 = vmatprep.subr.mxu0 0.0
        %3713 = vmatpush1.msra.mxu0 0.0
        %3714 = vmatprep.subr.mxu0 0.0
        %3715 = vmatpush1.msra.mxu0 0.0
        %3716 = vmatprep.subr.mxu0 0.0
        %3717 = vmatpush1.msra.mxu0 0.0
        %3718 = vmatprep.subr.mxu0 0.0
        %3719 = vmatpush1.msra.mxu0 0.0
        %3720 = vmatprep.subr.mxu0 0.0
        %3721 = vmatpush1.msra.mxu0 0.0
        %3722 = vmatprep.subr.mxu0 0.0
        %3723 = vmatpush1.msra.mxu0 0.0
        %3724 = vmatprep.subr.mxu0 0.0
        %3725 = vmatpush1.msra.mxu0 0.0
        %3726 = vmatprep.subr.mxu0 0.0
        %3727 = vmatpush1.msra.mxu0 0.0
        %3728 = vmatprep.mubr.f32.mxu0 %v3450
        %3729 = vmatmul.mubr.f32.gmra.mrb[0].mxu0 %v3395
        %v3730 = vpop.f32.mrb[0].mxu0
        %v3731 = vadd.f32 0.0, %v3730
        %v3732 = vpop.f32.mrb[0].mxu0
        %3733 = vmatprep.mubr.f32.mxu0 %v3453
        %3734 = vmatmul.mubr.f32.gmra.mrb[0].mxu0 %v3397
        %v3735 = vpop.f32.mrb[0].mxu0
        %v3736 = vadd.f32 0.0, %v3735
        %v3737 = vpop.f32.mrb[0].mxu0
        %3738 = vmatprep.mubr.f32.mxu0 %v3456
        %3739 = vmatmul.mubr.f32.gmra.mrb[0].mxu0 %v3399
        %v3740 = vpop.f32.mrb[0].mxu0
        %v3741 = vadd.f32 0.0, %v3740
        %v3742 = vpop.f32.mrb[0].mxu0
        %3743 = vmatprep.mubr.f32.mxu0 %v3459
        %3744 = vmatmul.mubr.f32.gmra.mrb[0].mxu0 %v3401
        %v3745 = vpop.f32.mrb[0].mxu0
        %v3746 = vadd.f32 0.0, %v3745
        %v3747 = vpop.f32.mrb[0].mxu0
        %3748 = vmatprep.mubr.f32.mxu0 %v3462
        %3749 = vmatmul.mubr.f32.gmra.mrb[0].mxu0 %v3403
        %v3750 = vpop.f32.mrb[0].mxu0
        %v3751 = vadd.f32 0.0, %v3750
        %v3752 = vpop.f32.mrb[0].mxu0
        %3753 = vmatprep.mubr.f32.mxu0 %v3465
        %3754 = vmatmul.mubr.f32.gmra.mrb[0].mxu0 %v3405
        %v3755 = vpop.f32.mrb[0].mxu0
        %v3756 = vadd.f32 0.0, %v3755
        %v3757 = vpop.f32.mrb[0].mxu0
        %3758 = vmatprep.mubr.f32.mxu0 %v3468
        %3759 = vmatmul.mubr.f32.gmra.mrb[0].mxu0 %v3407
        %v3760 = vpop.f32.mrb[0].mxu0
        %v3761 = vadd.f32 0.0, %v3760
        %v3762 = vpop.f32.mrb[0].mxu0
        %3763 = vmatprep.mubr.f32.mxu0 %v3471
        %3764 = vmatmul.mubr.f32.gmra.mrb[0].mxu0 %v3409
        %v3765 = vpop.f32.mrb[0].mxu0
        %v3766 = vadd.f32 0.0, %v3765
        %v3767 = vpop.f32.mrb[0].mxu0
        %3768 = vmatprep.mubr.f32.mxu0 %v3474
        %3769 = vmatmul.mubr.f32.gmra.mrb[0].mxu0 %v3411
        %v3770 = vpop.f32.mrb[0].mxu0
        %v3771 = vadd.f32 0.0, %v3770
        %v3772 = vpop.f32.mrb[0].mxu0
        %3773 = vmatprep.mubr.f32.mxu0 %v3477
        %3774 = vmatmul.mubr.f32.gmra.mrb[0].mxu0 %v3413
        %v3775 = vpop.f32.mrb[0].mxu0
        %v3776 = vadd.f32 0.0, %v3775
        %v3777 = vpop.f32.mrb[0].mxu0
        %3778 = vmatprep.mubr.f32.mxu0 %v3480
        %3779 = vmatmul.mubr.f32.gmra.mrb[0].mxu0 %v3415
        %v3780 = vpop.f32.mrb[0].mxu0
        %v3781 = vadd.f32 0.0, %v3780
        %v3782 = vpop.f32.mrb[0].mxu0
        %3783 = vmatprep.mubr.f32.mxu0 %v3483
        %3784 = vmatmul.mubr.f32.gmra.mrb[0].mxu0 %v3417
        %v3785 = vpop.f32.mrb[0].mxu0
        %v3786 = vadd.f32 0.0, %v3785
        %v3787 = vpop.f32.mrb[0].mxu0
        %3788 = vmatprep.mubr.f32.mxu0 %v3486
        %3789 = vmatmul.mubr.f32.gmra.mrb[0].mxu0 %v3419
        %v3790 = vpop.f32.mrb[0].mxu0
        %v3791 = vadd.f32 0.0, %v3790
        %v3792 = vpop.f32.mrb[0].mxu0
        %3793 = vmatprep.mubr.f32.mxu0 %v3489
        %3794 = vmatmul.mubr.f32.gmra.mrb[0].mxu0 %v3421
        %v3795 = vpop.f32.mrb[0].mxu0
        %v3796 = vadd.f32 0.0, %v3795
        %v3797 = vpop.f32.mrb[0].mxu0
        %3798 = vmatprep.mubr.f32.mxu0 %v3492
        %3799 = vmatmul.mubr.f32.gmra.mrb[0].mxu0 %v3423
        %v3800 = vpop.f32.mrb[0].mxu0
        %v3801 = vadd.f32 0.0, %v3800
        %v3802 = vpop.f32.mrb[0].mxu0
        %3803 = vmatprep.mubr.f32.mxu0 %v3495
        %3804 = vmatmul.mubr.f32.gmra.mrb[0].mxu0 %v3425
        %v3805 = vpop.f32.mrb[0].mxu0
        %v3806 = vadd.f32 0.0, %v3805
        %v3807 = vpop.f32.mrb[0].mxu0
        %3808 = vdwg.mxu0
        %v3809 = vmax.f32 %v3564, %v3731
        %v3810 = vmax.f32 %v3569, %v3736
        %v3811 = vmax.f32 %v3574, %v3741
        %v3812 = vmax.f32 %v3579, %v3746
        %v3813 = vmax.f32 %v3584, %v3751
        %v3814 = vmax.f32 %v3589, %v3756
        %v3815 = vmax.f32 %v3594, %v3761
        %v3816 = vmax.f32 %v3599, %v3766
        %v3817 = vmax.f32 %v3604, %v3771
        %v3818 = vmax.f32 %v3609, %v3776
        %v3819 = vmax.f32 %v3614, %v3781
        %v3820 = vmax.f32 %v3619, %v3786
        %v3821 = vmax.f32 %v3624, %v3791
        %v3822 = vmax.f32 %v3629, %v3796
        %v3823 = vmax.f32 %v3634, %v3801
        %v3824 = vmax.f32 %v3639, %v3806
        %vm3825 = vcmask 687104
        %3826 = vst.msk [vmem:[#allocation2] sm:$0xff] %vm3825, %v3809
        %3827 = vst.msk [vmem:[#allocation2 + $0x8] sm:$0xff] %vm3825, %v3810
        %3828 = vst.msk [vmem:[#allocation2 + $0x10] sm:$0xff] %vm3825, %v3811
        %3829 = vst.msk [vmem:[#allocation2 + $0x18] sm:$0xff] %vm3825, %v3812
        %3830 = vst.msk [vmem:[#allocation2 + $0x20] sm:$0xff] %vm3825, %v3813
        %3831 = vst.msk [vmem:[#allocation2 + $0x28] sm:$0xff] %vm3825, %v3814
        %3832 = vst.msk [vmem:[#allocation2 + $0x30] sm:$0xff] %vm3825, %v3815
        %3833 = vst.msk [vmem:[#allocation2 + $0x38] sm:$0xff] %vm3825, %v3816
        %3834 = vst.msk [vmem:[#allocation2 + $0x40] sm:$0xff] %vm3825, %v3817
        %3835 = vst.msk [vmem:[#allocation2 + $0x48] sm:$0xff] %vm3825, %v3818
        %3836 = vst.msk [vmem:[#allocation2 + $0x50] sm:$0xff] %vm3825, %v3819
        %3837 = vst.msk [vmem:[#allocation2 + $0x58] sm:$0xff] %vm3825, %v3820
        %3838 = vst.msk [vmem:[#allocation2 + $0x60] sm:$0xff] %vm3825, %v3821
        %3839 = vst.msk [vmem:[#allocation2 + $0x68] sm:$0xff] %vm3825, %v3822
        %3840 = vst.msk [vmem:[#allocation2 + $0x70] sm:$0xff] %vm3825, %v3823
        %3841 = vst.msk [vmem:[#allocation2 + $0x78] sm:$0xff] %vm3825, %v3824
        %v3842 = vld [vmem:[#allocation2] sm:$0xff]
        %v3843 = vld [vmem:[#allocation2 + $0x8] sm:$0xff]
        %v3844 = vld [vmem:[#allocation2 + $0x10] sm:$0xff]
        %v3845 = vld [vmem:[#allocation2 + $0x18] sm:$0xff]
        %v3846 = vld [vmem:[#allocation2 + $0x20] sm:$0xff]
        %v3847 = vld [vmem:[#allocation2 + $0x28] sm:$0xff]
        %v3848 = vld [vmem:[#allocation2 + $0x30] sm:$0xff]
        %v3849 = vld [vmem:[#allocation2 + $0x38] sm:$0xff]
        %v3850 = vld [vmem:[#allocation2 + $0x40] sm:$0xff]
        %v3851 = vld [vmem:[#allocation2 + $0x48] sm:$0xff]
        %v3852 = vld [vmem:[#allocation2 + $0x50] sm:$0xff]
        %v3853 = vld [vmem:[#allocation2 + $0x58] sm:$0xff]
        %v3854 = vld [vmem:[#allocation2 + $0x60] sm:$0xff]
        %v3855 = vld [vmem:[#allocation2 + $0x68] sm:$0xff]
        %v3856 = vld [vmem:[#allocation2 + $0x70] sm:$0xff]
        %v3857 = vld [vmem:[#allocation2 + $0x78] sm:$0xf]
        %v3858 = vld [vmem:[%s3] sm:$0xff]
        %v3859 = vld [vmem:[%s3 + $0x8] sm:$0xff]
        %v3860 = vld [vmem:[%s3 + $0x10] sm:$0xff]
        %v3861 = vld [vmem:[%s3 + $0x18] sm:$0xff]
        %v3862 = vld [vmem:[%s3 + $0x20] sm:$0xff]
        %v3863 = vld [vmem:[%s3 + $0x28] sm:$0xff]
        %v3864 = vld [vmem:[%s3 + $0x30] sm:$0xff]
        %v3865 = vld [vmem:[%s3 + $0x38] sm:$0xff]
        %v3866 = vld [vmem:[%s3 + $0x40] sm:$0xff]
        %v3867 = vld [vmem:[%s3 + $0x48] sm:$0xff]
        %v3868 = vld [vmem:[%s3 + $0x50] sm:$0xff]
        %v3869 = vld [vmem:[%s3 + $0x58] sm:$0xff]
        %v3870 = vld [vmem:[%s3 + $0x60] sm:$0xff]
        %v3871 = vld [vmem:[%s3 + $0x68] sm:$0xff]
        %v3872 = vld [vmem:[%s3 + $0x70] sm:$0xff]
        %v3873 = vld [vmem:[%s3 + $0x78] sm:$0xff]
        %v3874 = vld [vmem:[%s3 + $0x80] sm:$0xff]
        %v3875 = vld [vmem:[%s3 + $0x88] sm:$0xff]
        %v3876 = vld [vmem:[%s3 + $0x90] sm:$0xff]
        %v3877 = vld [vmem:[%s3 + $0x98] sm:$0xff]
        %v3878 = vld [vmem:[%s3 + $0xa0] sm:$0xf]
        %v3879 = vld [vmem:[%s3 + $0xa8] sm:$0xf]
        %v3880 = vld [vmem:[#allocation2 + $0x1] sm:$0xff]
        %v3881 = vld [vmem:[#allocation2 + $0x9] sm:$0xff]
        %v3882 = vld [vmem:[#allocation2 + $0x11] sm:$0xff]
        %v3883 = vld [vmem:[#allocation2 + $0x19] sm:$0xff]
        %v3884 = vld [vmem:[#allocation2 + $0x21] sm:$0xff]
        %v3885 = vld [vmem:[#allocation2 + $0x29] sm:$0xff]
        %v3886 = vld [vmem:[#allocation2 + $0x31] sm:$0xff]
        %v3887 = vld [vmem:[#allocation2 + $0x39] sm:$0xff]
        %v3888 = vld [vmem:[#allocation2 + $0x41] sm:$0xff]
        %v3889 = vld [vmem:[#allocation2 + $0x49] sm:$0xff]
        %v3890 = vld [vmem:[#allocation2 + $0x51] sm:$0xff]
        %v3891 = vld [vmem:[#allocation2 + $0x59] sm:$0xff]
        %v3892 = vld [vmem:[#allocation2 + $0x61] sm:$0xff]
        %v3893 = vld [vmem:[#allocation2 + $0x69] sm:$0xff]
        %v3894 = vld [vmem:[#allocation2 + $0x71] sm:$0xff]
        %v3895 = vld [vmem:[#allocation2 + $0x79] sm:$0xf]
        %s3896 = scalar_lea.vmem %s3, 176
        %v3897 = vld [vmem:[%s3896] sm:$0xff]
        %v3898 = vld [vmem:[%s3896 + $0x8] sm:$0xff]
        %v3899 = vld [vmem:[%s3896 + $0x10] sm:$0xff]
        %v3900 = vld [vmem:[%s3896 + $0x18] sm:$0xff]
        %v3901 = vld [vmem:[%s3896 + $0x20] sm:$0xff]
        %v3902 = vld [vmem:[%s3896 + $0x28] sm:$0xff]
        %v3903 = vld [vmem:[%s3896 + $0x30] sm:$0xff]
        %v3904 = vld [vmem:[%s3896 + $0x38] sm:$0xff]
        %v3905 = vld [vmem:[%s3896 + $0x40] sm:$0xff]
        %v3906 = vld [vmem:[%s3896 + $0x48] sm:$0xff]
        %v3907 = vld [vmem:[%s3896 + $0x50] sm:$0xff]
        %v3908 = vld [vmem:[%s3896 + $0x58] sm:$0xff]
        %v3909 = vld [vmem:[%s3896 + $0x60] sm:$0xff]
        %v3910 = vld [vmem:[%s3896 + $0x68] sm:$0xff]
        %v3911 = vld [vmem:[%s3896 + $0x70] sm:$0xff]
        %v3912 = vld [vmem:[%s3896 + $0x78] sm:$0xff]
        %v3913 = vld [vmem:[%s3896 + $0x80] sm:$0xff]
        %v3914 = vld [vmem:[%s3896 + $0x88] sm:$0xff]
        %v3915 = vld [vmem:[%s3896 + $0x90] sm:$0xff]
        %v3916 = vld [vmem:[%s3896 + $0x98] sm:$0xff]
        %v3917 = vld [vmem:[%s3896 + $0xa0] sm:$0xf]
        %v3918 = vld [vmem:[%s3896 + $0xa8] sm:$0xf]
        %v3920 = vsel %vm3825, %v3880, 0
        %v3923 = vsel %vm3825, %v3881, 0
        %v3926 = vsel %vm3825, %v3882, 0
        %v3929 = vsel %vm3825, %v3883, 0
        %v3932 = vsel %vm3825, %v3884, 0
        %v3935 = vsel %vm3825, %v3885, 0
        %v3938 = vsel %vm3825, %v3886, 0
        %v3941 = vsel %vm3825, %v3887, 0
        %v3944 = vsel %vm3825, %v3888, 0
        %v3947 = vsel %vm3825, %v3889, 0
        %v3950 = vsel %vm3825, %v3890, 0
        %v3953 = vsel %vm3825, %v3891, 0
        %v3956 = vsel %vm3825, %v3892, 0
        %v3959 = vsel %vm3825, %v3893, 0
        %v3962 = vsel %vm3825, %v3894, 0
        %v3965 = vsel %vm3825, %v3895, 0
        %v3968 = vsel %vm2985, %v3917, 0
        %v3971 = vsel %vm2985, %v3918, 0
        %3973 = vmatprep.subr.mxu0 %v3898
        %3974 = vmatpush1.msra.mxu0 %v3897
        %3975 = vmatprep.subr.mxu0 %v3900
        %3976 = vmatpush1.msra.mxu0 %v3899
        %3977 = vmatprep.subr.mxu0 %v3902
        %3978 = vmatpush1.msra.mxu0 %v3901
        %3979 = vmatprep.subr.mxu0 %v3904
        %3980 = vmatpush1.msra.mxu0 %v3903
        %3981 = vmatprep.subr.mxu0 %v3906
        %3982 = vmatpush1.msra.mxu0 %v3905
        %3983 = vmatprep.subr.mxu0 %v3908
        %3984 = vmatpush1.msra.mxu0 %v3907
        %3985 = vmatprep.subr.mxu0 %v3910
        %3986 = vmatpush1.msra.mxu0 %v3909
        %3987 = vmatprep.subr.mxu0 %v3912
        %3988 = vmatpush1.msra.mxu0 %v3911
        %3989 = vmatprep.subr.mxu0 %v3914
        %3990 = vmatpush1.msra.mxu0 %v3913
        %3991 = vmatprep.subr.mxu0 %v3916
        %3992 = vmatpush1.msra.mxu0 %v3915
        %3993 = vmatprep.subr.mxu0 %v3971
        %3994 = vmatpush1.msra.mxu0 %v3968
        %3995 = vmatprep.subr.mxu0 0.0
        %3996 = vmatpush1.msra.mxu0 0.0
        %3997 = vmatprep.subr.mxu0 0.0
        %3998 = vmatpush1.msra.mxu0 0.0
        %3999 = vmatprep.subr.mxu0 0.0
        %4000 = vmatpush1.msra.mxu0 0.0
        %4001 = vmatprep.subr.mxu0 0.0
        %4002 = vmatpush1.msra.mxu0 0.0
        %4003 = vmatprep.subr.mxu0 0.0
        %4004 = vmatpush1.msra.mxu0 0.0
        %4005 = vmatprep.subr.mxu0 0.0
        %4006 = vmatpush1.msra.mxu0 0.0
        %4007 = vmatprep.subr.mxu0 0.0
        %4008 = vmatpush1.msra.mxu0 0.0
        %4009 = vmatprep.subr.mxu0 0.0
        %4010 = vmatpush1.msra.mxu0 0.0
        %4011 = vmatprep.subr.mxu0 0.0
        %4012 = vmatpush1.msra.mxu0 0.0
        %4013 = vmatprep.subr.mxu0 0.0
        %4014 = vmatpush1.msra.mxu0 0.0
        %4015 = vmatprep.subr.mxu0 0.0
        %4016 = vmatpush1.msra.mxu0 0.0
        %4017 = vmatprep.subr.mxu0 0.0
        %4018 = vmatpush1.msra.mxu0 0.0
        %4019 = vmatprep.subr.mxu0 0.0
        %4020 = vmatpush1.msra.mxu0 0.0
        %4021 = vmatprep.subr.mxu0 0.0
        %4022 = vmatpush1.msra.mxu0 0.0
        %4023 = vmatprep.subr.mxu0 0.0
        %4024 = vmatpush1.msra.mxu0 0.0
        %4025 = vmatprep.subr.mxu0 0.0
        %4026 = vmatpush1.msra.mxu0 0.0
        %4027 = vmatprep.subr.mxu0 0.0
        %4028 = vmatpush1.msra.mxu0 0.0
        %4029 = vmatprep.subr.mxu0 0.0
        %4030 = vmatpush1.msra.mxu0 0.0
        %4031 = vmatprep.subr.mxu0 0.0
        %4032 = vmatpush1.msra.mxu0 0.0
        %4033 = vmatprep.subr.mxu0 0.0
        %4034 = vmatpush1.msra.mxu0 0.0
        %4035 = vmatprep.subr.mxu0 0.0
        %4036 = vmatpush1.msra.mxu0 0.0
        %4037 = vmatprep.mubr.f32.mxu0 0.0
        %4038 = vmatmul.mubr.f32.gmra.mrb[0].mxu0 %v3920
        %v4039 = vpop.f32.mrb[0].mxu0
        %v4040 = vadd.f32 0.0, %v4039
        %v4041 = vpop.f32.mrb[0].mxu0
        %v4042 = vadd.f32 0.0, %v4041
        %4043 = vmatprep.mubr.f32.mxu0 0.0
        %4044 = vmatmul.mubr.f32.gmra.mrb[0].mxu0 %v3923
        %v4045 = vpop.f32.mrb[0].mxu0
        %v4046 = vadd.f32 0.0, %v4045
        %v4047 = vpop.f32.mrb[0].mxu0
        %v4048 = vadd.f32 0.0, %v4047
        %4049 = vmatprep.mubr.f32.mxu0 0.0
        %4050 = vmatmul.mubr.f32.gmra.mrb[0].mxu0 %v3926
        %v4051 = vpop.f32.mrb[0].mxu0
        %v4052 = vadd.f32 0.0, %v4051
        %v4053 = vpop.f32.mrb[0].mxu0
        %v4054 = vadd.f32 0.0, %v4053
        %4055 = vmatprep.mubr.f32.mxu0 0.0
        %4056 = vmatmul.mubr.f32.gmra.mrb[0].mxu0 %v3929
        %v4057 = vpop.f32.mrb[0].mxu0
        %v4058 = vadd.f32 0.0, %v4057
        %v4059 = vpop.f32.mrb[0].mxu0
        %v4060 = vadd.f32 0.0, %v4059
        %4061 = vmatprep.mubr.f32.mxu0 0.0
        %4062 = vmatmul.mubr.f32.gmra.mrb[0].mxu0 %v3932
        %v4063 = vpop.f32.mrb[0].mxu0
        %v4064 = vadd.f32 0.0, %v4063
        %v4065 = vpop.f32.mrb[0].mxu0
        %v4066 = vadd.f32 0.0, %v4065
        %4067 = vmatprep.mubr.f32.mxu0 0.0
        %4068 = vmatmul.mubr.f32.gmra.mrb[0].mxu0 %v3935
        %v4069 = vpop.f32.mrb[0].mxu0
        %v4070 = vadd.f32 0.0, %v4069
        %v4071 = vpop.f32.mrb[0].mxu0
        %v4072 = vadd.f32 0.0, %v4071
        %4073 = vmatprep.mubr.f32.mxu0 0.0
        %4074 = vmatmul.mubr.f32.gmra.mrb[0].mxu0 %v3938
        %v4075 = vpop.f32.mrb[0].mxu0
        %v4076 = vadd.f32 0.0, %v4075
        %v4077 = vpop.f32.mrb[0].mxu0
        %v4078 = vadd.f32 0.0, %v4077
        %4079 = vmatprep.mubr.f32.mxu0 0.0
        %4080 = vmatmul.mubr.f32.gmra.mrb[0].mxu0 %v3941
        %v4081 = vpop.f32.mrb[0].mxu0
        %v4082 = vadd.f32 0.0, %v4081
        %v4083 = vpop.f32.mrb[0].mxu0
        %v4084 = vadd.f32 0.0, %v4083
        %4085 = vmatprep.mubr.f32.mxu0 0.0
        %4086 = vmatmul.mubr.f32.gmra.mrb[0].mxu0 %v3944
        %v4087 = vpop.f32.mrb[0].mxu0
        %v4088 = vadd.f32 0.0, %v4087
        %v4089 = vpop.f32.mrb[0].mxu0
        %v4090 = vadd.f32 0.0, %v4089
        %4091 = vmatprep.mubr.f32.mxu0 0.0
        %4092 = vmatmul.mubr.f32.gmra.mrb[0].mxu0 %v3947
        %v4093 = vpop.f32.mrb[0].mxu0
        %v4094 = vadd.f32 0.0, %v4093
        %v4095 = vpop.f32.mrb[0].mxu0
        %v4096 = vadd.f32 0.0, %v4095
        %4097 = vmatprep.mubr.f32.mxu0 0.0
        %4098 = vmatmul.mubr.f32.gmra.mrb[0].mxu0 %v3950
        %v4099 = vpop.f32.mrb[0].mxu0
        %v4100 = vadd.f32 0.0, %v4099
        %v4101 = vpop.f32.mrb[0].mxu0
        %v4102 = vadd.f32 0.0, %v4101
        %4103 = vmatprep.mubr.f32.mxu0 0.0
        %4104 = vmatmul.mubr.f32.gmra.mrb[0].mxu0 %v3953
        %v4105 = vpop.f32.mrb[0].mxu0
        %v4106 = vadd.f32 0.0, %v4105
        %v4107 = vpop.f32.mrb[0].mxu0
        %v4108 = vadd.f32 0.0, %v4107
        %4109 = vmatprep.mubr.f32.mxu0 0.0
        %4110 = vmatmul.mubr.f32.gmra.mrb[0].mxu0 %v3956
        %v4111 = vpop.f32.mrb[0].mxu0
        %v4112 = vadd.f32 0.0, %v4111
        %v4113 = vpop.f32.mrb[0].mxu0
        %v4114 = vadd.f32 0.0, %v4113
        %4115 = vmatprep.mubr.f32.mxu0 0.0
        %4116 = vmatmul.mubr.f32.gmra.mrb[0].mxu0 %v3959
        %v4117 = vpop.f32.mrb[0].mxu0
        %v4118 = vadd.f32 0.0, %v4117
        %v4119 = vpop.f32.mrb[0].mxu0
        %v4120 = vadd.f32 0.0, %v4119
        %4121 = vmatprep.mubr.f32.mxu0 0.0
        %4122 = vmatmul.mubr.f32.gmra.mrb[0].mxu0 %v3962
        %v4123 = vpop.f32.mrb[0].mxu0
        %v4124 = vadd.f32 0.0, %v4123
        %v4125 = vpop.f32.mrb[0].mxu0
        %v4126 = vadd.f32 0.0, %v4125
        %4127 = vmatprep.mubr.f32.mxu0 0.0
        %4128 = vmatmul.mubr.f32.gmra.mrb[0].mxu0 %v3965
        %v4129 = vpop.f32.mrb[0].mxu0
        %v4130 = vadd.f32 0.0, %v4129
        %v4131 = vpop.f32.mrb[0].mxu0
        %v4132 = vadd.f32 0.0, %v4131
        %4133 = vdwg.mxu0
        %v4135 = vsel %vm3825, %v3842, 0
        %v4138 = vsel %vm3825, %v3843, 0
        %v4141 = vsel %vm3825, %v3844, 0
        %v4144 = vsel %vm3825, %v3845, 0
        %v4147 = vsel %vm3825, %v3846, 0
        %v4150 = vsel %vm3825, %v3847, 0
        %v4153 = vsel %vm3825, %v3848, 0
        %v4156 = vsel %vm3825, %v3849, 0
        %v4159 = vsel %vm3825, %v3850, 0
        %v4162 = vsel %vm3825, %v3851, 0
        %v4165 = vsel %vm3825, %v3852, 0
        %v4168 = vsel %vm3825, %v3853, 0
        %v4171 = vsel %vm3825, %v3854, 0
        %v4174 = vsel %vm3825, %v3855, 0
        %v4177 = vsel %vm3825, %v3856, 0
        %v4180 = vsel %vm3825, %v3857, 0
        %v4183 = vsel %vm2985, %v3878, 0
        %v4186 = vsel %vm2985, %v3879, 0
        %4188 = vmatprep.subr.mxu0 %v3859
        %4189 = vmatpush1.msra.mxu0 %v3858
        %4190 = vmatprep.subr.mxu0 %v3861
        %4191 = vmatpush1.msra.mxu0 %v3860
        %4192 = vmatprep.subr.mxu0 %v3863
        %4193 = vmatpush1.msra.mxu0 %v3862
        %4194 = vmatprep.subr.mxu0 %v3865
        %4195 = vmatpush1.msra.mxu0 %v3864
        %4196 = vmatprep.subr.mxu0 %v3867
        %4197 = vmatpush1.msra.mxu0 %v3866
        %4198 = vmatprep.subr.mxu0 %v3869
        %4199 = vmatpush1.msra.mxu0 %v3868
        %4200 = vmatprep.subr.mxu0 %v3871
        %4201 = vmatpush1.msra.mxu0 %v3870
        %4202 = vmatprep.subr.mxu0 %v3873
        %4203 = vmatpush1.msra.mxu0 %v3872
        %4204 = vmatprep.subr.mxu0 %v3875
        %4205 = vmatpush1.msra.mxu0 %v3874
        %4206 = vmatprep.subr.mxu0 %v3877
        %4207 = vmatpush1.msra.mxu0 %v3876
        %4208 = vmatprep.subr.mxu0 %v4186
        %4209 = vmatpush1.msra.mxu0 %v4183
        %4210 = vmatprep.subr.mxu0 0.0
        %4211 = vmatpush1.msra.mxu0 0.0
        %4212 = vmatprep.subr.mxu0 0.0
        %4213 = vmatpush1.msra.mxu0 0.0
        %4214 = vmatprep.subr.mxu0 0.0
        %4215 = vmatpush1.msra.mxu0 0.0
        %4216 = vmatprep.subr.mxu0 0.0
        %4217 = vmatpush1.msra.mxu0 0.0
        %4218 = vmatprep.subr.mxu0 0.0
        %4219 = vmatpush1.msra.mxu0 0.0
        %4220 = vmatprep.subr.mxu0 0.0
        %4221 = vmatpush1.msra.mxu0 0.0
        %4222 = vmatprep.subr.mxu0 0.0
        %4223 = vmatpush1.msra.mxu0 0.0
        %4224 = vmatprep.subr.mxu0 0.0
        %4225 = vmatpush1.msra.mxu0 0.0
        %4226 = vmatprep.subr.mxu0 0.0
        %4227 = vmatpush1.msra.mxu0 0.0
        %4228 = vmatprep.subr.mxu0 0.0
        %4229 = vmatpush1.msra.mxu0 0.0
        %4230 = vmatprep.subr.mxu0 0.0
        %4231 = vmatpush1.msra.mxu0 0.0
        %4232 = vmatprep.subr.mxu0 0.0
        %4233 = vmatpush1.msra.mxu0 0.0
        %4234 = vmatprep.subr.mxu0 0.0
        %4235 = vmatpush1.msra.mxu0 0.0
        %4236 = vmatprep.subr.mxu0 0.0
        %4237 = vmatpush1.msra.mxu0 0.0
        %4238 = vmatprep.subr.mxu0 0.0
        %4239 = vmatpush1.msra.mxu0 0.0
        %4240 = vmatprep.subr.mxu0 0.0
        %4241 = vmatpush1.msra.mxu0 0.0
        %4242 = vmatprep.subr.mxu0 0.0
        %4243 = vmatpush1.msra.mxu0 0.0
        %4244 = vmatprep.subr.mxu0 0.0
        %4245 = vmatpush1.msra.mxu0 0.0
        %4246 = vmatprep.subr.mxu0 0.0
        %4247 = vmatpush1.msra.mxu0 0.0
        %4248 = vmatprep.subr.mxu0 0.0
        %4249 = vmatpush1.msra.mxu0 0.0
        %4250 = vmatprep.subr.mxu0 0.0
        %4251 = vmatpush1.msra.mxu0 0.0
        %4252 = vmatprep.mubr.f32.mxu0 0.0
        %4253 = vmatmul.mubr.f32.gmra.mrb[0].mxu0 %v4135
        %v4254 = vpop.f32.mrb[0].mxu0
        %v4255 = vadd.f32 %v4040, %v4254
        %v4256 = vpop.f32.mrb[0].mxu0
        %v4257 = vadd.f32 %v4042, %v4256
        %4258 = vmatprep.mubr.f32.mxu0 0.0
        %4259 = vmatmul.mubr.f32.gmra.mrb[0].mxu0 %v4138
        %v4260 = vpop.f32.mrb[0].mxu0
        %v4261 = vadd.f32 %v4046, %v4260
        %v4262 = vpop.f32.mrb[0].mxu0
        %v4263 = vadd.f32 %v4048, %v4262
        %4264 = vmatprep.mubr.f32.mxu0 0.0
        %4265 = vmatmul.mubr.f32.gmra.mrb[0].mxu0 %v4141
        %v4266 = vpop.f32.mrb[0].mxu0
        %v4267 = vadd.f32 %v4052, %v4266
        %v4268 = vpop.f32.mrb[0].mxu0
        %v4269 = vadd.f32 %v4054, %v4268
        %4270 = vmatprep.mubr.f32.mxu0 0.0
        %4271 = vmatmul.mubr.f32.gmra.mrb[0].mxu0 %v4144
        %v4272 = vpop.f32.mrb[0].mxu0
        %v4273 = vadd.f32 %v4058, %v4272
        %v4274 = vpop.f32.mrb[0].mxu0
        %v4275 = vadd.f32 %v4060, %v4274
        %4276 = vmatprep.mubr.f32.mxu0 0.0
        %4277 = vmatmul.mubr.f32.gmra.mrb[0].mxu0 %v4147
        %v4278 = vpop.f32.mrb[0].mxu0
        %v4279 = vadd.f32 %v4064, %v4278
        %v4280 = vpop.f32.mrb[0].mxu0
        %v4281 = vadd.f32 %v4066, %v4280
        %4282 = vmatprep.mubr.f32.mxu0 0.0
        %4283 = vmatmul.mubr.f32.gmra.mrb[0].mxu0 %v4150
        %v4284 = vpop.f32.mrb[0].mxu0
        %v4285 = vadd.f32 %v4070, %v4284
        %v4286 = vpop.f32.mrb[0].mxu0
        %v4287 = vadd.f32 %v4072, %v4286
        %4288 = vmatprep.mubr.f32.mxu0 0.0
        %4289 = vmatmul.mubr.f32.gmra.mrb[0].mxu0 %v4153
        %v4290 = vpop.f32.mrb[0].mxu0
        %v4291 = vadd.f32 %v4076, %v4290
        %v4292 = vpop.f32.mrb[0].mxu0
        %v4293 = vadd.f32 %v4078, %v4292
        %4294 = vmatprep.mubr.f32.mxu0 0.0
        %4295 = vmatmul.mubr.f32.gmra.mrb[0].mxu0 %v4156
        %v4296 = vpop.f32.mrb[0].mxu0
        %v4297 = vadd.f32 %v4082, %v4296
        %v4298 = vpop.f32.mrb[0].mxu0
        %v4299 = vadd.f32 %v4084, %v4298
        %4300 = vmatprep.mubr.f32.mxu0 0.0
        %4301 = vmatmul.mubr.f32.gmra.mrb[0].mxu0 %v4159
        %v4302 = vpop.f32.mrb[0].mxu0
        %v4303 = vadd.f32 %v4088, %v4302
        %v4304 = vpop.f32.mrb[0].mxu0
        %v4305 = vadd.f32 %v4090, %v4304
        %4306 = vmatprep.mubr.f32.mxu0 0.0
        %4307 = vmatmul.mubr.f32.gmra.mrb[0].mxu0 %v4162
        %v4308 = vpop.f32.mrb[0].mxu0
        %v4309 = vadd.f32 %v4094, %v4308
        %v4310 = vpop.f32.mrb[0].mxu0
        %v4311 = vadd.f32 %v4096, %v4310
        %4312 = vmatprep.mubr.f32.mxu0 0.0
        %4313 = vmatmul.mubr.f32.gmra.mrb[0].mxu0 %v4165
        %v4314 = vpop.f32.mrb[0].mxu0
        %v4315 = vadd.f32 %v4100, %v4314
        %v4316 = vpop.f32.mrb[0].mxu0
        %v4317 = vadd.f32 %v4102, %v4316
        %4318 = vmatprep.mubr.f32.mxu0 0.0
        %4319 = vmatmul.mubr.f32.gmra.mrb[0].mxu0 %v4168
        %v4320 = vpop.f32.mrb[0].mxu0
        %v4321 = vadd.f32 %v4106, %v4320
        %v4322 = vpop.f32.mrb[0].mxu0
        %v4323 = vadd.f32 %v4108, %v4322
        %4324 = vmatprep.mubr.f32.mxu0 0.0
        %4325 = vmatmul.mubr.f32.gmra.mrb[0].mxu0 %v4171
        %v4326 = vpop.f32.mrb[0].mxu0
        %v4327 = vadd.f32 %v4112, %v4326
        %v4328 = vpop.f32.mrb[0].mxu0
        %v4329 = vadd.f32 %v4114, %v4328
        %4330 = vmatprep.mubr.f32.mxu0 0.0
        %4331 = vmatmul.mubr.f32.gmra.mrb[0].mxu0 %v4174
        %v4332 = vpop.f32.mrb[0].mxu0
        %v4333 = vadd.f32 %v4118, %v4332
        %v4334 = vpop.f32.mrb[0].mxu0
        %v4335 = vadd.f32 %v4120, %v4334
        %4336 = vmatprep.mubr.f32.mxu0 0.0
        %4337 = vmatmul.mubr.f32.gmra.mrb[0].mxu0 %v4177
        %v4338 = vpop.f32.mrb[0].mxu0
        %v4339 = vadd.f32 %v4124, %v4338
        %v4340 = vpop.f32.mrb[0].mxu0
        %v4341 = vadd.f32 %v4126, %v4340
        %4342 = vmatprep.mubr.f32.mxu0 0.0
        %4343 = vmatmul.mubr.f32.gmra.mrb[0].mxu0 %v4180
        %v4344 = vpop.f32.mrb[0].mxu0
        %v4345 = vadd.f32 %v4130, %v4344
        %v4346 = vpop.f32.mrb[0].mxu0
        %v4347 = vadd.f32 %v4132, %v4346
        %4348 = vdwg.mxu0
        %v4349 = vld [vmem:[#allocation2 + $0x2] sm:$0xff]
        %v4350 = vld [vmem:[#allocation2 + $0xa] sm:$0xff]
        %v4351 = vld [vmem:[#allocation2 + $0x12] sm:$0xff]
        %v4352 = vld [vmem:[#allocation2 + $0x1a] sm:$0xff]
        %v4353 = vld [vmem:[#allocation2 + $0x22] sm:$0xff]
        %v4354 = vld [vmem:[#allocation2 + $0x2a] sm:$0xff]
        %v4355 = vld [vmem:[#allocation2 + $0x32] sm:$0xff]
        %v4356 = vld [vmem:[#allocation2 + $0x3a] sm:$0xff]
        %v4357 = vld [vmem:[#allocation2 + $0x42] sm:$0xff]
        %v4358 = vld [vmem:[#allocation2 + $0x4a] sm:$0xff]
        %v4359 = vld [vmem:[#allocation2 + $0x52] sm:$0xff]
        %v4360 = vld [vmem:[#allocation2 + $0x5a] sm:$0xff]
        %v4361 = vld [vmem:[#allocation2 + $0x62] sm:$0xff]
        %v4362 = vld [vmem:[#allocation2 + $0x6a] sm:$0xff]
        %v4363 = vld [vmem:[#allocation2 + $0x72] sm:$0xff]
        %v4364 = vld [vmem:[#allocation2 + $0x7a] sm:$0xf]
        %s4365 = scalar_lea.vmem %s3, 352
        %v4366 = vld [vmem:[%s4365] sm:$0xff]
        %v4367 = vld [vmem:[%s4365 + $0x8] sm:$0xff]
        %v4368 = vld [vmem:[%s4365 + $0x10] sm:$0xff]
        %v4369 = vld [vmem:[%s4365 + $0x18] sm:$0xff]
        %v4370 = vld [vmem:[%s4365 + $0x20] sm:$0xff]
        %v4371 = vld [vmem:[%s4365 + $0x28] sm:$0xff]
        %v4372 = vld [vmem:[%s4365 + $0x30] sm:$0xff]
        %v4373 = vld [vmem:[%s4365 + $0x38] sm:$0xff]
        %v4374 = vld [vmem:[%s4365 + $0x40] sm:$0xff]
        %v4375 = vld [vmem:[%s4365 + $0x48] sm:$0xff]
        %v4376 = vld [vmem:[%s4365 + $0x50] sm:$0xff]
        %v4377 = vld [vmem:[%s4365 + $0x58] sm:$0xff]
        %v4378 = vld [vmem:[%s4365 + $0x60] sm:$0xff]
        %v4379 = vld [vmem:[%s4365 + $0x68] sm:$0xff]
        %v4380 = vld [vmem:[%s4365 + $0x70] sm:$0xff]
        %v4381 = vld [vmem:[%s4365 + $0x78] sm:$0xff]
        %v4382 = vld [vmem:[%s4365 + $0x80] sm:$0xff]
        %v4383 = vld [vmem:[%s4365 + $0x88] sm:$0xff]
        %v4384 = vld [vmem:[%s4365 + $0x90] sm:$0xff]
        %v4385 = vld [vmem:[%s4365 + $0x98] sm:$0xff]
        %v4386 = vld [vmem:[%s4365 + $0xa0] sm:$0xf]
        %v4387 = vld [vmem:[%s4365 + $0xa8] sm:$0xf]
        %v4389 = vsel %vm3825, %v4349, 0
        %v4392 = vsel %vm3825, %v4350, 0
        %v4395 = vsel %vm3825, %v4351, 0
        %v4398 = vsel %vm3825, %v4352, 0
        %v4401 = vsel %vm3825, %v4353, 0
        %v4404 = vsel %vm3825, %v4354, 0
        %v4407 = vsel %vm3825, %v4355, 0
        %v4410 = vsel %vm3825, %v4356, 0
        %v4413 = vsel %vm3825, %v4357, 0
        %v4416 = vsel %vm3825, %v4358, 0
        %v4419 = vsel %vm3825, %v4359, 0
        %v4422 = vsel %vm3825, %v4360, 0
        %v4425 = vsel %vm3825, %v4361, 0
        %v4428 = vsel %vm3825, %v4362, 0
        %v4431 = vsel %vm3825, %v4363, 0
        %v4434 = vsel %vm3825, %v4364, 0
        %v4437 = vsel %vm2985, %v4386, 0
        %v4440 = vsel %vm2985, %v4387, 0
        %4442 = vmatprep.subr.mxu0 %v4367
        %4443 = vmatpush1.msra.mxu0 %v4366
        %4444 = vmatprep.subr.mxu0 %v4369
        %4445 = vmatpush1.msra.mxu0 %v4368
        %4446 = vmatprep.subr.mxu0 %v4371
        %4447 = vmatpush1.msra.mxu0 %v4370
        %4448 = vmatprep.subr.mxu0 %v4373
        %4449 = vmatpush1.msra.mxu0 %v4372
        %4450 = vmatprep.subr.mxu0 %v4375
        %4451 = vmatpush1.msra.mxu0 %v4374
        %4452 = vmatprep.subr.mxu0 %v4377
        %4453 = vmatpush1.msra.mxu0 %v4376
        %4454 = vmatprep.subr.mxu0 %v4379
        %4455 = vmatpush1.msra.mxu0 %v4378
        %4456 = vmatprep.subr.mxu0 %v4381
        %4457 = vmatpush1.msra.mxu0 %v4380
        %4458 = vmatprep.subr.mxu0 %v4383
        %4459 = vmatpush1.msra.mxu0 %v4382
        %4460 = vmatprep.subr.mxu0 %v4385
        %4461 = vmatpush1.msra.mxu0 %v4384
        %4462 = vmatprep.subr.mxu0 %v4440
        %4463 = vmatpush1.msra.mxu0 %v4437
        %4464 = vmatprep.subr.mxu0 0.0
        %4465 = vmatpush1.msra.mxu0 0.0
        %4466 = vmatprep.subr.mxu0 0.0
        %4467 = vmatpush1.msra.mxu0 0.0
        %4468 = vmatprep.subr.mxu0 0.0
        %4469 = vmatpush1.msra.mxu0 0.0
        %4470 = vmatprep.subr.mxu0 0.0
        %4471 = vmatpush1.msra.mxu0 0.0
        %4472 = vmatprep.subr.mxu0 0.0
        %4473 = vmatpush1.msra.mxu0 0.0
        %4474 = vmatprep.subr.mxu0 0.0
        %4475 = vmatpush1.msra.mxu0 0.0
        %4476 = vmatprep.subr.mxu0 0.0
        %4477 = vmatpush1.msra.mxu0 0.0
        %4478 = vmatprep.subr.mxu0 0.0
        %4479 = vmatpush1.msra.mxu0 0.0
        %4480 = vmatprep.subr.mxu0 0.0
        %4481 = vmatpush1.msra.mxu0 0.0
        %4482 = vmatprep.subr.mxu0 0.0
        %4483 = vmatpush1.msra.mxu0 0.0
        %4484 = vmatprep.subr.mxu0 0.0
        %4485 = vmatpush1.msra.mxu0 0.0
        %4486 = vmatprep.subr.mxu0 0.0
        %4487 = vmatpush1.msra.mxu0 0.0
        %4488 = vmatprep.subr.mxu0 0.0
        %4489 = vmatpush1.msra.mxu0 0.0
        %4490 = vmatprep.subr.mxu0 0.0
        %4491 = vmatpush1.msra.mxu0 0.0
        %4492 = vmatprep.subr.mxu0 0.0
        %4493 = vmatpush1.msra.mxu0 0.0
        %4494 = vmatprep.subr.mxu0 0.0
        %4495 = vmatpush1.msra.mxu0 0.0
        %4496 = vmatprep.subr.mxu0 0.0
        %4497 = vmatpush1.msra.mxu0 0.0
        %4498 = vmatprep.subr.mxu0 0.0
        %4499 = vmatpush1.msra.mxu0 0.0
        %4500 = vmatprep.subr.mxu0 0.0
        %4501 = vmatpush1.msra.mxu0 0.0
        %4502 = vmatprep.subr.mxu0 0.0
        %4503 = vmatpush1.msra.mxu0 0.0
        %4504 = vmatprep.subr.mxu0 0.0
        %4505 = vmatpush1.msra.mxu0 0.0
        %4506 = vmatprep.mubr.f32.mxu0 0.0
        %4507 = vmatmul.mubr.f32.gmra.mrb[0].mxu0 %v4389
        %v4508 = vpop.f32.mrb[0].mxu0
        %v4509 = vadd.f32 0.0, %v4508
        %v4510 = vpop.f32.mrb[0].mxu0
        %v4511 = vadd.f32 0.0, %v4510
        %4512 = vmatprep.mubr.f32.mxu0 0.0
        %4513 = vmatmul.mubr.f32.gmra.mrb[0].mxu0 %v4392
        %v4514 = vpop.f32.mrb[0].mxu0
        %v4515 = vadd.f32 0.0, %v4514
        %v4516 = vpop.f32.mrb[0].mxu0
        %v4517 = vadd.f32 0.0, %v4516
        %4518 = vmatprep.mubr.f32.mxu0 0.0
        %4519 = vmatmul.mubr.f32.gmra.mrb[0].mxu0 %v4395
        %v4520 = vpop.f32.mrb[0].mxu0
        %v4521 = vadd.f32 0.0, %v4520
        %v4522 = vpop.f32.mrb[0].mxu0
        %v4523 = vadd.f32 0.0, %v4522
        %4524 = vmatprep.mubr.f32.mxu0 0.0
        %4525 = vmatmul.mubr.f32.gmra.mrb[0].mxu0 %v4398
        %v4526 = vpop.f32.mrb[0].mxu0
        %v4527 = vadd.f32 0.0, %v4526
        %v4528 = vpop.f32.mrb[0].mxu0
        %v4529 = vadd.f32 0.0, %v4528
        %4530 = vmatprep.mubr.f32.mxu0 0.0
        %4531 = vmatmul.mubr.f32.gmra.mrb[0].mxu0 %v4401
        %v4532 = vpop.f32.mrb[0].mxu0
        %v4533 = vadd.f32 0.0, %v4532
        %v4534 = vpop.f32.mrb[0].mxu0
        %v4535 = vadd.f32 0.0, %v4534
        %4536 = vmatprep.mubr.f32.mxu0 0.0
        %4537 = vmatmul.mubr.f32.gmra.mrb[0].mxu0 %v4404
        %v4538 = vpop.f32.mrb[0].mxu0
        %v4539 = vadd.f32 0.0, %v4538
        %v4540 = vpop.f32.mrb[0].mxu0
        %v4541 = vadd.f32 0.0, %v4540
        %4542 = vmatprep.mubr.f32.mxu0 0.0
        %4543 = vmatmul.mubr.f32.gmra.mrb[0].mxu0 %v4407
        %v4544 = vpop.f32.mrb[0].mxu0
        %v4545 = vadd.f32 0.0, %v4544
        %v4546 = vpop.f32.mrb[0].mxu0
        %v4547 = vadd.f32 0.0, %v4546
        %4548 = vmatprep.mubr.f32.mxu0 0.0
        %4549 = vmatmul.mubr.f32.gmra.mrb[0].mxu0 %v4410
        %v4550 = vpop.f32.mrb[0].mxu0
        %v4551 = vadd.f32 0.0, %v4550
        %v4552 = vpop.f32.mrb[0].mxu0
        %v4553 = vadd.f32 0.0, %v4552
        %4554 = vmatprep.mubr.f32.mxu0 0.0
        %4555 = vmatmul.mubr.f32.gmra.mrb[0].mxu0 %v4413
        %v4556 = vpop.f32.mrb[0].mxu0
        %v4557 = vadd.f32 0.0, %v4556
        %v4558 = vpop.f32.mrb[0].mxu0
        %v4559 = vadd.f32 0.0, %v4558
        %4560 = vmatprep.mubr.f32.mxu0 0.0
        %4561 = vmatmul.mubr.f32.gmra.mrb[0].mxu0 %v4416
        %v4562 = vpop.f32.mrb[0].mxu0
        %v4563 = vadd.f32 0.0, %v4562
        %v4564 = vpop.f32.mrb[0].mxu0
        %v4565 = vadd.f32 0.0, %v4564
        %4566 = vmatprep.mubr.f32.mxu0 0.0
        %4567 = vmatmul.mubr.f32.gmra.mrb[0].mxu0 %v4419
        %v4568 = vpop.f32.mrb[0].mxu0
        %v4569 = vadd.f32 0.0, %v4568
        %v4570 = vpop.f32.mrb[0].mxu0
        %v4571 = vadd.f32 0.0, %v4570
        %4572 = vmatprep.mubr.f32.mxu0 0.0
        %4573 = vmatmul.mubr.f32.gmra.mrb[0].mxu0 %v4422
        %v4574 = vpop.f32.mrb[0].mxu0
        %v4575 = vadd.f32 0.0, %v4574
        %v4576 = vpop.f32.mrb[0].mxu0
        %v4577 = vadd.f32 0.0, %v4576
        %4578 = vmatprep.mubr.f32.mxu0 0.0
        %4579 = vmatmul.mubr.f32.gmra.mrb[0].mxu0 %v4425
        %v4580 = vpop.f32.mrb[0].mxu0
        %v4581 = vadd.f32 0.0, %v4580
        %v4582 = vpop.f32.mrb[0].mxu0
        %v4583 = vadd.f32 0.0, %v4582
        %4584 = vmatprep.mubr.f32.mxu0 0.0
        %4585 = vmatmul.mubr.f32.gmra.mrb[0].mxu0 %v4428
        %v4586 = vpop.f32.mrb[0].mxu0
        %v4587 = vadd.f32 0.0, %v4586
        %v4588 = vpop.f32.mrb[0].mxu0
        %v4589 = vadd.f32 0.0, %v4588
        %4590 = vmatprep.mubr.f32.mxu0 0.0
        %4591 = vmatmul.mubr.f32.gmra.mrb[0].mxu0 %v4431
        %v4592 = vpop.f32.mrb[0].mxu0
        %v4593 = vadd.f32 0.0, %v4592
        %v4594 = vpop.f32.mrb[0].mxu0
        %v4595 = vadd.f32 0.0, %v4594
        %4596 = vmatprep.mubr.f32.mxu0 0.0
        %4597 = vmatmul.mubr.f32.gmra.mrb[0].mxu0 %v4434
        %v4598 = vpop.f32.mrb[0].mxu0
        %v4599 = vadd.f32 0.0, %v4598
        %v4600 = vpop.f32.mrb[0].mxu0
        %v4601 = vadd.f32 0.0, %v4600
        %4602 = vdwg.mxu0
        %v4603 = vadd.f32 %v4255, %v4509
        %v4604 = vadd.f32 %v4257, %v4511
        %v4605 = vadd.f32 %v4261, %v4515
        %v4606 = vadd.f32 %v4263, %v4517
        %v4607 = vadd.f32 %v4267, %v4521
        %v4608 = vadd.f32 %v4269, %v4523
        %v4609 = vadd.f32 %v4273, %v4527
        %v4610 = vadd.f32 %v4275, %v4529
        %v4611 = vadd.f32 %v4279, %v4533
        %v4612 = vadd.f32 %v4281, %v4535
        %v4613 = vadd.f32 %v4285, %v4539
        %v4614 = vadd.f32 %v4287, %v4541
        %v4615 = vadd.f32 %v4291, %v4545
        %v4616 = vadd.f32 %v4293, %v4547
        %v4617 = vadd.f32 %v4297, %v4551
        %v4618 = vadd.f32 %v4299, %v4553
        %v4619 = vadd.f32 %v4303, %v4557
        %v4620 = vadd.f32 %v4305, %v4559
        %v4621 = vadd.f32 %v4309, %v4563
        %v4622 = vadd.f32 %v4311, %v4565
        %v4623 = vadd.f32 %v4315, %v4569
        %v4624 = vadd.f32 %v4317, %v4571
        %v4625 = vadd.f32 %v4321, %v4575
        %v4626 = vadd.f32 %v4323, %v4577
        %v4627 = vadd.f32 %v4327, %v4581
        %v4628 = vadd.f32 %v4329, %v4583
        %v4629 = vadd.f32 %v4333, %v4587
        %v4630 = vadd.f32 %v4335, %v4589
        %v4631 = vadd.f32 %v4339, %v4593
        %v4632 = vadd.f32 %v4341, %v4595
        %v4633 = vadd.f32 %v4345, %v4599
        %v4634 = vadd.f32 %v4347, %v4601
        %v4635 = vld [vmem:[#allocation2 + $0x3] sm:$0xff]
        %v4636 = vld [vmem:[#allocation2 + $0xb] sm:$0xff]
        %v4637 = vld [vmem:[#allocation2 + $0x13] sm:$0xff]
        %v4638 = vld [vmem:[#allocation2 + $0x1b] sm:$0xff]
        %v4639 = vld [vmem:[#allocation2 + $0x23] sm:$0xff]
        %v4640 = vld [vmem:[#allocation2 + $0x2b] sm:$0xff]
        %v4641 = vld [vmem:[#allocation2 + $0x33] sm:$0xff]
        %v4642 = vld [vmem:[#allocation2 + $0x3b] sm:$0xff]
        %v4643 = vld [vmem:[#allocation2 + $0x43] sm:$0xff]
        %v4644 = vld [vmem:[#allocation2 + $0x4b] sm:$0xff]
        %v4645 = vld [vmem:[#allocation2 + $0x53] sm:$0xff]
        %v4646 = vld [vmem:[#allocation2 + $0x5b] sm:$0xff]
        %v4647 = vld [vmem:[#allocation2 + $0x63] sm:$0xff]
        %v4648 = vld [vmem:[#allocation2 + $0x6b] sm:$0xff]
        %v4649 = vld [vmem:[#allocation2 + $0x73] sm:$0xff]
        %v4650 = vld [vmem:[#allocation2 + $0x7b] sm:$0xf]
        %s4651 = scalar_lea.vmem %s3, 528
        %v4652 = vld [vmem:[%s4651] sm:$0xff]
        %v4653 = vld [vmem:[%s4651 + $0x8] sm:$0xff]
        %v4654 = vld [vmem:[%s4651 + $0x10] sm:$0xff]
        %v4655 = vld [vmem:[%s4651 + $0x18] sm:$0xff]
        %v4656 = vld [vmem:[%s4651 + $0x20] sm:$0xff]
        %v4657 = vld [vmem:[%s4651 + $0x28] sm:$0xff]
        %v4658 = vld [vmem:[%s4651 + $0x30] sm:$0xff]
        %v4659 = vld [vmem:[%s4651 + $0x38] sm:$0xff]
        %v4660 = vld [vmem:[%s4651 + $0x40] sm:$0xff]
        %v4661 = vld [vmem:[%s4651 + $0x48] sm:$0xff]
        %v4662 = vld [vmem:[%s4651 + $0x50] sm:$0xff]
        %v4663 = vld [vmem:[%s4651 + $0x58] sm:$0xff]
        %v4664 = vld [vmem:[%s4651 + $0x60] sm:$0xff]
        %v4665 = vld [vmem:[%s4651 + $0x68] sm:$0xff]
        %v4666 = vld [vmem:[%s4651 + $0x70] sm:$0xff]
        %v4667 = vld [vmem:[%s4651 + $0x78] sm:$0xff]
        %v4668 = vld [vmem:[%s4651 + $0x80] sm:$0xff]
        %v4669 = vld [vmem:[%s4651 + $0x88] sm:$0xff]
        %v4670 = vld [vmem:[%s4651 + $0x90] sm:$0xff]
        %v4671 = vld [vmem:[%s4651 + $0x98] sm:$0xff]
        %v4672 = vld [vmem:[%s4651 + $0xa0] sm:$0xf]
        %v4673 = vld [vmem:[%s4651 + $0xa8] sm:$0xf]
        %v4675 = vsel %vm3825, %v4635, 0
        %v4678 = vsel %vm3825, %v4636, 0
        %v4681 = vsel %vm3825, %v4637, 0
        %v4684 = vsel %vm3825, %v4638, 0
        %v4687 = vsel %vm3825, %v4639, 0
        %v4690 = vsel %vm3825, %v4640, 0
        %v4693 = vsel %vm3825, %v4641, 0
        %v4696 = vsel %vm3825, %v4642, 0
        %v4699 = vsel %vm3825, %v4643, 0
        %v4702 = vsel %vm3825, %v4644, 0
        %v4705 = vsel %vm3825, %v4645, 0
        %v4708 = vsel %vm3825, %v4646, 0
        %v4711 = vsel %vm3825, %v4647, 0
        %v4714 = vsel %vm3825, %v4648, 0
        %v4717 = vsel %vm3825, %v4649, 0
        %v4720 = vsel %vm3825, %v4650, 0
        %v4723 = vsel %vm2985, %v4672, 0
        %v4726 = vsel %vm2985, %v4673, 0
        %4728 = vmatprep.subr.mxu0 %v4653
        %4729 = vmatpush1.msra.mxu0 %v4652
        %4730 = vmatprep.subr.mxu0 %v4655
        %4731 = vmatpush1.msra.mxu0 %v4654
        %4732 = vmatprep.subr.mxu0 %v4657
        %4733 = vmatpush1.msra.mxu0 %v4656
        %4734 = vmatprep.subr.mxu0 %v4659
        %4735 = vmatpush1.msra.mxu0 %v4658
        %4736 = vmatprep.subr.mxu0 %v4661
        %4737 = vmatpush1.msra.mxu0 %v4660
        %4738 = vmatprep.subr.mxu0 %v4663
        %4739 = vmatpush1.msra.mxu0 %v4662
        %4740 = vmatprep.subr.mxu0 %v4665
        %4741 = vmatpush1.msra.mxu0 %v4664
        %4742 = vmatprep.subr.mxu0 %v4667
        %4743 = vmatpush1.msra.mxu0 %v4666
        %4744 = vmatprep.subr.mxu0 %v4669
        %4745 = vmatpush1.msra.mxu0 %v4668
        %4746 = vmatprep.subr.mxu0 %v4671
        %4747 = vmatpush1.msra.mxu0 %v4670
        %4748 = vmatprep.subr.mxu0 %v4726
        %4749 = vmatpush1.msra.mxu0 %v4723
        %4750 = vmatprep.subr.mxu0 0.0
        %4751 = vmatpush1.msra.mxu0 0.0
        %4752 = vmatprep.subr.mxu0 0.0
        %4753 = vmatpush1.msra.mxu0 0.0
        %4754 = vmatprep.subr.mxu0 0.0
        %4755 = vmatpush1.msra.mxu0 0.0
        %4756 = vmatprep.subr.mxu0 0.0
        %4757 = vmatpush1.msra.mxu0 0.0
        %4758 = vmatprep.subr.mxu0 0.0
        %4759 = vmatpush1.msra.mxu0 0.0
        %4760 = vmatprep.subr.mxu0 0.0
        %4761 = vmatpush1.msra.mxu0 0.0
        %4762 = vmatprep.subr.mxu0 0.0
        %4763 = vmatpush1.msra.mxu0 0.0
        %4764 = vmatprep.subr.mxu0 0.0
        %4765 = vmatpush1.msra.mxu0 0.0
        %4766 = vmatprep.subr.mxu0 0.0
        %4767 = vmatpush1.msra.mxu0 0.0
        %4768 = vmatprep.subr.mxu0 0.0
        %4769 = vmatpush1.msra.mxu0 0.0
        %4770 = vmatprep.subr.mxu0 0.0
        %4771 = vmatpush1.msra.mxu0 0.0
        %4772 = vmatprep.subr.mxu0 0.0
        %4773 = vmatpush1.msra.mxu0 0.0
        %4774 = vmatprep.subr.mxu0 0.0
        %4775 = vmatpush1.msra.mxu0 0.0
        %4776 = vmatprep.subr.mxu0 0.0
        %4777 = vmatpush1.msra.mxu0 0.0
        %4778 = vmatprep.subr.mxu0 0.0
        %4779 = vmatpush1.msra.mxu0 0.0
        %4780 = vmatprep.subr.mxu0 0.0
        %4781 = vmatpush1.msra.mxu0 0.0
        %4782 = vmatprep.subr.mxu0 0.0
        %4783 = vmatpush1.msra.mxu0 0.0
        %4784 = vmatprep.subr.mxu0 0.0
        %4785 = vmatpush1.msra.mxu0 0.0
        %4786 = vmatprep.subr.mxu0 0.0
        %4787 = vmatpush1.msra.mxu0 0.0
        %4788 = vmatprep.subr.mxu0 0.0
        %4789 = vmatpush1.msra.mxu0 0.0
        %4790 = vmatprep.subr.mxu0 0.0
        %4791 = vmatpush1.msra.mxu0 0.0
        %4792 = vmatprep.mubr.f32.mxu0 0.0
        %4793 = vmatmul.mubr.f32.gmra.mrb[0].mxu0 %v4675
        %v4794 = vpop.f32.mrb[0].mxu0
        %v4795 = vadd.f32 0.0, %v4794
        %v4796 = vpop.f32.mrb[0].mxu0
        %v4797 = vadd.f32 0.0, %v4796
        %4798 = vmatprep.mubr.f32.mxu0 0.0
        %4799 = vmatmul.mubr.f32.gmra.mrb[0].mxu0 %v4678
        %v4800 = vpop.f32.mrb[0].mxu0
        %v4801 = vadd.f32 0.0, %v4800
        %v4802 = vpop.f32.mrb[0].mxu0
        %v4803 = vadd.f32 0.0, %v4802
        %4804 = vmatprep.mubr.f32.mxu0 0.0
        %4805 = vmatmul.mubr.f32.gmra.mrb[0].mxu0 %v4681
        %v4806 = vpop.f32.mrb[0].mxu0
        %v4807 = vadd.f32 0.0, %v4806
        %v4808 = vpop.f32.mrb[0].mxu0
        %v4809 = vadd.f32 0.0, %v4808
        %4810 = vmatprep.mubr.f32.mxu0 0.0
        %4811 = vmatmul.mubr.f32.gmra.mrb[0].mxu0 %v4684
        %v4812 = vpop.f32.mrb[0].mxu0
        %v4813 = vadd.f32 0.0, %v4812
        %v4814 = vpop.f32.mrb[0].mxu0
        %v4815 = vadd.f32 0.0, %v4814
        %4816 = vmatprep.mubr.f32.mxu0 0.0
        %4817 = vmatmul.mubr.f32.gmra.mrb[0].mxu0 %v4687
        %v4818 = vpop.f32.mrb[0].mxu0
        %v4819 = vadd.f32 0.0, %v4818
        %v4820 = vpop.f32.mrb[0].mxu0
        %v4821 = vadd.f32 0.0, %v4820
        %4822 = vmatprep.mubr.f32.mxu0 0.0
        %4823 = vmatmul.mubr.f32.gmra.mrb[0].mxu0 %v4690
        %v4824 = vpop.f32.mrb[0].mxu0
        %v4825 = vadd.f32 0.0, %v4824
        %v4826 = vpop.f32.mrb[0].mxu0
        %v4827 = vadd.f32 0.0, %v4826
        %4828 = vmatprep.mubr.f32.mxu0 0.0
        %4829 = vmatmul.mubr.f32.gmra.mrb[0].mxu0 %v4693
        %v4830 = vpop.f32.mrb[0].mxu0
        %v4831 = vadd.f32 0.0, %v4830
        %v4832 = vpop.f32.mrb[0].mxu0
        %v4833 = vadd.f32 0.0, %v4832
        %4834 = vmatprep.mubr.f32.mxu0 0.0
        %4835 = vmatmul.mubr.f32.gmra.mrb[0].mxu0 %v4696
        %v4836 = vpop.f32.mrb[0].mxu0
        %v4837 = vadd.f32 0.0, %v4836
        %v4838 = vpop.f32.mrb[0].mxu0
        %v4839 = vadd.f32 0.0, %v4838
        %4840 = vmatprep.mubr.f32.mxu0 0.0
        %4841 = vmatmul.mubr.f32.gmra.mrb[0].mxu0 %v4699
        %v4842 = vpop.f32.mrb[0].mxu0
        %v4843 = vadd.f32 0.0, %v4842
        %v4844 = vpop.f32.mrb[0].mxu0
        %v4845 = vadd.f32 0.0, %v4844
        %4846 = vmatprep.mubr.f32.mxu0 0.0
        %4847 = vmatmul.mubr.f32.gmra.mrb[0].mxu0 %v4702
        %v4848 = vpop.f32.mrb[0].mxu0
        %v4849 = vadd.f32 0.0, %v4848
        %v4850 = vpop.f32.mrb[0].mxu0
        %v4851 = vadd.f32 0.0, %v4850
        %4852 = vmatprep.mubr.f32.mxu0 0.0
        %4853 = vmatmul.mubr.f32.gmra.mrb[0].mxu0 %v4705
        %v4854 = vpop.f32.mrb[0].mxu0
        %v4855 = vadd.f32 0.0, %v4854
        %v4856 = vpop.f32.mrb[0].mxu0
        %v4857 = vadd.f32 0.0, %v4856
        %4858 = vmatprep.mubr.f32.mxu0 0.0
        %4859 = vmatmul.mubr.f32.gmra.mrb[0].mxu0 %v4708
        %v4860 = vpop.f32.mrb[0].mxu0
        %v4861 = vadd.f32 0.0, %v4860
        %v4862 = vpop.f32.mrb[0].mxu0
        %v4863 = vadd.f32 0.0, %v4862
        %4864 = vmatprep.mubr.f32.mxu0 0.0
        %4865 = vmatmul.mubr.f32.gmra.mrb[0].mxu0 %v4711
        %v4866 = vpop.f32.mrb[0].mxu0
        %v4867 = vadd.f32 0.0, %v4866
        %v4868 = vpop.f32.mrb[0].mxu0
        %v4869 = vadd.f32 0.0, %v4868
        %4870 = vmatprep.mubr.f32.mxu0 0.0
        %4871 = vmatmul.mubr.f32.gmra.mrb[0].mxu0 %v4714
        %v4872 = vpop.f32.mrb[0].mxu0
        %v4873 = vadd.f32 0.0, %v4872
        %v4874 = vpop.f32.mrb[0].mxu0
        %v4875 = vadd.f32 0.0, %v4874
        %4876 = vmatprep.mubr.f32.mxu0 0.0
        %4877 = vmatmul.mubr.f32.gmra.mrb[0].mxu0 %v4717
        %v4878 = vpop.f32.mrb[0].mxu0
        %v4879 = vadd.f32 0.0, %v4878
        %v4880 = vpop.f32.mrb[0].mxu0
        %v4881 = vadd.f32 0.0, %v4880
        %4882 = vmatprep.mubr.f32.mxu0 0.0
        %4883 = vmatmul.mubr.f32.gmra.mrb[0].mxu0 %v4720
        %v4884 = vpop.f32.mrb[0].mxu0
        %v4885 = vadd.f32 0.0, %v4884
        %v4886 = vpop.f32.mrb[0].mxu0
        %v4887 = vadd.f32 0.0, %v4886
        %4888 = vdwg.mxu0
        %v4889 = vadd.f32 %v4603, %v4795
        %v4890 = vadd.f32 %v4604, %v4797
        %v4891 = vadd.f32 %v4605, %v4801
        %v4892 = vadd.f32 %v4606, %v4803
        %v4893 = vadd.f32 %v4607, %v4807
        %v4894 = vadd.f32 %v4608, %v4809
        %v4895 = vadd.f32 %v4609, %v4813
        %v4896 = vadd.f32 %v4610, %v4815
        %v4897 = vadd.f32 %v4611, %v4819
        %v4898 = vadd.f32 %v4612, %v4821
        %v4899 = vadd.f32 %v4613, %v4825
        %v4900 = vadd.f32 %v4614, %v4827
        %v4901 = vadd.f32 %v4615, %v4831
        %v4902 = vadd.f32 %v4616, %v4833
        %v4903 = vadd.f32 %v4617, %v4837
        %v4904 = vadd.f32 %v4618, %v4839
        %v4905 = vadd.f32 %v4619, %v4843
        %v4906 = vadd.f32 %v4620, %v4845
        %v4907 = vadd.f32 %v4621, %v4849
        %v4908 = vadd.f32 %v4622, %v4851
        %v4909 = vadd.f32 %v4623, %v4855
        %v4910 = vadd.f32 %v4624, %v4857
        %v4911 = vadd.f32 %v4625, %v4861
        %v4912 = vadd.f32 %v4626, %v4863
        %v4913 = vadd.f32 %v4627, %v4867
        %v4914 = vadd.f32 %v4628, %v4869
        %v4915 = vadd.f32 %v4629, %v4873
        %v4916 = vadd.f32 %v4630, %v4875
        %v4917 = vadd.f32 %v4631, %v4879
        %v4918 = vadd.f32 %v4632, %v4881
        %v4919 = vadd.f32 %v4633, %v4885
        %v4920 = vadd.f32 %v4634, %v4887
        %v4921 = vld [vmem:[#allocation2 + $0x4] sm:$0xff]
        %v4922 = vld [vmem:[#allocation2 + $0xc] sm:$0xff]
        %v4923 = vld [vmem:[#allocation2 + $0x14] sm:$0xff]
        %v4924 = vld [vmem:[#allocation2 + $0x1c] sm:$0xff]
        %v4925 = vld [vmem:[#allocation2 + $0x24] sm:$0xff]
        %v4926 = vld [vmem:[#allocation2 + $0x2c] sm:$0xff]
        %v4927 = vld [vmem:[#allocation2 + $0x34] sm:$0xff]
        %v4928 = vld [vmem:[#allocation2 + $0x3c] sm:$0xff]
        %v4929 = vld [vmem:[#allocation2 + $0x44] sm:$0xff]
        %v4930 = vld [vmem:[#allocation2 + $0x4c] sm:$0xff]
        %v4931 = vld [vmem:[#allocation2 + $0x54] sm:$0xff]
        %v4932 = vld [vmem:[#allocation2 + $0x5c] sm:$0xff]
        %v4933 = vld [vmem:[#allocation2 + $0x64] sm:$0xff]
        %v4934 = vld [vmem:[#allocation2 + $0x6c] sm:$0xff]
        %v4935 = vld [vmem:[#allocation2 + $0x74] sm:$0xff]
        %v4936 = vld [vmem:[#allocation2 + $0x7c] sm:$0xf]
        %s4937 = scalar_lea.vmem %s3, 704
        %v4938 = vld [vmem:[%s4937] sm:$0xff]
        %v4939 = vld [vmem:[%s4937 + $0x8] sm:$0xff]
        %v4940 = vld [vmem:[%s4937 + $0x10] sm:$0xff]
        %v4941 = vld [vmem:[%s4937 + $0x18] sm:$0xff]
        %v4942 = vld [vmem:[%s4937 + $0x20] sm:$0xff]
        %v4943 = vld [vmem:[%s4937 + $0x28] sm:$0xff]
        %v4944 = vld [vmem:[%s4937 + $0x30] sm:$0xff]
        %v4945 = vld [vmem:[%s4937 + $0x38] sm:$0xff]
        %v4946 = vld [vmem:[%s4937 + $0x40] sm:$0xff]
        %v4947 = vld [vmem:[%s4937 + $0x48] sm:$0xff]
        %v4948 = vld [vmem:[%s4937 + $0x50] sm:$0xff]
        %v4949 = vld [vmem:[%s4937 + $0x58] sm:$0xff]
        %v4950 = vld [vmem:[%s4937 + $0x60] sm:$0xff]
        %v4951 = vld [vmem:[%s4937 + $0x68] sm:$0xff]
        %v4952 = vld [vmem:[%s4937 + $0x70] sm:$0xff]
        %v4953 = vld [vmem:[%s4937 + $0x78] sm:$0xff]
        %v4954 = vld [vmem:[%s4937 + $0x80] sm:$0xff]
        %v4955 = vld [vmem:[%s4937 + $0x88] sm:$0xff]
        %v4956 = vld [vmem:[%s4937 + $0x90] sm:$0xff]
        %v4957 = vld [vmem:[%s4937 + $0x98] sm:$0xff]
        %v4958 = vld [vmem:[%s4937 + $0xa0] sm:$0xf]
        %v4959 = vld [vmem:[%s4937 + $0xa8] sm:$0xf]
        %v4961 = vsel %vm3825, %v4921, 0
        %v4964 = vsel %vm3825, %v4922, 0
        %v4967 = vsel %vm3825, %v4923, 0
        %v4970 = vsel %vm3825, %v4924, 0
        %v4973 = vsel %vm3825, %v4925, 0
        %v4976 = vsel %vm3825, %v4926, 0
        %v4979 = vsel %vm3825, %v4927, 0
        %v4982 = vsel %vm3825, %v4928, 0
        %v4985 = vsel %vm3825, %v4929, 0
        %v4988 = vsel %vm3825, %v4930, 0
        %v4991 = vsel %vm3825, %v4931, 0
        %v4994 = vsel %vm3825, %v4932, 0
        %v4997 = vsel %vm3825, %v4933, 0
        %v5000 = vsel %vm3825, %v4934, 0
        %v5003 = vsel %vm3825, %v4935, 0
        %v5006 = vsel %vm3825, %v4936, 0
        %v5009 = vsel %vm2985, %v4958, 0
        %v5012 = vsel %vm2985, %v4959, 0
        %5014 = vmatprep.subr.mxu0 %v4939
        %5015 = vmatpush1.msra.mxu0 %v4938
        %5016 = vmatprep.subr.mxu0 %v4941
        %5017 = vmatpush1.msra.mxu0 %v4940
        %5018 = vmatprep.subr.mxu0 %v4943
        %5019 = vmatpush1.msra.mxu0 %v4942
        %5020 = vmatprep.subr.mxu0 %v4945
        %5021 = vmatpush1.msra.mxu0 %v4944
        %5022 = vmatprep.subr.mxu0 %v4947
        %5023 = vmatpush1.msra.mxu0 %v4946
        %5024 = vmatprep.subr.mxu0 %v4949
        %5025 = vmatpush1.msra.mxu0 %v4948
        %5026 = vmatprep.subr.mxu0 %v4951
        %5027 = vmatpush1.msra.mxu0 %v4950
        %5028 = vmatprep.subr.mxu0 %v4953
        %5029 = vmatpush1.msra.mxu0 %v4952
        %5030 = vmatprep.subr.mxu0 %v4955
        %5031 = vmatpush1.msra.mxu0 %v4954
        %5032 = vmatprep.subr.mxu0 %v4957
        %5033 = vmatpush1.msra.mxu0 %v4956
        %5034 = vmatprep.subr.mxu0 %v5012
        %5035 = vmatpush1.msra.mxu0 %v5009
        %5036 = vmatprep.subr.mxu0 0.0
        %5037 = vmatpush1.msra.mxu0 0.0
        %5038 = vmatprep.subr.mxu0 0.0
        %5039 = vmatpush1.msra.mxu0 0.0
        %5040 = vmatprep.subr.mxu0 0.0
        %5041 = vmatpush1.msra.mxu0 0.0
        %5042 = vmatprep.subr.mxu0 0.0
        %5043 = vmatpush1.msra.mxu0 0.0
        %5044 = vmatprep.subr.mxu0 0.0
        %5045 = vmatpush1.msra.mxu0 0.0
        %5046 = vmatprep.subr.mxu0 0.0
        %5047 = vmatpush1.msra.mxu0 0.0
        %5048 = vmatprep.subr.mxu0 0.0
        %5049 = vmatpush1.msra.mxu0 0.0
        %5050 = vmatprep.subr.mxu0 0.0
        %5051 = vmatpush1.msra.mxu0 0.0
        %5052 = vmatprep.subr.mxu0 0.0
        %5053 = vmatpush1.msra.mxu0 0.0
        %5054 = vmatprep.subr.mxu0 0.0
        %5055 = vmatpush1.msra.mxu0 0.0
        %5056 = vmatprep.subr.mxu0 0.0
        %5057 = vmatpush1.msra.mxu0 0.0
        %5058 = vmatprep.subr.mxu0 0.0
        %5059 = vmatpush1.msra.mxu0 0.0
        %5060 = vmatprep.subr.mxu0 0.0
        %5061 = vmatpush1.msra.mxu0 0.0
        %5062 = vmatprep.subr.mxu0 0.0
        %5063 = vmatpush1.msra.mxu0 0.0
        %5064 = vmatprep.subr.mxu0 0.0
        %5065 = vmatpush1.msra.mxu0 0.0
        %5066 = vmatprep.subr.mxu0 0.0
        %5067 = vmatpush1.msra.mxu0 0.0
        %5068 = vmatprep.subr.mxu0 0.0
        %5069 = vmatpush1.msra.mxu0 0.0
        %5070 = vmatprep.subr.mxu0 0.0
        %5071 = vmatpush1.msra.mxu0 0.0
        %5072 = vmatprep.subr.mxu0 0.0
        %5073 = vmatpush1.msra.mxu0 0.0
        %5074 = vmatprep.subr.mxu0 0.0
        %5075 = vmatpush1.msra.mxu0 0.0
        %5076 = vmatprep.subr.mxu0 0.0
        %5077 = vmatpush1.msra.mxu0 0.0
        %5078 = vmatprep.mubr.f32.mxu0 0.0
        %5079 = vmatmul.mubr.f32.gmra.mrb[0].mxu0 %v4961
        %v5080 = vpop.f32.mrb[0].mxu0
        %v5081 = vadd.f32 0.0, %v5080
        %v5082 = vpop.f32.mrb[0].mxu0
        %v5083 = vadd.f32 0.0, %v5082
        %5084 = vmatprep.mubr.f32.mxu0 0.0
        %5085 = vmatmul.mubr.f32.gmra.mrb[0].mxu0 %v4964
        %v5086 = vpop.f32.mrb[0].mxu0
        %v5087 = vadd.f32 0.0, %v5086
        %v5088 = vpop.f32.mrb[0].mxu0
        %v5089 = vadd.f32 0.0, %v5088
        %5090 = vmatprep.mubr.f32.mxu0 0.0
        %5091 = vmatmul.mubr.f32.gmra.mrb[0].mxu0 %v4967
        %v5092 = vpop.f32.mrb[0].mxu0
        %v5093 = vadd.f32 0.0, %v5092
        %v5094 = vpop.f32.mrb[0].mxu0
        %v5095 = vadd.f32 0.0, %v5094
        %5096 = vmatprep.mubr.f32.mxu0 0.0
        %5097 = vmatmul.mubr.f32.gmra.mrb[0].mxu0 %v4970
        %v5098 = vpop.f32.mrb[0].mxu0
        %v5099 = vadd.f32 0.0, %v5098
        %v5100 = vpop.f32.mrb[0].mxu0
        %v5101 = vadd.f32 0.0, %v5100
        %5102 = vmatprep.mubr.f32.mxu0 0.0
        %5103 = vmatmul.mubr.f32.gmra.mrb[0].mxu0 %v4973
        %v5104 = vpop.f32.mrb[0].mxu0
        %v5105 = vadd.f32 0.0, %v5104
        %v5106 = vpop.f32.mrb[0].mxu0
        %v5107 = vadd.f32 0.0, %v5106
        %5108 = vmatprep.mubr.f32.mxu0 0.0
        %5109 = vmatmul.mubr.f32.gmra.mrb[0].mxu0 %v4976
        %v5110 = vpop.f32.mrb[0].mxu0
        %v5111 = vadd.f32 0.0, %v5110
        %v5112 = vpop.f32.mrb[0].mxu0
        %v5113 = vadd.f32 0.0, %v5112
        %5114 = vmatprep.mubr.f32.mxu0 0.0
        %5115 = vmatmul.mubr.f32.gmra.mrb[0].mxu0 %v4979
        %v5116 = vpop.f32.mrb[0].mxu0
        %v5117 = vadd.f32 0.0, %v5116
        %v5118 = vpop.f32.mrb[0].mxu0
        %v5119 = vadd.f32 0.0, %v5118
        %5120 = vmatprep.mubr.f32.mxu0 0.0
        %5121 = vmatmul.mubr.f32.gmra.mrb[0].mxu0 %v4982
        %v5122 = vpop.f32.mrb[0].mxu0
        %v5123 = vadd.f32 0.0, %v5122
        %v5124 = vpop.f32.mrb[0].mxu0
        %v5125 = vadd.f32 0.0, %v5124
        %5126 = vmatprep.mubr.f32.mxu0 0.0
        %5127 = vmatmul.mubr.f32.gmra.mrb[0].mxu0 %v4985
        %v5128 = vpop.f32.mrb[0].mxu0
        %v5129 = vadd.f32 0.0, %v5128
        %v5130 = vpop.f32.mrb[0].mxu0
        %v5131 = vadd.f32 0.0, %v5130
        %5132 = vmatprep.mubr.f32.mxu0 0.0
        %5133 = vmatmul.mubr.f32.gmra.mrb[0].mxu0 %v4988
        %v5134 = vpop.f32.mrb[0].mxu0
        %v5135 = vadd.f32 0.0, %v5134
        %v5136 = vpop.f32.mrb[0].mxu0
        %v5137 = vadd.f32 0.0, %v5136
        %5138 = vmatprep.mubr.f32.mxu0 0.0
        %5139 = vmatmul.mubr.f32.gmra.mrb[0].mxu0 %v4991
        %v5140 = vpop.f32.mrb[0].mxu0
        %v5141 = vadd.f32 0.0, %v5140
        %v5142 = vpop.f32.mrb[0].mxu0
        %v5143 = vadd.f32 0.0, %v5142
        %5144 = vmatprep.mubr.f32.mxu0 0.0
        %5145 = vmatmul.mubr.f32.gmra.mrb[0].mxu0 %v4994
        %v5146 = vpop.f32.mrb[0].mxu0
        %v5147 = vadd.f32 0.0, %v5146
        %v5148 = vpop.f32.mrb[0].mxu0
        %v5149 = vadd.f32 0.0, %v5148
        %5150 = vmatprep.mubr.f32.mxu0 0.0
        %5151 = vmatmul.mubr.f32.gmra.mrb[0].mxu0 %v4997
        %v5152 = vpop.f32.mrb[0].mxu0
        %v5153 = vadd.f32 0.0, %v5152
        %v5154 = vpop.f32.mrb[0].mxu0
        %v5155 = vadd.f32 0.0, %v5154
        %5156 = vmatprep.mubr.f32.mxu0 0.0
        %5157 = vmatmul.mubr.f32.gmra.mrb[0].mxu0 %v5000
        %v5158 = vpop.f32.mrb[0].mxu0
        %v5159 = vadd.f32 0.0, %v5158
        %v5160 = vpop.f32.mrb[0].mxu0
        %v5161 = vadd.f32 0.0, %v5160
        %5162 = vmatprep.mubr.f32.mxu0 0.0
        %5163 = vmatmul.mubr.f32.gmra.mrb[0].mxu0 %v5003
        %v5164 = vpop.f32.mrb[0].mxu0
        %v5165 = vadd.f32 0.0, %v5164
        %v5166 = vpop.f32.mrb[0].mxu0
        %v5167 = vadd.f32 0.0, %v5166
        %5168 = vmatprep.mubr.f32.mxu0 0.0
        %5169 = vmatmul.mubr.f32.gmra.mrb[0].mxu0 %v5006
        %v5170 = vpop.f32.mrb[0].mxu0
        %v5171 = vadd.f32 0.0, %v5170
        %v5172 = vpop.f32.mrb[0].mxu0
        %v5173 = vadd.f32 0.0, %v5172
        %5174 = vdwg.mxu0
        %v5175 = vadd.f32 %v4889, %v5081
        %v5176 = vadd.f32 %v4890, %v5083
        %v5177 = vadd.f32 %v4891, %v5087
        %v5178 = vadd.f32 %v4892, %v5089
        %v5179 = vadd.f32 %v4893, %v5093
        %v5180 = vadd.f32 %v4894, %v5095
        %v5181 = vadd.f32 %v4895, %v5099
        %v5182 = vadd.f32 %v4896, %v5101
        %v5183 = vadd.f32 %v4897, %v5105
        %v5184 = vadd.f32 %v4898, %v5107
        %v5185 = vadd.f32 %v4899, %v5111
        %v5186 = vadd.f32 %v4900, %v5113
        %v5187 = vadd.f32 %v4901, %v5117
        %v5188 = vadd.f32 %v4902, %v5119
        %v5189 = vadd.f32 %v4903, %v5123
        %v5190 = vadd.f32 %v4904, %v5125
        %v5191 = vadd.f32 %v4905, %v5129
        %v5192 = vadd.f32 %v4906, %v5131
        %v5193 = vadd.f32 %v4907, %v5135
        %v5194 = vadd.f32 %v4908, %v5137
        %v5195 = vadd.f32 %v4909, %v5141
        %v5196 = vadd.f32 %v4910, %v5143
        %v5197 = vadd.f32 %v4911, %v5147
        %v5198 = vadd.f32 %v4912, %v5149
        %v5199 = vadd.f32 %v4913, %v5153
        %v5200 = vadd.f32 %v4914, %v5155
        %v5201 = vadd.f32 %v4915, %v5159
        %v5202 = vadd.f32 %v4916, %v5161
        %v5203 = vadd.f32 %v4917, %v5165
        %v5204 = vadd.f32 %v4918, %v5167
        %v5205 = vadd.f32 %v4919, %v5171
        %v5206 = vadd.f32 %v4920, %v5173
        %v5207 = vld [vmem:[%s4] sm:$0x3]
        %v5209 = vlaneseq
        %v5210 = vshrl.u32 %v5209, 7
        %v5211 = vsub.s32 0, %v5210
        %v5212 = vrot.slane %v5207, %v5211
        %v5213 = vlaneseq
        %v5214 = vshrl.u32 %v5213, 7
        %v5215 = vsub.s32 1, %v5214
        %v5216 = vrot.slane %v5207, %v5215
        %v5219 = vadd.f32 %v5175, %v5212
        %v5220 = vadd.f32 %v5176, %v5216
        %v5221 = vadd.f32 %v5177, %v5212
        %v5222 = vadd.f32 %v5178, %v5216
        %v5223 = vadd.f32 %v5179, %v5212
        %v5224 = vadd.f32 %v5180, %v5216
        %v5225 = vadd.f32 %v5181, %v5212
        %v5226 = vadd.f32 %v5182, %v5216
        %v5227 = vadd.f32 %v5183, %v5212
        %v5228 = vadd.f32 %v5184, %v5216
        %v5229 = vadd.f32 %v5185, %v5212
        %v5230 = vadd.f32 %v5186, %v5216
        %v5231 = vadd.f32 %v5187, %v5212
        %v5232 = vadd.f32 %v5188, %v5216
        %v5233 = vadd.f32 %v5189, %v5212
        %v5234 = vadd.f32 %v5190, %v5216
        %v5235 = vadd.f32 %v5191, %v5212
        %v5236 = vadd.f32 %v5192, %v5216
        %v5237 = vadd.f32 %v5193, %v5212
        %v5238 = vadd.f32 %v5194, %v5216
        %v5239 = vadd.f32 %v5195, %v5212
        %v5240 = vadd.f32 %v5196, %v5216
        %v5241 = vadd.f32 %v5197, %v5212
        %v5242 = vadd.f32 %v5198, %v5216
        %v5243 = vadd.f32 %v5199, %v5212
        %v5244 = vadd.f32 %v5200, %v5216
        %v5245 = vadd.f32 %v5201, %v5212
        %v5246 = vadd.f32 %v5202, %v5216
        %v5247 = vadd.f32 %v5203, %v5212
        %v5248 = vadd.f32 %v5204, %v5216
        %v5249 = vadd.f32 %v5205, %v5212
        %v5250 = vadd.f32 %v5206, %v5216
        %v5251 = vmax.f32 %v5219, 0.0
        %v5252 = vmax.f32 %v5220, 0.0
        %v5253 = vmax.f32 %v5221, 0.0
        %v5254 = vmax.f32 %v5222, 0.0
        %v5255 = vmax.f32 %v5223, 0.0
        %v5256 = vmax.f32 %v5224, 0.0
        %v5257 = vmax.f32 %v5225, 0.0
        %v5258 = vmax.f32 %v5226, 0.0
        %v5259 = vmax.f32 %v5227, 0.0
        %v5260 = vmax.f32 %v5228, 0.0
        %v5261 = vmax.f32 %v5229, 0.0
        %v5262 = vmax.f32 %v5230, 0.0
        %v5263 = vmax.f32 %v5231, 0.0
        %v5264 = vmax.f32 %v5232, 0.0
        %v5265 = vmax.f32 %v5233, 0.0
        %v5266 = vmax.f32 %v5234, 0.0
        %v5267 = vmax.f32 %v5235, 0.0
        %v5268 = vmax.f32 %v5236, 0.0
        %v5269 = vmax.f32 %v5237, 0.0
        %v5270 = vmax.f32 %v5238, 0.0
        %v5271 = vmax.f32 %v5239, 0.0
        %v5272 = vmax.f32 %v5240, 0.0
        %v5273 = vmax.f32 %v5241, 0.0
        %v5274 = vmax.f32 %v5242, 0.0
        %v5275 = vmax.f32 %v5243, 0.0
        %v5276 = vmax.f32 %v5244, 0.0
        %v5277 = vmax.f32 %v5245, 0.0
        %v5278 = vmax.f32 %v5246, 0.0
        %v5279 = vmax.f32 %v5247, 0.0
        %v5280 = vmax.f32 %v5248, 0.0
        %v5281 = vmax.f32 %v5249, 0.0
        %v5282 = vmax.f32 %v5250, 0.0
        %v5283 = vld [vmem:[%s7] sm:$0xff]
        %v5284 = vld [vmem:[%s7 + $0x8] sm:$0xff]
        %v5285 = vld [vmem:[%s7 + $0x10] sm:$0xff]
        %v5286 = vld [vmem:[%s7 + $0x18] sm:$0xff]
        %v5287 = vld [vmem:[%s7 + $0x20] sm:$0xff]
        %v5288 = vld [vmem:[%s7 + $0x28] sm:$0xff]
        %v5289 = vld [vmem:[%s7 + $0x30] sm:$0xff]
        %v5290 = vld [vmem:[%s7 + $0x38] sm:$0xff]
        %v5292 = vsel %vm2936, %v5283, 0
        %v5295 = vsel %vm2936, %v5284, 0
        %v5298 = vsel %vm2936, %v5285, 0
        %v5301 = vsel %vm2936, %v5286, 0
        %v5304 = vsel %vm2936, %v5287, 0
        %v5307 = vsel %vm2936, %v5288, 0
        %v5310 = vsel %vm2936, %v5289, 0
        %v5313 = vsel %vm2936, %v5290, 0
        %v5316 = vsel %vm2985, %v5281, 0
        %v5319 = vsel %vm2985, %v5282, 0
        %5321 = vmatprep.subr.mxu0 %v5252
        %5322 = vmatpush1.msra.mxu0 %v5251
        %5323 = vmatprep.subr.mxu0 %v5254
        %5324 = vmatpush1.msra.mxu0 %v5253
        %5325 = vmatprep.subr.mxu0 %v5256
        %5326 = vmatpush1.msra.mxu0 %v5255
        %5327 = vmatprep.subr.mxu0 %v5258
        %5328 = vmatpush1.msra.mxu0 %v5257
        %5329 = vmatprep.subr.mxu0 %v5260
        %5330 = vmatpush1.msra.mxu0 %v5259
        %5331 = vmatprep.subr.mxu0 %v5262
        %5332 = vmatpush1.msra.mxu0 %v5261
        %5333 = vmatprep.subr.mxu0 %v5264
        %5334 = vmatpush1.msra.mxu0 %v5263
        %5335 = vmatprep.subr.mxu0 %v5266
        %5336 = vmatpush1.msra.mxu0 %v5265
        %5337 = vmatprep.subr.mxu0 %v5268
        %5338 = vmatpush1.msra.mxu0 %v5267
        %5339 = vmatprep.subr.mxu0 %v5270
        %5340 = vmatpush1.msra.mxu0 %v5269
        %5341 = vmatprep.subr.mxu0 %v5272
        %5342 = vmatpush1.msra.mxu0 %v5271
        %5343 = vmatprep.subr.mxu0 %v5274
        %5344 = vmatpush1.msra.mxu0 %v5273
        %5345 = vmatprep.subr.mxu0 %v5276
        %5346 = vmatpush1.msra.mxu0 %v5275
        %5347 = vmatprep.subr.mxu0 %v5278
        %5348 = vmatpush1.msra.mxu0 %v5277
        %5349 = vmatprep.subr.mxu0 %v5280
        %5350 = vmatpush1.msra.mxu0 %v5279
        %5351 = vmatprep.subr.mxu0 %v5319
        %5352 = vmatpush1.msra.mxu0 %v5316
        %5353 = vmatprep.subr.mxu0 0.0
        %5354 = vmatpush1.msra.mxu0 0.0
        %5355 = vmatprep.subr.mxu0 0.0
        %5356 = vmatpush1.msra.mxu0 0.0
        %5357 = vmatprep.subr.mxu0 0.0
        %5358 = vmatpush1.msra.mxu0 0.0
        %5359 = vmatprep.subr.mxu0 0.0
        %5360 = vmatpush1.msra.mxu0 0.0
        %5361 = vmatprep.subr.mxu0 0.0
        %5362 = vmatpush1.msra.mxu0 0.0
        %5363 = vmatprep.subr.mxu0 0.0
        %5364 = vmatpush1.msra.mxu0 0.0
        %5365 = vmatprep.subr.mxu0 0.0
        %5366 = vmatpush1.msra.mxu0 0.0
        %5367 = vmatprep.subr.mxu0 0.0
        %5368 = vmatpush1.msra.mxu0 0.0
        %5369 = vmatprep.subr.mxu0 0.0
        %5370 = vmatpush1.msra.mxu0 0.0
        %5371 = vmatprep.subr.mxu0 0.0
        %5372 = vmatpush1.msra.mxu0 0.0
        %5373 = vmatprep.subr.mxu0 0.0
        %5374 = vmatpush1.msra.mxu0 0.0
        %5375 = vmatprep.subr.mxu0 0.0
        %5376 = vmatpush1.msra.mxu0 0.0
        %5377 = vmatprep.subr.mxu0 0.0
        %5378 = vmatpush1.msra.mxu0 0.0
        %5379 = vmatprep.subr.mxu0 0.0
        %5380 = vmatpush1.msra.mxu0 0.0
        %5381 = vmatprep.subr.mxu0 0.0
        %5382 = vmatpush1.msra.mxu0 0.0
        %5383 = vmatprep.subr.mxu0 0.0
        %5384 = vmatpush1.msra.mxu0 0.0
        %5385 = vmatprep.mubr.f32.mxu0 0.0
        %5386 = vmatmul.mubr.f32.gmra.mrb[0].mxu0 %v5292
        %v5387 = vpop.f32.mrb[0].mxu0
        %v5388 = vadd.f32 0.0, %v5387
        %v5389 = vpop.f32.mrb[0].mxu0
        %v5390 = vadd.f32 0.0, %v5389
        %5391 = vmatprep.mubr.f32.mxu0 0.0
        %5392 = vmatmul.mubr.f32.gmra.mrb[0].mxu0 %v5295
        %v5393 = vpop.f32.mrb[0].mxu0
        %v5394 = vadd.f32 0.0, %v5393
        %v5395 = vpop.f32.mrb[0].mxu0
        %v5396 = vadd.f32 0.0, %v5395
        %5397 = vmatprep.mubr.f32.mxu0 0.0
        %5398 = vmatmul.mubr.f32.gmra.mrb[0].mxu0 %v5298
        %v5399 = vpop.f32.mrb[0].mxu0
        %v5400 = vadd.f32 0.0, %v5399
        %v5401 = vpop.f32.mrb[0].mxu0
        %v5402 = vadd.f32 0.0, %v5401
        %5403 = vmatprep.mubr.f32.mxu0 0.0
        %5404 = vmatmul.mubr.f32.gmra.mrb[0].mxu0 %v5301
        %v5405 = vpop.f32.mrb[0].mxu0
        %v5406 = vadd.f32 0.0, %v5405
        %v5407 = vpop.f32.mrb[0].mxu0
        %v5408 = vadd.f32 0.0, %v5407
        %5409 = vmatprep.mubr.f32.mxu0 0.0
        %5410 = vmatmul.mubr.f32.gmra.mrb[0].mxu0 %v5304
        %v5411 = vpop.f32.mrb[0].mxu0
        %v5412 = vadd.f32 0.0, %v5411
        %v5413 = vpop.f32.mrb[0].mxu0
        %v5414 = vadd.f32 0.0, %v5413
        %5415 = vmatprep.mubr.f32.mxu0 0.0
        %5416 = vmatmul.mubr.f32.gmra.mrb[0].mxu0 %v5307
        %v5417 = vpop.f32.mrb[0].mxu0
        %v5418 = vadd.f32 0.0, %v5417
        %v5419 = vpop.f32.mrb[0].mxu0
        %v5420 = vadd.f32 0.0, %v5419
        %5421 = vmatprep.mubr.f32.mxu0 0.0
        %5422 = vmatmul.mubr.f32.gmra.mrb[0].mxu0 %v5310
        %v5423 = vpop.f32.mrb[0].mxu0
        %v5424 = vadd.f32 0.0, %v5423
        %v5425 = vpop.f32.mrb[0].mxu0
        %v5426 = vadd.f32 0.0, %v5425
        %5427 = vmatprep.mubr.f32.mxu0 0.0
        %5428 = vmatmul.mubr.f32.gmra.mrb[0].mxu0 %v5313
        %v5429 = vpop.f32.mrb[0].mxu0
        %v5430 = vadd.f32 0.0, %v5429
        %v5431 = vpop.f32.mrb[0].mxu0
        %v5432 = vadd.f32 0.0, %v5431
        %5433 = vdwg.mxu0
        %s5434 = scalar_lea.vmem %s7, 64
        %v5435 = vld [vmem:[%s5434] sm:$0xff]
        %v5436 = vld [vmem:[%s5434 + $0x8] sm:$0xff]
        %v5437 = vld [vmem:[%s5434 + $0x10] sm:$0xff]
        %v5438 = vld [vmem:[%s5434 + $0x18] sm:$0xff]
        %v5439 = vld [vmem:[%s5434 + $0x20] sm:$0xff]
        %v5440 = vld [vmem:[%s5434 + $0x28] sm:$0xff]
        %v5441 = vld [vmem:[%s5434 + $0x30] sm:$0xff]
        %v5442 = vld [vmem:[%s5434 + $0x38] sm:$0xff]
        %v5444 = vsel %vm2936, %v5435, 0
        %v5447 = vsel %vm2936, %v5436, 0
        %v5450 = vsel %vm2936, %v5437, 0
        %v5453 = vsel %vm2936, %v5438, 0
        %v5456 = vsel %vm2936, %v5439, 0
        %v5459 = vsel %vm2936, %v5440, 0
        %v5462 = vsel %vm2936, %v5441, 0
        %v5465 = vsel %vm2936, %v5442, 0
        %5467 = vmatprep.subr.mxu0 %v5252
        %5468 = vmatpush1.msra.mxu0 %v5251
        %5469 = vmatprep.subr.mxu0 %v5254
        %5470 = vmatpush1.msra.mxu0 %v5253
        %5471 = vmatprep.subr.mxu0 %v5256
        %5472 = vmatpush1.msra.mxu0 %v5255
        %5473 = vmatprep.subr.mxu0 %v5258
        %5474 = vmatpush1.msra.mxu0 %v5257
        %5475 = vmatprep.subr.mxu0 %v5260
        %5476 = vmatpush1.msra.mxu0 %v5259
        %5477 = vmatprep.subr.mxu0 %v5262
        %5478 = vmatpush1.msra.mxu0 %v5261
        %5479 = vmatprep.subr.mxu0 %v5264
        %5480 = vmatpush1.msra.mxu0 %v5263
        %5481 = vmatprep.subr.mxu0 %v5266
        %5482 = vmatpush1.msra.mxu0 %v5265
        %5483 = vmatprep.subr.mxu0 %v5268
        %5484 = vmatpush1.msra.mxu0 %v5267
        %5485 = vmatprep.subr.mxu0 %v5270
        %5486 = vmatpush1.msra.mxu0 %v5269
        %5487 = vmatprep.subr.mxu0 %v5272
        %5488 = vmatpush1.msra.mxu0 %v5271
        %5489 = vmatprep.subr.mxu0 %v5274
        %5490 = vmatpush1.msra.mxu0 %v5273
        %5491 = vmatprep.subr.mxu0 %v5276
        %5492 = vmatpush1.msra.mxu0 %v5275
        %5493 = vmatprep.subr.mxu0 %v5278
        %5494 = vmatpush1.msra.mxu0 %v5277
        %5495 = vmatprep.subr.mxu0 %v5280
        %5496 = vmatpush1.msra.mxu0 %v5279
        %5497 = vmatprep.subr.mxu0 %v5319
        %5498 = vmatpush1.msra.mxu0 %v5316
        %5499 = vmatprep.subr.mxu0 0.0
        %5500 = vmatpush1.msra.mxu0 0.0
        %5501 = vmatprep.subr.mxu0 0.0
        %5502 = vmatpush1.msra.mxu0 0.0
        %5503 = vmatprep.subr.mxu0 0.0
        %5504 = vmatpush1.msra.mxu0 0.0
        %5505 = vmatprep.subr.mxu0 0.0
        %5506 = vmatpush1.msra.mxu0 0.0
        %5507 = vmatprep.subr.mxu0 0.0
        %5508 = vmatpush1.msra.mxu0 0.0
        %5509 = vmatprep.subr.mxu0 0.0
        %5510 = vmatpush1.msra.mxu0 0.0
        %5511 = vmatprep.subr.mxu0 0.0
        %5512 = vmatpush1.msra.mxu0 0.0
        %5513 = vmatprep.subr.mxu0 0.0
        %5514 = vmatpush1.msra.mxu0 0.0
        %5515 = vmatprep.subr.mxu0 0.0
        %5516 = vmatpush1.msra.mxu0 0.0
        %5517 = vmatprep.subr.mxu0 0.0
        %5518 = vmatpush1.msra.mxu0 0.0
        %5519 = vmatprep.subr.mxu0 0.0
        %5520 = vmatpush1.msra.mxu0 0.0
        %5521 = vmatprep.subr.mxu0 0.0
        %5522 = vmatpush1.msra.mxu0 0.0
        %5523 = vmatprep.subr.mxu0 0.0
        %5524 = vmatpush1.msra.mxu0 0.0
        %5525 = vmatprep.subr.mxu0 0.0
        %5526 = vmatpush1.msra.mxu0 0.0
        %5527 = vmatprep.subr.mxu0 0.0
        %5528 = vmatpush1.msra.mxu0 0.0
        %5529 = vmatprep.subr.mxu0 0.0
        %5530 = vmatpush1.msra.mxu0 0.0
        %5531 = vmatprep.mubr.f32.mxu0 0.0
        %5532 = vmatmul.mubr.f32.gmra.mrb[0].mxu0 %v5444
        %v5533 = vpop.f32.mrb[0].mxu0
        %v5534 = vadd.f32 0.0, %v5533
        %v5535 = vpop.f32.mrb[0].mxu0
        %v5536 = vadd.f32 0.0, %v5535
        %5537 = vmatprep.mubr.f32.mxu0 0.0
        %5538 = vmatmul.mubr.f32.gmra.mrb[0].mxu0 %v5447
        %v5539 = vpop.f32.mrb[0].mxu0
        %v5540 = vadd.f32 0.0, %v5539
        %v5541 = vpop.f32.mrb[0].mxu0
        %v5542 = vadd.f32 0.0, %v5541
        %5543 = vmatprep.mubr.f32.mxu0 0.0
        %5544 = vmatmul.mubr.f32.gmra.mrb[0].mxu0 %v5450
        %v5545 = vpop.f32.mrb[0].mxu0
        %v5546 = vadd.f32 0.0, %v5545
        %v5547 = vpop.f32.mrb[0].mxu0
        %v5548 = vadd.f32 0.0, %v5547
        %5549 = vmatprep.mubr.f32.mxu0 0.0
        %5550 = vmatmul.mubr.f32.gmra.mrb[0].mxu0 %v5453
        %v5551 = vpop.f32.mrb[0].mxu0
        %v5552 = vadd.f32 0.0, %v5551
        %v5553 = vpop.f32.mrb[0].mxu0
        %v5554 = vadd.f32 0.0, %v5553
        %5555 = vmatprep.mubr.f32.mxu0 0.0
        %5556 = vmatmul.mubr.f32.gmra.mrb[0].mxu0 %v5456
        %v5557 = vpop.f32.mrb[0].mxu0
        %v5558 = vadd.f32 0.0, %v5557
        %v5559 = vpop.f32.mrb[0].mxu0
        %v5560 = vadd.f32 0.0, %v5559
        %5561 = vmatprep.mubr.f32.mxu0 0.0
        %5562 = vmatmul.mubr.f32.gmra.mrb[0].mxu0 %v5459
        %v5563 = vpop.f32.mrb[0].mxu0
        %v5564 = vadd.f32 0.0, %v5563
        %v5565 = vpop.f32.mrb[0].mxu0
        %v5566 = vadd.f32 0.0, %v5565
        %5567 = vmatprep.mubr.f32.mxu0 0.0
        %5568 = vmatmul.mubr.f32.gmra.mrb[0].mxu0 %v5462
        %v5569 = vpop.f32.mrb[0].mxu0
        %v5570 = vadd.f32 0.0, %v5569
        %v5571 = vpop.f32.mrb[0].mxu0
        %v5572 = vadd.f32 0.0, %v5571
        %5573 = vmatprep.mubr.f32.mxu0 0.0
        %5574 = vmatmul.mubr.f32.gmra.mrb[0].mxu0 %v5465
        %v5575 = vpop.f32.mrb[0].mxu0
        %v5576 = vadd.f32 0.0, %v5575
        %v5577 = vpop.f32.mrb[0].mxu0
        %v5578 = vadd.f32 0.0, %v5577
        %5579 = vdwg.mxu0
        %v5580 = vmax.f32 %v5388, %v5534
        %v5581 = vmax.f32 %v5390, %v5536
        %v5582 = vmax.f32 %v5394, %v5540
        %v5583 = vmax.f32 %v5396, %v5542
        %v5584 = vmax.f32 %v5400, %v5546
        %v5585 = vmax.f32 %v5402, %v5548
        %v5586 = vmax.f32 %v5406, %v5552
        %v5587 = vmax.f32 %v5408, %v5554
        %v5588 = vmax.f32 %v5412, %v5558
        %v5589 = vmax.f32 %v5414, %v5560
        %v5590 = vmax.f32 %v5418, %v5564
        %v5591 = vmax.f32 %v5420, %v5566
        %v5592 = vmax.f32 %v5424, %v5570
        %v5593 = vmax.f32 %v5426, %v5572
        %v5594 = vmax.f32 %v5430, %v5576
        %v5595 = vmax.f32 %v5432, %v5578
        %v5596 = vld [vmem:[%s8] sm:$0xff]
        %v5597 = vld [vmem:[%s8 + $0x8] sm:$0xff]
        %v5598 = vld [vmem:[%s8 + $0x10] sm:$0xff]
        %v5599 = vld [vmem:[%s8 + $0x18] sm:$0xff]
        %v5600 = vld [vmem:[%s8 + $0x20] sm:$0xff]
        %v5601 = vld [vmem:[%s8 + $0x28] sm:$0xff]
        %v5602 = vld [vmem:[%s8 + $0x30] sm:$0xff]
        %v5603 = vld [vmem:[%s8 + $0x38] sm:$0xff]
        %v5604 = vld [vmem:[%s8 + $0x40] sm:$0xff]
        %v5605 = vld [vmem:[%s8 + $0x48] sm:$0xff]
        %v5606 = vld [vmem:[%s8 + $0x50] sm:$0xff]
        %v5607 = vld [vmem:[%s8 + $0x58] sm:$0xff]
        %v5608 = vld [vmem:[%s8 + $0x60] sm:$0xff]
        %v5609 = vld [vmem:[%s8 + $0x68] sm:$0xff]
        %v5610 = vld [vmem:[%s8 + $0x70] sm:$0xff]
        %v5611 = vld [vmem:[%s8 + $0x78] sm:$0xff]
        %v5612 = vld [vmem:[%s8 + $0x80] sm:$0xff]
        %v5613 = vld [vmem:[%s8 + $0x88] sm:$0xff]
        %v5614 = vld [vmem:[%s8 + $0x90] sm:$0xff]
        %v5615 = vld [vmem:[%s8 + $0x98] sm:$0xff]
        %vm5616 = vcmask 261120
        %v5618 = vsel %vm5616, %v5581, 0
        %v5621 = vsel %vm5616, %v5583, 0
        %v5624 = vsel %vm5616, %v5585, 0
        %v5627 = vsel %vm5616, %v5587, 0
        %v5630 = vsel %vm5616, %v5589, 0
        %v5633 = vsel %vm5616, %v5591, 0
        %v5636 = vsel %vm5616, %v5593, 0
        %v5639 = vsel %vm5616, %v5595, 0
        %5641 = vmatprep.subr.mxu0 0.0
        %5642 = vmatpush1.msra.mxu0 %v5596
        %5643 = vmatprep.subr.mxu0 0.0
        %5644 = vmatpush1.msra.mxu0 %v5597
        %5645 = vmatprep.subr.mxu0 0.0
        %5646 = vmatpush1.msra.mxu0 %v5598
        %5647 = vmatprep.subr.mxu0 0.0
        %5648 = vmatpush1.msra.mxu0 %v5599
        %5649 = vmatprep.subr.mxu0 0.0
        %5650 = vmatpush1.msra.mxu0 %v5600
        %5651 = vmatprep.subr.mxu0 0.0
        %5652 = vmatpush1.msra.mxu0 %v5601
        %5653 = vmatprep.subr.mxu0 0.0
        %5654 = vmatpush1.msra.mxu0 %v5602
        %5655 = vmatprep.subr.mxu0 0.0
        %5656 = vmatpush1.msra.mxu0 %v5603
        %5657 = vmatprep.subr.mxu0 0.0
        %5658 = vmatpush1.msra.mxu0 %v5604
        %5659 = vmatprep.subr.mxu0 0.0
        %5660 = vmatpush1.msra.mxu0 %v5605
        %5661 = vmatprep.subr.mxu0 0.0
        %5662 = vmatpush1.msra.mxu0 %v5606
        %5663 = vmatprep.subr.mxu0 0.0
        %5664 = vmatpush1.msra.mxu0 %v5607
        %5665 = vmatprep.subr.mxu0 0.0
        %5666 = vmatpush1.msra.mxu0 %v5608
        %5667 = vmatprep.subr.mxu0 0.0
        %5668 = vmatpush1.msra.mxu0 %v5609
        %5669 = vmatprep.subr.mxu0 0.0
        %5670 = vmatpush1.msra.mxu0 %v5610
        %5671 = vmatprep.subr.mxu0 0.0
        %5672 = vmatpush1.msra.mxu0 %v5611
        %5673 = vmatprep.subr.mxu0 0.0
        %5674 = vmatpush1.msra.mxu0 %v5612
        %5675 = vmatprep.subr.mxu0 0.0
        %5676 = vmatpush1.msra.mxu0 %v5613
        %5677 = vmatprep.subr.mxu0 0.0
        %5678 = vmatpush1.msra.mxu0 %v5614
        %5679 = vmatprep.subr.mxu0 0.0
        %5680 = vmatpush1.msra.mxu0 %v5615
        %5681 = vmatprep.subr.mxu0 0.0
        %5682 = vmatpush1.msra.mxu0 0.0
        %5683 = vmatprep.subr.mxu0 0.0
        %5684 = vmatpush1.msra.mxu0 0.0
        %5685 = vmatprep.subr.mxu0 0.0
        %5686 = vmatpush1.msra.mxu0 0.0
        %5687 = vmatprep.subr.mxu0 0.0
        %5688 = vmatpush1.msra.mxu0 0.0
        %5689 = vmatprep.subr.mxu0 0.0
        %5690 = vmatpush1.msra.mxu0 0.0
        %5691 = vmatprep.subr.mxu0 0.0
        %5692 = vmatpush1.msra.mxu0 0.0
        %5693 = vmatprep.subr.mxu0 0.0
        %5694 = vmatpush1.msra.mxu0 0.0
        %5695 = vmatprep.subr.mxu0 0.0
        %5696 = vmatpush1.msra.mxu0 0.0
        %5697 = vmatprep.subr.mxu0 0.0
        %5698 = vmatpush1.msra.mxu0 0.0
        %5699 = vmatprep.subr.mxu0 0.0
        %5700 = vmatpush1.msra.mxu0 0.0
        %5701 = vmatprep.subr.mxu0 0.0
        %5702 = vmatpush1.msra.mxu0 0.0
        %5703 = vmatprep.subr.mxu0 0.0
        %5704 = vmatpush1.msra.mxu0 0.0
        %5705 = vmatprep.mubr.f32.mxu0 %v5618
        %5706 = vmatmul.mubr.f32.gmra.mrb[0].mxu0 %v5580
        %v5707 = vpop.f32.mrb[0].mxu0
        %v5708 = vadd.f32 0.0, %v5707
        %v5709 = vpop.f32.mrb[0].mxu0
        %5710 = vmatprep.mubr.f32.mxu0 %v5621
        %5711 = vmatmul.mubr.f32.gmra.mrb[0].mxu0 %v5582
        %v5712 = vpop.f32.mrb[0].mxu0
        %v5713 = vadd.f32 0.0, %v5712
        %v5714 = vpop.f32.mrb[0].mxu0
        %5715 = vmatprep.mubr.f32.mxu0 %v5624
        %5716 = vmatmul.mubr.f32.gmra.mrb[0].mxu0 %v5584
        %v5717 = vpop.f32.mrb[0].mxu0
        %v5718 = vadd.f32 0.0, %v5717
        %v5719 = vpop.f32.mrb[0].mxu0
        %5720 = vmatprep.mubr.f32.mxu0 %v5627
        %5721 = vmatmul.mubr.f32.gmra.mrb[0].mxu0 %v5586
        %v5722 = vpop.f32.mrb[0].mxu0
        %v5723 = vadd.f32 0.0, %v5722
        %v5724 = vpop.f32.mrb[0].mxu0
        %5725 = vmatprep.mubr.f32.mxu0 %v5630
        %5726 = vmatmul.mubr.f32.gmra.mrb[0].mxu0 %v5588
        %v5727 = vpop.f32.mrb[0].mxu0
        %v5728 = vadd.f32 0.0, %v5727
        %v5729 = vpop.f32.mrb[0].mxu0
        %5730 = vmatprep.mubr.f32.mxu0 %v5633
        %5731 = vmatmul.mubr.f32.gmra.mrb[0].mxu0 %v5590
        %v5732 = vpop.f32.mrb[0].mxu0
        %v5733 = vadd.f32 0.0, %v5732
        %v5734 = vpop.f32.mrb[0].mxu0
        %5735 = vmatprep.mubr.f32.mxu0 %v5636
        %5736 = vmatmul.mubr.f32.gmra.mrb[0].mxu0 %v5592
        %v5737 = vpop.f32.mrb[0].mxu0
        %v5738 = vadd.f32 0.0, %v5737
        %v5739 = vpop.f32.mrb[0].mxu0
        %5740 = vmatprep.mubr.f32.mxu0 %v5639
        %5741 = vmatmul.mubr.f32.gmra.mrb[0].mxu0 %v5594
        %v5742 = vpop.f32.mrb[0].mxu0
        %v5743 = vadd.f32 0.0, %v5742
        %v5744 = vpop.f32.mrb[0].mxu0
        %5745 = vdwg.mxu0
        %s5746 = scalar_lea.vmem %s8, 160
        %v5747 = vld [vmem:[%s5746] sm:$0xff]
        %v5748 = vld [vmem:[%s5746 + $0x8] sm:$0xff]
        %v5749 = vld [vmem:[%s5746 + $0x10] sm:$0xff]
        %v5750 = vld [vmem:[%s5746 + $0x18] sm:$0xff]
        %v5751 = vld [vmem:[%s5746 + $0x20] sm:$0xff]
        %v5752 = vld [vmem:[%s5746 + $0x28] sm:$0xff]
        %v5753 = vld [vmem:[%s5746 + $0x30] sm:$0xff]
        %v5754 = vld [vmem:[%s5746 + $0x38] sm:$0xff]
        %v5755 = vld [vmem:[%s5746 + $0x40] sm:$0xff]
        %v5756 = vld [vmem:[%s5746 + $0x48] sm:$0xff]
        %v5757 = vld [vmem:[%s5746 + $0x50] sm:$0xff]
        %v5758 = vld [vmem:[%s5746 + $0x58] sm:$0xff]
        %v5759 = vld [vmem:[%s5746 + $0x60] sm:$0xff]
        %v5760 = vld [vmem:[%s5746 + $0x68] sm:$0xff]
        %v5761 = vld [vmem:[%s5746 + $0x70] sm:$0xff]
        %v5762 = vld [vmem:[%s5746 + $0x78] sm:$0xff]
        %v5763 = vld [vmem:[%s5746 + $0x80] sm:$0xff]
        %v5764 = vld [vmem:[%s5746 + $0x88] sm:$0xff]
        %v5765 = vld [vmem:[%s5746 + $0x90] sm:$0xff]
        %v5766 = vld [vmem:[%s5746 + $0x98] sm:$0xff]
        %5767 = vmatprep.subr.mxu0 0.0
        %5768 = vmatpush1.msra.mxu0 %v5747
        %5769 = vmatprep.subr.mxu0 0.0
        %5770 = vmatpush1.msra.mxu0 %v5748
        %5771 = vmatprep.subr.mxu0 0.0
        %5772 = vmatpush1.msra.mxu0 %v5749
        %5773 = vmatprep.subr.mxu0 0.0
        %5774 = vmatpush1.msra.mxu0 %v5750
        %5775 = vmatprep.subr.mxu0 0.0
        %5776 = vmatpush1.msra.mxu0 %v5751
        %5777 = vmatprep.subr.mxu0 0.0
        %5778 = vmatpush1.msra.mxu0 %v5752
        %5779 = vmatprep.subr.mxu0 0.0
        %5780 = vmatpush1.msra.mxu0 %v5753
        %5781 = vmatprep.subr.mxu0 0.0
        %5782 = vmatpush1.msra.mxu0 %v5754
        %5783 = vmatprep.subr.mxu0 0.0
        %5784 = vmatpush1.msra.mxu0 %v5755
        %5785 = vmatprep.subr.mxu0 0.0
        %5786 = vmatpush1.msra.mxu0 %v5756
        %5787 = vmatprep.subr.mxu0 0.0
        %5788 = vmatpush1.msra.mxu0 %v5757
        %5789 = vmatprep.subr.mxu0 0.0
        %5790 = vmatpush1.msra.mxu0 %v5758
        %5791 = vmatprep.subr.mxu0 0.0
        %5792 = vmatpush1.msra.mxu0 %v5759
        %5793 = vmatprep.subr.mxu0 0.0
        %5794 = vmatpush1.msra.mxu0 %v5760
        %5795 = vmatprep.subr.mxu0 0.0
        %5796 = vmatpush1.msra.mxu0 %v5761
        %5797 = vmatprep.subr.mxu0 0.0
        %5798 = vmatpush1.msra.mxu0 %v5762
        %5799 = vmatprep.subr.mxu0 0.0
        %5800 = vmatpush1.msra.mxu0 %v5763
        %5801 = vmatprep.subr.mxu0 0.0
        %5802 = vmatpush1.msra.mxu0 %v5764
        %5803 = vmatprep.subr.mxu0 0.0
        %5804 = vmatpush1.msra.mxu0 %v5765
        %5805 = vmatprep.subr.mxu0 0.0
        %5806 = vmatpush1.msra.mxu0 %v5766
        %5807 = vmatprep.subr.mxu0 0.0
        %5808 = vmatpush1.msra.mxu0 0.0
        %5809 = vmatprep.subr.mxu0 0.0
        %5810 = vmatpush1.msra.mxu0 0.0
        %5811 = vmatprep.subr.mxu0 0.0
        %5812 = vmatpush1.msra.mxu0 0.0
        %5813 = vmatprep.subr.mxu0 0.0
        %5814 = vmatpush1.msra.mxu0 0.0
        %5815 = vmatprep.subr.mxu0 0.0
        %5816 = vmatpush1.msra.mxu0 0.0
        %5817 = vmatprep.subr.mxu0 0.0
        %5818 = vmatpush1.msra.mxu0 0.0
        %5819 = vmatprep.subr.mxu0 0.0
        %5820 = vmatpush1.msra.mxu0 0.0
        %5821 = vmatprep.subr.mxu0 0.0
        %5822 = vmatpush1.msra.mxu0 0.0
        %5823 = vmatprep.subr.mxu0 0.0
        %5824 = vmatpush1.msra.mxu0 0.0
        %5825 = vmatprep.subr.mxu0 0.0
        %5826 = vmatpush1.msra.mxu0 0.0
        %5827 = vmatprep.subr.mxu0 0.0
        %5828 = vmatpush1.msra.mxu0 0.0
        %5829 = vmatprep.subr.mxu0 0.0
        %5830 = vmatpush1.msra.mxu0 0.0
        %5831 = vmatprep.mubr.f32.mxu0 %v5618
        %5832 = vmatmul.mubr.f32.gmra.mrb[0].mxu0 %v5580
        %v5833 = vpop.f32.mrb[0].mxu0
        %v5834 = vadd.f32 0.0, %v5833
        %v5835 = vpop.f32.mrb[0].mxu0
        %5836 = vmatprep.mubr.f32.mxu0 %v5621
        %5837 = vmatmul.mubr.f32.gmra.mrb[0].mxu0 %v5582
        %v5838 = vpop.f32.mrb[0].mxu0
        %v5839 = vadd.f32 0.0, %v5838
        %v5840 = vpop.f32.mrb[0].mxu0
        %5841 = vmatprep.mubr.f32.mxu0 %v5624
        %5842 = vmatmul.mubr.f32.gmra.mrb[0].mxu0 %v5584
        %v5843 = vpop.f32.mrb[0].mxu0
        %v5844 = vadd.f32 0.0, %v5843
        %v5845 = vpop.f32.mrb[0].mxu0
        %5846 = vmatprep.mubr.f32.mxu0 %v5627
        %5847 = vmatmul.mubr.f32.gmra.mrb[0].mxu0 %v5586
        %v5848 = vpop.f32.mrb[0].mxu0
        %v5849 = vadd.f32 0.0, %v5848
        %v5850 = vpop.f32.mrb[0].mxu0
        %5851 = vmatprep.mubr.f32.mxu0 %v5630
        %5852 = vmatmul.mubr.f32.gmra.mrb[0].mxu0 %v5588
        %v5853 = vpop.f32.mrb[0].mxu0
        %v5854 = vadd.f32 0.0, %v5853
        %v5855 = vpop.f32.mrb[0].mxu0
        %5856 = vmatprep.mubr.f32.mxu0 %v5633
        %5857 = vmatmul.mubr.f32.gmra.mrb[0].mxu0 %v5590
        %v5858 = vpop.f32.mrb[0].mxu0
        %v5859 = vadd.f32 0.0, %v5858
        %v5860 = vpop.f32.mrb[0].mxu0
        %5861 = vmatprep.mubr.f32.mxu0 %v5636
        %5862 = vmatmul.mubr.f32.gmra.mrb[0].mxu0 %v5592
        %v5863 = vpop.f32.mrb[0].mxu0
        %v5864 = vadd.f32 0.0, %v5863
        %v5865 = vpop.f32.mrb[0].mxu0
        %5866 = vmatprep.mubr.f32.mxu0 %v5639
        %5867 = vmatmul.mubr.f32.gmra.mrb[0].mxu0 %v5594
        %v5868 = vpop.f32.mrb[0].mxu0
        %v5869 = vadd.f32 0.0, %v5868
        %v5870 = vpop.f32.mrb[0].mxu0
        %5871 = vdwg.mxu0
        %v5872 = vmax.f32 %v5708, %v5834
        %v5873 = vmax.f32 %v5713, %v5839
        %v5874 = vmax.f32 %v5718, %v5844
        %v5875 = vmax.f32 %v5723, %v5849
        %v5876 = vmax.f32 %v5728, %v5854
        %v5877 = vmax.f32 %v5733, %v5859
        %v5878 = vmax.f32 %v5738, %v5864
        %v5879 = vmax.f32 %v5743, %v5869
        %v5880 = vld [vmem:[%s9] sm:$0xff]
        %vm5881 = vcmask 523264
        %v5883 = vsel %vm5881, %v5880, 0
        %5885 = vmatprep.subr.mxu0 0.0
        %5886 = vmatpush1.msra.mxu0 %v5872
        %5887 = vmatprep.subr.mxu0 0.0
        %5888 = vmatpush1.msra.mxu0 %v5873
        %5889 = vmatprep.subr.mxu0 0.0
        %5890 = vmatpush1.msra.mxu0 %v5874
        %5891 = vmatprep.subr.mxu0 0.0
        %5892 = vmatpush1.msra.mxu0 %v5875
        %5893 = vmatprep.subr.mxu0 0.0
        %5894 = vmatpush1.msra.mxu0 %v5876
        %5895 = vmatprep.subr.mxu0 0.0
        %5896 = vmatpush1.msra.mxu0 %v5877
        %5897 = vmatprep.subr.mxu0 0.0
        %5898 = vmatpush1.msra.mxu0 %v5878
        %5899 = vmatprep.subr.mxu0 0.0
        %5900 = vmatpush1.msra.mxu0 %v5879
        %5901 = vmatprep.subr.mxu0 0.0
        %5902 = vmatpush1.msra.mxu0 0.0
        %5903 = vmatprep.subr.mxu0 0.0
        %5904 = vmatpush1.msra.mxu0 0.0
        %5905 = vmatprep.subr.mxu0 0.0
        %5906 = vmatpush1.msra.mxu0 0.0
        %5907 = vmatprep.subr.mxu0 0.0
        %5908 = vmatpush1.msra.mxu0 0.0
        %5909 = vmatprep.subr.mxu0 0.0
        %5910 = vmatpush1.msra.mxu0 0.0
        %5911 = vmatprep.subr.mxu0 0.0
        %5912 = vmatpush1.msra.mxu0 0.0
        %5913 = vmatprep.subr.mxu0 0.0
        %5914 = vmatpush1.msra.mxu0 0.0
        %5915 = vmatprep.subr.mxu0 0.0
        %5916 = vmatpush1.msra.mxu0 0.0
        %5917 = vmatprep.subr.mxu0 0.0
        %5918 = vmatpush1.msra.mxu0 0.0
        %5919 = vmatprep.subr.mxu0 0.0
        %5920 = vmatpush1.msra.mxu0 0.0
        %5921 = vmatprep.subr.mxu0 0.0
        %5922 = vmatpush1.msra.mxu0 0.0
        %5923 = vmatprep.subr.mxu0 0.0
        %5924 = vmatpush1.msra.mxu0 0.0
        %5925 = vmatprep.subr.mxu0 0.0
        %5926 = vmatpush1.msra.mxu0 0.0
        %5927 = vmatprep.subr.mxu0 0.0
        %5928 = vmatpush1.msra.mxu0 0.0
        %5929 = vmatprep.subr.mxu0 0.0
        %5930 = vmatpush1.msra.mxu0 0.0
        %5931 = vmatprep.subr.mxu0 0.0
        %5932 = vmatpush1.msra.mxu0 0.0
        %5933 = vmatprep.subr.mxu0 0.0
        %5934 = vmatpush1.msra.mxu0 0.0
        %5935 = vmatprep.subr.mxu0 0.0
        %5936 = vmatpush1.msra.mxu0 0.0
        %5937 = vmatprep.subr.mxu0 0.0
        %5938 = vmatpush1.msra.mxu0 0.0
        %5939 = vmatprep.subr.mxu0 0.0
        %5940 = vmatpush1.msra.mxu0 0.0
        %5941 = vmatprep.subr.mxu0 0.0
        %5942 = vmatpush1.msra.mxu0 0.0
        %5943 = vmatprep.subr.mxu0 0.0
        %5944 = vmatpush1.msra.mxu0 0.0
        %5945 = vmatprep.subr.mxu0 0.0
        %5946 = vmatpush1.msra.mxu0 0.0
        %5947 = vmatprep.subr.mxu0 0.0
        %5948 = vmatpush1.msra.mxu0 0.0
        %5949 = vmatprep.mubr.f32.mxu0 0.0
        %5950 = vmatmul.mubr.f32.gmra.mrb[0].mxu0 %v5883
        %v5951 = vpop.f32.mrb[0].mxu0
        %v5952 = vadd.f32 0.0, %v5951
        %v5953 = vpop.f32.mrb[0].mxu0
        %5954 = vdwg.mxu0
        %v5955 = vld [vmem:[%s10] sm:$0xff]
        %v5956 = vld [vmem:[%s10 + $0x8] sm:$0xff]
        %v5957 = vld [vmem:[%s10 + $0x10] sm:$0xff]
        %v5958 = vld [vmem:[%s10 + $0x18] sm:$0xff]
        %v5959 = vld [vmem:[%s10 + $0x20] sm:$0xff]
        %v5960 = vld [vmem:[%s10 + $0x28] sm:$0xff]
        %v5961 = vld [vmem:[%s10 + $0x30] sm:$0xff]
        %v5962 = vld [vmem:[%s10 + $0x38] sm:$0xff]
        %v5963 = vld [vmem:[%s10 + $0x40] sm:$0xff]
        %v5964 = vld [vmem:[%s10 + $0x48] sm:$0xff]
        %v5965 = vld [vmem:[%s10 + $0x50] sm:$0xff]
        %v5966 = vld [vmem:[%s10 + $0x58] sm:$0xff]
        %v5967 = vld [vmem:[%s10 + $0x60] sm:$0xff]
        %v5968 = vld [vmem:[%s10 + $0x68] sm:$0xff]
        %v5969 = vld [vmem:[%s10 + $0x70] sm:$0xff]
        %v5970 = vld [vmem:[%s10 + $0x78] sm:$0xff]
        %v5971 = vld [vmem:[%s10 + $0x80] sm:$0xff]
        %v5972 = vld [vmem:[%s10 + $0x88] sm:$0xff]
        %v5973 = vld [vmem:[%s10 + $0x90] sm:$0xff]
        %v5974 = vld [vmem:[%s10 + $0x98] sm:$0xff]
        %s5975 = scalar_lea.vmem %s9, 8
        %v5976 = vld [vmem:[%s5975] sm:$0xff]
        %v5978 = vsel %vm5881, %v5976, 0
        %5980 = vmatprep.subr.mxu0 0.0
        %5981 = vmatpush1.msra.mxu0 %v5872
        %5982 = vmatprep.subr.mxu0 0.0
        %5983 = vmatpush1.msra.mxu0 %v5873
        %5984 = vmatprep.subr.mxu0 0.0
        %5985 = vmatpush1.msra.mxu0 %v5874
        %5986 = vmatprep.subr.mxu0 0.0
        %5987 = vmatpush1.msra.mxu0 %v5875
        %5988 = vmatprep.subr.mxu0 0.0
        %5989 = vmatpush1.msra.mxu0 %v5876
        %5990 = vmatprep.subr.mxu0 0.0
        %5991 = vmatpush1.msra.mxu0 %v5877
        %5992 = vmatprep.subr.mxu0 0.0
        %5993 = vmatpush1.msra.mxu0 %v5878
        %5994 = vmatprep.subr.mxu0 0.0
        %5995 = vmatpush1.msra.mxu0 %v5879
        %5996 = vmatprep.subr.mxu0 0.0
        %5997 = vmatpush1.msra.mxu0 0.0
        %5998 = vmatprep.subr.mxu0 0.0
        %5999 = vmatpush1.msra.mxu0 0.0
        %6000 = vmatprep.subr.mxu0 0.0
        %6001 = vmatpush1.msra.mxu0 0.0
        %6002 = vmatprep.subr.mxu0 0.0
        %6003 = vmatpush1.msra.mxu0 0.0
        %6004 = vmatprep.subr.mxu0 0.0
        %6005 = vmatpush1.msra.mxu0 0.0
        %6006 = vmatprep.subr.mxu0 0.0
        %6007 = vmatpush1.msra.mxu0 0.0
        %6008 = vmatprep.subr.mxu0 0.0
        %6009 = vmatpush1.msra.mxu0 0.0
        %6010 = vmatprep.subr.mxu0 0.0
        %6011 = vmatpush1.msra.mxu0 0.0
        %6012 = vmatprep.subr.mxu0 0.0
        %6013 = vmatpush1.msra.mxu0 0.0
        %6014 = vmatprep.subr.mxu0 0.0
        %6015 = vmatpush1.msra.mxu0 0.0
        %6016 = vmatprep.subr.mxu0 0.0
        %6017 = vmatpush1.msra.mxu0 0.0
        %6018 = vmatprep.subr.mxu0 0.0
        %6019 = vmatpush1.msra.mxu0 0.0
        %6020 = vmatprep.subr.mxu0 0.0
        %6021 = vmatpush1.msra.mxu0 0.0
        %6022 = vmatprep.subr.mxu0 0.0
        %6023 = vmatpush1.msra.mxu0 0.0
        %6024 = vmatprep.subr.mxu0 0.0
        %6025 = vmatpush1.msra.mxu0 0.0
        %6026 = vmatprep.subr.mxu0 0.0
        %6027 = vmatpush1.msra.mxu0 0.0
        %6028 = vmatprep.subr.mxu0 0.0
        %6029 = vmatpush1.msra.mxu0 0.0
        %6030 = vmatprep.subr.mxu0 0.0
        %6031 = vmatpush1.msra.mxu0 0.0
        %6032 = vmatprep.subr.mxu0 0.0
        %6033 = vmatpush1.msra.mxu0 0.0
        %6034 = vmatprep.subr.mxu0 0.0
        %6035 = vmatpush1.msra.mxu0 0.0
        %6036 = vmatprep.subr.mxu0 0.0
        %6037 = vmatpush1.msra.mxu0 0.0
        %6038 = vmatprep.subr.mxu0 0.0
        %6039 = vmatpush1.msra.mxu0 0.0
        %6040 = vmatprep.subr.mxu0 0.0
        %6041 = vmatpush1.msra.mxu0 0.0
        %6042 = vmatprep.subr.mxu0 0.0
        %6043 = vmatpush1.msra.mxu0 0.0
        %6044 = vmatprep.mubr.f32.mxu0 0.0
        %6045 = vmatmul.mubr.f32.gmra.mrb[0].mxu0 %v5978
        %v6046 = vpop.f32.mrb[0].mxu0
        %v6047 = vadd.f32 0.0, %v6046
        %v6048 = vpop.f32.mrb[0].mxu0
        %6049 = vdwg.mxu0
        %s6050 = scalar_lea.vmem %s10, 160
        %v6051 = vld [vmem:[%s6050] sm:$0xff]
        %v6052 = vld [vmem:[%s6050 + $0x8] sm:$0xff]
        %v6053 = vld [vmem:[%s6050 + $0x10] sm:$0xff]
        %v6054 = vld [vmem:[%s6050 + $0x18] sm:$0xff]
        %v6055 = vld [vmem:[%s6050 + $0x20] sm:$0xff]
        %v6056 = vld [vmem:[%s6050 + $0x28] sm:$0xff]
        %v6057 = vld [vmem:[%s6050 + $0x30] sm:$0xff]
        %v6058 = vld [vmem:[%s6050 + $0x38] sm:$0xff]
        %v6059 = vld [vmem:[%s6050 + $0x40] sm:$0xff]
        %v6060 = vld [vmem:[%s6050 + $0x48] sm:$0xff]
        %v6061 = vld [vmem:[%s6050 + $0x50] sm:$0xff]
        %v6062 = vld [vmem:[%s6050 + $0x58] sm:$0xff]
        %v6063 = vld [vmem:[%s6050 + $0x60] sm:$0xff]
        %v6064 = vld [vmem:[%s6050 + $0x68] sm:$0xff]
        %v6065 = vld [vmem:[%s6050 + $0x70] sm:$0xff]
        %v6066 = vld [vmem:[%s6050 + $0x78] sm:$0xff]
        %v6067 = vld [vmem:[%s6050 + $0x80] sm:$0xff]
        %v6068 = vld [vmem:[%s6050 + $0x88] sm:$0xff]
        %v6069 = vld [vmem:[%s6050 + $0x90] sm:$0xff]
        %v6070 = vld [vmem:[%s6050 + $0x98] sm:$0xff]
        %vm6071 = vcmask 654336
        %v6073 = vsel %vm6071, %v6047, 0
        %6075 = vmatprep.subr.mxu0 %v6052
        %6076 = vmatpush1.msra.mxu0 %v6051
        %6077 = vmatprep.subr.mxu0 %v6054
        %6078 = vmatpush1.msra.mxu0 %v6053
        %6079 = vmatprep.subr.mxu0 %v6056
        %6080 = vmatpush1.msra.mxu0 %v6055
        %6081 = vmatprep.subr.mxu0 %v6058
        %6082 = vmatpush1.msra.mxu0 %v6057
        %6083 = vmatprep.subr.mxu0 %v6060
        %6084 = vmatpush1.msra.mxu0 %v6059
        %6085 = vmatprep.subr.mxu0 %v6062
        %6086 = vmatpush1.msra.mxu0 %v6061
        %6087 = vmatprep.subr.mxu0 %v6064
        %6088 = vmatpush1.msra.mxu0 %v6063
        %6089 = vmatprep.subr.mxu0 %v6066
        %6090 = vmatpush1.msra.mxu0 %v6065
        %6091 = vmatprep.subr.mxu0 %v6068
        %6092 = vmatpush1.msra.mxu0 %v6067
        %6093 = vmatprep.subr.mxu0 %v6070
        %6094 = vmatpush1.msra.mxu0 %v6069
        %6095 = vmatprep.subr.mxu0 0.0
        %6096 = vmatpush1.msra.mxu0 0.0
        %6097 = vmatprep.subr.mxu0 0.0
        %6098 = vmatpush1.msra.mxu0 0.0
        %6099 = vmatprep.subr.mxu0 0.0
        %6100 = vmatpush1.msra.mxu0 0.0
        %6101 = vmatprep.subr.mxu0 0.0
        %6102 = vmatpush1.msra.mxu0 0.0
        %6103 = vmatprep.subr.mxu0 0.0
        %6104 = vmatpush1.msra.mxu0 0.0
        %6105 = vmatprep.subr.mxu0 0.0
        %6106 = vmatpush1.msra.mxu0 0.0
        %6107 = vmatprep.subr.mxu0 0.0
        %6108 = vmatpush1.msra.mxu0 0.0
        %6109 = vmatprep.subr.mxu0 0.0
        %6110 = vmatpush1.msra.mxu0 0.0
        %6111 = vmatprep.subr.mxu0 0.0
        %6112 = vmatpush1.msra.mxu0 0.0
        %6113 = vmatprep.subr.mxu0 0.0
        %6114 = vmatpush1.msra.mxu0 0.0
        %6115 = vmatprep.subr.mxu0 0.0
        %6116 = vmatpush1.msra.mxu0 0.0
        %6117 = vmatprep.subr.mxu0 0.0
        %6118 = vmatpush1.msra.mxu0 0.0
        %6119 = vmatprep.subr.mxu0 0.0
        %6120 = vmatpush1.msra.mxu0 0.0
        %6121 = vmatprep.subr.mxu0 0.0
        %6122 = vmatpush1.msra.mxu0 0.0
        %6123 = vmatprep.subr.mxu0 0.0
        %6124 = vmatpush1.msra.mxu0 0.0
        %6125 = vmatprep.subr.mxu0 0.0
        %6126 = vmatpush1.msra.mxu0 0.0
        %6127 = vmatprep.subr.mxu0 0.0
        %6128 = vmatpush1.msra.mxu0 0.0
        %6129 = vmatprep.subr.mxu0 0.0
        %6130 = vmatpush1.msra.mxu0 0.0
        %6131 = vmatprep.subr.mxu0 0.0
        %6132 = vmatpush1.msra.mxu0 0.0
        %6133 = vmatprep.subr.mxu0 0.0
        %6134 = vmatpush1.msra.mxu0 0.0
        %6135 = vmatprep.subr.mxu0 0.0
        %6136 = vmatpush1.msra.mxu0 0.0
        %6137 = vmatprep.subr.mxu0 0.0
        %6138 = vmatpush1.msra.mxu0 0.0
        %6139 = vmatprep.mubr.f32.mxu0 0.0
        %6140 = vmatmul.mubr.f32.gmra.mrb[0].mxu0 %v6073
        %v6141 = vpop.f32.mrb[0].mxu0
        %v6142 = vadd.f32 0.0, %v6141
        %v6143 = vpop.f32.mrb[0].mxu0
        %v6144 = vadd.f32 0.0, %v6143
        %6145 = vdwg.mxu0
        %v6147 = vsel %vm6071, %v5952, 0
        %6149 = vmatprep.subr.mxu0 %v5956
        %6150 = vmatpush1.msra.mxu0 %v5955
        %6151 = vmatprep.subr.mxu0 %v5958
        %6152 = vmatpush1.msra.mxu0 %v5957
        %6153 = vmatprep.subr.mxu0 %v5960
        %6154 = vmatpush1.msra.mxu0 %v5959
        %6155 = vmatprep.subr.mxu0 %v5962
        %6156 = vmatpush1.msra.mxu0 %v5961
        %6157 = vmatprep.subr.mxu0 %v5964
        %6158 = vmatpush1.msra.mxu0 %v5963
        %6159 = vmatprep.subr.mxu0 %v5966
        %6160 = vmatpush1.msra.mxu0 %v5965
        %6161 = vmatprep.subr.mxu0 %v5968
        %6162 = vmatpush1.msra.mxu0 %v5967
        %6163 = vmatprep.subr.mxu0 %v5970
        %6164 = vmatpush1.msra.mxu0 %v5969
        %6165 = vmatprep.subr.mxu0 %v5972
        %6166 = vmatpush1.msra.mxu0 %v5971
        %6167 = vmatprep.subr.mxu0 %v5974
        %6168 = vmatpush1.msra.mxu0 %v5973
        %6169 = vmatprep.subr.mxu0 0.0
        %6170 = vmatpush1.msra.mxu0 0.0
        %6171 = vmatprep.subr.mxu0 0.0
        %6172 = vmatpush1.msra.mxu0 0.0
        %6173 = vmatprep.subr.mxu0 0.0
        %6174 = vmatpush1.msra.mxu0 0.0
        %6175 = vmatprep.subr.mxu0 0.0
        %6176 = vmatpush1.msra.mxu0 0.0
        %6177 = vmatprep.subr.mxu0 0.0
        %6178 = vmatpush1.msra.mxu0 0.0
        %6179 = vmatprep.subr.mxu0 0.0
        %6180 = vmatpush1.msra.mxu0 0.0
        %6181 = vmatprep.subr.mxu0 0.0
        %6182 = vmatpush1.msra.mxu0 0.0
        %6183 = vmatprep.subr.mxu0 0.0
        %6184 = vmatpush1.msra.mxu0 0.0
        %6185 = vmatprep.subr.mxu0 0.0
        %6186 = vmatpush1.msra.mxu0 0.0
        %6187 = vmatprep.subr.mxu0 0.0
        %6188 = vmatpush1.msra.mxu0 0.0
        %6189 = vmatprep.subr.mxu0 0.0
        %6190 = vmatpush1.msra.mxu0 0.0
        %6191 = vmatprep.subr.mxu0 0.0
        %6192 = vmatpush1.msra.mxu0 0.0
        %6193 = vmatprep.subr.mxu0 0.0
        %6194 = vmatpush1.msra.mxu0 0.0
        %6195 = vmatprep.subr.mxu0 0.0
        %6196 = vmatpush1.msra.mxu0 0.0
        %6197 = vmatprep.subr.mxu0 0.0
        %6198 = vmatpush1.msra.mxu0 0.0
        %6199 = vmatprep.subr.mxu0 0.0
        %6200 = vmatpush1.msra.mxu0 0.0
        %6201 = vmatprep.subr.mxu0 0.0
        %6202 = vmatpush1.msra.mxu0 0.0
        %6203 = vmatprep.subr.mxu0 0.0
        %6204 = vmatpush1.msra.mxu0 0.0
        %6205 = vmatprep.subr.mxu0 0.0
        %6206 = vmatpush1.msra.mxu0 0.0
        %6207 = vmatprep.subr.mxu0 0.0
        %6208 = vmatpush1.msra.mxu0 0.0
        %6209 = vmatprep.subr.mxu0 0.0
        %6210 = vmatpush1.msra.mxu0 0.0
        %6211 = vmatprep.subr.mxu0 0.0
        %6212 = vmatpush1.msra.mxu0 0.0
        %6213 = vmatprep.mubr.f32.mxu0 0.0
        %6214 = vmatmul.mubr.f32.gmra.mrb[0].mxu0 %v6147
        %v6215 = vpop.f32.mrb[0].mxu0
        %v6216 = vadd.f32 %v6142, %v6215
        %v6217 = vpop.f32.mrb[0].mxu0
        %v6218 = vadd.f32 %v6144, %v6217
        %6219 = vdwg.mxu0
        %s6220 = scalar_lea.vmem %s9, 16
        %v6221 = vld [vmem:[%s6220] sm:$0xff]
        %v6223 = vsel %vm5881, %v6221, 0
        %6225 = vmatprep.subr.mxu0 0.0
        %6226 = vmatpush1.msra.mxu0 %v5872
        %6227 = vmatprep.subr.mxu0 0.0
        %6228 = vmatpush1.msra.mxu0 %v5873
        %6229 = vmatprep.subr.mxu0 0.0
        %6230 = vmatpush1.msra.mxu0 %v5874
        %6231 = vmatprep.subr.mxu0 0.0
        %6232 = vmatpush1.msra.mxu0 %v5875
        %6233 = vmatprep.subr.mxu0 0.0
        %6234 = vmatpush1.msra.mxu0 %v5876
        %6235 = vmatprep.subr.mxu0 0.0
        %6236 = vmatpush1.msra.mxu0 %v5877
        %6237 = vmatprep.subr.mxu0 0.0
        %6238 = vmatpush1.msra.mxu0 %v5878
        %6239 = vmatprep.subr.mxu0 0.0
        %6240 = vmatpush1.msra.mxu0 %v5879
        %6241 = vmatprep.subr.mxu0 0.0
        %6242 = vmatpush1.msra.mxu0 0.0
        %6243 = vmatprep.subr.mxu0 0.0
        %6244 = vmatpush1.msra.mxu0 0.0
        %6245 = vmatprep.subr.mxu0 0.0
        %6246 = vmatpush1.msra.mxu0 0.0
        %6247 = vmatprep.subr.mxu0 0.0
        %6248 = vmatpush1.msra.mxu0 0.0
        %6249 = vmatprep.subr.mxu0 0.0
        %6250 = vmatpush1.msra.mxu0 0.0
        %6251 = vmatprep.subr.mxu0 0.0
        %6252 = vmatpush1.msra.mxu0 0.0
        %6253 = vmatprep.subr.mxu0 0.0
        %6254 = vmatpush1.msra.mxu0 0.0
        %6255 = vmatprep.subr.mxu0 0.0
        %6256 = vmatpush1.msra.mxu0 0.0
        %6257 = vmatprep.subr.mxu0 0.0
        %6258 = vmatpush1.msra.mxu0 0.0
        %6259 = vmatprep.subr.mxu0 0.0
        %6260 = vmatpush1.msra.mxu0 0.0
        %6261 = vmatprep.subr.mxu0 0.0
        %6262 = vmatpush1.msra.mxu0 0.0
        %6263 = vmatprep.subr.mxu0 0.0
        %6264 = vmatpush1.msra.mxu0 0.0
        %6265 = vmatprep.subr.mxu0 0.0
        %6266 = vmatpush1.msra.mxu0 0.0
        %6267 = vmatprep.subr.mxu0 0.0
        %6268 = vmatpush1.msra.mxu0 0.0
        %6269 = vmatprep.subr.mxu0 0.0
        %6270 = vmatpush1.msra.mxu0 0.0
        %6271 = vmatprep.subr.mxu0 0.0
        %6272 = vmatpush1.msra.mxu0 0.0
        %6273 = vmatprep.subr.mxu0 0.0
        %6274 = vmatpush1.msra.mxu0 0.0
        %6275 = vmatprep.subr.mxu0 0.0
        %6276 = vmatpush1.msra.mxu0 0.0
        %6277 = vmatprep.subr.mxu0 0.0
        %6278 = vmatpush1.msra.mxu0 0.0
        %6279 = vmatprep.subr.mxu0 0.0
        %6280 = vmatpush1.msra.mxu0 0.0
        %6281 = vmatprep.subr.mxu0 0.0
        %6282 = vmatpush1.msra.mxu0 0.0
        %6283 = vmatprep.subr.mxu0 0.0
        %6284 = vmatpush1.msra.mxu0 0.0
        %6285 = vmatprep.subr.mxu0 0.0
        %6286 = vmatpush1.msra.mxu0 0.0
        %6287 = vmatprep.subr.mxu0 0.0
        %6288 = vmatpush1.msra.mxu0 0.0
        %6289 = vmatprep.mubr.f32.mxu0 0.0
        %6290 = vmatmul.mubr.f32.gmra.mrb[0].mxu0 %v6223
        %v6291 = vpop.f32.mrb[0].mxu0
        %v6292 = vadd.f32 0.0, %v6291
        %v6293 = vpop.f32.mrb[0].mxu0
        %6294 = vdwg.mxu0
        %s6295 = scalar_lea.vmem %s10, 320
        %v6296 = vld [vmem:[%s6295] sm:$0xff]
        %v6297 = vld [vmem:[%s6295 + $0x8] sm:$0xff]
        %v6298 = vld [vmem:[%s6295 + $0x10] sm:$0xff]
        %v6299 = vld [vmem:[%s6295 + $0x18] sm:$0xff]
        %v6300 = vld [vmem:[%s6295 + $0x20] sm:$0xff]
        %v6301 = vld [vmem:[%s6295 + $0x28] sm:$0xff]
        %v6302 = vld [vmem:[%s6295 + $0x30] sm:$0xff]
        %v6303 = vld [vmem:[%s6295 + $0x38] sm:$0xff]
        %v6304 = vld [vmem:[%s6295 + $0x40] sm:$0xff]
        %v6305 = vld [vmem:[%s6295 + $0x48] sm:$0xff]
        %v6306 = vld [vmem:[%s6295 + $0x50] sm:$0xff]
        %v6307 = vld [vmem:[%s6295 + $0x58] sm:$0xff]
        %v6308 = vld [vmem:[%s6295 + $0x60] sm:$0xff]
        %v6309 = vld [vmem:[%s6295 + $0x68] sm:$0xff]
        %v6310 = vld [vmem:[%s6295 + $0x70] sm:$0xff]
        %v6311 = vld [vmem:[%s6295 + $0x78] sm:$0xff]
        %v6312 = vld [vmem:[%s6295 + $0x80] sm:$0xff]
        %v6313 = vld [vmem:[%s6295 + $0x88] sm:$0xff]
        %v6314 = vld [vmem:[%s6295 + $0x90] sm:$0xff]
        %v6315 = vld [vmem:[%s6295 + $0x98] sm:$0xff]
        %v6317 = vsel %vm6071, %v6292, 0
        %6319 = vmatprep.subr.mxu0 %v6297
        %6320 = vmatpush1.msra.mxu0 %v6296
        %6321 = vmatprep.subr.mxu0 %v6299
        %6322 = vmatpush1.msra.mxu0 %v6298
        %6323 = vmatprep.subr.mxu0 %v6301
        %6324 = vmatpush1.msra.mxu0 %v6300
        %6325 = vmatprep.subr.mxu0 %v6303
        %6326 = vmatpush1.msra.mxu0 %v6302
        %6327 = vmatprep.subr.mxu0 %v6305
        %6328 = vmatpush1.msra.mxu0 %v6304
        %6329 = vmatprep.subr.mxu0 %v6307
        %6330 = vmatpush1.msra.mxu0 %v6306
        %6331 = vmatprep.subr.mxu0 %v6309
        %6332 = vmatpush1.msra.mxu0 %v6308
        %6333 = vmatprep.subr.mxu0 %v6311
        %6334 = vmatpush1.msra.mxu0 %v6310
        %6335 = vmatprep.subr.mxu0 %v6313
        %6336 = vmatpush1.msra.mxu0 %v6312
        %6337 = vmatprep.subr.mxu0 %v6315
        %6338 = vmatpush1.msra.mxu0 %v6314
        %6339 = vmatprep.subr.mxu0 0.0
        %6340 = vmatpush1.msra.mxu0 0.0
        %6341 = vmatprep.subr.mxu0 0.0
        %6342 = vmatpush1.msra.mxu0 0.0
        %6343 = vmatprep.subr.mxu0 0.0
        %6344 = vmatpush1.msra.mxu0 0.0
        %6345 = vmatprep.subr.mxu0 0.0
        %6346 = vmatpush1.msra.mxu0 0.0
        %6347 = vmatprep.subr.mxu0 0.0
        %6348 = vmatpush1.msra.mxu0 0.0
        %6349 = vmatprep.subr.mxu0 0.0
        %6350 = vmatpush1.msra.mxu0 0.0
        %6351 = vmatprep.subr.mxu0 0.0
        %6352 = vmatpush1.msra.mxu0 0.0
        %6353 = vmatprep.subr.mxu0 0.0
        %6354 = vmatpush1.msra.mxu0 0.0
        %6355 = vmatprep.subr.mxu0 0.0
        %6356 = vmatpush1.msra.mxu0 0.0
        %6357 = vmatprep.subr.mxu0 0.0
        %6358 = vmatpush1.msra.mxu0 0.0
        %6359 = vmatprep.subr.mxu0 0.0
        %6360 = vmatpush1.msra.mxu0 0.0
        %6361 = vmatprep.subr.mxu0 0.0
        %6362 = vmatpush1.msra.mxu0 0.0
        %6363 = vmatprep.subr.mxu0 0.0
        %6364 = vmatpush1.msra.mxu0 0.0
        %6365 = vmatprep.subr.mxu0 0.0
        %6366 = vmatpush1.msra.mxu0 0.0
        %6367 = vmatprep.subr.mxu0 0.0
        %6368 = vmatpush1.msra.mxu0 0.0
        %6369 = vmatprep.subr.mxu0 0.0
        %6370 = vmatpush1.msra.mxu0 0.0
        %6371 = vmatprep.subr.mxu0 0.0
        %6372 = vmatpush1.msra.mxu0 0.0
        %6373 = vmatprep.subr.mxu0 0.0
        %6374 = vmatpush1.msra.mxu0 0.0
        %6375 = vmatprep.subr.mxu0 0.0
        %6376 = vmatpush1.msra.mxu0 0.0
        %6377 = vmatprep.subr.mxu0 0.0
        %6378 = vmatpush1.msra.mxu0 0.0
        %6379 = vmatprep.subr.mxu0 0.0
        %6380 = vmatpush1.msra.mxu0 0.0
        %6381 = vmatprep.subr.mxu0 0.0
        %6382 = vmatpush1.msra.mxu0 0.0
        %6383 = vmatprep.mubr.f32.mxu0 0.0
        %6384 = vmatmul.mubr.f32.gmra.mrb[0].mxu0 %v6317
        %v6385 = vpop.f32.mrb[0].mxu0
        %v6386 = vadd.f32 0.0, %v6385
        %v6387 = vpop.f32.mrb[0].mxu0
        %v6388 = vadd.f32 0.0, %v6387
        %6389 = vdwg.mxu0
        %v6390 = vadd.f32 %v6216, %v6386
        %v6391 = vadd.f32 %v6218, %v6388
        %s6392 = scalar_lea.vmem %s9, 24
        %v6393 = vld [vmem:[%s6392] sm:$0xff]
        %v6395 = vsel %vm5881, %v6393, 0
        %6397 = vmatprep.subr.mxu0 0.0
        %6398 = vmatpush1.msra.mxu0 %v5872
        %6399 = vmatprep.subr.mxu0 0.0
        %6400 = vmatpush1.msra.mxu0 %v5873
        %6401 = vmatprep.subr.mxu0 0.0
        %6402 = vmatpush1.msra.mxu0 %v5874
        %6403 = vmatprep.subr.mxu0 0.0
        %6404 = vmatpush1.msra.mxu0 %v5875
        %6405 = vmatprep.subr.mxu0 0.0
        %6406 = vmatpush1.msra.mxu0 %v5876
        %6407 = vmatprep.subr.mxu0 0.0
        %6408 = vmatpush1.msra.mxu0 %v5877
        %6409 = vmatprep.subr.mxu0 0.0
        %6410 = vmatpush1.msra.mxu0 %v5878
        %6411 = vmatprep.subr.mxu0 0.0
        %6412 = vmatpush1.msra.mxu0 %v5879
        %6413 = vmatprep.subr.mxu0 0.0
        %6414 = vmatpush1.msra.mxu0 0.0
        %6415 = vmatprep.subr.mxu0 0.0
        %6416 = vmatpush1.msra.mxu0 0.0
        %6417 = vmatprep.subr.mxu0 0.0
        %6418 = vmatpush1.msra.mxu0 0.0
        %6419 = vmatprep.subr.mxu0 0.0
        %6420 = vmatpush1.msra.mxu0 0.0
        %6421 = vmatprep.subr.mxu0 0.0
        %6422 = vmatpush1.msra.mxu0 0.0
        %6423 = vmatprep.subr.mxu0 0.0
        %6424 = vmatpush1.msra.mxu0 0.0
        %6425 = vmatprep.subr.mxu0 0.0
        %6426 = vmatpush1.msra.mxu0 0.0
        %6427 = vmatprep.subr.mxu0 0.0
        %6428 = vmatpush1.msra.mxu0 0.0
        %6429 = vmatprep.subr.mxu0 0.0
        %6430 = vmatpush1.msra.mxu0 0.0
        %6431 = vmatprep.subr.mxu0 0.0
        %6432 = vmatpush1.msra.mxu0 0.0
        %6433 = vmatprep.subr.mxu0 0.0
        %6434 = vmatpush1.msra.mxu0 0.0
        %6435 = vmatprep.subr.mxu0 0.0
        %6436 = vmatpush1.msra.mxu0 0.0
        %6437 = vmatprep.subr.mxu0 0.0
        %6438 = vmatpush1.msra.mxu0 0.0
        %6439 = vmatprep.subr.mxu0 0.0
        %6440 = vmatpush1.msra.mxu0 0.0
        %6441 = vmatprep.subr.mxu0 0.0
        %6442 = vmatpush1.msra.mxu0 0.0
        %6443 = vmatprep.subr.mxu0 0.0
        %6444 = vmatpush1.msra.mxu0 0.0
        %6445 = vmatprep.subr.mxu0 0.0
        %6446 = vmatpush1.msra.mxu0 0.0
        %6447 = vmatprep.subr.mxu0 0.0
        %6448 = vmatpush1.msra.mxu0 0.0
        %6449 = vmatprep.subr.mxu0 0.0
        %6450 = vmatpush1.msra.mxu0 0.0
        %6451 = vmatprep.subr.mxu0 0.0
        %6452 = vmatpush1.msra.mxu0 0.0
        %6453 = vmatprep.subr.mxu0 0.0
        %6454 = vmatpush1.msra.mxu0 0.0
        %6455 = vmatprep.subr.mxu0 0.0
        %6456 = vmatpush1.msra.mxu0 0.0
        %6457 = vmatprep.subr.mxu0 0.0
        %6458 = vmatpush1.msra.mxu0 0.0
        %6459 = vmatprep.subr.mxu0 0.0
        %6460 = vmatpush1.msra.mxu0 0.0
        %6461 = vmatprep.mubr.f32.mxu0 0.0
        %6462 = vmatmul.mubr.f32.gmra.mrb[0].mxu0 %v6395
        %v6463 = vpop.f32.mrb[0].mxu0
        %v6464 = vadd.f32 0.0, %v6463
        %v6465 = vpop.f32.mrb[0].mxu0
        %6466 = vdwg.mxu0
        %s6467 = scalar_lea.vmem %s10, 480
        %v6468 = vld [vmem:[%s6467] sm:$0xff]
        %v6469 = vld [vmem:[%s6467 + $0x8] sm:$0xff]
        %v6470 = vld [vmem:[%s6467 + $0x10] sm:$0xff]
        %v6471 = vld [vmem:[%s6467 + $0x18] sm:$0xff]
        %v6472 = vld [vmem:[%s6467 + $0x20] sm:$0xff]
        %v6473 = vld [vmem:[%s6467 + $0x28] sm:$0xff]
        %v6474 = vld [vmem:[%s6467 + $0x30] sm:$0xff]
        %v6475 = vld [vmem:[%s6467 + $0x38] sm:$0xff]
        %v6476 = vld [vmem:[%s6467 + $0x40] sm:$0xff]
        %v6477 = vld [vmem:[%s6467 + $0x48] sm:$0xff]
        %v6478 = vld [vmem:[%s6467 + $0x50] sm:$0xff]
        %v6479 = vld [vmem:[%s6467 + $0x58] sm:$0xff]
        %v6480 = vld [vmem:[%s6467 + $0x60] sm:$0xff]
        %v6481 = vld [vmem:[%s6467 + $0x68] sm:$0xff]
        %v6482 = vld [vmem:[%s6467 + $0x70] sm:$0xff]
        %v6483 = vld [vmem:[%s6467 + $0x78] sm:$0xff]
        %v6484 = vld [vmem:[%s6467 + $0x80] sm:$0xff]
        %v6485 = vld [vmem:[%s6467 + $0x88] sm:$0xff]
        %v6486 = vld [vmem:[%s6467 + $0x90] sm:$0xff]
        %v6487 = vld [vmem:[%s6467 + $0x98] sm:$0xff]
        %v6489 = vsel %vm6071, %v6464, 0
        %6491 = vmatprep.subr.mxu0 %v6469
        %6492 = vmatpush1.msra.mxu0 %v6468
        %6493 = vmatprep.subr.mxu0 %v6471
        %6494 = vmatpush1.msra.mxu0 %v6470
        %6495 = vmatprep.subr.mxu0 %v6473
        %6496 = vmatpush1.msra.mxu0 %v6472
        %6497 = vmatprep.subr.mxu0 %v6475
        %6498 = vmatpush1.msra.mxu0 %v6474
        %6499 = vmatprep.subr.mxu0 %v6477
        %6500 = vmatpush1.msra.mxu0 %v6476
        %6501 = vmatprep.subr.mxu0 %v6479
        %6502 = vmatpush1.msra.mxu0 %v6478
        %6503 = vmatprep.subr.mxu0 %v6481
        %6504 = vmatpush1.msra.mxu0 %v6480
        %6505 = vmatprep.subr.mxu0 %v6483
        %6506 = vmatpush1.msra.mxu0 %v6482
        %6507 = vmatprep.subr.mxu0 %v6485
        %6508 = vmatpush1.msra.mxu0 %v6484
        %6509 = vmatprep.subr.mxu0 %v6487
        %6510 = vmatpush1.msra.mxu0 %v6486
        %6511 = vmatprep.subr.mxu0 0.0
        %6512 = vmatpush1.msra.mxu0 0.0
        %6513 = vmatprep.subr.mxu0 0.0
        %6514 = vmatpush1.msra.mxu0 0.0
        %6515 = vmatprep.subr.mxu0 0.0
        %6516 = vmatpush1.msra.mxu0 0.0
        %6517 = vmatprep.subr.mxu0 0.0
        %6518 = vmatpush1.msra.mxu0 0.0
        %6519 = vmatprep.subr.mxu0 0.0
        %6520 = vmatpush1.msra.mxu0 0.0
        %6521 = vmatprep.subr.mxu0 0.0
        %6522 = vmatpush1.msra.mxu0 0.0
        %6523 = vmatprep.subr.mxu0 0.0
        %6524 = vmatpush1.msra.mxu0 0.0
        %6525 = vmatprep.subr.mxu0 0.0
        %6526 = vmatpush1.msra.mxu0 0.0
        %6527 = vmatprep.subr.mxu0 0.0
        %6528 = vmatpush1.msra.mxu0 0.0
        %6529 = vmatprep.subr.mxu0 0.0
        %6530 = vmatpush1.msra.mxu0 0.0
        %6531 = vmatprep.subr.mxu0 0.0
        %6532 = vmatpush1.msra.mxu0 0.0
        %6533 = vmatprep.subr.mxu0 0.0
        %6534 = vmatpush1.msra.mxu0 0.0
        %6535 = vmatprep.subr.mxu0 0.0
        %6536 = vmatpush1.msra.mxu0 0.0
        %6537 = vmatprep.subr.mxu0 0.0
        %6538 = vmatpush1.msra.mxu0 0.0
        %6539 = vmatprep.subr.mxu0 0.0
        %6540 = vmatpush1.msra.mxu0 0.0
        %6541 = vmatprep.subr.mxu0 0.0
        %6542 = vmatpush1.msra.mxu0 0.0
        %6543 = vmatprep.subr.mxu0 0.0
        %6544 = vmatpush1.msra.mxu0 0.0
        %6545 = vmatprep.subr.mxu0 0.0
        %6546 = vmatpush1.msra.mxu0 0.0
        %6547 = vmatprep.subr.mxu0 0.0
        %6548 = vmatpush1.msra.mxu0 0.0
        %6549 = vmatprep.subr.mxu0 0.0
        %6550 = vmatpush1.msra.mxu0 0.0
        %6551 = vmatprep.subr.mxu0 0.0
        %6552 = vmatpush1.msra.mxu0 0.0
        %6553 = vmatprep.subr.mxu0 0.0
        %6554 = vmatpush1.msra.mxu0 0.0
        %6555 = vmatprep.mubr.f32.mxu0 0.0
        %6556 = vmatmul.mubr.f32.gmra.mrb[0].mxu0 %v6489
        %v6557 = vpop.f32.mrb[0].mxu0
        %v6558 = vadd.f32 0.0, %v6557
        %v6559 = vpop.f32.mrb[0].mxu0
        %v6560 = vadd.f32 0.0, %v6559
        %6561 = vdwg.mxu0
        %v6562 = vadd.f32 %v6390, %v6558
        %v6563 = vadd.f32 %v6391, %v6560
        %s6564 = scalar_lea.vmem %s9, 32
        %v6565 = vld [vmem:[%s6564] sm:$0xff]
        %v6567 = vsel %vm5881, %v6565, 0
        %6569 = vmatprep.subr.mxu0 0.0
        %6570 = vmatpush1.msra.mxu0 %v5872
        %6571 = vmatprep.subr.mxu0 0.0
        %6572 = vmatpush1.msra.mxu0 %v5873
        %6573 = vmatprep.subr.mxu0 0.0
        %6574 = vmatpush1.msra.mxu0 %v5874
        %6575 = vmatprep.subr.mxu0 0.0
        %6576 = vmatpush1.msra.mxu0 %v5875
        %6577 = vmatprep.subr.mxu0 0.0
        %6578 = vmatpush1.msra.mxu0 %v5876
        %6579 = vmatprep.subr.mxu0 0.0
        %6580 = vmatpush1.msra.mxu0 %v5877
        %6581 = vmatprep.subr.mxu0 0.0
        %6582 = vmatpush1.msra.mxu0 %v5878
        %6583 = vmatprep.subr.mxu0 0.0
        %6584 = vmatpush1.msra.mxu0 %v5879
        %6585 = vmatprep.subr.mxu0 0.0
        %6586 = vmatpush1.msra.mxu0 0.0
        %6587 = vmatprep.subr.mxu0 0.0
        %6588 = vmatpush1.msra.mxu0 0.0
        %6589 = vmatprep.subr.mxu0 0.0
        %6590 = vmatpush1.msra.mxu0 0.0
        %6591 = vmatprep.subr.mxu0 0.0
        %6592 = vmatpush1.msra.mxu0 0.0
        %6593 = vmatprep.subr.mxu0 0.0
        %6594 = vmatpush1.msra.mxu0 0.0
        %6595 = vmatprep.subr.mxu0 0.0
        %6596 = vmatpush1.msra.mxu0 0.0
        %6597 = vmatprep.subr.mxu0 0.0
        %6598 = vmatpush1.msra.mxu0 0.0
        %6599 = vmatprep.subr.mxu0 0.0
        %6600 = vmatpush1.msra.mxu0 0.0
        %6601 = vmatprep.subr.mxu0 0.0
        %6602 = vmatpush1.msra.mxu0 0.0
        %6603 = vmatprep.subr.mxu0 0.0
        %6604 = vmatpush1.msra.mxu0 0.0
        %6605 = vmatprep.subr.mxu0 0.0
        %6606 = vmatpush1.msra.mxu0 0.0
        %6607 = vmatprep.subr.mxu0 0.0
        %6608 = vmatpush1.msra.mxu0 0.0
        %6609 = vmatprep.subr.mxu0 0.0
        %6610 = vmatpush1.msra.mxu0 0.0
        %6611 = vmatprep.subr.mxu0 0.0
        %6612 = vmatpush1.msra.mxu0 0.0
        %6613 = vmatprep.subr.mxu0 0.0
        %6614 = vmatpush1.msra.mxu0 0.0
        %6615 = vmatprep.subr.mxu0 0.0
        %6616 = vmatpush1.msra.mxu0 0.0
        %6617 = vmatprep.subr.mxu0 0.0
        %6618 = vmatpush1.msra.mxu0 0.0
        %6619 = vmatprep.subr.mxu0 0.0
        %6620 = vmatpush1.msra.mxu0 0.0
        %6621 = vmatprep.subr.mxu0 0.0
        %6622 = vmatpush1.msra.mxu0 0.0
        %6623 = vmatprep.subr.mxu0 0.0
        %6624 = vmatpush1.msra.mxu0 0.0
        %6625 = vmatprep.subr.mxu0 0.0
        %6626 = vmatpush1.msra.mxu0 0.0
        %6627 = vmatprep.subr.mxu0 0.0
        %6628 = vmatpush1.msra.mxu0 0.0
        %6629 = vmatprep.subr.mxu0 0.0
        %6630 = vmatpush1.msra.mxu0 0.0
        %6631 = vmatprep.subr.mxu0 0.0
        %6632 = vmatpush1.msra.mxu0 0.0
        %6633 = vmatprep.mubr.f32.mxu0 0.0
        %6634 = vmatmul.mubr.f32.gmra.mrb[0].mxu0 %v6567
        %v6635 = vpop.f32.mrb[0].mxu0
        %v6636 = vadd.f32 0.0, %v6635
        %v6637 = vpop.f32.mrb[0].mxu0
        %6638 = vdwg.mxu0
        %s6639 = scalar_lea.vmem %s10, 640
        %v6640 = vld [vmem:[%s6639] sm:$0xff]
        %v6641 = vld [vmem:[%s6639 + $0x8] sm:$0xff]
        %v6642 = vld [vmem:[%s6639 + $0x10] sm:$0xff]
        %v6643 = vld [vmem:[%s6639 + $0x18] sm:$0xff]
        %v6644 = vld [vmem:[%s6639 + $0x20] sm:$0xff]
        %v6645 = vld [vmem:[%s6639 + $0x28] sm:$0xff]
        %v6646 = vld [vmem:[%s6639 + $0x30] sm:$0xff]
        %v6647 = vld [vmem:[%s6639 + $0x38] sm:$0xff]
        %v6648 = vld [vmem:[%s6639 + $0x40] sm:$0xff]
        %v6649 = vld [vmem:[%s6639 + $0x48] sm:$0xff]
        %v6650 = vld [vmem:[%s6639 + $0x50] sm:$0xff]
        %v6651 = vld [vmem:[%s6639 + $0x58] sm:$0xff]
        %v6652 = vld [vmem:[%s6639 + $0x60] sm:$0xff]
        %v6653 = vld [vmem:[%s6639 + $0x68] sm:$0xff]
        %v6654 = vld [vmem:[%s6639 + $0x70] sm:$0xff]
        %v6655 = vld [vmem:[%s6639 + $0x78] sm:$0xff]
        %v6656 = vld [vmem:[%s6639 + $0x80] sm:$0xff]
        %v6657 = vld [vmem:[%s6639 + $0x88] sm:$0xff]
        %v6658 = vld [vmem:[%s6639 + $0x90] sm:$0xff]
        %v6659 = vld [vmem:[%s6639 + $0x98] sm:$0xff]
        %v6661 = vsel %vm6071, %v6636, 0
        %6663 = vmatprep.subr.mxu0 %v6641
        %6664 = vmatpush1.msra.mxu0 %v6640
        %6665 = vmatprep.subr.mxu0 %v6643
        %6666 = vmatpush1.msra.mxu0 %v6642
        %6667 = vmatprep.subr.mxu0 %v6645
        %6668 = vmatpush1.msra.mxu0 %v6644
        %6669 = vmatprep.subr.mxu0 %v6647
        %6670 = vmatpush1.msra.mxu0 %v6646
        %6671 = vmatprep.subr.mxu0 %v6649
        %6672 = vmatpush1.msra.mxu0 %v6648
        %6673 = vmatprep.subr.mxu0 %v6651
        %6674 = vmatpush1.msra.mxu0 %v6650
        %6675 = vmatprep.subr.mxu0 %v6653
        %6676 = vmatpush1.msra.mxu0 %v6652
        %6677 = vmatprep.subr.mxu0 %v6655
        %6678 = vmatpush1.msra.mxu0 %v6654
        %6679 = vmatprep.subr.mxu0 %v6657
        %6680 = vmatpush1.msra.mxu0 %v6656
        %6681 = vmatprep.subr.mxu0 %v6659
        %6682 = vmatpush1.msra.mxu0 %v6658
        %6683 = vmatprep.subr.mxu0 0.0
        %6684 = vmatpush1.msra.mxu0 0.0
        %6685 = vmatprep.subr.mxu0 0.0
        %6686 = vmatpush1.msra.mxu0 0.0
        %6687 = vmatprep.subr.mxu0 0.0
        %6688 = vmatpush1.msra.mxu0 0.0
        %6689 = vmatprep.subr.mxu0 0.0
        %6690 = vmatpush1.msra.mxu0 0.0
        %6691 = vmatprep.subr.mxu0 0.0
        %6692 = vmatpush1.msra.mxu0 0.0
        %6693 = vmatprep.subr.mxu0 0.0
        %6694 = vmatpush1.msra.mxu0 0.0
        %6695 = vmatprep.subr.mxu0 0.0
        %6696 = vmatpush1.msra.mxu0 0.0
        %6697 = vmatprep.subr.mxu0 0.0
        %6698 = vmatpush1.msra.mxu0 0.0
        %6699 = vmatprep.subr.mxu0 0.0
        %6700 = vmatpush1.msra.mxu0 0.0
        %6701 = vmatprep.subr.mxu0 0.0
        %6702 = vmatpush1.msra.mxu0 0.0
        %6703 = vmatprep.subr.mxu0 0.0
        %6704 = vmatpush1.msra.mxu0 0.0
        %6705 = vmatprep.subr.mxu0 0.0
        %6706 = vmatpush1.msra.mxu0 0.0
        %6707 = vmatprep.subr.mxu0 0.0
        %6708 = vmatpush1.msra.mxu0 0.0
        %6709 = vmatprep.subr.mxu0 0.0
        %6710 = vmatpush1.msra.mxu0 0.0
        %6711 = vmatprep.subr.mxu0 0.0
        %6712 = vmatpush1.msra.mxu0 0.0
        %6713 = vmatprep.subr.mxu0 0.0
        %6714 = vmatpush1.msra.mxu0 0.0
        %6715 = vmatprep.subr.mxu0 0.0
        %6716 = vmatpush1.msra.mxu0 0.0
        %6717 = vmatprep.subr.mxu0 0.0
        %6718 = vmatpush1.msra.mxu0 0.0
        %6719 = vmatprep.subr.mxu0 0.0
        %6720 = vmatpush1.msra.mxu0 0.0
        %6721 = vmatprep.subr.mxu0 0.0
        %6722 = vmatpush1.msra.mxu0 0.0
        %6723 = vmatprep.subr.mxu0 0.0
        %6724 = vmatpush1.msra.mxu0 0.0
        %6725 = vmatprep.subr.mxu0 0.0
        %6726 = vmatpush1.msra.mxu0 0.0
        %6727 = vmatprep.mubr.f32.mxu0 0.0
        %6728 = vmatmul.mubr.f32.gmra.mrb[0].mxu0 %v6661
        %v6729 = vpop.f32.mrb[0].mxu0
        %v6730 = vadd.f32 0.0, %v6729
        %v6731 = vpop.f32.mrb[0].mxu0
        %v6732 = vadd.f32 0.0, %v6731
        %6733 = vdwg.mxu0
        %v6734 = vadd.f32 %v6562, %v6730
        %v6735 = vadd.f32 %v6563, %v6732
        %v6736 = vld [vmem:[%s11] sm:$0x3]
        %v6738 = vlaneseq
        %v6739 = vshrl.u32 %v6738, 7
        %v6740 = vsub.s32 0, %v6739
        %v6741 = vrot.slane %v6736, %v6740
        %v6742 = vlaneseq
        %v6743 = vshrl.u32 %v6742, 7
        %v6744 = vsub.s32 1, %v6743
        %v6745 = vrot.slane %v6736, %v6744
        %v6748 = vadd.f32 %v6734, %v6741
        %v6749 = vadd.f32 %v6735, %v6745
        %v6750 = vmax.f32 %v6748, 0.0
        %v6751 = vmax.f32 %v6749, 0.0
        %v6752 = vld [vmem:[%s12] sm:$0xff]
        %v6753 = vld [vmem:[%s12 + $0x8] sm:$0xff]
        %v6754 = vld [vmem:[%s12 + $0x10] sm:$0xff]
        %v6755 = vld [vmem:[%s12 + $0x18] sm:$0xff]
        %v6756 = vld [vmem:[%s12 + $0x20] sm:$0xff]
        %v6757 = vld [vmem:[%s12 + $0x28] sm:$0xff]
        %v6758 = vld [vmem:[%s12 + $0x30] sm:$0xff]
        %v6759 = vld [vmem:[%s12 + $0x38] sm:$0xff]
        %v6760 = vld [vmem:[%s12 + $0x40] sm:$0xff]
        %v6761 = vld [vmem:[%s12 + $0x48] sm:$0xff]
        %v6762 = vld [vmem:[%s12 + $0x50] sm:$0xff]
        %v6763 = vld [vmem:[%s12 + $0x58] sm:$0xff]
        %v6764 = vld [vmem:[%s12 + $0x60] sm:$0xff]
        %v6765 = vld [vmem:[%s12 + $0x68] sm:$0xff]
        %v6766 = vld [vmem:[%s12 + $0x70] sm:$0xff]
        %v6767 = vld [vmem:[%s12 + $0x78] sm:$0xff]
        %v6768 = vld [vmem:[%s12 + $0x80] sm:$0xff]
        %v6769 = vld [vmem:[%s12 + $0x88] sm:$0xff]
        %v6770 = vld [vmem:[%s12 + $0x90] sm:$0xff]
        %v6771 = vld [vmem:[%s12 + $0x98] sm:$0xff]
        %v6772 = vld [vmem:[%s12 + $0xa0] sm:$0xff]
        %v6773 = vld [vmem:[%s12 + $0xa8] sm:$0xff]
        %v6774 = vld [vmem:[%s12 + $0xb0] sm:$0xff]
        %v6775 = vld [vmem:[%s12 + $0xb8] sm:$0xff]
        %v6776 = vld [vmem:[%s12 + $0xc0] sm:$0xff]
        %v6777 = vld [vmem:[%s12 + $0xc8] sm:$0xff]
        %v6778 = vld [vmem:[%s12 + $0xd0] sm:$0xff]
        %v6779 = vld [vmem:[%s12 + $0xd8] sm:$0xff]
        %v6780 = vld [vmem:[%s12 + $0xe0] sm:$0xff]
        %v6781 = vld [vmem:[%s12 + $0xe8] sm:$0xff]
        %v6782 = vld [vmem:[%s12 + $0xf0] sm:$0xff]
        %v6783 = vld [vmem:[%s12 + $0xf8] sm:$0xff]
        %v6784 = vld [vmem:[%s13] sm:$0x1]
        %v6786 = vlaneseq
        %v6787 = vshrl.u32 %v6786, 7
        %v6788 = vsub.s32 0, %v6787
        %v6789 = vrot.slane %v6784, %v6788
        %6791 = vmatprep.subr.mxu0 0.0
        %6792 = vmatpush1.msra.mxu0 %v6752
        %6793 = vmatprep.subr.mxu0 0.0
        %6794 = vmatpush1.msra.mxu0 %v6753
        %6795 = vmatprep.subr.mxu0 0.0
        %6796 = vmatpush1.msra.mxu0 %v6754
        %6797 = vmatprep.subr.mxu0 0.0
        %6798 = vmatpush1.msra.mxu0 %v6755
        %6799 = vmatprep.subr.mxu0 0.0
        %6800 = vmatpush1.msra.mxu0 %v6756
        %6801 = vmatprep.subr.mxu0 0.0
        %6802 = vmatpush1.msra.mxu0 %v6757
        %6803 = vmatprep.subr.mxu0 0.0
        %6804 = vmatpush1.msra.mxu0 %v6758
        %6805 = vmatprep.subr.mxu0 0.0
        %6806 = vmatpush1.msra.mxu0 %v6759
        %6807 = vmatprep.subr.mxu0 0.0
        %6808 = vmatpush1.msra.mxu0 %v6760
        %6809 = vmatprep.subr.mxu0 0.0
        %6810 = vmatpush1.msra.mxu0 %v6761
        %6811 = vmatprep.subr.mxu0 0.0
        %6812 = vmatpush1.msra.mxu0 %v6762
        %6813 = vmatprep.subr.mxu0 0.0
        %6814 = vmatpush1.msra.mxu0 %v6763
        %6815 = vmatprep.subr.mxu0 0.0
        %6816 = vmatpush1.msra.mxu0 %v6764
        %6817 = vmatprep.subr.mxu0 0.0
        %6818 = vmatpush1.msra.mxu0 %v6765
        %6819 = vmatprep.subr.mxu0 0.0
        %6820 = vmatpush1.msra.mxu0 %v6766
        %6821 = vmatprep.subr.mxu0 0.0
        %6822 = vmatpush1.msra.mxu0 %v6767
        %6823 = vmatprep.subr.mxu0 0.0
        %6824 = vmatpush1.msra.mxu0 %v6768
        %6825 = vmatprep.subr.mxu0 0.0
        %6826 = vmatpush1.msra.mxu0 %v6769
        %6827 = vmatprep.subr.mxu0 0.0
        %6828 = vmatpush1.msra.mxu0 %v6770
        %6829 = vmatprep.subr.mxu0 0.0
        %6830 = vmatpush1.msra.mxu0 %v6771
        %6831 = vmatprep.subr.mxu0 0.0
        %6832 = vmatpush1.msra.mxu0 %v6772
        %6833 = vmatprep.subr.mxu0 0.0
        %6834 = vmatpush1.msra.mxu0 %v6773
        %6835 = vmatprep.subr.mxu0 0.0
        %6836 = vmatpush1.msra.mxu0 %v6774
        %6837 = vmatprep.subr.mxu0 0.0
        %6838 = vmatpush1.msra.mxu0 %v6775
        %6839 = vmatprep.subr.mxu0 0.0
        %6840 = vmatpush1.msra.mxu0 %v6776
        %6841 = vmatprep.subr.mxu0 0.0
        %6842 = vmatpush1.msra.mxu0 %v6777
        %6843 = vmatprep.subr.mxu0 0.0
        %6844 = vmatpush1.msra.mxu0 %v6778
        %6845 = vmatprep.subr.mxu0 0.0
        %6846 = vmatpush1.msra.mxu0 %v6779
        %6847 = vmatprep.subr.mxu0 0.0
        %6848 = vmatpush1.msra.mxu0 %v6780
        %6849 = vmatprep.subr.mxu0 0.0
        %6850 = vmatpush1.msra.mxu0 %v6781
        %6851 = vmatprep.subr.mxu0 0.0
        %6852 = vmatpush1.msra.mxu0 %v6782
        %6853 = vmatprep.subr.mxu0 0.0
        %6854 = vmatpush1.msra.mxu0 %v6783
        %6855 = vmatprep.mubr.f32.mxu0 %v6751
        %6856 = vmatmul.mubr.f32.gmra.mrb[0].mxu0 %v6750
        %v6857 = vpop.f32.mrb[0].mxu0
        %v6858 = vadd.f32 %v6789, %v6857
        %v6859 = vpop.f32.mrb[0].mxu0
        %6860 = vdwg.mxu0
        %v6861 = vmax.f32 %v6858, 0.0
        %v6862 = vld [vmem:[%s14] sm:$0xff]
        %v6863 = vld [vmem:[%s14 + $0x8] sm:$0xff]
        %v6864 = vld [vmem:[%s14 + $0x10] sm:$0xff]
        %v6865 = vld [vmem:[%s14 + $0x18] sm:$0xff]
        %v6866 = vld [vmem:[%s14 + $0x20] sm:$0xff]
        %v6867 = vld [vmem:[%s14 + $0x28] sm:$0xff]
        %v6868 = vld [vmem:[%s14 + $0x30] sm:$0xff]
        %v6869 = vld [vmem:[%s14 + $0x38] sm:$0xff]
        %v6870 = vld [vmem:[%s14 + $0x40] sm:$0xff]
        %v6871 = vld [vmem:[%s14 + $0x48] sm:$0xff]
        %v6872 = vld [vmem:[%s14 + $0x50] sm:$0xff]
        %v6873 = vld [vmem:[%s14 + $0x58] sm:$0xff]
        %v6874 = vld [vmem:[%s14 + $0x60] sm:$0xff]
        %v6875 = vld [vmem:[%s14 + $0x68] sm:$0xff]
        %v6876 = vld [vmem:[%s14 + $0x70] sm:$0xff]
        %v6877 = vld [vmem:[%s14 + $0x78] sm:$0xff]
        %v6878 = vld [vmem:[%s15] sm:$0x1]
        %v6880 = vlaneseq
        %v6881 = vshrl.u32 %v6880, 7
        %v6882 = vsub.s32 0, %v6881
        %v6883 = vrot.slane %v6878, %v6882
        %6885 = vmatprep.subr.mxu0 0.0
        %6886 = vmatpush1.msra.mxu0 %v6862
        %6887 = vmatprep.subr.mxu0 0.0
        %6888 = vmatpush1.msra.mxu0 %v6863
        %6889 = vmatprep.subr.mxu0 0.0
        %6890 = vmatpush1.msra.mxu0 %v6864
        %6891 = vmatprep.subr.mxu0 0.0
        %6892 = vmatpush1.msra.mxu0 %v6865
        %6893 = vmatprep.subr.mxu0 0.0
        %6894 = vmatpush1.msra.mxu0 %v6866
        %6895 = vmatprep.subr.mxu0 0.0
        %6896 = vmatpush1.msra.mxu0 %v6867
        %6897 = vmatprep.subr.mxu0 0.0
        %6898 = vmatpush1.msra.mxu0 %v6868
        %6899 = vmatprep.subr.mxu0 0.0
        %6900 = vmatpush1.msra.mxu0 %v6869
        %6901 = vmatprep.subr.mxu0 0.0
        %6902 = vmatpush1.msra.mxu0 %v6870
        %6903 = vmatprep.subr.mxu0 0.0
        %6904 = vmatpush1.msra.mxu0 %v6871
        %6905 = vmatprep.subr.mxu0 0.0
        %6906 = vmatpush1.msra.mxu0 %v6872
        %6907 = vmatprep.subr.mxu0 0.0
        %6908 = vmatpush1.msra.mxu0 %v6873
        %6909 = vmatprep.subr.mxu0 0.0
        %6910 = vmatpush1.msra.mxu0 %v6874
        %6911 = vmatprep.subr.mxu0 0.0
        %6912 = vmatpush1.msra.mxu0 %v6875
        %6913 = vmatprep.subr.mxu0 0.0
        %6914 = vmatpush1.msra.mxu0 %v6876
        %6915 = vmatprep.subr.mxu0 0.0
        %6916 = vmatpush1.msra.mxu0 %v6877
        %6917 = vmatprep.subr.mxu0 0.0
        %6918 = vmatpush1.msra.mxu0 0.0
        %6919 = vmatprep.subr.mxu0 0.0
        %6920 = vmatpush1.msra.mxu0 0.0
        %6921 = vmatprep.subr.mxu0 0.0
        %6922 = vmatpush1.msra.mxu0 0.0
        %6923 = vmatprep.subr.mxu0 0.0
        %6924 = vmatpush1.msra.mxu0 0.0
        %6925 = vmatprep.subr.mxu0 0.0
        %6926 = vmatpush1.msra.mxu0 0.0
        %6927 = vmatprep.subr.mxu0 0.0
        %6928 = vmatpush1.msra.mxu0 0.0
        %6929 = vmatprep.subr.mxu0 0.0
        %6930 = vmatpush1.msra.mxu0 0.0
        %6931 = vmatprep.subr.mxu0 0.0
        %6932 = vmatpush1.msra.mxu0 0.0
        %6933 = vmatprep.subr.mxu0 0.0
        %6934 = vmatpush1.msra.mxu0 0.0
        %6935 = vmatprep.subr.mxu0 0.0
        %6936 = vmatpush1.msra.mxu0 0.0
        %6937 = vmatprep.subr.mxu0 0.0
        %6938 = vmatpush1.msra.mxu0 0.0
        %6939 = vmatprep.subr.mxu0 0.0
        %6940 = vmatpush1.msra.mxu0 0.0
        %6941 = vmatprep.subr.mxu0 0.0
        %6942 = vmatpush1.msra.mxu0 0.0
        %6943 = vmatprep.subr.mxu0 0.0
        %6944 = vmatpush1.msra.mxu0 0.0
        %6945 = vmatprep.subr.mxu0 0.0
        %6946 = vmatpush1.msra.mxu0 0.0
        %6947 = vmatprep.subr.mxu0 0.0
        %6948 = vmatpush1.msra.mxu0 0.0
        %6949 = vmatprep.mubr.f32.mxu0 0.0
        %6950 = vmatmul.mubr.f32.gmra.mrb[0].mxu0 %v6861
        %v6951 = vpop.f32.mrb[0].mxu0
        %v6952 = vadd.f32 %v6883, %v6951
        %v6953 = vpop.f32.mrb[0].mxu0
        %6954 = vdwg.mxu0
        %6955 = vst [vmem:[%s515] sm:$0xff] %v6952
        %s6956 = sand.u32 %s379, 1
        %s6957 = scalar_lea.sflag [#allocation4], %s6956
        %s6958 = sand.u32 %s379, 1
        %s6959 = smul.addr %s6958, 8
        %s6960 = scalar_lea.vmem [#allocation3], %s6959
        // Predicated region
        $region85: #{_fused_logits.1} parent=83 // pred_check
          %p6961 = pneg %p389
        $region86: #{_fused_logits.1} parent=83 // pred_check_branch
          %6963 = sbr.rel (%p6961) target = $region88
        $region87: #{_fused_logits.1} parent=83 // pred_region
          %s6965 = ssub.s32 128, 128
          %6966 = vsyncadd %s6957, %s6965
          %s6967 = smul.addr %s30, 128
          %s6968 = scalar_lea.hbm %s16, %s6967
          %s6970 = sshll.u32 %s6960, 4
          %s6971 = int_to_ptr.vmem [resolvable:$true] %s6970
          %6973 = dma.vmem_to_hbm [thread:$0]  %s6971, 128, %s6968, %s6957
        $region88: #{_fused_logits.1} parent=83 // pred_fallthru
          _
      $region84: #{_fused_logits.1} parent=5 // pred_fallthru
        _
      %p6974 = scmp.le.s32.totalorder 2, %s25
      // Predicated region
      $region89: #{_fused_logits.1} parent=5 // pred_check
        %p6975 = pneg %p6974
      $region90: #{_fused_logits.1} parent=5 // pred_check_branch
        %6977 = sbr.rel (%p6975) target = $region92
      $region91: #{_fused_logits.1} parent=5 // pred_region
        %s6978 = ssub.s32 %s25, 2
        // Predicated region
        $region93: #{_fused_logits.1} parent=91 // pred_check
          %p6979 = pneg %p395
        $region94: #{_fused_logits.1} parent=91 // pred_check_branch
          %6981 = sbr.rel (%p6979) target = $region96
        $region95: #{_fused_logits.1} parent=91 // pred_region
          %s6982 = sand.u32 %s380, 1
          %s6983 = scalar_lea.sflag [#allocation4], %s6982
          %s6984 = sand.u32 %s380, 1
          %s6985 = smul.addr %s6984, 8
          %s6986 = scalar_lea.vmem [#allocation3], %s6985
          %6987 = dma.done %s6983, 128
        $region96: #{_fused_logits.1} parent=91 // pred_fallthru
          _
      $region92: #{_fused_logits.1} parent=5 // pred_fallthru
        _
    $region6: #{_fused_logits.1} parent=1 // loop_footer
      %s29 = sadd.s32 1, %s25
    $region7: #{_fused_logits.1} parent=1 // loop_footer_branch
      %24 = sbr.rel target = $region3
    $region8: #{_fused_logits.1} parent=1 // loop_exit
      _
    %6988 = vsyncpa [#allocation4], 1
    %s6989 = scalar_lea.sflag [#allocation4], 1
    %6990 = vsyncpa %s6989, 1

</llo_original>
